<compile_context>
chip_gen: v7x
topology: tpu7x:2x2x1
jax: 0.10.0
libtpu: 0.0.40
codegen_flags: <defaults>
</compile_context>

<pallas_src>
import math

import jax
import jax.numpy as jnp
import numpy as np
from jax.experimental import pallas as pl
from jax.experimental.pallas import tpu as pltpu

LN_EPS = 1e-5  # PyTorch nn.LayerNorm default


def _round_up(x, m):
    return ((x + m - 1) // m) * m


def _layernorm(x, gamma, beta):
    mean = jnp.mean(x, axis=-1, keepdims=True)
    var = jnp.mean(jnp.square(x - mean), axis=-1, keepdims=True)
    return (x - mean) * jax.lax.rsqrt(var + LN_EPS) * gamma + beta


def _freq_row(time_embed_dim):
    """(1, half) frequency row of the standard diffusion sinusoidal embedding."""
    half = time_embed_dim // 2
    scale = math.log(10000.0) / max(half - 1, 1)
    return jnp.asarray(np.exp(-scale * np.arange(half)), jnp.float32)[None, :]


def value_network_kernel(
    state_ref, time_ref, freqs_ref,
    wts_ref, wtc_ref, bt_ref,
    w0s_ref, w0t_ref, b0_ref, g0_ref, be0_ref,
    w1_ref, b1_ref, g1_ref, be1_ref,
    w2_ref, b2_ref, g2_ref, be2_ref,
    w3_ref, b3_ref,
    out_ref,
):
    f32 = jnp.float32
    bf16 = jnp.bfloat16

    # Fused sinusoidal position embedding (EUP sin/cos, f32).
    args = time_ref[...] * freqs_ref[...]                 # (TILE_B, half)
    sin_e = jnp.sin(args)
    cos_e = jnp.cos(args)

    # time_embed: Linear + ReLU.  concat([sin, cos]) @ Wt == sin @ Wt[:half] + cos @ Wt[half:]
    t_emb = (jnp.dot(sin_e.astype(bf16), wts_ref[...], preferred_element_type=f32)
             + jnp.dot(cos_e.astype(bf16), wtc_ref[...], preferred_element_type=f32)
             + bt_ref[...])
    t_emb = jnp.maximum(t_emb, 0.0)

    # Layer 0: cat([state, t_emb]) @ W0 == state @ W0[:S] + t_emb @ W0[S:]
    h = (jnp.dot(state_ref[...].astype(bf16), w0s_ref[...], preferred_element_type=f32)
         + jnp.dot(t_emb.astype(bf16), w0t_ref[...], preferred_element_type=f32)
         + b0_ref[...])
    h = jnp.maximum(_layernorm(h, g0_ref[...], be0_ref[...]), 0.0)

    h = jnp.dot(h.astype(bf16), w1_ref[...], preferred_element_type=f32) + b1_ref[...]
    h = jnp.maximum(_layernorm(h, g1_ref[...], be1_ref[...]), 0.0)

    h = jnp.dot(h.astype(bf16), w2_ref[...], preferred_element_type=f32) + b2_ref[...]
    h = jnp.maximum(_layernorm(h, g2_ref[...], be2_ref[...]), 0.0)

    # Final hidden -> 1 layer, contracted against the hidden axis so the result is
    # already a lane-dense (1, TILE_B) row (no N=1 matmul, no masked 1-lane store).
    v = jax.lax.dot_general(
        w3_ref[...], h.astype(bf16),
        dimension_numbers=(((1,), (1,)), ((), ())),
        preferred_element_type=f32)                        # (1, TILE_B)
    out_ref[...] = v + b3_ref[...]


def init_params(key, state_dim, hidden_dim, time_embed_dim):
    """Init mimicking PyTorch Linear defaults; matmul weights stored bf16 [in, out]."""
    half = time_embed_dim // 2

    def linear(k, fan_in, fan_out):
        kw, kb = jax.random.split(k)
        bound = 1.0 / math.sqrt(fan_in)
        w = jax.random.uniform(kw, (fan_in, fan_out), jnp.float32, -bound, bound)
        b = jax.random.uniform(kb, (1, fan_out), jnp.float32, -bound, bound)
        return w, b

    keys = jax.random.split(key, 5)
    p = {}

    wt, bt = linear(keys[0], time_embed_dim, time_embed_dim)
    p["wt_sin"] = wt[:half].astype(jnp.bfloat16)   # multiplies the sin half
    p["wt_cos"] = wt[half:].astype(jnp.bfloat16)   # multiplies the cos half
    p["bt"] = bt

    w0, b0 = linear(keys[1], state_dim + time_embed_dim, hidden_dim)
    p["w0s"] = w0[:state_dim].astype(jnp.bfloat16)
    p["w0t"] = w0[state_dim:].astype(jnp.bfloat16)
    p["b0"] = b0
    p["g0"] = jnp.ones((1, hidden_dim), jnp.float32)
    p["be0"] = jnp.zeros((1, hidden_dim), jnp.float32)

    for i, k in zip((1, 2), keys[2:4]):
        w, b = linear(k, hidden_dim, hidden_dim)
        p[f"w{i}"] = w.astype(jnp.bfloat16)
        p[f"b{i}"] = b
        p[f"g{i}"] = jnp.ones((1, hidden_dim), jnp.float32)
        p[f"be{i}"] = jnp.zeros((1, hidden_dim), jnp.float32)

    w3, b3 = linear(keys[4], hidden_dim, 1)
    p["w_out"] = w3.T.astype(jnp.bfloat16)         # (1, hidden) row
    p["b_out"] = b3                                 # (1, 1)
    return p


def value_network_forward(state, time, params, *, tile_b=1024):
    B, state_dim = state.shape
    half, temb = params["wt_sin"].shape
    hidden = params["w1"].shape[0]

    state = state.astype(jnp.float32)
    time = time.astype(jnp.float32)

    # Large batch tiles (amortize ~0.35us/step), but never pad a tiny batch past 256.
    tile_b = min(tile_b, _round_up(max(B, 1), 256))
    b_pad = _round_up(B, tile_b)
    num_tiles = b_pad // tile_b
    if b_pad != B:
        state = jnp.pad(state, ((0, b_pad - B), (0, 0)))
        time = jnp.pad(time, ((0, b_pad - B),))
    time2d = time[:, None]
    freqs = _freq_row(temb)

    weight_args = (
        params["wt_sin"], params["wt_cos"], params["bt"],
        params["w0s"], params["w0t"], params["b0"], params["g0"], params["be0"],
        params["w1"], params["b1"], params["g1"], params["be1"],
        params["w2"], params["b2"], params["g2"], params["be2"],
        params["w_out"], params["b_out"],
    )

    in_specs = [
        pl.BlockSpec((tile_b, state_dim), lambda i: (i, 0)),   # state tile
        pl.BlockSpec((tile_b, 1), lambda i: (i, 0)),           # time column tile
        pl.BlockSpec(freqs.shape, lambda i: (0, 0)),           # resident freqs row
    ] + [pl.BlockSpec(w.shape, lambda i: (0, 0)) for w in weight_args]  # resident params
    out_specs = pl.BlockSpec((1, tile_b), lambda i: (i, 0))    # lane-dense output row

    matmul_flops = 2 * b_pad * (temb * temb + (state_dim + temb) * hidden
                                + 2 * hidden * hidden + hidden)
    weight_bytes = sum(int(np.prod(w.shape)) * w.dtype.itemsize for w in weight_args)
    cost = pl.CostEstimate(
        flops=int(matmul_flops),
        transcendentals=int(b_pad * (temb + 4)),
        bytes_accessed=int(b_pad * (state_dim + 2) * 4 + weight_bytes),
    )

    out = pl.pallas_call(
        value_network_kernel,
        out_shape=jax.ShapeDtypeStruct((num_tiles, tile_b), jnp.float32),
        grid_spec=pltpu.PrefetchScalarGridSpec(
            num_scalar_prefetch=0,
            grid=(num_tiles,),
            in_specs=in_specs,
            out_specs=out_specs,
        ),
        compiler_params=pltpu.CompilerParams(
            dimension_semantics=("parallel",),
            vmem_limit_bytes=32 * 1024 * 1024,
        ),
        cost_estimate=cost,
    )(state, time2d, freqs, *weight_args)

    return out.reshape(-1)[:B, None]


def value_network_reference(state, time, params):
    """Pure-JAX reference matching the PyTorch forward (same bf16-matmul recipe)."""
    f32, bf16 = jnp.float32, jnp.bfloat16
    half, temb = params["wt_sin"].shape

    def dot(x, w):
        return jnp.dot(x.astype(bf16), w, preferred_element_type=f32)

    args = time.astype(f32)[:, None] * _freq_row(temb)
    t_emb = jax.nn.relu(dot(jnp.sin(args), params["wt_sin"])
                        + dot(jnp.cos(args), params["wt_cos"]) + params["bt"])

    h = dot(state.astype(f32), params["w0s"]) + dot(t_emb, params["w0t"]) + params["b0"]
    h = jax.nn.relu(_layernorm(h, params["g0"], params["be0"]))
    for i in (1, 2):
        h = dot(h, params[f"w{i}"]) + params[f"b{i}"]
        h = jax.nn.relu(_layernorm(h, params[f"g{i}"], params[f"be{i}"]))

    v = jax.lax.dot_general(params["w_out"], h.astype(bf16),
                            dimension_numbers=(((1,), (1,)), ((), ())),
                            preferred_element_type=f32)       # (1, B)
    return v.T + params["b_out"]


if __name__ == "__main__":
    # Small batch, module-default feature sizes (hidden=256, time_embed=128) so all
    # lane dims are naturally 128-aligned without padding logic.
    batch = 4
    state_dim = 16
    hidden_dim = 256
    time_embed_dim = 128

    key = jax.random.PRNGKey(0)
    k_state, k_time, k_params = jax.random.split(key, 3)

    state = jax.random.normal(k_state, (batch, state_dim), jnp.float32)
    time = jax.random.uniform(k_time, (batch,), jnp.float32, 0.0, 1000.0)
    params = init_params(k_params, state_dim, hidden_dim, time_embed_dim)

    fwd = jax.jit(value_network_forward)
    out = jax.block_until_ready(fwd(state, time, params))

    ref = value_network_reference(state, time, params)
    assert out.shape == (batch, 1), out.shape
    np.testing.assert_allclose(np.asarray(out), np.asarray(ref, dtype=np.float32),
                               rtol=5e-3, atol=5e-3)

    print("KERNEL_OK")
</pallas_src>

<mosaic_0001>
module attributes {stable_mosaic.version = 11 : i64} {
  func.func @value_network_kernel(%arg0: i32, %arg1: memref<256x16xf32, #tpu.memory_space<vmem>>, %arg2: memref<256x1xf32, #tpu.memory_space<vmem>>, %arg3: memref<1x64xf32, #tpu.memory_space<vmem>>, %arg4: memref<64x128xbf16, #tpu.memory_space<vmem>>, %arg5: memref<64x128xbf16, #tpu.memory_space<vmem>>, %arg6: memref<1x128xf32, #tpu.memory_space<vmem>>, %arg7: memref<16x256xbf16, #tpu.memory_space<vmem>>, %arg8: memref<128x256xbf16, #tpu.memory_space<vmem>>, %arg9: memref<1x256xf32, #tpu.memory_space<vmem>>, %arg10: memref<1x256xf32, #tpu.memory_space<vmem>>, %arg11: memref<1x256xf32, #tpu.memory_space<vmem>>, %arg12: memref<256x256xbf16, #tpu.memory_space<vmem>>, %arg13: memref<1x256xf32, #tpu.memory_space<vmem>>, %arg14: memref<1x256xf32, #tpu.memory_space<vmem>>, %arg15: memref<1x256xf32, #tpu.memory_space<vmem>>, %arg16: memref<256x256xbf16, #tpu.memory_space<vmem>>, %arg17: memref<1x256xf32, #tpu.memory_space<vmem>>, %arg18: memref<1x256xf32, #tpu.memory_space<vmem>>, %arg19: memref<1x256xf32, #tpu.memory_space<vmem>>, %arg20: memref<1x256xbf16, #tpu.memory_space<vmem>>, %arg21: memref<1x1xf32, #tpu.memory_space<vmem>>, %arg22: memref<1x256xf32, #tpu.memory_space<vmem>>) attributes {dimension_semantics = [#tpu.dimension_semantics<parallel>], iteration_bounds = array<i64: 1>, scalar_prefetch = 0 : i64, scratch_operands = 0 : i64, tpu.core_type = #tpu.core_type<tc>, window_params = [{transform_indices = @transform_0, window_bounds = array<i64: 256, 16>}, {transform_indices = @transform_1, window_bounds = array<i64: 256, 1>}, {pipeline_mode = #tpu.pipeline_mode<synchronous>, transform_indices = @transform_2, window_bounds = array<i64: 1, 64>}, {pipeline_mode = #tpu.pipeline_mode<synchronous>, transform_indices = @transform_3, window_bounds = array<i64: 64, 128>}, {pipeline_mode = #tpu.pipeline_mode<synchronous>, transform_indices = @transform_4, window_bounds = array<i64: 64, 128>}, {pipeline_mode = #tpu.pipeline_mode<synchronous>, transform_indices = @transform_5, window_bounds = array<i64: 1, 128>}, {pipeline_mode = #tpu.pipeline_mode<synchronous>, transform_indices = @transform_6, window_bounds = array<i64: 16, 256>}, {pipeline_mode = #tpu.pipeline_mode<synchronous>, transform_indices = @transform_7, window_bounds = array<i64: 128, 256>}, {pipeline_mode = #tpu.pipeline_mode<synchronous>, transform_indices = @transform_8, window_bounds = array<i64: 1, 256>}, {pipeline_mode = #tpu.pipeline_mode<synchronous>, transform_indices = @transform_9, window_bounds = array<i64: 1, 256>}, {pipeline_mode = #tpu.pipeline_mode<synchronous>, transform_indices = @transform_10, window_bounds = array<i64: 1, 256>}, {pipeline_mode = #tpu.pipeline_mode<synchronous>, transform_indices = @transform_11, window_bounds = array<i64: 256, 256>}, {pipeline_mode = #tpu.pipeline_mode<synchronous>, transform_indices = @transform_12, window_bounds = array<i64: 1, 256>}, {pipeline_mode = #tpu.pipeline_mode<synchronous>, transform_indices = @transform_13, window_bounds = array<i64: 1, 256>}, {pipeline_mode = #tpu.pipeline_mode<synchronous>, transform_indices = @transform_14, window_bounds = array<i64: 1, 256>}, {pipeline_mode = #tpu.pipeline_mode<synchronous>, transform_indices = @transform_15, window_bounds = array<i64: 256, 256>}, {pipeline_mode = #tpu.pipeline_mode<synchronous>, transform_indices = @transform_16, window_bounds = array<i64: 1, 256>}, {pipeline_mode = #tpu.pipeline_mode<synchronous>, transform_indices = @transform_17, window_bounds = array<i64: 1, 256>}, {pipeline_mode = #tpu.pipeline_mode<synchronous>, transform_indices = @transform_18, window_bounds = array<i64: 1, 256>}, {pipeline_mode = #tpu.pipeline_mode<synchronous>, transform_indices = @transform_19, window_bounds = array<i64: 1, 256>}, {pipeline_mode = #tpu.pipeline_mode<synchronous>, transform_indices = @transform_20, window_bounds = array<i64: 1, 1>}, {transform_indices = @transform_21, window_bounds = array<i64: 1, 256>}]} {
    %c0 = arith.constant 0 : index
    %c0_0 = arith.constant 0 : index
    %0 = vector.load %arg2[%c0, %c0_0] : memref<256x1xf32, #tpu.memory_space<vmem>>, vector<256x1xf32>
    %c0_1 = arith.constant 0 : index
    %c0_2 = arith.constant 0 : index
    %1 = vector.load %arg3[%c0_1, %c0_2] : memref<1x64xf32, #tpu.memory_space<vmem>>, vector<1x64xf32>
    %2 = vector.broadcast %0 : vector<256x1xf32> to vector<256x64xf32>
    %3 = vector.broadcast %1 : vector<1x64xf32> to vector<256x64xf32>
    %4 = arith.mulf %2, %3 : vector<256x64xf32>
    %5 = math.sin %4 : vector<256x64xf32>
    %6 = math.cos %4 : vector<256x64xf32>
    %7 = arith.truncf %5 : vector<256x64xf32> to vector<256x64xbf16>
    %c0_3 = arith.constant 0 : index
    %c0_4 = arith.constant 0 : index
    %8 = vector.load %arg4[%c0_3, %c0_4] : memref<64x128xbf16, #tpu.memory_space<vmem>>, vector<64x128xbf16>
    %cst = arith.constant dense<0.000000e+00> : vector<256x128xf32>
    %9 = tpu.matmul %7, %8, %cst {dimension_numbers = #tpu.dot_dimension_numbers<[1], [0], [0], [1], [0, 0, 1, 1], [], []>} : vector<256x64xbf16>, vector<64x128xbf16>, vector<256x128xf32> -> vector<256x128xf32>
    %10 = arith.truncf %6 : vector<256x64xf32> to vector<256x64xbf16>
    %c0_5 = arith.constant 0 : index
    %c0_6 = arith.constant 0 : index
    %11 = vector.load %arg5[%c0_5, %c0_6] : memref<64x128xbf16, #tpu.memory_space<vmem>>, vector<64x128xbf16>
    %cst_7 = arith.constant dense<0.000000e+00> : vector<256x128xf32>
    %12 = tpu.matmul %10, %11, %cst_7 {dimension_numbers = #tpu.dot_dimension_numbers<[1], [0], [0], [1], [0, 0, 1, 1], [], []>} : vector<256x64xbf16>, vector<64x128xbf16>, vector<256x128xf32> -> vector<256x128xf32>
    %13 = arith.addf %9, %12 : vector<256x128xf32>
    %c0_8 = arith.constant 0 : index
    %c0_9 = arith.constant 0 : index
    %14 = vector.load %arg6[%c0_8, %c0_9] : memref<1x128xf32, #tpu.memory_space<vmem>>, vector<1x128xf32>
    %15 = vector.broadcast %14 : vector<1x128xf32> to vector<256x128xf32>
    %16 = arith.addf %13, %15 : vector<256x128xf32>
    %cst_10 = arith.constant 0.000000e+00 : f32
    %17 = vector.broadcast %cst_10 : f32 to vector<256x128xf32>
    %18 = arith.maximumf %16, %17 : vector<256x128xf32>
    %c0_11 = arith.constant 0 : index
    %c0_12 = arith.constant 0 : index
    %19 = vector.load %arg1[%c0_11, %c0_12] : memref<256x16xf32, #tpu.memory_space<vmem>>, vector<256x16xf32>
    %20 = arith.truncf %19 : vector<256x16xf32> to vector<256x16xbf16>
    %c0_13 = arith.constant 0 : index
    %c0_14 = arith.constant 0 : index
    %21 = vector.load %arg7[%c0_13, %c0_14] : memref<16x256xbf16, #tpu.memory_space<vmem>>, vector<16x256xbf16>
    %cst_15 = arith.constant dense<0.000000e+00> : vector<256x256xf32>
    %22 = tpu.matmul %20, %21, %cst_15 {dimension_numbers = #tpu.dot_dimension_numbers<[1], [0], [0], [1], [0, 0, 1, 1], [], []>} : vector<256x16xbf16>, vector<16x256xbf16>, vector<256x256xf32> -> vector<256x256xf32>
    %23 = arith.truncf %18 : vector<256x128xf32> to vector<256x128xbf16>
    %c0_16 = arith.constant 0 : index
    %c0_17 = arith.constant 0 : index
    %24 = vector.load %arg8[%c0_16, %c0_17] : memref<128x256xbf16, #tpu.memory_space<vmem>>, vector<128x256xbf16>
    %cst_18 = arith.constant dense<0.000000e+00> : vector<256x256xf32>
    %25 = tpu.matmul %23, %24, %cst_18 {dimension_numbers = #tpu.dot_dimension_numbers<[1], [0], [0], [1], [0, 0, 1, 1], [], []>} : vector<256x128xbf16>, vector<128x256xbf16>, vector<256x256xf32> -> vector<256x256xf32>
    %26 = arith.addf %22, %25 : vector<256x256xf32>
    %c0_19 = arith.constant 0 : index
    %c0_20 = arith.constant 0 : index
    %27 = vector.load %arg9[%c0_19, %c0_20] : memref<1x256xf32, #tpu.memory_space<vmem>>, vector<1x256xf32>
    %28 = vector.broadcast %27 : vector<1x256xf32> to vector<256x256xf32>
    %29 = arith.addf %26, %28 : vector<256x256xf32>
    %c0_21 = arith.constant 0 : index
    %c0_22 = arith.constant 0 : index
    %30 = vector.load %arg10[%c0_21, %c0_22] : memref<1x256xf32, #tpu.memory_space<vmem>>, vector<1x256xf32>
    %c0_23 = arith.constant 0 : index
    %c0_24 = arith.constant 0 : index
    %31 = vector.load %arg11[%c0_23, %c0_24] : memref<1x256xf32, #tpu.memory_space<vmem>>, vector<1x256xf32>
    %cst_25 = arith.constant dense<0.000000e+00> : vector<256xf32>
    %32 = vector.multi_reduction <add>, %29, %cst_25 [1] : vector<256x256xf32> to vector<256xf32>
    %33 = vector.shape_cast %32 : vector<256xf32> to vector<256x1xf32>
    %cst_26 = arith.constant 2.560000e+02 : f32
    %34 = vector.broadcast %cst_26 : f32 to vector<256x1xf32>
    %35 = arith.divf %33, %34 : vector<256x1xf32>
    %36 = vector.broadcast %35 : vector<256x1xf32> to vector<256x256xf32>
    %37 = arith.subf %29, %36 : vector<256x256xf32>
    %38 = arith.mulf %37, %37 : vector<256x256xf32>
    %cst_27 = arith.constant dense<0.000000e+00> : vector<256xf32>
    %39 = vector.multi_reduction <add>, %38, %cst_27 [1] : vector<256x256xf32> to vector<256xf32>
    %40 = vector.shape_cast %39 : vector<256xf32> to vector<256x1xf32>
    %cst_28 = arith.constant 2.560000e+02 : f32
    %41 = vector.broadcast %cst_28 : f32 to vector<256x1xf32>
    %42 = arith.divf %40, %41 : vector<256x1xf32>
    %43 = vector.broadcast %35 : vector<256x1xf32> to vector<256x256xf32>
    %44 = arith.subf %29, %43 : vector<256x256xf32>
    %cst_29 = arith.constant 9.99999974E-6 : f32
    %45 = vector.broadcast %cst_29 : f32 to vector<256x1xf32>
    %46 = arith.addf %42, %45 : vector<256x1xf32>
    %47 = math.rsqrt %46 : vector<256x1xf32>
    %48 = vector.broadcast %47 : vector<256x1xf32> to vector<256x256xf32>
    %49 = arith.mulf %44, %48 : vector<256x256xf32>
    %50 = vector.broadcast %30 : vector<1x256xf32> to vector<256x256xf32>
    %51 = arith.mulf %49, %50 : vector<256x256xf32>
    %52 = vector.broadcast %31 : vector<1x256xf32> to vector<256x256xf32>
    %53 = arith.addf %51, %52 : vector<256x256xf32>
    %cst_30 = arith.constant 0.000000e+00 : f32
    %54 = vector.broadcast %cst_30 : f32 to vector<256x256xf32>
    %55 = arith.maximumf %53, %54 : vector<256x256xf32>
    %56 = arith.truncf %55 : vector<256x256xf32> to vector<256x256xbf16>
    %c0_31 = arith.constant 0 : index
    %c0_32 = arith.constant 0 : index
    %57 = vector.load %arg12[%c0_31, %c0_32] : memref<256x256xbf16, #tpu.memory_space<vmem>>, vector<256x256xbf16>
    %cst_33 = arith.constant dense<0.000000e+00> : vector<256x256xf32>
    %58 = tpu.matmul %56, %57, %cst_33 {dimension_numbers = #tpu.dot_dimension_numbers<[1], [0], [0], [1], [0, 0, 1, 1], [], []>} : vector<256x256xbf16>, vector<256x256xbf16>, vector<256x256xf32> -> vector<256x256xf32>
    %c0_34 = arith.constant 0 : index
    %c0_35 = arith.constant 0 : index
    %59 = vector.load %arg13[%c0_34, %c0_35] : memref<1x256xf32, #tpu.memory_space<vmem>>, vector<1x256xf32>
    %60 = vector.broadcast %59 : vector<1x256xf32> to vector<256x256xf32>
    %61 = arith.addf %58, %60 : vector<256x256xf32>
    %c0_36 = arith.constant 0 : index
    %c0_37 = arith.constant 0 : index
    %62 = vector.load %arg14[%c0_36, %c0_37] : memref<1x256xf32, #tpu.memory_space<vmem>>, vector<1x256xf32>
    %c0_38 = arith.constant 0 : index
    %c0_39 = arith.constant 0 : index
    %63 = vector.load %arg15[%c0_38, %c0_39] : memref<1x256xf32, #tpu.memory_space<vmem>>, vector<1x256xf32>
    %cst_40 = arith.constant dense<0.000000e+00> : vector<256xf32>
    %64 = vector.multi_reduction <add>, %61, %cst_40 [1] : vector<256x256xf32> to vector<256xf32>
    %65 = vector.shape_cast %64 : vector<256xf32> to vector<256x1xf32>
    %cst_41 = arith.constant 2.560000e+02 : f32
    %66 = vector.broadcast %cst_41 : f32 to vector<256x1xf32>
    %67 = arith.divf %65, %66 : vector<256x1xf32>
    %68 = vector.broadcast %67 : vector<256x1xf32> to vector<256x256xf32>
    %69 = arith.subf %61, %68 : vector<256x256xf32>
    %70 = arith.mulf %69, %69 : vector<256x256xf32>
    %cst_42 = arith.constant dense<0.000000e+00> : vector<256xf32>
    %71 = vector.multi_reduction <add>, %70, %cst_42 [1] : vector<256x256xf32> to vector<256xf32>
    %72 = vector.shape_cast %71 : vector<256xf32> to vector<256x1xf32>
    %cst_43 = arith.constant 2.560000e+02 : f32
    %73 = vector.broadcast %cst_43 : f32 to vector<256x1xf32>
    %74 = arith.divf %72, %73 : vector<256x1xf32>
    %75 = vector.broadcast %67 : vector<256x1xf32> to vector<256x256xf32>
    %76 = arith.subf %61, %75 : vector<256x256xf32>
    %cst_44 = arith.constant 9.99999974E-6 : f32
    %77 = vector.broadcast %cst_44 : f32 to vector<256x1xf32>
    %78 = arith.addf %74, %77 : vector<256x1xf32>
    %79 = math.rsqrt %78 : vector<256x1xf32>
    %80 = vector.broadcast %79 : vector<256x1xf32> to vector<256x256xf32>
    %81 = arith.mulf %76, %80 : vector<256x256xf32>
    %82 = vector.broadcast %62 : vector<1x256xf32> to vector<256x256xf32>
    %83 = arith.mulf %81, %82 : vector<256x256xf32>
    %84 = vector.broadcast %63 : vector<1x256xf32> to vector<256x256xf32>
    %85 = arith.addf %83, %84 : vector<256x256xf32>
    %cst_45 = arith.constant 0.000000e+00 : f32
    %86 = vector.broadcast %cst_45 : f32 to vector<256x256xf32>
    %87 = arith.maximumf %85, %86 : vector<256x256xf32>
    %88 = arith.truncf %87 : vector<256x256xf32> to vector<256x256xbf16>
    %c0_46 = arith.constant 0 : index
    %c0_47 = arith.constant 0 : index
    %89 = vector.load %arg16[%c0_46, %c0_47] : memref<256x256xbf16, #tpu.memory_space<vmem>>, vector<256x256xbf16>
    %cst_48 = arith.constant dense<0.000000e+00> : vector<256x256xf32>
    %90 = tpu.matmul %88, %89, %cst_48 {dimension_numbers = #tpu.dot_dimension_numbers<[1], [0], [0], [1], [0, 0, 1, 1], [], []>} : vector<256x256xbf16>, vector<256x256xbf16>, vector<256x256xf32> -> vector<256x256xf32>
    %c0_49 = arith.constant 0 : index
    %c0_50 = arith.constant 0 : index
    %91 = vector.load %arg17[%c0_49, %c0_50] : memref<1x256xf32, #tpu.memory_space<vmem>>, vector<1x256xf32>
    %92 = vector.broadcast %91 : vector<1x256xf32> to vector<256x256xf32>
    %93 = arith.addf %90, %92 : vector<256x256xf32>
    %c0_51 = arith.constant 0 : index
    %c0_52 = arith.constant 0 : index
    %94 = vector.load %arg18[%c0_51, %c0_52] : memref<1x256xf32, #tpu.memory_space<vmem>>, vector<1x256xf32>
    %c0_53 = arith.constant 0 : index
    %c0_54 = arith.constant 0 : index
    %95 = vector.load %arg19[%c0_53, %c0_54] : memref<1x256xf32, #tpu.memory_space<vmem>>, vector<1x256xf32>
    %cst_55 = arith.constant dense<0.000000e+00> : vector<256xf32>
    %96 = vector.multi_reduction <add>, %93, %cst_55 [1] : vector<256x256xf32> to vector<256xf32>
    %97 = vector.shape_cast %96 : vector<256xf32> to vector<256x1xf32>
    %cst_56 = arith.constant 2.560000e+02 : f32
    %98 = vector.broadcast %cst_56 : f32 to vector<256x1xf32>
    %99 = arith.divf %97, %98 : vector<256x1xf32>
    %100 = vector.broadcast %99 : vector<256x1xf32> to vector<256x256xf32>
    %101 = arith.subf %93, %100 : vector<256x256xf32>
    %102 = arith.mulf %101, %101 : vector<256x256xf32>
    %cst_57 = arith.constant dense<0.000000e+00> : vector<256xf32>
    %103 = vector.multi_reduction <add>, %102, %cst_57 [1] : vector<256x256xf32> to vector<256xf32>
    %104 = vector.shape_cast %103 : vector<256xf32> to vector<256x1xf32>
    %cst_58 = arith.constant 2.560000e+02 : f32
    %105 = vector.broadcast %cst_58 : f32 to vector<256x1xf32>
    %106 = arith.divf %104, %105 : vector<256x1xf32>
    %107 = vector.broadcast %99 : vector<256x1xf32> to vector<256x256xf32>
    %108 = arith.subf %93, %107 : vector<256x256xf32>
    %cst_59 = arith.constant 9.99999974E-6 : f32
    %109 = vector.broadcast %cst_59 : f32 to vector<256x1xf32>
    %110 = arith.addf %106, %109 : vector<256x1xf32>
    %111 = math.rsqrt %110 : vector<256x1xf32>
    %112 = vector.broadcast %111 : vector<256x1xf32> to vector<256x256xf32>
    %113 = arith.mulf %108, %112 : vector<256x256xf32>
    %114 = vector.broadcast %94 : vector<1x256xf32> to vector<256x256xf32>
    %115 = arith.mulf %113, %114 : vector<256x256xf32>
    %116 = vector.broadcast %95 : vector<1x256xf32> to vector<256x256xf32>
    %117 = arith.addf %115, %116 : vector<256x256xf32>
    %cst_60 = arith.constant 0.000000e+00 : f32
    %118 = vector.broadcast %cst_60 : f32 to vector<256x256xf32>
    %119 = arith.maximumf %117, %118 : vector<256x256xf32>
    %c0_61 = arith.constant 0 : index
    %c0_62 = arith.constant 0 : index
    %120 = vector.load %arg20[%c0_61, %c0_62] : memref<1x256xbf16, #tpu.memory_space<vmem>>, vector<1x256xbf16>
    %121 = arith.truncf %119 : vector<256x256xf32> to vector<256x256xbf16>
    %cst_63 = arith.constant dense<0.000000e+00> : vector<1x256xf32>
    %122 = tpu.matmul %120, %121, %cst_63 {dimension_numbers = #tpu.dot_dimension_numbers<[1], [1], [0], [0], [0, 0, 1, 0], [], []>} : vector<1x256xbf16>, vector<256x256xbf16>, vector<1x256xf32> -> vector<1x256xf32>
    %c0_64 = arith.constant 0 : index
    %c0_65 = arith.constant 0 : index
    %123 = vector.load %arg21[%c0_64, %c0_65] : memref<1x1xf32, #tpu.memory_space<vmem>>, vector<1x1xf32>
    %124 = vector.broadcast %123 : vector<1x1xf32> to vector<1x256xf32>
    %125 = arith.addf %122, %124 : vector<1x256xf32>
    %c0_66 = arith.constant 0 : index
    %c0_67 = arith.constant 0 : index
    %126 = vector.load %arg22[%c0_66, %c0_67] : memref<1x256xf32, #tpu.memory_space<vmem>>, vector<1x256xf32>
    tpu.vector_store %arg22[%c0_66, %c0_67], %125 {strides = array<i32>} : memref<1x256xf32, #tpu.memory_space<vmem>>, vector<1x256xf32>,
    return
  }
  func.func @transform_0(%arg0: i32) -> (i32, i32) {
    %c0_i32 = arith.constant 0 : i32
    %c0_i32_0 = arith.constant 0 : i32
    return %arg0, %c0_i32 : i32, i32
  }
  func.func @transform_1(%arg0: i32) -> (i32, i32) {
    %c0_i32 = arith.constant 0 : i32
    %c0_i32_0 = arith.constant 0 : i32
    return %arg0, %c0_i32 : i32, i32
  }
  func.func @transform_2(%arg0: i32) -> (i32, i32) {
    %c0_i32 = arith.constant 0 : i32
    %c0_i32_0 = arith.constant 0 : i32
    %c0_i32_1 = arith.constant 0 : i32
    return %c0_i32, %c0_i32_0 : i32, i32
  }
  func.func @transform_3(%arg0: i32) -> (i32, i32) {
    %c0_i32 = arith.constant 0 : i32
    %c0_i32_0 = arith.constant 0 : i32
    %c0_i32_1 = arith.constant 0 : i32
    return %c0_i32, %c0_i32_0 : i32, i32
  }
  func.func @transform_4(%arg0: i32) -> (i32, i32) {
    %c0_i32 = arith.constant 0 : i32
    %c0_i32_0 = arith.constant 0 : i32
    %c0_i32_1 = arith.constant 0 : i32
    return %c0_i32, %c0_i32_0 : i32, i32
  }
  func.func @transform_5(%arg0: i32) -> (i32, i32) {
    %c0_i32 = arith.constant 0 : i32
    %c0_i32_0 = arith.constant 0 : i32
    %c0_i32_1 = arith.constant 0 : i32
    return %c0_i32, %c0_i32_0 : i32, i32
  }
  func.func @transform_6(%arg0: i32) -> (i32, i32) {
    %c0_i32 = arith.constant 0 : i32
    %c0_i32_0 = arith.constant 0 : i32
    %c0_i32_1 = arith.constant 0 : i32
    return %c0_i32, %c0_i32_0 : i32, i32
  }
  func.func @transform_7(%arg0: i32) -> (i32, i32) {
    %c0_i32 = arith.constant 0 : i32
    %c0_i32_0 = arith.constant 0 : i32
    %c0_i32_1 = arith.constant 0 : i32
    return %c0_i32, %c0_i32_0 : i32, i32
  }
  func.func @transform_8(%arg0: i32) -> (i32, i32) {
    %c0_i32 = arith.constant 0 : i32
    %c0_i32_0 = arith.constant 0 : i32
    %c0_i32_1 = arith.constant 0 : i32
    return %c0_i32, %c0_i32_0 : i32, i32
  }
  func.func @transform_9(%arg0: i32) -> (i32, i32) {
    %c0_i32 = arith.constant 0 : i32
    %c0_i32_0 = arith.constant 0 : i32
    %c0_i32_1 = arith.constant 0 : i32
    return %c0_i32, %c0_i32_0 : i32, i32
  }
  func.func @transform_10(%arg0: i32) -> (i32, i32) {
    %c0_i32 = arith.constant 0 : i32
    %c0_i32_0 = arith.constant 0 : i32
    %c0_i32_1 = arith.constant 0 : i32
    return %c0_i32, %c0_i32_0 : i32, i32
  }
  func.func @transform_11(%arg0: i32) -> (i32, i32) {
    %c0_i32 = arith.constant 0 : i32
    %c0_i32_0 = arith.constant 0 : i32
    %c0_i32_1 = arith.constant 0 : i32
    return %c0_i32, %c0_i32_0 : i32, i32
  }
  func.func @transform_12(%arg0: i32) -> (i32, i32) {
    %c0_i32 = arith.constant 0 : i32
    %c0_i32_0 = arith.constant 0 : i32
    %c0_i32_1 = arith.constant 0 : i32
    return %c0_i32, %c0_i32_0 : i32, i32
  }
  func.func @transform_13(%arg0: i32) -> (i32, i32) {
    %c0_i32 = arith.constant 0 : i32
    %c0_i32_0 = arith.constant 0 : i32
    %c0_i32_1 = arith.constant 0 : i32
    return %c0_i32, %c0_i32_0 : i32, i32
  }
  func.func @transform_14(%arg0: i32) -> (i32, i32) {
    %c0_i32 = arith.constant 0 : i32
    %c0_i32_0 = arith.constant 0 : i32
    %c0_i32_1 = arith.constant 0 : i32
    return %c0_i32, %c0_i32_0 : i32, i32
  }
  func.func @transform_15(%arg0: i32) -> (i32, i32) {
    %c0_i32 = arith.constant 0 : i32
    %c0_i32_0 = arith.constant 0 : i32
    %c0_i32_1 = arith.constant 0 : i32
    return %c0_i32, %c0_i32_0 : i32, i32
  }
  func.func @transform_16(%arg0: i32) -> (i32, i32) {
    %c0_i32 = arith.constant 0 : i32
    %c0_i32_0 = arith.constant 0 : i32
    %c0_i32_1 = arith.constant 0 : i32
    return %c0_i32, %c0_i32_0 : i32, i32
  }
  func.func @transform_17(%arg0: i32) -> (i32, i32) {
    %c0_i32 = arith.constant 0 : i32
    %c0_i32_0 = arith.constant 0 : i32
    %c0_i32_1 = arith.constant 0 : i32
    return %c0_i32, %c0_i32_0 : i32, i32
  }
  func.func @transform_18(%arg0: i32) -> (i32, i32) {
    %c0_i32 = arith.constant 0 : i32
    %c0_i32_0 = arith.constant 0 : i32
    %c0_i32_1 = arith.constant 0 : i32
    return %c0_i32, %c0_i32_0 : i32, i32
  }
  func.func @transform_19(%arg0: i32) -> (i32, i32) {
    %c0_i32 = arith.constant 0 : i32
    %c0_i32_0 = arith.constant 0 : i32
    %c0_i32_1 = arith.constant 0 : i32
    return %c0_i32, %c0_i32_0 : i32, i32
  }
  func.func @transform_20(%arg0: i32) -> (i32, i32) {
    %c0_i32 = arith.constant 0 : i32
    %c0_i32_0 = arith.constant 0 : i32
    %c0_i32_1 = arith.constant 0 : i32
    return %c0_i32, %c0_i32_0 : i32, i32
  }
  func.func @transform_21(%arg0: i32) -> (i32, i32) {
    %c0_i32 = arith.constant 0 : i32
    %c0_i32_0 = arith.constant 0 : i32
    return %arg0, %c0_i32 : i32, i32
  }
}

</mosaic_0001>

<llo_original>
// kernel: value_network_forward.1
$region0: #{value_network_forward.1}
  #allocation0 [shape = 'u32[]', space=smem, size = 0x4, offset = 0x4, fixed_abs, tag = 'smem constant byte address 0x4 - core index']
  #allocation1 [shape = 'u32[144,128]{1,0:T(1,128)}', space=vmem, size = 0x12000, scoped, tag = 'internal scratch']
  #allocation2 [shape = 'f32[1,1]{1,0:T(1,128)S(1)}', space=vmem, size = 0x200, scoped, tag = 'scoped memory for value_network_forward.1']
  %s0 = inlined_call_operand.vmem [shape: f32[256,16], index: 0, kind: input, shape index: {}]
  %s1 = inlined_call_operand.vmem [shape: f32[256,1], index: 1, kind: input, shape index: {}]
  %s2 = inlined_call_operand.vmem [shape: f32[1,64], index: 2, kind: input, shape index: {}]
  %s3 = inlined_call_operand.vmem [shape: bf16[64,128], index: 3, kind: input, shape index: {}]
  %s4 = inlined_call_operand.vmem [shape: bf16[64,128], index: 4, kind: input, shape index: {}]
  %s5 = inlined_call_operand.vmem [shape: f32[1,128], index: 5, kind: input, shape index: {}]
  %s6 = inlined_call_operand.hbm [shape: bf16[16,256], index: 6, kind: input, shape index: {}]
  %s7 = inlined_call_operand.hbm [shape: bf16[128,256], index: 7, kind: input, shape index: {}]
  %s8 = inlined_call_operand.vmem [shape: f32[1,256], index: 8, kind: input, shape index: {}]
  %s9 = inlined_call_operand.hbm [shape: f32[1,256], index: 9, kind: input, shape index: {}]
  %s10 = inlined_call_operand.hbm [shape: f32[1,256], index: 10, kind: input, shape index: {}]
  %s11 = inlined_call_operand.vmem [shape: bf16[256,256], index: 11, kind: input, shape index: {}]
  %s12 = inlined_call_operand.hbm [shape: f32[1,256], index: 12, kind: input, shape index: {}]
  %s13 = inlined_call_operand.hbm [shape: f32[1,256], index: 13, kind: input, shape index: {}]
  %s14 = inlined_call_operand.hbm [shape: f32[1,256], index: 14, kind: input, shape index: {}]
  %s15 = inlined_call_operand.vmem [shape: bf16[256,256], index: 15, kind: input, shape index: {}]
  %s16 = inlined_call_operand.hbm [shape: f32[1,256], index: 16, kind: input, shape index: {}]
  %s17 = inlined_call_operand.hbm [shape: f32[1,256], index: 17, kind: input, shape index: {}]
  %s18 = inlined_call_operand.hbm [shape: f32[1,256], index: 18, kind: input, shape index: {}]
  %s19 = inlined_call_operand.vmem [shape: bf16[1,256], index: 19, kind: input, shape index: {}]
  %s20 = inlined_call_operand.<no memory space> [shape: f32[1,1], index: 20, kind: input, shape index: {}]
  %s21 = inlined_call_operand.vmem [shape: f32[1,256], index: 21, kind: output, shape index: {}]
  %s22 = sld [smem:[#allocation0]]
  $region134: #{value_network_forward.1} parent=0
    _
  %s24 = ssub.s32 1, %s22
  %s25 = scalar_select 0, %s24, %s22
  %v26 = vstv %s20
  %27 = vst [vmem:[#allocation2] sm:$0x1] %v26
  $region1: #{value_network_forward.1} parent=0
    #allocation3 [shape = 'u8[8192]{0}', space=vmem, size = 0x2000, scoped, tag = 'input window, operand 6, single buffered']
    #allocation4 [shape = 's32[1]{0}', space=sflag, size = 0x4, scoped, tag = 'scoped memory for value_network_forward.1']
    #allocation5 [shape = 'u8[65536]{0}', space=vmem, size = 0x10000, scoped, tag = 'input window, operand 7, single buffered']
    #allocation6 [shape = 's32[1]{0}', space=sflag, size = 0x4, scoped, tag = 'scoped memory for value_network_forward.1']
    #allocation7 [shape = 'u8[1024]{0}', space=vmem, size = 0x400, scoped, tag = 'input window, operand 9, single buffered']
    #allocation8 [shape = 'u8[1024]{0}', space=vmem, size = 0x400, scoped, tag = 'input window, operand 10, single buffered']
    #allocation9 [shape = 's32[1]{0}', space=sflag, size = 0x4, scoped, tag = 'scoped memory for value_network_forward.1']
    #allocation10 [shape = 'u8[1024]{0}', space=vmem, size = 0x400, scoped, tag = 'input window, operand 12, single buffered']
    #allocation11 [shape = 'u8[1024]{0}', space=vmem, size = 0x400, scoped, tag = 'input window, operand 13, single buffered']
    #allocation12 [shape = 's32[1]{0}', space=sflag, size = 0x4, scoped, tag = 'scoped memory for value_network_forward.1']
    #allocation13 [shape = 'u8[1024]{0}', space=vmem, size = 0x400, scoped, tag = 'input window, operand 14, single buffered']
    #allocation14 [shape = 'u8[1024]{0}', space=vmem, size = 0x400, scoped, tag = 'input window, operand 16, single buffered']
    #allocation15 [shape = 's32[1]{0}', space=sflag, size = 0x4, scoped, tag = 'scoped memory for value_network_forward.1']
    #allocation16 [shape = 'u8[1024]{0}', space=vmem, size = 0x400, scoped, tag = 'input window, operand 17, single buffered']
    #allocation17 [shape = 'u8[1024]{0}', space=vmem, size = 0x400, scoped, tag = 'input window, operand 18, single buffered']
    #allocation18 [shape = 's32[1]{0}', space=sflag, size = 0x4, scoped, tag = 'scoped memory for value_network_forward.1']
    %28 = vsyncpa [#allocation4], 0
    %29 = vsyncpa [#allocation6], 0
    %30 = vsyncpa [#allocation9], 0
    %31 = vsyncpa [#allocation12], 0
    %32 = vsyncpa [#allocation15], 0
    %33 = vsyncpa [#allocation18], 0
    // Predicated region
    $region2: #{value_network_forward.1} parent=1 // pred_check
      _
    $region3: #{value_network_forward.1} parent=1 // pred_check_branch
      %35 = sbr.rel (0) target = $region5
    $region4: #{value_network_forward.1} parent=1 // pred_region
      _
    $region5: #{value_network_forward.1} parent=1 // pred_fallthru
      _
    // Predicated region
    $region6: #{value_network_forward.1} parent=1 // pred_check
      _
    $region7: #{value_network_forward.1} parent=1 // pred_check_branch
      %37 = sbr.rel (0) target = $region9
    $region8: #{value_network_forward.1} parent=1 // pred_region
      _
    $region9: #{value_network_forward.1} parent=1 // pred_fallthru
      _
    // Predicated region
    $region10: #{value_network_forward.1} parent=1 // pred_check
      _
    $region11: #{value_network_forward.1} parent=1 // pred_check_branch
      %39 = sbr.rel (0) target = $region13
    $region12: #{value_network_forward.1} parent=1 // pred_region
      _
    $region13: #{value_network_forward.1} parent=1 // pred_fallthru
      _
    // Predicated region
    $region14: #{value_network_forward.1} parent=1 // pred_check
      _
    $region15: #{value_network_forward.1} parent=1 // pred_check_branch
      %41 = sbr.rel (0) target = $region17
    $region16: #{value_network_forward.1} parent=1 // pred_region
      _
    $region17: #{value_network_forward.1} parent=1 // pred_fallthru
      _
    // Predicated region
    $region18: #{value_network_forward.1} parent=1 // pred_check
      _
    $region19: #{value_network_forward.1} parent=1 // pred_check_branch
      %43 = sbr.rel (0) target = $region21
    $region20: #{value_network_forward.1} parent=1 // pred_region
      _
    $region21: #{value_network_forward.1} parent=1 // pred_fallthru
      _
    // Predicated region
    $region22: #{value_network_forward.1} parent=1 // pred_check
      _
    $region23: #{value_network_forward.1} parent=1 // pred_check_branch
      %45 = sbr.rel (0) target = $region25
    $region24: #{value_network_forward.1} parent=1 // pred_region
      _
    $region25: #{value_network_forward.1} parent=1 // pred_fallthru
      _
    // Predicated region
    $region26: #{value_network_forward.1} parent=1 // pred_check
      _
    $region27: #{value_network_forward.1} parent=1 // pred_check_branch
      %47 = sbr.rel (0) target = $region29
    $region28: #{value_network_forward.1} parent=1 // pred_region
      %s49 = ssub.s32 256, 256
      %50 = vsyncadd [#allocation4], %s49
      %s51 = sshll.u32 [#allocation3], 4
      %s52 = int_to_ptr.vmem [resolvable:$true] %s51
      %57 = dma.hbm_to_vmem [thread:$0]  %s6, 256, %s52, [#allocation4], 128, 128, 8
    $region29: #{value_network_forward.1} parent=1 // pred_fallthru
      _
    // Predicated region
    $region30: #{value_network_forward.1} parent=1 // pred_check
      _
    $region31: #{value_network_forward.1} parent=1 // pred_check_branch
      %59 = sbr.rel (0) target = $region33
    $region32: #{value_network_forward.1} parent=1 // pred_region
      %s61 = ssub.s32 2048, 2048
      %62 = vsyncadd [#allocation6], %s61
      %s63 = sshll.u32 [#allocation5], 4
      %s64 = int_to_ptr.vmem [resolvable:$true] %s63
      %69 = dma.hbm_to_vmem [thread:$0]  %s7, 2048, %s64, [#allocation6], 128, 128, 8
    $region33: #{value_network_forward.1} parent=1 // pred_fallthru
      _
    // Predicated region
    $region34: #{value_network_forward.1} parent=1 // pred_check
      _
    $region35: #{value_network_forward.1} parent=1 // pred_check_branch
      %71 = sbr.rel (0) target = $region37
    $region36: #{value_network_forward.1} parent=1 // pred_region
      _
    $region37: #{value_network_forward.1} parent=1 // pred_fallthru
      _
    // Predicated region
    $region38: #{value_network_forward.1} parent=1 // pred_check
      _
    $region39: #{value_network_forward.1} parent=1 // pred_check_branch
      %73 = sbr.rel (0) target = $region41
    $region40: #{value_network_forward.1} parent=1 // pred_region
      %s75 = ssub.s32 32, 32
      %76 = vsyncadd [#allocation6], %s75
      %s78 = sshll.u32 [#allocation7], 4
      %s79 = int_to_ptr.vmem [resolvable:$true] %s78
      %81 = dma.hbm_to_vmem [thread:$0]  %s9, 32, %s79, [#allocation6]
    $region41: #{value_network_forward.1} parent=1 // pred_fallthru
      _
    // Predicated region
    $region42: #{value_network_forward.1} parent=1 // pred_check
      _
    $region43: #{value_network_forward.1} parent=1 // pred_check_branch
      %83 = sbr.rel (0) target = $region45
    $region44: #{value_network_forward.1} parent=1 // pred_region
      %s85 = ssub.s32 32, 32
      %86 = vsyncadd [#allocation9], %s85
      %s88 = sshll.u32 [#allocation8], 4
      %s89 = int_to_ptr.vmem [resolvable:$true] %s88
      %91 = dma.hbm_to_vmem [thread:$0]  %s10, 32, %s89, [#allocation9]
    $region45: #{value_network_forward.1} parent=1 // pred_fallthru
      _
    // Predicated region
    $region46: #{value_network_forward.1} parent=1 // pred_check
      _
    $region47: #{value_network_forward.1} parent=1 // pred_check_branch
      %93 = sbr.rel (0) target = $region49
    $region48: #{value_network_forward.1} parent=1 // pred_region
      _
    $region49: #{value_network_forward.1} parent=1 // pred_fallthru
      _
    // Predicated region
    $region50: #{value_network_forward.1} parent=1 // pred_check
      _
    $region51: #{value_network_forward.1} parent=1 // pred_check_branch
      %95 = sbr.rel (0) target = $region53
    $region52: #{value_network_forward.1} parent=1 // pred_region
      %s97 = ssub.s32 32, 32
      %98 = vsyncadd [#allocation9], %s97
      %s100 = sshll.u32 [#allocation10], 4
      %s101 = int_to_ptr.vmem [resolvable:$true] %s100
      %103 = dma.hbm_to_vmem [thread:$0]  %s12, 32, %s101, [#allocation9]
    $region53: #{value_network_forward.1} parent=1 // pred_fallthru
      _
    // Predicated region
    $region54: #{value_network_forward.1} parent=1 // pred_check
      _
    $region55: #{value_network_forward.1} parent=1 // pred_check_branch
      %105 = sbr.rel (0) target = $region57
    $region56: #{value_network_forward.1} parent=1 // pred_region
      %s107 = ssub.s32 32, 32
      %108 = vsyncadd [#allocation12], %s107
      %s110 = sshll.u32 [#allocation11], 4
      %s111 = int_to_ptr.vmem [resolvable:$true] %s110
      %113 = dma.hbm_to_vmem [thread:$0]  %s13, 32, %s111, [#allocation12]
    $region57: #{value_network_forward.1} parent=1 // pred_fallthru
      _
    // Predicated region
    $region58: #{value_network_forward.1} parent=1 // pred_check
      _
    $region59: #{value_network_forward.1} parent=1 // pred_check_branch
      %115 = sbr.rel (0) target = $region61
    $region60: #{value_network_forward.1} parent=1 // pred_region
      %s117 = ssub.s32 32, 32
      %118 = vsyncadd [#allocation12], %s117
      %s120 = sshll.u32 [#allocation13], 4
      %s121 = int_to_ptr.vmem [resolvable:$true] %s120
      %123 = dma.hbm_to_vmem [thread:$0]  %s14, 32, %s121, [#allocation12]
    $region61: #{value_network_forward.1} parent=1 // pred_fallthru
      _
    // Predicated region
    $region62: #{value_network_forward.1} parent=1 // pred_check
      _
    $region63: #{value_network_forward.1} parent=1 // pred_check_branch
      %125 = sbr.rel (0) target = $region65
    $region64: #{value_network_forward.1} parent=1 // pred_region
      _
    $region65: #{value_network_forward.1} parent=1 // pred_fallthru
      _
    // Predicated region
    $region66: #{value_network_forward.1} parent=1 // pred_check
      _
    $region67: #{value_network_forward.1} parent=1 // pred_check_branch
      %127 = sbr.rel (0) target = $region69
    $region68: #{value_network_forward.1} parent=1 // pred_region
      %s129 = ssub.s32 32, 32
      %130 = vsyncadd [#allocation15], %s129
      %s132 = sshll.u32 [#allocation14], 4
      %s133 = int_to_ptr.vmem [resolvable:$true] %s132
      %135 = dma.hbm_to_vmem [thread:$0]  %s16, 32, %s133, [#allocation15]
    $region69: #{value_network_forward.1} parent=1 // pred_fallthru
      _
    // Predicated region
    $region70: #{value_network_forward.1} parent=1 // pred_check
      _
    $region71: #{value_network_forward.1} parent=1 // pred_check_branch
      %137 = sbr.rel (0) target = $region73
    $region72: #{value_network_forward.1} parent=1 // pred_region
      %s139 = ssub.s32 32, 32
      %140 = vsyncadd [#allocation15], %s139
      %s142 = sshll.u32 [#allocation16], 4
      %s143 = int_to_ptr.vmem [resolvable:$true] %s142
      %145 = dma.hbm_to_vmem [thread:$0]  %s17, 32, %s143, [#allocation15]
    $region73: #{value_network_forward.1} parent=1 // pred_fallthru
      _
    // Predicated region
    $region74: #{value_network_forward.1} parent=1 // pred_check
      _
    $region75: #{value_network_forward.1} parent=1 // pred_check_branch
      %147 = sbr.rel (0) target = $region77
    $region76: #{value_network_forward.1} parent=1 // pred_region
      %s149 = ssub.s32 32, 32
      %150 = vsyncadd [#allocation18], %s149
      %s152 = sshll.u32 [#allocation17], 4
      %s153 = int_to_ptr.vmem [resolvable:$true] %s152
      %155 = dma.hbm_to_vmem [thread:$0]  %s18, 32, %s153, [#allocation18]
    $region77: #{value_network_forward.1} parent=1 // pred_fallthru
      _
    // Predicated region
    $region78: #{value_network_forward.1} parent=1 // pred_check
      _
    $region79: #{value_network_forward.1} parent=1 // pred_check_branch
      %157 = sbr.rel (0) target = $region81
    $region80: #{value_network_forward.1} parent=1 // pred_region
      _
    $region81: #{value_network_forward.1} parent=1 // pred_fallthru
      _
    // Predicated region
    $region82: #{value_network_forward.1} parent=1 // pred_check
      _
    $region83: #{value_network_forward.1} parent=1 // pred_check_branch
      %159 = sbr.rel (0) target = $region85
    $region84: #{value_network_forward.1} parent=1 // pred_region
      _
    $region85: #{value_network_forward.1} parent=1 // pred_fallthru
      _
    // Predicated region
    $region86: #{value_network_forward.1} parent=1 // pred_check
      _
    $region87: #{value_network_forward.1} parent=1 // pred_check_branch
      %161 = sbr.rel (0) target = $region89
    $region88: #{value_network_forward.1} parent=1 // pred_region
      %162 = dma.done [#allocation4], 256
    $region89: #{value_network_forward.1} parent=1 // pred_fallthru
      _
    // Predicated region
    $region90: #{value_network_forward.1} parent=1 // pred_check
      _
    $region91: #{value_network_forward.1} parent=1 // pred_check_branch
      %164 = sbr.rel (0) target = $region93
    $region92: #{value_network_forward.1} parent=1 // pred_region
      %165 = dma.done [#allocation6], 2048
    $region93: #{value_network_forward.1} parent=1 // pred_fallthru
      _
    // Predicated region
    $region94: #{value_network_forward.1} parent=1 // pred_check
      _
    $region95: #{value_network_forward.1} parent=1 // pred_check_branch
      %167 = sbr.rel (0) target = $region97
    $region96: #{value_network_forward.1} parent=1 // pred_region
      %168 = dma.done [#allocation6], 32
    $region97: #{value_network_forward.1} parent=1 // pred_fallthru
      _
    // Predicated region
    $region98: #{value_network_forward.1} parent=1 // pred_check
      _
    $region99: #{value_network_forward.1} parent=1 // pred_check_branch
      %170 = sbr.rel (0) target = $region101
    $region100: #{value_network_forward.1} parent=1 // pred_region
      %171 = dma.done [#allocation9], 32
    $region101: #{value_network_forward.1} parent=1 // pred_fallthru
      _
    // Predicated region
    $region102: #{value_network_forward.1} parent=1 // pred_check
      _
    $region103: #{value_network_forward.1} parent=1 // pred_check_branch
      %173 = sbr.rel (0) target = $region105
    $region104: #{value_network_forward.1} parent=1 // pred_region
      %174 = dma.done [#allocation9], 32
    $region105: #{value_network_forward.1} parent=1 // pred_fallthru
      _
    // Predicated region
    $region106: #{value_network_forward.1} parent=1 // pred_check
      _
    $region107: #{value_network_forward.1} parent=1 // pred_check_branch
      %176 = sbr.rel (0) target = $region109
    $region108: #{value_network_forward.1} parent=1 // pred_region
      %177 = dma.done [#allocation12], 32
    $region109: #{value_network_forward.1} parent=1 // pred_fallthru
      _
    // Predicated region
    $region110: #{value_network_forward.1} parent=1 // pred_check
      _
    $region111: #{value_network_forward.1} parent=1 // pred_check_branch
      %179 = sbr.rel (0) target = $region113
    $region112: #{value_network_forward.1} parent=1 // pred_region
      %180 = dma.done [#allocation12], 32
    $region113: #{value_network_forward.1} parent=1 // pred_fallthru
      _
    // Predicated region
    $region114: #{value_network_forward.1} parent=1 // pred_check
      _
    $region115: #{value_network_forward.1} parent=1 // pred_check_branch
      %182 = sbr.rel (0) target = $region117
    $region116: #{value_network_forward.1} parent=1 // pred_region
      %183 = dma.done [#allocation15], 32
    $region117: #{value_network_forward.1} parent=1 // pred_fallthru
      _
    // Predicated region
    $region118: #{value_network_forward.1} parent=1 // pred_check
      _
    $region119: #{value_network_forward.1} parent=1 // pred_check_branch
      %185 = sbr.rel (0) target = $region121
    $region120: #{value_network_forward.1} parent=1 // pred_region
      %186 = dma.done [#allocation15], 32
    $region121: #{value_network_forward.1} parent=1 // pred_fallthru
      _
    // Predicated region
    $region122: #{value_network_forward.1} parent=1 // pred_check
      _
    $region123: #{value_network_forward.1} parent=1 // pred_check_branch
      %188 = sbr.rel (0) target = $region125
    $region124: #{value_network_forward.1} parent=1 // pred_region
      %189 = dma.done [#allocation18], 32
    $region125: #{value_network_forward.1} parent=1 // pred_fallthru
      _
    %v191 = vld [vmem:[%s1] sm:$0xff]
    %v192 = vld [vmem:[%s1 + $0x8] sm:$0xff]
    %v193 = vld [vmem:[%s1 + $0x10] sm:$0xff]
    %v194 = vld [vmem:[%s1 + $0x18] sm:$0xff]
    %v195 = vld [vmem:[%s1 + $0x20] sm:$0xff]
    %v196 = vld [vmem:[%s1 + $0x28] sm:$0xff]
    %v197 = vld [vmem:[%s1 + $0x30] sm:$0xff]
    %v198 = vld [vmem:[%s1 + $0x38] sm:$0xff]
    %v199 = vld [vmem:[%s1 + $0x40] sm:$0xff]
    %v200 = vld [vmem:[%s1 + $0x48] sm:$0xff]
    %v201 = vld [vmem:[%s1 + $0x50] sm:$0xff]
    %v202 = vld [vmem:[%s1 + $0x58] sm:$0xff]
    %v203 = vld [vmem:[%s1 + $0x60] sm:$0xff]
    %v204 = vld [vmem:[%s1 + $0x68] sm:$0xff]
    %v205 = vld [vmem:[%s1 + $0x70] sm:$0xff]
    %v206 = vld [vmem:[%s1 + $0x78] sm:$0xff]
    %v207 = vld [vmem:[%s1 + $0x80] sm:$0xff]
    %v208 = vld [vmem:[%s1 + $0x88] sm:$0xff]
    %v209 = vld [vmem:[%s1 + $0x90] sm:$0xff]
    %v210 = vld [vmem:[%s1 + $0x98] sm:$0xff]
    %v211 = vld [vmem:[%s1 + $0xa0] sm:$0xff]
    %v212 = vld [vmem:[%s1 + $0xa8] sm:$0xff]
    %v213 = vld [vmem:[%s1 + $0xb0] sm:$0xff]
    %v214 = vld [vmem:[%s1 + $0xb8] sm:$0xff]
    %v215 = vld [vmem:[%s1 + $0xc0] sm:$0xff]
    %v216 = vld [vmem:[%s1 + $0xc8] sm:$0xff]
    %v217 = vld [vmem:[%s1 + $0xd0] sm:$0xff]
    %v218 = vld [vmem:[%s1 + $0xd8] sm:$0xff]
    %v219 = vld [vmem:[%s1 + $0xe0] sm:$0xff]
    %v220 = vld [vmem:[%s1 + $0xe8] sm:$0xff]
    %v221 = vld [vmem:[%s1 + $0xf0] sm:$0xff]
    %v222 = vld [vmem:[%s1 + $0xf8] sm:$0xff]
    %v223 = vld [vmem:[%s2] sm:$0x1]
    %225 = vset.pattern.permute.xlu0 0
    %226 = vperm.xlu0 %225, %v191
    %v227 = vpop.permute.xlu0 %226
    %230 = vset.pattern.permute.xlu0 0
    %231 = vperm.xlu0 %230, %v192
    %v232 = vpop.permute.xlu0 %231
    %235 = vset.pattern.permute.xlu0 0
    %236 = vperm.xlu0 %235, %v193
    %v237 = vpop.permute.xlu0 %236
    %240 = vset.pattern.permute.xlu0 0
    %241 = vperm.xlu0 %240, %v194
    %v242 = vpop.permute.xlu0 %241
    %245 = vset.pattern.permute.xlu0 0
    %246 = vperm.xlu0 %245, %v195
    %v247 = vpop.permute.xlu0 %246
    %250 = vset.pattern.permute.xlu0 0
    %251 = vperm.xlu0 %250, %v196
    %v252 = vpop.permute.xlu0 %251
    %255 = vset.pattern.permute.xlu0 0
    %256 = vperm.xlu0 %255, %v197
    %v257 = vpop.permute.xlu0 %256
    %260 = vset.pattern.permute.xlu0 0
    %261 = vperm.xlu0 %260, %v198
    %v262 = vpop.permute.xlu0 %261
    %265 = vset.pattern.permute.xlu0 0
    %266 = vperm.xlu0 %265, %v199
    %v267 = vpop.permute.xlu0 %266
    %270 = vset.pattern.permute.xlu0 0
    %271 = vperm.xlu0 %270, %v200
    %v272 = vpop.permute.xlu0 %271
    %275 = vset.pattern.permute.xlu0 0
    %276 = vperm.xlu0 %275, %v201
    %v277 = vpop.permute.xlu0 %276
    %280 = vset.pattern.permute.xlu0 0
    %281 = vperm.xlu0 %280, %v202
    %v282 = vpop.permute.xlu0 %281
    %285 = vset.pattern.permute.xlu0 0
    %286 = vperm.xlu0 %285, %v203
    %v287 = vpop.permute.xlu0 %286
    %290 = vset.pattern.permute.xlu0 0
    %291 = vperm.xlu0 %290, %v204
    %v292 = vpop.permute.xlu0 %291
    %295 = vset.pattern.permute.xlu0 0
    %296 = vperm.xlu0 %295, %v205
    %v297 = vpop.permute.xlu0 %296
    %300 = vset.pattern.permute.xlu0 0
    %301 = vperm.xlu0 %300, %v206
    %v302 = vpop.permute.xlu0 %301
    %305 = vset.pattern.permute.xlu0 0
    %306 = vperm.xlu0 %305, %v207
    %v307 = vpop.permute.xlu0 %306
    %310 = vset.pattern.permute.xlu0 0
    %311 = vperm.xlu0 %310, %v208
    %v312 = vpop.permute.xlu0 %311
    %315 = vset.pattern.permute.xlu0 0
    %316 = vperm.xlu0 %315, %v209
    %v317 = vpop.permute.xlu0 %316
    %320 = vset.pattern.permute.xlu0 0
    %321 = vperm.xlu0 %320, %v210
    %v322 = vpop.permute.xlu0 %321
    %325 = vset.pattern.permute.xlu0 0
    %326 = vperm.xlu0 %325, %v211
    %v327 = vpop.permute.xlu0 %326
    %330 = vset.pattern.permute.xlu0 0
    %331 = vperm.xlu0 %330, %v212
    %v332 = vpop.permute.xlu0 %331
    %335 = vset.pattern.permute.xlu0 0
    %336 = vperm.xlu0 %335, %v213
    %v337 = vpop.permute.xlu0 %336
    %340 = vset.pattern.permute.xlu0 0
    %341 = vperm.xlu0 %340, %v214
    %v342 = vpop.permute.xlu0 %341
    %345 = vset.pattern.permute.xlu0 0
    %346 = vperm.xlu0 %345, %v215
    %v347 = vpop.permute.xlu0 %346
    %350 = vset.pattern.permute.xlu0 0
    %351 = vperm.xlu0 %350, %v216
    %v352 = vpop.permute.xlu0 %351
    %355 = vset.pattern.permute.xlu0 0
    %356 = vperm.xlu0 %355, %v217
    %v357 = vpop.permute.xlu0 %356
    %360 = vset.pattern.permute.xlu0 0
    %361 = vperm.xlu0 %360, %v218
    %v362 = vpop.permute.xlu0 %361
    %365 = vset.pattern.permute.xlu0 0
    %366 = vperm.xlu0 %365, %v219
    %v367 = vpop.permute.xlu0 %366
    %370 = vset.pattern.permute.xlu0 0
    %371 = vperm.xlu0 %370, %v220
    %v372 = vpop.permute.xlu0 %371
    %375 = vset.pattern.permute.xlu0 0
    %376 = vperm.xlu0 %375, %v221
    %v377 = vpop.permute.xlu0 %376
    %380 = vset.pattern.permute.xlu0 0
    %381 = vperm.xlu0 %380, %v222
    %v382 = vpop.permute.xlu0 %381
    %v385 = vlaneseq
    %v386 = vshrl.u32 %v385, 7
    %v387 = vsub.s32 0, %v386
    %v388 = vrot.slane %v223, %v387
    %v390 = vmul.f32 %v227, %v388
    %v391 = vmul.f32 %v232, %v388
    %v392 = vmul.f32 %v237, %v388
    %v393 = vmul.f32 %v242, %v388
    %v394 = vmul.f32 %v247, %v388
    %v395 = vmul.f32 %v252, %v388
    %v396 = vmul.f32 %v257, %v388
    %v397 = vmul.f32 %v262, %v388
    %v398 = vmul.f32 %v267, %v388
    %v399 = vmul.f32 %v272, %v388
    %v400 = vmul.f32 %v277, %v388
    %v401 = vmul.f32 %v282, %v388
    %v402 = vmul.f32 %v287, %v388
    %v403 = vmul.f32 %v292, %v388
    %v404 = vmul.f32 %v297, %v388
    %v405 = vmul.f32 %v302, %v388
    %v406 = vmul.f32 %v307, %v388
    %v407 = vmul.f32 %v312, %v388
    %v408 = vmul.f32 %v317, %v388
    %v409 = vmul.f32 %v322, %v388
    %v410 = vmul.f32 %v327, %v388
    %v411 = vmul.f32 %v332, %v388
    %v412 = vmul.f32 %v337, %v388
    %v413 = vmul.f32 %v342, %v388
    %v414 = vmul.f32 %v347, %v388
    %v415 = vmul.f32 %v352, %v388
    %v416 = vmul.f32 %v357, %v388
    %v417 = vmul.f32 %v362, %v388
    %v418 = vmul.f32 %v367, %v388
    %v419 = vmul.f32 %v372, %v388
    %v420 = vmul.f32 %v377, %v388
    %v421 = vmul.f32 %v382, %v388
    %v422 = vand.u32 2147483647, %v390
    %vm423 = vcmp.le.f32.partialorder %v422, 0.7853982
    %vm424 = vcmp.lt.s32.totalorder %v390, 0
    %v425 = vand.u32 %v390, 2139095040
    %v426 = vshrl.u32 %v425, 23
    %v427 = vsub.s32 %v426, 127
    %v428 = vand.u32 2147483647, %v390
    %v429 = vand.u32 %v428, 8388607
    %v430 = vor.u32 %v429, 8388608
    %v431 = vsub.s32 0, %v430
    %v432 = vadd.s32 %v427, 1
    %vm433 = vcmp.gt.s32.totalorder %v432, 0
    %v434 = vsel %vm433, %v432, 0
    %v435 = vshrl.u32 %v434, 5
    %v436 = vand.u32 %v434, 31
    %v437 = vsub.s32 32, %v436
    %v438 = vshrl.u32 683565275, %v437
    %v439 = vshll.u32 683565275, %v436
    %v440 = vshrl.u32 2475754826, %v437
    %v441 = vor.u32 %v439, %v440
    %v442 = vshll.u32 2475754826, %v436
    %v443 = vshrl.u32 2131351028, %v437
    %v444 = vor.u32 %v442, %v443
    %v445 = vshll.u32 2131351028, %v436
    %v446 = vshrl.u32 2102212464, %v437
    %v447 = vor.u32 %v445, %v446
    %v448 = vshll.u32 2102212464, %v436
    %v449 = vshrl.u32 920167782, %v437
    %v450 = vor.u32 %v448, %v449
    %v451 = vshll.u32 920167782, %v436
    %v452 = vshrl.u32 1326507024, %v437
    %v453 = vor.u32 %v451, %v452
    %vm454 = vcmp.lt.s32.totalorder %v435, 1
    %vm455 = vcmp.lt.s32.totalorder %v435, 2
    %vm456 = vcmp.lt.s32.totalorder %v435, 3
    %vm457 = vcmp.lt.s32.totalorder %v435, 4
    %v458 = vsel %vm454, %v438, %v441
    %v459 = vsel %vm457, %v447, 2102212464
    %v460 = vsel %vm456, %v444, %v459
    %v461 = vsel %vm455, %v458, %v460
    %v462 = vsel %vm454, %v441, %v444
    %v463 = vsel %vm457, %v450, 920167782
    %v464 = vsel %vm456, %v447, %v463
    %v465 = vsel %vm455, %v462, %v464
    %v466 = vsel %vm454, %v444, %v447
    %v467 = vsel %vm457, %v453, 1326507024
    %v468 = vsel %vm456, %v450, %v467
    %v469 = vsel %vm455, %v466, %v468
    %v470 = vshll.u32 %v430, 8
    %v471 = vmul.u32.u64.compose %v470, %v469
    %v472 = vextract.low.u32 %v471
    %v473 = vextract.high.u32 %v471
    %v474 = vmul.u32.u64.compose %v470, %v465
    %v475 = vextract.low.u32 %v474
    %v476 = vextract.high.u32 %v474
    %v477 = vmul.u32 %v470, %v461
    %v478 = vadd.s32 %v473, %v475
    %vm479 = vc.u32 %v473, %v475
    %v480 = vadd.s32 %v476, 1
    %v481 = vsel %vm479, %v480, %v476
    %v482 = vadd.s32 %v477, %v481
    %v483 = vadd.s32 %v482, 536870912
    %v484 = vshrl.u32 %v483, 30
    %v485 = vshll.u32 %v484, 30
    %v486 = vsub.s32 %v482, %v485
    %vm487 = vcmp.lt.s32.totalorder %v486, 0
    %v488 = vsub.s32 0, %v486
    %v489 = vsel %vm487, %v488, %v486
    %v490 = vclz %v489
    %v491 = vsub.s32 %v490, 2
    %vm492 = vcmp.gt.s32.totalorder 0, %v491
    %v493 = vsel %vm492, 0, %v491
    %v494 = vsub.s32 32, %v493
    %v495 = vshll.u32 %v486, %v493
    %v496 = vshrl.u32 %v478, %v494
    %v497 = vor.u32 %v495, %v496
    %v498 = vsub.s32 4294967266, %v493
    %v499 = vadd.s32 %v498, 127
    %v500 = vshll.u32 %v499, 23
    %v501 = vor.u32 4788187, %v500
    %v502 = vand.u32 2147483647, %v501
    %v504 = vcvt.s32.f32 %v497
    %v505 = vmul.f32 %v504, %v502
    %v506 = vxor.u32 %v505, 2147483648
    %v507 = vsel %vm424, %v506, %v505
    %v508 = vsub.s32 4, %v484
    %v509 = vsel %vm424, %v508, %v484
    %v510 = vsel %vm423, %v390, %v507
    %v511 = vsel %vm423, 0, %v509
    %v512 = vcosq.f32.pop %v510
    %v513 = vsinq.f32.pop %v510
    %vm514 = vweird.f32 %v390
    %v515 = vadd.s32 %v511, 3
    %v516 = vand.u32 %v515, 3
    %vm517 = vcmp.lt.s32.totalorder %v516, 2
    %vm518 = vcmp.eq.s32.totalorder %v516, 0
    %v519 = vxor.u32 %v513, 2147483648
    %v520 = vsel %vm518, %v512, %v519
    %vm521 = vcmp.eq.s32.totalorder %v516, 2
    %v522 = vxor.u32 %v512, 2147483648
    %v523 = vsel %vm521, %v522, %v513
    %v524 = vsel %vm517, %v520, %v523
    %v525 = vsel %vm514, nan, %v524
    %v526 = vand.u32 2147483647, %v391
    %vm527 = vcmp.le.f32.partialorder %v526, 0.7853982
    %vm528 = vcmp.lt.s32.totalorder %v391, 0
    %v529 = vand.u32 %v391, 2139095040
    %v530 = vshrl.u32 %v529, 23
    %v531 = vsub.s32 %v530, 127
    %v532 = vand.u32 2147483647, %v391
    %v533 = vand.u32 %v532, 8388607
    %v534 = vor.u32 %v533, 8388608
    %v535 = vsub.s32 0, %v534
    %v536 = vadd.s32 %v531, 1
    %vm537 = vcmp.gt.s32.totalorder %v536, 0
    %v538 = vsel %vm537, %v536, 0
    %v539 = vshrl.u32 %v538, 5
    %v540 = vand.u32 %v538, 31
    %v541 = vsub.s32 32, %v540
    %v542 = vshrl.u32 683565275, %v541
    %v543 = vshll.u32 683565275, %v540
    %v544 = vshrl.u32 2475754826, %v541
    %v545 = vor.u32 %v543, %v544
    %v546 = vshll.u32 2475754826, %v540
    %v547 = vshrl.u32 2131351028, %v541
    %v548 = vor.u32 %v546, %v547
    %v549 = vshll.u32 2131351028, %v540
    %v550 = vshrl.u32 2102212464, %v541
    %v551 = vor.u32 %v549, %v550
    %v552 = vshll.u32 2102212464, %v540
    %v553 = vshrl.u32 920167782, %v541
    %v554 = vor.u32 %v552, %v553
    %v555 = vshll.u32 920167782, %v540
    %v556 = vshrl.u32 1326507024, %v541
    %v557 = vor.u32 %v555, %v556
    %vm558 = vcmp.lt.s32.totalorder %v539, 1
    %vm559 = vcmp.lt.s32.totalorder %v539, 2
    %vm560 = vcmp.lt.s32.totalorder %v539, 3
    %vm561 = vcmp.lt.s32.totalorder %v539, 4
    %v562 = vsel %vm558, %v542, %v545
    %v563 = vsel %vm561, %v551, 2102212464
    %v564 = vsel %vm560, %v548, %v563
    %v565 = vsel %vm559, %v562, %v564
    %v566 = vsel %vm558, %v545, %v548
    %v567 = vsel %vm561, %v554, 920167782
    %v568 = vsel %vm560, %v551, %v567
    %v569 = vsel %vm559, %v566, %v568
    %v570 = vsel %vm558, %v548, %v551
    %v571 = vsel %vm561, %v557, 1326507024
    %v572 = vsel %vm560, %v554, %v571
    %v573 = vsel %vm559, %v570, %v572
    %v574 = vshll.u32 %v534, 8
    %v575 = vmul.u32.u64.compose %v574, %v573
    %v576 = vextract.low.u32 %v575
    %v577 = vextract.high.u32 %v575
    %v578 = vmul.u32.u64.compose %v574, %v569
    %v579 = vextract.low.u32 %v578
    %v580 = vextract.high.u32 %v578
    %v581 = vmul.u32 %v574, %v565
    %v582 = vadd.s32 %v577, %v579
    %vm583 = vc.u32 %v577, %v579
    %v584 = vadd.s32 %v580, 1
    %v585 = vsel %vm583, %v584, %v580
    %v586 = vadd.s32 %v581, %v585
    %v587 = vadd.s32 %v586, 536870912
    %v588 = vshrl.u32 %v587, 30
    %v589 = vshll.u32 %v588, 30
    %v590 = vsub.s32 %v586, %v589
    %vm591 = vcmp.lt.s32.totalorder %v590, 0
    %v592 = vsub.s32 0, %v590
    %v593 = vsel %vm591, %v592, %v590
    %v594 = vclz %v593
    %v595 = vsub.s32 %v594, 2
    %vm596 = vcmp.gt.s32.totalorder 0, %v595
    %v597 = vsel %vm596, 0, %v595
    %v598 = vsub.s32 32, %v597
    %v599 = vshll.u32 %v590, %v597
    %v600 = vshrl.u32 %v582, %v598
    %v601 = vor.u32 %v599, %v600
    %v602 = vsub.s32 4294967266, %v597
    %v603 = vadd.s32 %v602, 127
    %v604 = vshll.u32 %v603, 23
    %v605 = vor.u32 4788187, %v604
    %v606 = vand.u32 2147483647, %v605
    %v608 = vcvt.s32.f32 %v601
    %v609 = vmul.f32 %v608, %v606
    %v610 = vxor.u32 %v609, 2147483648
    %v611 = vsel %vm528, %v610, %v609
    %v612 = vsub.s32 4, %v588
    %v613 = vsel %vm528, %v612, %v588
    %v614 = vsel %vm527, %v391, %v611
    %v615 = vsel %vm527, 0, %v613
    %v616 = vcosq.f32.pop %v614
    %v617 = vsinq.f32.pop %v614
    %vm618 = vweird.f32 %v391
    %v619 = vadd.s32 %v615, 3
    %v620 = vand.u32 %v619, 3
    %vm621 = vcmp.lt.s32.totalorder %v620, 2
    %vm622 = vcmp.eq.s32.totalorder %v620, 0
    %v623 = vxor.u32 %v617, 2147483648
    %v624 = vsel %vm622, %v616, %v623
    %vm625 = vcmp.eq.s32.totalorder %v620, 2
    %v626 = vxor.u32 %v616, 2147483648
    %v627 = vsel %vm625, %v626, %v617
    %v628 = vsel %vm621, %v624, %v627
    %v629 = vsel %vm618, nan, %v628
    %v630 = vand.u32 2147483647, %v392
    %vm631 = vcmp.le.f32.partialorder %v630, 0.7853982
    %vm632 = vcmp.lt.s32.totalorder %v392, 0
    %v633 = vand.u32 %v392, 2139095040
    %v634 = vshrl.u32 %v633, 23
    %v635 = vsub.s32 %v634, 127
    %v636 = vand.u32 2147483647, %v392
    %v637 = vand.u32 %v636, 8388607
    %v638 = vor.u32 %v637, 8388608
    %v639 = vsub.s32 0, %v638
    %v640 = vadd.s32 %v635, 1
    %vm641 = vcmp.gt.s32.totalorder %v640, 0
    %v642 = vsel %vm641, %v640, 0
    %v643 = vshrl.u32 %v642, 5
    %v644 = vand.u32 %v642, 31
    %v645 = vsub.s32 32, %v644
    %v646 = vshrl.u32 683565275, %v645
    %v647 = vshll.u32 683565275, %v644
    %v648 = vshrl.u32 2475754826, %v645
    %v649 = vor.u32 %v647, %v648
    %v650 = vshll.u32 2475754826, %v644
    %v651 = vshrl.u32 2131351028, %v645
    %v652 = vor.u32 %v650, %v651
    %v653 = vshll.u32 2131351028, %v644
    %v654 = vshrl.u32 2102212464, %v645
    %v655 = vor.u32 %v653, %v654
    %v656 = vshll.u32 2102212464, %v644
    %v657 = vshrl.u32 920167782, %v645
    %v658 = vor.u32 %v656, %v657
    %v659 = vshll.u32 920167782, %v644
    %v660 = vshrl.u32 1326507024, %v645
    %v661 = vor.u32 %v659, %v660
    %vm662 = vcmp.lt.s32.totalorder %v643, 1
    %vm663 = vcmp.lt.s32.totalorder %v643, 2
    %vm664 = vcmp.lt.s32.totalorder %v643, 3
    %vm665 = vcmp.lt.s32.totalorder %v643, 4
    %v666 = vsel %vm662, %v646, %v649
    %v667 = vsel %vm665, %v655, 2102212464
    %v668 = vsel %vm664, %v652, %v667
    %v669 = vsel %vm663, %v666, %v668
    %v670 = vsel %vm662, %v649, %v652
    %v671 = vsel %vm665, %v658, 920167782
    %v672 = vsel %vm664, %v655, %v671
    %v673 = vsel %vm663, %v670, %v672
    %v674 = vsel %vm662, %v652, %v655
    %v675 = vsel %vm665, %v661, 1326507024
    %v676 = vsel %vm664, %v658, %v675
    %v677 = vsel %vm663, %v674, %v676
    %v678 = vshll.u32 %v638, 8
    %v679 = vmul.u32.u64.compose %v678, %v677
    %v680 = vextract.low.u32 %v679
    %v681 = vextract.high.u32 %v679
    %v682 = vmul.u32.u64.compose %v678, %v673
    %v683 = vextract.low.u32 %v682
    %v684 = vextract.high.u32 %v682
    %v685 = vmul.u32 %v678, %v669
    %v686 = vadd.s32 %v681, %v683
    %vm687 = vc.u32 %v681, %v683
    %v688 = vadd.s32 %v684, 1
    %v689 = vsel %vm687, %v688, %v684
    %v690 = vadd.s32 %v685, %v689
    %v691 = vadd.s32 %v690, 536870912
    %v692 = vshrl.u32 %v691, 30
    %v693 = vshll.u32 %v692, 30
    %v694 = vsub.s32 %v690, %v693
    %vm695 = vcmp.lt.s32.totalorder %v694, 0
    %v696 = vsub.s32 0, %v694
    %v697 = vsel %vm695, %v696, %v694
    %v698 = vclz %v697
    %v699 = vsub.s32 %v698, 2
    %vm700 = vcmp.gt.s32.totalorder 0, %v699
    %v701 = vsel %vm700, 0, %v699
    %v702 = vsub.s32 32, %v701
    %v703 = vshll.u32 %v694, %v701
    %v704 = vshrl.u32 %v686, %v702
    %v705 = vor.u32 %v703, %v704
    %v706 = vsub.s32 4294967266, %v701
    %v707 = vadd.s32 %v706, 127
    %v708 = vshll.u32 %v707, 23
    %v709 = vor.u32 4788187, %v708
    %v710 = vand.u32 2147483647, %v709
    %v712 = vcvt.s32.f32 %v705
    %v713 = vmul.f32 %v712, %v710
    %v714 = vxor.u32 %v713, 2147483648
    %v715 = vsel %vm632, %v714, %v713
    %v716 = vsub.s32 4, %v692
    %v717 = vsel %vm632, %v716, %v692
    %v718 = vsel %vm631, %v392, %v715
    %v719 = vsel %vm631, 0, %v717
    %v720 = vcosq.f32.pop %v718
    %v721 = vsinq.f32.pop %v718
    %vm722 = vweird.f32 %v392
    %v723 = vadd.s32 %v719, 3
    %v724 = vand.u32 %v723, 3
    %vm725 = vcmp.lt.s32.totalorder %v724, 2
    %vm726 = vcmp.eq.s32.totalorder %v724, 0
    %v727 = vxor.u32 %v721, 2147483648
    %v728 = vsel %vm726, %v720, %v727
    %vm729 = vcmp.eq.s32.totalorder %v724, 2
    %v730 = vxor.u32 %v720, 2147483648
    %v731 = vsel %vm729, %v730, %v721
    %v732 = vsel %vm725, %v728, %v731
    %v733 = vsel %vm722, nan, %v732
    %v734 = vand.u32 2147483647, %v393
    %vm735 = vcmp.le.f32.partialorder %v734, 0.7853982
    %vm736 = vcmp.lt.s32.totalorder %v393, 0
    %v737 = vand.u32 %v393, 2139095040
    %v738 = vshrl.u32 %v737, 23
    %v739 = vsub.s32 %v738, 127
    %v740 = vand.u32 2147483647, %v393
    %v741 = vand.u32 %v740, 8388607
    %v742 = vor.u32 %v741, 8388608
    %v743 = vsub.s32 0, %v742
    %v744 = vadd.s32 %v739, 1
    %vm745 = vcmp.gt.s32.totalorder %v744, 0
    %v746 = vsel %vm745, %v744, 0
    %v747 = vshrl.u32 %v746, 5
    %v748 = vand.u32 %v746, 31
    %v749 = vsub.s32 32, %v748
    %v750 = vshrl.u32 683565275, %v749
    %v751 = vshll.u32 683565275, %v748
    %v752 = vshrl.u32 2475754826, %v749
    %v753 = vor.u32 %v751, %v752
    %v754 = vshll.u32 2475754826, %v748
    %v755 = vshrl.u32 2131351028, %v749
    %v756 = vor.u32 %v754, %v755
    %v757 = vshll.u32 2131351028, %v748
    %v758 = vshrl.u32 2102212464, %v749
    %v759 = vor.u32 %v757, %v758
    %v760 = vshll.u32 2102212464, %v748
    %v761 = vshrl.u32 920167782, %v749
    %v762 = vor.u32 %v760, %v761
    %v763 = vshll.u32 920167782, %v748
    %v764 = vshrl.u32 1326507024, %v749
    %v765 = vor.u32 %v763, %v764
    %vm766 = vcmp.lt.s32.totalorder %v747, 1
    %vm767 = vcmp.lt.s32.totalorder %v747, 2
    %vm768 = vcmp.lt.s32.totalorder %v747, 3
    %vm769 = vcmp.lt.s32.totalorder %v747, 4
    %v770 = vsel %vm766, %v750, %v753
    %v771 = vsel %vm769, %v759, 2102212464
    %v772 = vsel %vm768, %v756, %v771
    %v773 = vsel %vm767, %v770, %v772
    %v774 = vsel %vm766, %v753, %v756
    %v775 = vsel %vm769, %v762, 920167782
    %v776 = vsel %vm768, %v759, %v775
    %v777 = vsel %vm767, %v774, %v776
    %v778 = vsel %vm766, %v756, %v759
    %v779 = vsel %vm769, %v765, 1326507024
    %v780 = vsel %vm768, %v762, %v779
    %v781 = vsel %vm767, %v778, %v780
    %v782 = vshll.u32 %v742, 8
    %v783 = vmul.u32.u64.compose %v782, %v781
    %v784 = vextract.low.u32 %v783
    %v785 = vextract.high.u32 %v783
    %v786 = vmul.u32.u64.compose %v782, %v777
    %v787 = vextract.low.u32 %v786
    %v788 = vextract.high.u32 %v786
    %v789 = vmul.u32 %v782, %v773
    %v790 = vadd.s32 %v785, %v787
    %vm791 = vc.u32 %v785, %v787
    %v792 = vadd.s32 %v788, 1
    %v793 = vsel %vm791, %v792, %v788
    %v794 = vadd.s32 %v789, %v793
    %v795 = vadd.s32 %v794, 536870912
    %v796 = vshrl.u32 %v795, 30
    %v797 = vshll.u32 %v796, 30
    %v798 = vsub.s32 %v794, %v797
    %vm799 = vcmp.lt.s32.totalorder %v798, 0
    %v800 = vsub.s32 0, %v798
    %v801 = vsel %vm799, %v800, %v798
    %v802 = vclz %v801
    %v803 = vsub.s32 %v802, 2
    %vm804 = vcmp.gt.s32.totalorder 0, %v803
    %v805 = vsel %vm804, 0, %v803
    %v806 = vsub.s32 32, %v805
    %v807 = vshll.u32 %v798, %v805
    %v808 = vshrl.u32 %v790, %v806
    %v809 = vor.u32 %v807, %v808
    %v810 = vsub.s32 4294967266, %v805
    %v811 = vadd.s32 %v810, 127
    %v812 = vshll.u32 %v811, 23
    %v813 = vor.u32 4788187, %v812
    %v814 = vand.u32 2147483647, %v813
    %v816 = vcvt.s32.f32 %v809
    %v817 = vmul.f32 %v816, %v814
    %v818 = vxor.u32 %v817, 2147483648
    %v819 = vsel %vm736, %v818, %v817
    %v820 = vsub.s32 4, %v796
    %v821 = vsel %vm736, %v820, %v796
    %v822 = vsel %vm735, %v393, %v819
    %v823 = vsel %vm735, 0, %v821
    %v824 = vcosq.f32.pop %v822
    %v825 = vsinq.f32.pop %v822
    %vm826 = vweird.f32 %v393
    %v827 = vadd.s32 %v823, 3
    %v828 = vand.u32 %v827, 3
    %vm829 = vcmp.lt.s32.totalorder %v828, 2
    %vm830 = vcmp.eq.s32.totalorder %v828, 0
    %v831 = vxor.u32 %v825, 2147483648
    %v832 = vsel %vm830, %v824, %v831
    %vm833 = vcmp.eq.s32.totalorder %v828, 2
    %v834 = vxor.u32 %v824, 2147483648
    %v835 = vsel %vm833, %v834, %v825
    %v836 = vsel %vm829, %v832, %v835
    %v837 = vsel %vm826, nan, %v836
    %v838 = vand.u32 2147483647, %v394
    %vm839 = vcmp.le.f32.partialorder %v838, 0.7853982
    %vm840 = vcmp.lt.s32.totalorder %v394, 0
    %v841 = vand.u32 %v394, 2139095040
    %v842 = vshrl.u32 %v841, 23
    %v843 = vsub.s32 %v842, 127
    %v844 = vand.u32 2147483647, %v394
    %v845 = vand.u32 %v844, 8388607
    %v846 = vor.u32 %v845, 8388608
    %v847 = vsub.s32 0, %v846
    %v848 = vadd.s32 %v843, 1
    %vm849 = vcmp.gt.s32.totalorder %v848, 0
    %v850 = vsel %vm849, %v848, 0
    %v851 = vshrl.u32 %v850, 5
    %v852 = vand.u32 %v850, 31
    %v853 = vsub.s32 32, %v852
    %v854 = vshrl.u32 683565275, %v853
    %v855 = vshll.u32 683565275, %v852
    %v856 = vshrl.u32 2475754826, %v853
    %v857 = vor.u32 %v855, %v856
    %v858 = vshll.u32 2475754826, %v852
    %v859 = vshrl.u32 2131351028, %v853
    %v860 = vor.u32 %v858, %v859
    %v861 = vshll.u32 2131351028, %v852
    %v862 = vshrl.u32 2102212464, %v853
    %v863 = vor.u32 %v861, %v862
    %v864 = vshll.u32 2102212464, %v852
    %v865 = vshrl.u32 920167782, %v853
    %v866 = vor.u32 %v864, %v865
    %v867 = vshll.u32 920167782, %v852
    %v868 = vshrl.u32 1326507024, %v853
    %v869 = vor.u32 %v867, %v868
    %vm870 = vcmp.lt.s32.totalorder %v851, 1
    %vm871 = vcmp.lt.s32.totalorder %v851, 2
    %vm872 = vcmp.lt.s32.totalorder %v851, 3
    %vm873 = vcmp.lt.s32.totalorder %v851, 4
    %v874 = vsel %vm870, %v854, %v857
    %v875 = vsel %vm873, %v863, 2102212464
    %v876 = vsel %vm872, %v860, %v875
    %v877 = vsel %vm871, %v874, %v876
    %v878 = vsel %vm870, %v857, %v860
    %v879 = vsel %vm873, %v866, 920167782
    %v880 = vsel %vm872, %v863, %v879
    %v881 = vsel %vm871, %v878, %v880
    %v882 = vsel %vm870, %v860, %v863
    %v883 = vsel %vm873, %v869, 1326507024
    %v884 = vsel %vm872, %v866, %v883
    %v885 = vsel %vm871, %v882, %v884
    %v886 = vshll.u32 %v846, 8
    %v887 = vmul.u32.u64.compose %v886, %v885
    %v888 = vextract.low.u32 %v887
    %v889 = vextract.high.u32 %v887
    %v890 = vmul.u32.u64.compose %v886, %v881
    %v891 = vextract.low.u32 %v890
    %v892 = vextract.high.u32 %v890
    %v893 = vmul.u32 %v886, %v877
    %v894 = vadd.s32 %v889, %v891
    %vm895 = vc.u32 %v889, %v891
    %v896 = vadd.s32 %v892, 1
    %v897 = vsel %vm895, %v896, %v892
    %v898 = vadd.s32 %v893, %v897
    %v899 = vadd.s32 %v898, 536870912
    %v900 = vshrl.u32 %v899, 30
    %v901 = vshll.u32 %v900, 30
    %v902 = vsub.s32 %v898, %v901
    %vm903 = vcmp.lt.s32.totalorder %v902, 0
    %v904 = vsub.s32 0, %v902
    %v905 = vsel %vm903, %v904, %v902
    %v906 = vclz %v905
    %v907 = vsub.s32 %v906, 2
    %vm908 = vcmp.gt.s32.totalorder 0, %v907
    %v909 = vsel %vm908, 0, %v907
    %v910 = vsub.s32 32, %v909
    %v911 = vshll.u32 %v902, %v909
    %v912 = vshrl.u32 %v894, %v910
    %v913 = vor.u32 %v911, %v912
    %v914 = vsub.s32 4294967266, %v909
    %v915 = vadd.s32 %v914, 127
    %v916 = vshll.u32 %v915, 23
    %v917 = vor.u32 4788187, %v916
    %v918 = vand.u32 2147483647, %v917
    %v920 = vcvt.s32.f32 %v913
    %v921 = vmul.f32 %v920, %v918
    %v922 = vxor.u32 %v921, 2147483648
    %v923 = vsel %vm840, %v922, %v921
    %v924 = vsub.s32 4, %v900
    %v925 = vsel %vm840, %v924, %v900
    %v926 = vsel %vm839, %v394, %v923
    %v927 = vsel %vm839, 0, %v925
    %v928 = vcosq.f32.pop %v926
    %v929 = vsinq.f32.pop %v926
    %vm930 = vweird.f32 %v394
    %v931 = vadd.s32 %v927, 3
    %v932 = vand.u32 %v931, 3
    %vm933 = vcmp.lt.s32.totalorder %v932, 2
    %vm934 = vcmp.eq.s32.totalorder %v932, 0
    %v935 = vxor.u32 %v929, 2147483648
    %v936 = vsel %vm934, %v928, %v935
    %vm937 = vcmp.eq.s32.totalorder %v932, 2
    %v938 = vxor.u32 %v928, 2147483648
    %v939 = vsel %vm937, %v938, %v929
    %v940 = vsel %vm933, %v936, %v939
    %v941 = vsel %vm930, nan, %v940
    %v942 = vand.u32 2147483647, %v395
    %vm943 = vcmp.le.f32.partialorder %v942, 0.7853982
    %vm944 = vcmp.lt.s32.totalorder %v395, 0
    %v945 = vand.u32 %v395, 2139095040
    %v946 = vshrl.u32 %v945, 23
    %v947 = vsub.s32 %v946, 127
    %v948 = vand.u32 2147483647, %v395
    %v949 = vand.u32 %v948, 8388607
    %v950 = vor.u32 %v949, 8388608
    %v951 = vsub.s32 0, %v950
    %v952 = vadd.s32 %v947, 1
    %vm953 = vcmp.gt.s32.totalorder %v952, 0
    %v954 = vsel %vm953, %v952, 0
    %v955 = vshrl.u32 %v954, 5
    %v956 = vand.u32 %v954, 31
    %v957 = vsub.s32 32, %v956
    %v958 = vshrl.u32 683565275, %v957
    %v959 = vshll.u32 683565275, %v956
    %v960 = vshrl.u32 2475754826, %v957
    %v961 = vor.u32 %v959, %v960
    %v962 = vshll.u32 2475754826, %v956
    %v963 = vshrl.u32 2131351028, %v957
    %v964 = vor.u32 %v962, %v963
    %v965 = vshll.u32 2131351028, %v956
    %v966 = vshrl.u32 2102212464, %v957
    %v967 = vor.u32 %v965, %v966
    %v968 = vshll.u32 2102212464, %v956
    %v969 = vshrl.u32 920167782, %v957
    %v970 = vor.u32 %v968, %v969
    %v971 = vshll.u32 920167782, %v956
    %v972 = vshrl.u32 1326507024, %v957
    %v973 = vor.u32 %v971, %v972
    %vm974 = vcmp.lt.s32.totalorder %v955, 1
    %vm975 = vcmp.lt.s32.totalorder %v955, 2
    %vm976 = vcmp.lt.s32.totalorder %v955, 3
    %vm977 = vcmp.lt.s32.totalorder %v955, 4
    %v978 = vsel %vm974, %v958, %v961
    %v979 = vsel %vm977, %v967, 2102212464
    %v980 = vsel %vm976, %v964, %v979
    %v981 = vsel %vm975, %v978, %v980
    %v982 = vsel %vm974, %v961, %v964
    %v983 = vsel %vm977, %v970, 920167782
    %v984 = vsel %vm976, %v967, %v983
    %v985 = vsel %vm975, %v982, %v984
    %v986 = vsel %vm974, %v964, %v967
    %v987 = vsel %vm977, %v973, 1326507024
    %v988 = vsel %vm976, %v970, %v987
    %v989 = vsel %vm975, %v986, %v988
    %v990 = vshll.u32 %v950, 8
    %v991 = vmul.u32.u64.compose %v990, %v989
    %v992 = vextract.low.u32 %v991
    %v993 = vextract.high.u32 %v991
    %v994 = vmul.u32.u64.compose %v990, %v985
    %v995 = vextract.low.u32 %v994
    %v996 = vextract.high.u32 %v994
    %v997 = vmul.u32 %v990, %v981
    %v998 = vadd.s32 %v993, %v995
    %vm999 = vc.u32 %v993, %v995
    %v1000 = vadd.s32 %v996, 1
    %v1001 = vsel %vm999, %v1000, %v996
    %v1002 = vadd.s32 %v997, %v1001
    %v1003 = vadd.s32 %v1002, 536870912
    %v1004 = vshrl.u32 %v1003, 30
    %v1005 = vshll.u32 %v1004, 30
    %v1006 = vsub.s32 %v1002, %v1005
    %vm1007 = vcmp.lt.s32.totalorder %v1006, 0
    %v1008 = vsub.s32 0, %v1006
    %v1009 = vsel %vm1007, %v1008, %v1006
    %v1010 = vclz %v1009
    %v1011 = vsub.s32 %v1010, 2
    %vm1012 = vcmp.gt.s32.totalorder 0, %v1011
    %v1013 = vsel %vm1012, 0, %v1011
    %v1014 = vsub.s32 32, %v1013
    %v1015 = vshll.u32 %v1006, %v1013
    %v1016 = vshrl.u32 %v998, %v1014
    %v1017 = vor.u32 %v1015, %v1016
    %v1018 = vsub.s32 4294967266, %v1013
    %v1019 = vadd.s32 %v1018, 127
    %v1020 = vshll.u32 %v1019, 23
    %v1021 = vor.u32 4788187, %v1020
    %v1022 = vand.u32 2147483647, %v1021
    %v1024 = vcvt.s32.f32 %v1017
    %v1025 = vmul.f32 %v1024, %v1022
    %v1026 = vxor.u32 %v1025, 2147483648
    %v1027 = vsel %vm944, %v1026, %v1025
    %v1028 = vsub.s32 4, %v1004
    %v1029 = vsel %vm944, %v1028, %v1004
    %v1030 = vsel %vm943, %v395, %v1027
    %v1031 = vsel %vm943, 0, %v1029
    %v1032 = vcosq.f32.pop %v1030
    %v1033 = vsinq.f32.pop %v1030
    %vm1034 = vweird.f32 %v395
    %v1035 = vadd.s32 %v1031, 3
    %v1036 = vand.u32 %v1035, 3
    %vm1037 = vcmp.lt.s32.totalorder %v1036, 2
    %vm1038 = vcmp.eq.s32.totalorder %v1036, 0
    %v1039 = vxor.u32 %v1033, 2147483648
    %v1040 = vsel %vm1038, %v1032, %v1039
    %vm1041 = vcmp.eq.s32.totalorder %v1036, 2
    %v1042 = vxor.u32 %v1032, 2147483648
    %v1043 = vsel %vm1041, %v1042, %v1033
    %v1044 = vsel %vm1037, %v1040, %v1043
    %v1045 = vsel %vm1034, nan, %v1044
    %v1046 = vand.u32 2147483647, %v396
    %vm1047 = vcmp.le.f32.partialorder %v1046, 0.7853982
    %vm1048 = vcmp.lt.s32.totalorder %v396, 0
    %v1049 = vand.u32 %v396, 2139095040
    %v1050 = vshrl.u32 %v1049, 23
    %v1051 = vsub.s32 %v1050, 127
    %v1052 = vand.u32 2147483647, %v396
    %v1053 = vand.u32 %v1052, 8388607
    %v1054 = vor.u32 %v1053, 8388608
    %v1055 = vsub.s32 0, %v1054
    %v1056 = vadd.s32 %v1051, 1
    %vm1057 = vcmp.gt.s32.totalorder %v1056, 0
    %v1058 = vsel %vm1057, %v1056, 0
    %v1059 = vshrl.u32 %v1058, 5
    %v1060 = vand.u32 %v1058, 31
    %v1061 = vsub.s32 32, %v1060
    %v1062 = vshrl.u32 683565275, %v1061
    %v1063 = vshll.u32 683565275, %v1060
    %v1064 = vshrl.u32 2475754826, %v1061
    %v1065 = vor.u32 %v1063, %v1064
    %v1066 = vshll.u32 2475754826, %v1060
    %v1067 = vshrl.u32 2131351028, %v1061
    %v1068 = vor.u32 %v1066, %v1067
    %v1069 = vshll.u32 2131351028, %v1060
    %v1070 = vshrl.u32 2102212464, %v1061
    %v1071 = vor.u32 %v1069, %v1070
    %v1072 = vshll.u32 2102212464, %v1060
    %v1073 = vshrl.u32 920167782, %v1061
    %v1074 = vor.u32 %v1072, %v1073
    %v1075 = vshll.u32 920167782, %v1060
    %v1076 = vshrl.u32 1326507024, %v1061
    %v1077 = vor.u32 %v1075, %v1076
    %vm1078 = vcmp.lt.s32.totalorder %v1059, 1
    %vm1079 = vcmp.lt.s32.totalorder %v1059, 2
    %vm1080 = vcmp.lt.s32.totalorder %v1059, 3
    %vm1081 = vcmp.lt.s32.totalorder %v1059, 4
    %v1082 = vsel %vm1078, %v1062, %v1065
    %v1083 = vsel %vm1081, %v1071, 2102212464
    %v1084 = vsel %vm1080, %v1068, %v1083
    %v1085 = vsel %vm1079, %v1082, %v1084
    %v1086 = vsel %vm1078, %v1065, %v1068
    %v1087 = vsel %vm1081, %v1074, 920167782
    %v1088 = vsel %vm1080, %v1071, %v1087
    %v1089 = vsel %vm1079, %v1086, %v1088
    %v1090 = vsel %vm1078, %v1068, %v1071
    %v1091 = vsel %vm1081, %v1077, 1326507024
    %v1092 = vsel %vm1080, %v1074, %v1091
    %v1093 = vsel %vm1079, %v1090, %v1092
    %v1094 = vshll.u32 %v1054, 8
    %v1095 = vmul.u32.u64.compose %v1094, %v1093
    %v1096 = vextract.low.u32 %v1095
    %v1097 = vextract.high.u32 %v1095
    %v1098 = vmul.u32.u64.compose %v1094, %v1089
    %v1099 = vextract.low.u32 %v1098
    %v1100 = vextract.high.u32 %v1098
    %v1101 = vmul.u32 %v1094, %v1085
    %v1102 = vadd.s32 %v1097, %v1099
    %vm1103 = vc.u32 %v1097, %v1099
    %v1104 = vadd.s32 %v1100, 1
    %v1105 = vsel %vm1103, %v1104, %v1100
    %v1106 = vadd.s32 %v1101, %v1105
    %v1107 = vadd.s32 %v1106, 536870912
    %v1108 = vshrl.u32 %v1107, 30
    %v1109 = vshll.u32 %v1108, 30
    %v1110 = vsub.s32 %v1106, %v1109
    %vm1111 = vcmp.lt.s32.totalorder %v1110, 0
    %v1112 = vsub.s32 0, %v1110
    %v1113 = vsel %vm1111, %v1112, %v1110
    %v1114 = vclz %v1113
    %v1115 = vsub.s32 %v1114, 2
    %vm1116 = vcmp.gt.s32.totalorder 0, %v1115
    %v1117 = vsel %vm1116, 0, %v1115
    %v1118 = vsub.s32 32, %v1117
    %v1119 = vshll.u32 %v1110, %v1117
    %v1120 = vshrl.u32 %v1102, %v1118
    %v1121 = vor.u32 %v1119, %v1120
    %v1122 = vsub.s32 4294967266, %v1117
    %v1123 = vadd.s32 %v1122, 127
    %v1124 = vshll.u32 %v1123, 23
    %v1125 = vor.u32 4788187, %v1124
    %v1126 = vand.u32 2147483647, %v1125
    %v1128 = vcvt.s32.f32 %v1121
    %v1129 = vmul.f32 %v1128, %v1126
    %v1130 = vxor.u32 %v1129, 2147483648
    %v1131 = vsel %vm1048, %v1130, %v1129
    %v1132 = vsub.s32 4, %v1108
    %v1133 = vsel %vm1048, %v1132, %v1108
    %v1134 = vsel %vm1047, %v396, %v1131
    %v1135 = vsel %vm1047, 0, %v1133
    %v1136 = vcosq.f32.pop %v1134
    %v1137 = vsinq.f32.pop %v1134
    %vm1138 = vweird.f32 %v396
    %v1139 = vadd.s32 %v1135, 3
    %v1140 = vand.u32 %v1139, 3
    %vm1141 = vcmp.lt.s32.totalorder %v1140, 2
    %vm1142 = vcmp.eq.s32.totalorder %v1140, 0
    %v1143 = vxor.u32 %v1137, 2147483648
    %v1144 = vsel %vm1142, %v1136, %v1143
    %vm1145 = vcmp.eq.s32.totalorder %v1140, 2
    %v1146 = vxor.u32 %v1136, 2147483648
    %v1147 = vsel %vm1145, %v1146, %v1137
    %v1148 = vsel %vm1141, %v1144, %v1147
    %v1149 = vsel %vm1138, nan, %v1148
    %v1150 = vand.u32 2147483647, %v397
    %vm1151 = vcmp.le.f32.partialorder %v1150, 0.7853982
    %vm1152 = vcmp.lt.s32.totalorder %v397, 0
    %v1153 = vand.u32 %v397, 2139095040
    %v1154 = vshrl.u32 %v1153, 23
    %v1155 = vsub.s32 %v1154, 127
    %v1156 = vand.u32 2147483647, %v397
    %v1157 = vand.u32 %v1156, 8388607
    %v1158 = vor.u32 %v1157, 8388608
    %v1159 = vsub.s32 0, %v1158
    %v1160 = vadd.s32 %v1155, 1
    %vm1161 = vcmp.gt.s32.totalorder %v1160, 0
    %v1162 = vsel %vm1161, %v1160, 0
    %v1163 = vshrl.u32 %v1162, 5
    %v1164 = vand.u32 %v1162, 31
    %v1165 = vsub.s32 32, %v1164
    %v1166 = vshrl.u32 683565275, %v1165
    %v1167 = vshll.u32 683565275, %v1164
    %v1168 = vshrl.u32 2475754826, %v1165
    %v1169 = vor.u32 %v1167, %v1168
    %v1170 = vshll.u32 2475754826, %v1164
    %v1171 = vshrl.u32 2131351028, %v1165
    %v1172 = vor.u32 %v1170, %v1171
    %v1173 = vshll.u32 2131351028, %v1164
    %v1174 = vshrl.u32 2102212464, %v1165
    %v1175 = vor.u32 %v1173, %v1174
    %v1176 = vshll.u32 2102212464, %v1164
    %v1177 = vshrl.u32 920167782, %v1165
    %v1178 = vor.u32 %v1176, %v1177
    %v1179 = vshll.u32 920167782, %v1164
    %v1180 = vshrl.u32 1326507024, %v1165
    %v1181 = vor.u32 %v1179, %v1180
    %vm1182 = vcmp.lt.s32.totalorder %v1163, 1
    %vm1183 = vcmp.lt.s32.totalorder %v1163, 2
    %vm1184 = vcmp.lt.s32.totalorder %v1163, 3
    %vm1185 = vcmp.lt.s32.totalorder %v1163, 4
    %v1186 = vsel %vm1182, %v1166, %v1169
    %v1187 = vsel %vm1185, %v1175, 2102212464
    %v1188 = vsel %vm1184, %v1172, %v1187
    %v1189 = vsel %vm1183, %v1186, %v1188
    %v1190 = vsel %vm1182, %v1169, %v1172
    %v1191 = vsel %vm1185, %v1178, 920167782
    %v1192 = vsel %vm1184, %v1175, %v1191
    %v1193 = vsel %vm1183, %v1190, %v1192
    %v1194 = vsel %vm1182, %v1172, %v1175
    %v1195 = vsel %vm1185, %v1181, 1326507024
    %v1196 = vsel %vm1184, %v1178, %v1195
    %v1197 = vsel %vm1183, %v1194, %v1196
    %v1198 = vshll.u32 %v1158, 8
    %v1199 = vmul.u32.u64.compose %v1198, %v1197
    %v1200 = vextract.low.u32 %v1199
    %v1201 = vextract.high.u32 %v1199
    %v1202 = vmul.u32.u64.compose %v1198, %v1193
    %v1203 = vextract.low.u32 %v1202
    %v1204 = vextract.high.u32 %v1202
    %v1205 = vmul.u32 %v1198, %v1189
    %v1206 = vadd.s32 %v1201, %v1203
    %vm1207 = vc.u32 %v1201, %v1203
    %v1208 = vadd.s32 %v1204, 1
    %v1209 = vsel %vm1207, %v1208, %v1204
    %v1210 = vadd.s32 %v1205, %v1209
    %v1211 = vadd.s32 %v1210, 536870912
    %v1212 = vshrl.u32 %v1211, 30
    %v1213 = vshll.u32 %v1212, 30
    %v1214 = vsub.s32 %v1210, %v1213
    %vm1215 = vcmp.lt.s32.totalorder %v1214, 0
    %v1216 = vsub.s32 0, %v1214
    %v1217 = vsel %vm1215, %v1216, %v1214
    %v1218 = vclz %v1217
    %v1219 = vsub.s32 %v1218, 2
    %vm1220 = vcmp.gt.s32.totalorder 0, %v1219
    %v1221 = vsel %vm1220, 0, %v1219
    %v1222 = vsub.s32 32, %v1221
    %v1223 = vshll.u32 %v1214, %v1221
    %v1224 = vshrl.u32 %v1206, %v1222
    %v1225 = vor.u32 %v1223, %v1224
    %v1226 = vsub.s32 4294967266, %v1221
    %v1227 = vadd.s32 %v1226, 127
    %v1228 = vshll.u32 %v1227, 23
    %v1229 = vor.u32 4788187, %v1228
    %v1230 = vand.u32 2147483647, %v1229
    %v1232 = vcvt.s32.f32 %v1225
    %v1233 = vmul.f32 %v1232, %v1230
    %v1234 = vxor.u32 %v1233, 2147483648
    %v1235 = vsel %vm1152, %v1234, %v1233
    %v1236 = vsub.s32 4, %v1212
    %v1237 = vsel %vm1152, %v1236, %v1212
    %v1238 = vsel %vm1151, %v397, %v1235
    %v1239 = vsel %vm1151, 0, %v1237
    %v1240 = vcosq.f32.pop %v1238
    %v1241 = vsinq.f32.pop %v1238
    %vm1242 = vweird.f32 %v397
    %v1243 = vadd.s32 %v1239, 3
    %v1244 = vand.u32 %v1243, 3
    %vm1245 = vcmp.lt.s32.totalorder %v1244, 2
    %vm1246 = vcmp.eq.s32.totalorder %v1244, 0
    %v1247 = vxor.u32 %v1241, 2147483648
    %v1248 = vsel %vm1246, %v1240, %v1247
    %vm1249 = vcmp.eq.s32.totalorder %v1244, 2
    %v1250 = vxor.u32 %v1240, 2147483648
    %v1251 = vsel %vm1249, %v1250, %v1241
    %v1252 = vsel %vm1245, %v1248, %v1251
    %v1253 = vsel %vm1242, nan, %v1252
    %v1254 = vand.u32 2147483647, %v398
    %vm1255 = vcmp.le.f32.partialorder %v1254, 0.7853982
    %vm1256 = vcmp.lt.s32.totalorder %v398, 0
    %v1257 = vand.u32 %v398, 2139095040
    %v1258 = vshrl.u32 %v1257, 23
    %v1259 = vsub.s32 %v1258, 127
    %v1260 = vand.u32 2147483647, %v398
    %v1261 = vand.u32 %v1260, 8388607
    %v1262 = vor.u32 %v1261, 8388608
    %v1263 = vsub.s32 0, %v1262
    %v1264 = vadd.s32 %v1259, 1
    %vm1265 = vcmp.gt.s32.totalorder %v1264, 0
    %v1266 = vsel %vm1265, %v1264, 0
    %v1267 = vshrl.u32 %v1266, 5
    %v1268 = vand.u32 %v1266, 31
    %v1269 = vsub.s32 32, %v1268
    %v1270 = vshrl.u32 683565275, %v1269
    %v1271 = vshll.u32 683565275, %v1268
    %v1272 = vshrl.u32 2475754826, %v1269
    %v1273 = vor.u32 %v1271, %v1272
    %v1274 = vshll.u32 2475754826, %v1268
    %v1275 = vshrl.u32 2131351028, %v1269
    %v1276 = vor.u32 %v1274, %v1275
    %v1277 = vshll.u32 2131351028, %v1268
    %v1278 = vshrl.u32 2102212464, %v1269
    %v1279 = vor.u32 %v1277, %v1278
    %v1280 = vshll.u32 2102212464, %v1268
    %v1281 = vshrl.u32 920167782, %v1269
    %v1282 = vor.u32 %v1280, %v1281
    %v1283 = vshll.u32 920167782, %v1268
    %v1284 = vshrl.u32 1326507024, %v1269
    %v1285 = vor.u32 %v1283, %v1284
    %vm1286 = vcmp.lt.s32.totalorder %v1267, 1
    %vm1287 = vcmp.lt.s32.totalorder %v1267, 2
    %vm1288 = vcmp.lt.s32.totalorder %v1267, 3
    %vm1289 = vcmp.lt.s32.totalorder %v1267, 4
    %v1290 = vsel %vm1286, %v1270, %v1273
    %v1291 = vsel %vm1289, %v1279, 2102212464
    %v1292 = vsel %vm1288, %v1276, %v1291
    %v1293 = vsel %vm1287, %v1290, %v1292
    %v1294 = vsel %vm1286, %v1273, %v1276
    %v1295 = vsel %vm1289, %v1282, 920167782
    %v1296 = vsel %vm1288, %v1279, %v1295
    %v1297 = vsel %vm1287, %v1294, %v1296
    %v1298 = vsel %vm1286, %v1276, %v1279
    %v1299 = vsel %vm1289, %v1285, 1326507024
    %v1300 = vsel %vm1288, %v1282, %v1299
    %v1301 = vsel %vm1287, %v1298, %v1300
    %v1302 = vshll.u32 %v1262, 8
    %v1303 = vmul.u32.u64.compose %v1302, %v1301
    %v1304 = vextract.low.u32 %v1303
    %v1305 = vextract.high.u32 %v1303
    %v1306 = vmul.u32.u64.compose %v1302, %v1297
    %v1307 = vextract.low.u32 %v1306
    %v1308 = vextract.high.u32 %v1306
    %v1309 = vmul.u32 %v1302, %v1293
    %v1310 = vadd.s32 %v1305, %v1307
    %vm1311 = vc.u32 %v1305, %v1307
    %v1312 = vadd.s32 %v1308, 1
    %v1313 = vsel %vm1311, %v1312, %v1308
    %v1314 = vadd.s32 %v1309, %v1313
    %v1315 = vadd.s32 %v1314, 536870912
    %v1316 = vshrl.u32 %v1315, 30
    %v1317 = vshll.u32 %v1316, 30
    %v1318 = vsub.s32 %v1314, %v1317
    %vm1319 = vcmp.lt.s32.totalorder %v1318, 0
    %v1320 = vsub.s32 0, %v1318
    %v1321 = vsel %vm1319, %v1320, %v1318
    %v1322 = vclz %v1321
    %v1323 = vsub.s32 %v1322, 2
    %vm1324 = vcmp.gt.s32.totalorder 0, %v1323
    %v1325 = vsel %vm1324, 0, %v1323
    %v1326 = vsub.s32 32, %v1325
    %v1327 = vshll.u32 %v1318, %v1325
    %v1328 = vshrl.u32 %v1310, %v1326
    %v1329 = vor.u32 %v1327, %v1328
    %v1330 = vsub.s32 4294967266, %v1325
    %v1331 = vadd.s32 %v1330, 127
    %v1332 = vshll.u32 %v1331, 23
    %v1333 = vor.u32 4788187, %v1332
    %v1334 = vand.u32 2147483647, %v1333
    %v1336 = vcvt.s32.f32 %v1329
    %v1337 = vmul.f32 %v1336, %v1334
    %v1338 = vxor.u32 %v1337, 2147483648
    %v1339 = vsel %vm1256, %v1338, %v1337
    %v1340 = vsub.s32 4, %v1316
    %v1341 = vsel %vm1256, %v1340, %v1316
    %v1342 = vsel %vm1255, %v398, %v1339
    %v1343 = vsel %vm1255, 0, %v1341
    %v1344 = vcosq.f32.pop %v1342
    %v1345 = vsinq.f32.pop %v1342
    %vm1346 = vweird.f32 %v398
    %v1347 = vadd.s32 %v1343, 3
    %v1348 = vand.u32 %v1347, 3
    %vm1349 = vcmp.lt.s32.totalorder %v1348, 2
    %vm1350 = vcmp.eq.s32.totalorder %v1348, 0
    %v1351 = vxor.u32 %v1345, 2147483648
    %v1352 = vsel %vm1350, %v1344, %v1351
    %vm1353 = vcmp.eq.s32.totalorder %v1348, 2
    %v1354 = vxor.u32 %v1344, 2147483648
    %v1355 = vsel %vm1353, %v1354, %v1345
    %v1356 = vsel %vm1349, %v1352, %v1355
    %v1357 = vsel %vm1346, nan, %v1356
    %v1358 = vand.u32 2147483647, %v399
    %vm1359 = vcmp.le.f32.partialorder %v1358, 0.7853982
    %vm1360 = vcmp.lt.s32.totalorder %v399, 0
    %v1361 = vand.u32 %v399, 2139095040
    %v1362 = vshrl.u32 %v1361, 23
    %v1363 = vsub.s32 %v1362, 127
    %v1364 = vand.u32 2147483647, %v399
    %v1365 = vand.u32 %v1364, 8388607
    %v1366 = vor.u32 %v1365, 8388608
    %v1367 = vsub.s32 0, %v1366
    %v1368 = vadd.s32 %v1363, 1
    %vm1369 = vcmp.gt.s32.totalorder %v1368, 0
    %v1370 = vsel %vm1369, %v1368, 0
    %v1371 = vshrl.u32 %v1370, 5
    %v1372 = vand.u32 %v1370, 31
    %v1373 = vsub.s32 32, %v1372
    %v1374 = vshrl.u32 683565275, %v1373
    %v1375 = vshll.u32 683565275, %v1372
    %v1376 = vshrl.u32 2475754826, %v1373
    %v1377 = vor.u32 %v1375, %v1376
    %v1378 = vshll.u32 2475754826, %v1372
    %v1379 = vshrl.u32 2131351028, %v1373
    %v1380 = vor.u32 %v1378, %v1379
    %v1381 = vshll.u32 2131351028, %v1372
    %v1382 = vshrl.u32 2102212464, %v1373
    %v1383 = vor.u32 %v1381, %v1382
    %v1384 = vshll.u32 2102212464, %v1372
    %v1385 = vshrl.u32 920167782, %v1373
    %v1386 = vor.u32 %v1384, %v1385
    %v1387 = vshll.u32 920167782, %v1372
    %v1388 = vshrl.u32 1326507024, %v1373
    %v1389 = vor.u32 %v1387, %v1388
    %vm1390 = vcmp.lt.s32.totalorder %v1371, 1
    %vm1391 = vcmp.lt.s32.totalorder %v1371, 2
    %vm1392 = vcmp.lt.s32.totalorder %v1371, 3
    %vm1393 = vcmp.lt.s32.totalorder %v1371, 4
    %v1394 = vsel %vm1390, %v1374, %v1377
    %v1395 = vsel %vm1393, %v1383, 2102212464
    %v1396 = vsel %vm1392, %v1380, %v1395
    %v1397 = vsel %vm1391, %v1394, %v1396
    %v1398 = vsel %vm1390, %v1377, %v1380
    %v1399 = vsel %vm1393, %v1386, 920167782
    %v1400 = vsel %vm1392, %v1383, %v1399
    %v1401 = vsel %vm1391, %v1398, %v1400
    %v1402 = vsel %vm1390, %v1380, %v1383
    %v1403 = vsel %vm1393, %v1389, 1326507024
    %v1404 = vsel %vm1392, %v1386, %v1403
    %v1405 = vsel %vm1391, %v1402, %v1404
    %v1406 = vshll.u32 %v1366, 8
    %v1407 = vmul.u32.u64.compose %v1406, %v1405
    %v1408 = vextract.low.u32 %v1407
    %v1409 = vextract.high.u32 %v1407
    %v1410 = vmul.u32.u64.compose %v1406, %v1401
    %v1411 = vextract.low.u32 %v1410
    %v1412 = vextract.high.u32 %v1410
    %v1413 = vmul.u32 %v1406, %v1397
    %v1414 = vadd.s32 %v1409, %v1411
    %vm1415 = vc.u32 %v1409, %v1411
    %v1416 = vadd.s32 %v1412, 1
    %v1417 = vsel %vm1415, %v1416, %v1412
    %v1418 = vadd.s32 %v1413, %v1417
    %v1419 = vadd.s32 %v1418, 536870912
    %v1420 = vshrl.u32 %v1419, 30
    %v1421 = vshll.u32 %v1420, 30
    %v1422 = vsub.s32 %v1418, %v1421
    %vm1423 = vcmp.lt.s32.totalorder %v1422, 0
    %v1424 = vsub.s32 0, %v1422
    %v1425 = vsel %vm1423, %v1424, %v1422
    %v1426 = vclz %v1425
    %v1427 = vsub.s32 %v1426, 2
    %vm1428 = vcmp.gt.s32.totalorder 0, %v1427
    %v1429 = vsel %vm1428, 0, %v1427
    %v1430 = vsub.s32 32, %v1429
    %v1431 = vshll.u32 %v1422, %v1429
    %v1432 = vshrl.u32 %v1414, %v1430
    %v1433 = vor.u32 %v1431, %v1432
    %v1434 = vsub.s32 4294967266, %v1429
    %v1435 = vadd.s32 %v1434, 127
    %v1436 = vshll.u32 %v1435, 23
    %v1437 = vor.u32 4788187, %v1436
    %v1438 = vand.u32 2147483647, %v1437
    %v1440 = vcvt.s32.f32 %v1433
    %v1441 = vmul.f32 %v1440, %v1438
    %v1442 = vxor.u32 %v1441, 2147483648
    %v1443 = vsel %vm1360, %v1442, %v1441
    %v1444 = vsub.s32 4, %v1420
    %v1445 = vsel %vm1360, %v1444, %v1420
    %v1446 = vsel %vm1359, %v399, %v1443
    %v1447 = vsel %vm1359, 0, %v1445
    %v1448 = vcosq.f32.pop %v1446
    %v1449 = vsinq.f32.pop %v1446
    %vm1450 = vweird.f32 %v399
    %v1451 = vadd.s32 %v1447, 3
    %v1452 = vand.u32 %v1451, 3
    %vm1453 = vcmp.lt.s32.totalorder %v1452, 2
    %vm1454 = vcmp.eq.s32.totalorder %v1452, 0
    %v1455 = vxor.u32 %v1449, 2147483648
    %v1456 = vsel %vm1454, %v1448, %v1455
    %vm1457 = vcmp.eq.s32.totalorder %v1452, 2
    %v1458 = vxor.u32 %v1448, 2147483648
    %v1459 = vsel %vm1457, %v1458, %v1449
    %v1460 = vsel %vm1453, %v1456, %v1459
    %v1461 = vsel %vm1450, nan, %v1460
    %v1462 = vand.u32 2147483647, %v400
    %vm1463 = vcmp.le.f32.partialorder %v1462, 0.7853982
    %vm1464 = vcmp.lt.s32.totalorder %v400, 0
    %v1465 = vand.u32 %v400, 2139095040
    %v1466 = vshrl.u32 %v1465, 23
    %v1467 = vsub.s32 %v1466, 127
    %v1468 = vand.u32 2147483647, %v400
    %v1469 = vand.u32 %v1468, 8388607
    %v1470 = vor.u32 %v1469, 8388608
    %v1471 = vsub.s32 0, %v1470
    %v1472 = vadd.s32 %v1467, 1
    %vm1473 = vcmp.gt.s32.totalorder %v1472, 0
    %v1474 = vsel %vm1473, %v1472, 0
    %v1475 = vshrl.u32 %v1474, 5
    %v1476 = vand.u32 %v1474, 31
    %v1477 = vsub.s32 32, %v1476
    %v1478 = vshrl.u32 683565275, %v1477
    %v1479 = vshll.u32 683565275, %v1476
    %v1480 = vshrl.u32 2475754826, %v1477
    %v1481 = vor.u32 %v1479, %v1480
    %v1482 = vshll.u32 2475754826, %v1476
    %v1483 = vshrl.u32 2131351028, %v1477
    %v1484 = vor.u32 %v1482, %v1483
    %v1485 = vshll.u32 2131351028, %v1476
    %v1486 = vshrl.u32 2102212464, %v1477
    %v1487 = vor.u32 %v1485, %v1486
    %v1488 = vshll.u32 2102212464, %v1476
    %v1489 = vshrl.u32 920167782, %v1477
    %v1490 = vor.u32 %v1488, %v1489
    %v1491 = vshll.u32 920167782, %v1476
    %v1492 = vshrl.u32 1326507024, %v1477
    %v1493 = vor.u32 %v1491, %v1492
    %vm1494 = vcmp.lt.s32.totalorder %v1475, 1
    %vm1495 = vcmp.lt.s32.totalorder %v1475, 2
    %vm1496 = vcmp.lt.s32.totalorder %v1475, 3
    %vm1497 = vcmp.lt.s32.totalorder %v1475, 4
    %v1498 = vsel %vm1494, %v1478, %v1481
    %v1499 = vsel %vm1497, %v1487, 2102212464
    %v1500 = vsel %vm1496, %v1484, %v1499
    %v1501 = vsel %vm1495, %v1498, %v1500
    %v1502 = vsel %vm1494, %v1481, %v1484
    %v1503 = vsel %vm1497, %v1490, 920167782
    %v1504 = vsel %vm1496, %v1487, %v1503
    %v1505 = vsel %vm1495, %v1502, %v1504
    %v1506 = vsel %vm1494, %v1484, %v1487
    %v1507 = vsel %vm1497, %v1493, 1326507024
    %v1508 = vsel %vm1496, %v1490, %v1507
    %v1509 = vsel %vm1495, %v1506, %v1508
    %v1510 = vshll.u32 %v1470, 8
    %v1511 = vmul.u32.u64.compose %v1510, %v1509
    %v1512 = vextract.low.u32 %v1511
    %v1513 = vextract.high.u32 %v1511
    %v1514 = vmul.u32.u64.compose %v1510, %v1505
    %v1515 = vextract.low.u32 %v1514
    %v1516 = vextract.high.u32 %v1514
    %v1517 = vmul.u32 %v1510, %v1501
    %v1518 = vadd.s32 %v1513, %v1515
    %vm1519 = vc.u32 %v1513, %v1515
    %v1520 = vadd.s32 %v1516, 1
    %v1521 = vsel %vm1519, %v1520, %v1516
    %v1522 = vadd.s32 %v1517, %v1521
    %v1523 = vadd.s32 %v1522, 536870912
    %v1524 = vshrl.u32 %v1523, 30
    %v1525 = vshll.u32 %v1524, 30
    %v1526 = vsub.s32 %v1522, %v1525
    %vm1527 = vcmp.lt.s32.totalorder %v1526, 0
    %v1528 = vsub.s32 0, %v1526
    %v1529 = vsel %vm1527, %v1528, %v1526
    %v1530 = vclz %v1529
    %v1531 = vsub.s32 %v1530, 2
    %vm1532 = vcmp.gt.s32.totalorder 0, %v1531
    %v1533 = vsel %vm1532, 0, %v1531
    %v1534 = vsub.s32 32, %v1533
    %v1535 = vshll.u32 %v1526, %v1533
    %v1536 = vshrl.u32 %v1518, %v1534
    %v1537 = vor.u32 %v1535, %v1536
    %v1538 = vsub.s32 4294967266, %v1533
    %v1539 = vadd.s32 %v1538, 127
    %v1540 = vshll.u32 %v1539, 23
    %v1541 = vor.u32 4788187, %v1540
    %v1542 = vand.u32 2147483647, %v1541
    %v1544 = vcvt.s32.f32 %v1537
    %v1545 = vmul.f32 %v1544, %v1542
    %v1546 = vxor.u32 %v1545, 2147483648
    %v1547 = vsel %vm1464, %v1546, %v1545
    %v1548 = vsub.s32 4, %v1524
    %v1549 = vsel %vm1464, %v1548, %v1524
    %v1550 = vsel %vm1463, %v400, %v1547
    %v1551 = vsel %vm1463, 0, %v1549
    %v1552 = vcosq.f32.pop %v1550
    %v1553 = vsinq.f32.pop %v1550
    %vm1554 = vweird.f32 %v400
    %v1555 = vadd.s32 %v1551, 3
    %v1556 = vand.u32 %v1555, 3
    %vm1557 = vcmp.lt.s32.totalorder %v1556, 2
    %vm1558 = vcmp.eq.s32.totalorder %v1556, 0
    %v1559 = vxor.u32 %v1553, 2147483648
    %v1560 = vsel %vm1558, %v1552, %v1559
    %vm1561 = vcmp.eq.s32.totalorder %v1556, 2
    %v1562 = vxor.u32 %v1552, 2147483648
    %v1563 = vsel %vm1561, %v1562, %v1553
    %v1564 = vsel %vm1557, %v1560, %v1563
    %v1565 = vsel %vm1554, nan, %v1564
    %v1566 = vand.u32 2147483647, %v401
    %vm1567 = vcmp.le.f32.partialorder %v1566, 0.7853982
    %vm1568 = vcmp.lt.s32.totalorder %v401, 0
    %v1569 = vand.u32 %v401, 2139095040
    %v1570 = vshrl.u32 %v1569, 23
    %v1571 = vsub.s32 %v1570, 127
    %v1572 = vand.u32 2147483647, %v401
    %v1573 = vand.u32 %v1572, 8388607
    %v1574 = vor.u32 %v1573, 8388608
    %v1575 = vsub.s32 0, %v1574
    %v1576 = vadd.s32 %v1571, 1
    %vm1577 = vcmp.gt.s32.totalorder %v1576, 0
    %v1578 = vsel %vm1577, %v1576, 0
    %v1579 = vshrl.u32 %v1578, 5
    %v1580 = vand.u32 %v1578, 31
    %v1581 = vsub.s32 32, %v1580
    %v1582 = vshrl.u32 683565275, %v1581
    %v1583 = vshll.u32 683565275, %v1580
    %v1584 = vshrl.u32 2475754826, %v1581
    %v1585 = vor.u32 %v1583, %v1584
    %v1586 = vshll.u32 2475754826, %v1580
    %v1587 = vshrl.u32 2131351028, %v1581
    %v1588 = vor.u32 %v1586, %v1587
    %v1589 = vshll.u32 2131351028, %v1580
    %v1590 = vshrl.u32 2102212464, %v1581
    %v1591 = vor.u32 %v1589, %v1590
    %v1592 = vshll.u32 2102212464, %v1580
    %v1593 = vshrl.u32 920167782, %v1581
    %v1594 = vor.u32 %v1592, %v1593
    %v1595 = vshll.u32 920167782, %v1580
    %v1596 = vshrl.u32 1326507024, %v1581
    %v1597 = vor.u32 %v1595, %v1596
    %vm1598 = vcmp.lt.s32.totalorder %v1579, 1
    %vm1599 = vcmp.lt.s32.totalorder %v1579, 2
    %vm1600 = vcmp.lt.s32.totalorder %v1579, 3
    %vm1601 = vcmp.lt.s32.totalorder %v1579, 4
    %v1602 = vsel %vm1598, %v1582, %v1585
    %v1603 = vsel %vm1601, %v1591, 2102212464
    %v1604 = vsel %vm1600, %v1588, %v1603
    %v1605 = vsel %vm1599, %v1602, %v1604
    %v1606 = vsel %vm1598, %v1585, %v1588
    %v1607 = vsel %vm1601, %v1594, 920167782
    %v1608 = vsel %vm1600, %v1591, %v1607
    %v1609 = vsel %vm1599, %v1606, %v1608
    %v1610 = vsel %vm1598, %v1588, %v1591
    %v1611 = vsel %vm1601, %v1597, 1326507024
    %v1612 = vsel %vm1600, %v1594, %v1611
    %v1613 = vsel %vm1599, %v1610, %v1612
    %v1614 = vshll.u32 %v1574, 8
    %v1615 = vmul.u32.u64.compose %v1614, %v1613
    %v1616 = vextract.low.u32 %v1615
    %v1617 = vextract.high.u32 %v1615
    %v1618 = vmul.u32.u64.compose %v1614, %v1609
    %v1619 = vextract.low.u32 %v1618
    %v1620 = vextract.high.u32 %v1618
    %v1621 = vmul.u32 %v1614, %v1605
    %v1622 = vadd.s32 %v1617, %v1619
    %vm1623 = vc.u32 %v1617, %v1619
    %v1624 = vadd.s32 %v1620, 1
    %v1625 = vsel %vm1623, %v1624, %v1620
    %v1626 = vadd.s32 %v1621, %v1625
    %v1627 = vadd.s32 %v1626, 536870912
    %v1628 = vshrl.u32 %v1627, 30
    %v1629 = vshll.u32 %v1628, 30
    %v1630 = vsub.s32 %v1626, %v1629
    %vm1631 = vcmp.lt.s32.totalorder %v1630, 0
    %v1632 = vsub.s32 0, %v1630
    %v1633 = vsel %vm1631, %v1632, %v1630
    %v1634 = vclz %v1633
    %v1635 = vsub.s32 %v1634, 2
    %vm1636 = vcmp.gt.s32.totalorder 0, %v1635
    %v1637 = vsel %vm1636, 0, %v1635
    %v1638 = vsub.s32 32, %v1637
    %v1639 = vshll.u32 %v1630, %v1637
    %v1640 = vshrl.u32 %v1622, %v1638
    %v1641 = vor.u32 %v1639, %v1640
    %v1642 = vsub.s32 4294967266, %v1637
    %v1643 = vadd.s32 %v1642, 127
    %v1644 = vshll.u32 %v1643, 23
    %v1645 = vor.u32 4788187, %v1644
    %v1646 = vand.u32 2147483647, %v1645
    %v1648 = vcvt.s32.f32 %v1641
    %v1649 = vmul.f32 %v1648, %v1646
    %v1650 = vxor.u32 %v1649, 2147483648
    %v1651 = vsel %vm1568, %v1650, %v1649
    %v1652 = vsub.s32 4, %v1628
    %v1653 = vsel %vm1568, %v1652, %v1628
    %v1654 = vsel %vm1567, %v401, %v1651
    %v1655 = vsel %vm1567, 0, %v1653
    %v1656 = vcosq.f32.pop %v1654
    %v1657 = vsinq.f32.pop %v1654
    %vm1658 = vweird.f32 %v401
    %v1659 = vadd.s32 %v1655, 3
    %v1660 = vand.u32 %v1659, 3
    %vm1661 = vcmp.lt.s32.totalorder %v1660, 2
    %vm1662 = vcmp.eq.s32.totalorder %v1660, 0
    %v1663 = vxor.u32 %v1657, 2147483648
    %v1664 = vsel %vm1662, %v1656, %v1663
    %vm1665 = vcmp.eq.s32.totalorder %v1660, 2
    %v1666 = vxor.u32 %v1656, 2147483648
    %v1667 = vsel %vm1665, %v1666, %v1657
    %v1668 = vsel %vm1661, %v1664, %v1667
    %v1669 = vsel %vm1658, nan, %v1668
    %v1670 = vand.u32 2147483647, %v402
    %vm1671 = vcmp.le.f32.partialorder %v1670, 0.7853982
    %vm1672 = vcmp.lt.s32.totalorder %v402, 0
    %v1673 = vand.u32 %v402, 2139095040
    %v1674 = vshrl.u32 %v1673, 23
    %v1675 = vsub.s32 %v1674, 127
    %v1676 = vand.u32 2147483647, %v402
    %v1677 = vand.u32 %v1676, 8388607
    %v1678 = vor.u32 %v1677, 8388608
    %v1679 = vsub.s32 0, %v1678
    %v1680 = vadd.s32 %v1675, 1
    %vm1681 = vcmp.gt.s32.totalorder %v1680, 0
    %v1682 = vsel %vm1681, %v1680, 0
    %v1683 = vshrl.u32 %v1682, 5
    %v1684 = vand.u32 %v1682, 31
    %v1685 = vsub.s32 32, %v1684
    %v1686 = vshrl.u32 683565275, %v1685
    %v1687 = vshll.u32 683565275, %v1684
    %v1688 = vshrl.u32 2475754826, %v1685
    %v1689 = vor.u32 %v1687, %v1688
    %v1690 = vshll.u32 2475754826, %v1684
    %v1691 = vshrl.u32 2131351028, %v1685
    %v1692 = vor.u32 %v1690, %v1691
    %v1693 = vshll.u32 2131351028, %v1684
    %v1694 = vshrl.u32 2102212464, %v1685
    %v1695 = vor.u32 %v1693, %v1694
    %v1696 = vshll.u32 2102212464, %v1684
    %v1697 = vshrl.u32 920167782, %v1685
    %v1698 = vor.u32 %v1696, %v1697
    %v1699 = vshll.u32 920167782, %v1684
    %v1700 = vshrl.u32 1326507024, %v1685
    %v1701 = vor.u32 %v1699, %v1700
    %vm1702 = vcmp.lt.s32.totalorder %v1683, 1
    %vm1703 = vcmp.lt.s32.totalorder %v1683, 2
    %vm1704 = vcmp.lt.s32.totalorder %v1683, 3
    %vm1705 = vcmp.lt.s32.totalorder %v1683, 4
    %v1706 = vsel %vm1702, %v1686, %v1689
    %v1707 = vsel %vm1705, %v1695, 2102212464
    %v1708 = vsel %vm1704, %v1692, %v1707
    %v1709 = vsel %vm1703, %v1706, %v1708
    %v1710 = vsel %vm1702, %v1689, %v1692
    %v1711 = vsel %vm1705, %v1698, 920167782
    %v1712 = vsel %vm1704, %v1695, %v1711
    %v1713 = vsel %vm1703, %v1710, %v1712
    %v1714 = vsel %vm1702, %v1692, %v1695
    %v1715 = vsel %vm1705, %v1701, 1326507024
    %v1716 = vsel %vm1704, %v1698, %v1715
    %v1717 = vsel %vm1703, %v1714, %v1716
    %v1718 = vshll.u32 %v1678, 8
    %v1719 = vmul.u32.u64.compose %v1718, %v1717
    %v1720 = vextract.low.u32 %v1719
    %v1721 = vextract.high.u32 %v1719
    %v1722 = vmul.u32.u64.compose %v1718, %v1713
    %v1723 = vextract.low.u32 %v1722
    %v1724 = vextract.high.u32 %v1722
    %v1725 = vmul.u32 %v1718, %v1709
    %v1726 = vadd.s32 %v1721, %v1723
    %vm1727 = vc.u32 %v1721, %v1723
    %v1728 = vadd.s32 %v1724, 1
    %v1729 = vsel %vm1727, %v1728, %v1724
    %v1730 = vadd.s32 %v1725, %v1729
    %v1731 = vadd.s32 %v1730, 536870912
    %v1732 = vshrl.u32 %v1731, 30
    %v1733 = vshll.u32 %v1732, 30
    %v1734 = vsub.s32 %v1730, %v1733
    %vm1735 = vcmp.lt.s32.totalorder %v1734, 0
    %v1736 = vsub.s32 0, %v1734
    %v1737 = vsel %vm1735, %v1736, %v1734
    %v1738 = vclz %v1737
    %v1739 = vsub.s32 %v1738, 2
    %vm1740 = vcmp.gt.s32.totalorder 0, %v1739
    %v1741 = vsel %vm1740, 0, %v1739
    %v1742 = vsub.s32 32, %v1741
    %v1743 = vshll.u32 %v1734, %v1741
    %v1744 = vshrl.u32 %v1726, %v1742
    %v1745 = vor.u32 %v1743, %v1744
    %v1746 = vsub.s32 4294967266, %v1741
    %v1747 = vadd.s32 %v1746, 127
    %v1748 = vshll.u32 %v1747, 23
    %v1749 = vor.u32 4788187, %v1748
    %v1750 = vand.u32 2147483647, %v1749
    %v1752 = vcvt.s32.f32 %v1745
    %v1753 = vmul.f32 %v1752, %v1750
    %v1754 = vxor.u32 %v1753, 2147483648
    %v1755 = vsel %vm1672, %v1754, %v1753
    %v1756 = vsub.s32 4, %v1732
    %v1757 = vsel %vm1672, %v1756, %v1732
    %v1758 = vsel %vm1671, %v402, %v1755
    %v1759 = vsel %vm1671, 0, %v1757
    %v1760 = vcosq.f32.pop %v1758
    %v1761 = vsinq.f32.pop %v1758
    %vm1762 = vweird.f32 %v402
    %v1763 = vadd.s32 %v1759, 3
    %v1764 = vand.u32 %v1763, 3
    %vm1765 = vcmp.lt.s32.totalorder %v1764, 2
    %vm1766 = vcmp.eq.s32.totalorder %v1764, 0
    %v1767 = vxor.u32 %v1761, 2147483648
    %v1768 = vsel %vm1766, %v1760, %v1767
    %vm1769 = vcmp.eq.s32.totalorder %v1764, 2
    %v1770 = vxor.u32 %v1760, 2147483648
    %v1771 = vsel %vm1769, %v1770, %v1761
    %v1772 = vsel %vm1765, %v1768, %v1771
    %v1773 = vsel %vm1762, nan, %v1772
    %v1774 = vand.u32 2147483647, %v403
    %vm1775 = vcmp.le.f32.partialorder %v1774, 0.7853982
    %vm1776 = vcmp.lt.s32.totalorder %v403, 0
    %v1777 = vand.u32 %v403, 2139095040
    %v1778 = vshrl.u32 %v1777, 23
    %v1779 = vsub.s32 %v1778, 127
    %v1780 = vand.u32 2147483647, %v403
    %v1781 = vand.u32 %v1780, 8388607
    %v1782 = vor.u32 %v1781, 8388608
    %v1783 = vsub.s32 0, %v1782
    %v1784 = vadd.s32 %v1779, 1
    %vm1785 = vcmp.gt.s32.totalorder %v1784, 0
    %v1786 = vsel %vm1785, %v1784, 0
    %v1787 = vshrl.u32 %v1786, 5
    %v1788 = vand.u32 %v1786, 31
    %v1789 = vsub.s32 32, %v1788
    %v1790 = vshrl.u32 683565275, %v1789
    %v1791 = vshll.u32 683565275, %v1788
    %v1792 = vshrl.u32 2475754826, %v1789
    %v1793 = vor.u32 %v1791, %v1792
    %v1794 = vshll.u32 2475754826, %v1788
    %v1795 = vshrl.u32 2131351028, %v1789
    %v1796 = vor.u32 %v1794, %v1795
    %v1797 = vshll.u32 2131351028, %v1788
    %v1798 = vshrl.u32 2102212464, %v1789
    %v1799 = vor.u32 %v1797, %v1798
    %v1800 = vshll.u32 2102212464, %v1788
    %v1801 = vshrl.u32 920167782, %v1789
    %v1802 = vor.u32 %v1800, %v1801
    %v1803 = vshll.u32 920167782, %v1788
    %v1804 = vshrl.u32 1326507024, %v1789
    %v1805 = vor.u32 %v1803, %v1804
    %vm1806 = vcmp.lt.s32.totalorder %v1787, 1
    %vm1807 = vcmp.lt.s32.totalorder %v1787, 2
    %vm1808 = vcmp.lt.s32.totalorder %v1787, 3
    %vm1809 = vcmp.lt.s32.totalorder %v1787, 4
    %v1810 = vsel %vm1806, %v1790, %v1793
    %v1811 = vsel %vm1809, %v1799, 2102212464
    %v1812 = vsel %vm1808, %v1796, %v1811
    %v1813 = vsel %vm1807, %v1810, %v1812
    %v1814 = vsel %vm1806, %v1793, %v1796
    %v1815 = vsel %vm1809, %v1802, 920167782
    %v1816 = vsel %vm1808, %v1799, %v1815
    %v1817 = vsel %vm1807, %v1814, %v1816
    %v1818 = vsel %vm1806, %v1796, %v1799
    %v1819 = vsel %vm1809, %v1805, 1326507024
    %v1820 = vsel %vm1808, %v1802, %v1819
    %v1821 = vsel %vm1807, %v1818, %v1820
    %v1822 = vshll.u32 %v1782, 8
    %v1823 = vmul.u32.u64.compose %v1822, %v1821
    %v1824 = vextract.low.u32 %v1823
    %v1825 = vextract.high.u32 %v1823
    %v1826 = vmul.u32.u64.compose %v1822, %v1817
    %v1827 = vextract.low.u32 %v1826
    %v1828 = vextract.high.u32 %v1826
    %v1829 = vmul.u32 %v1822, %v1813
    %v1830 = vadd.s32 %v1825, %v1827
    %vm1831 = vc.u32 %v1825, %v1827
    %v1832 = vadd.s32 %v1828, 1
    %v1833 = vsel %vm1831, %v1832, %v1828
    %v1834 = vadd.s32 %v1829, %v1833
    %v1835 = vadd.s32 %v1834, 536870912
    %v1836 = vshrl.u32 %v1835, 30
    %v1837 = vshll.u32 %v1836, 30
    %v1838 = vsub.s32 %v1834, %v1837
    %vm1839 = vcmp.lt.s32.totalorder %v1838, 0
    %v1840 = vsub.s32 0, %v1838
    %v1841 = vsel %vm1839, %v1840, %v1838
    %v1842 = vclz %v1841
    %v1843 = vsub.s32 %v1842, 2
    %vm1844 = vcmp.gt.s32.totalorder 0, %v1843
    %v1845 = vsel %vm1844, 0, %v1843
    %v1846 = vsub.s32 32, %v1845
    %v1847 = vshll.u32 %v1838, %v1845
    %v1848 = vshrl.u32 %v1830, %v1846
    %v1849 = vor.u32 %v1847, %v1848
    %v1850 = vsub.s32 4294967266, %v1845
    %v1851 = vadd.s32 %v1850, 127
    %v1852 = vshll.u32 %v1851, 23
    %v1853 = vor.u32 4788187, %v1852
    %v1854 = vand.u32 2147483647, %v1853
    %v1856 = vcvt.s32.f32 %v1849
    %v1857 = vmul.f32 %v1856, %v1854
    %v1858 = vxor.u32 %v1857, 2147483648
    %v1859 = vsel %vm1776, %v1858, %v1857
    %v1860 = vsub.s32 4, %v1836
    %v1861 = vsel %vm1776, %v1860, %v1836
    %v1862 = vsel %vm1775, %v403, %v1859
    %v1863 = vsel %vm1775, 0, %v1861
    %v1864 = vcosq.f32.pop %v1862
    %v1865 = vsinq.f32.pop %v1862
    %vm1866 = vweird.f32 %v403
    %v1867 = vadd.s32 %v1863, 3
    %v1868 = vand.u32 %v1867, 3
    %vm1869 = vcmp.lt.s32.totalorder %v1868, 2
    %vm1870 = vcmp.eq.s32.totalorder %v1868, 0
    %v1871 = vxor.u32 %v1865, 2147483648
    %v1872 = vsel %vm1870, %v1864, %v1871
    %vm1873 = vcmp.eq.s32.totalorder %v1868, 2
    %v1874 = vxor.u32 %v1864, 2147483648
    %v1875 = vsel %vm1873, %v1874, %v1865
    %v1876 = vsel %vm1869, %v1872, %v1875
    %v1877 = vsel %vm1866, nan, %v1876
    %v1878 = vand.u32 2147483647, %v404
    %vm1879 = vcmp.le.f32.partialorder %v1878, 0.7853982
    %vm1880 = vcmp.lt.s32.totalorder %v404, 0
    %v1881 = vand.u32 %v404, 2139095040
    %v1882 = vshrl.u32 %v1881, 23
    %v1883 = vsub.s32 %v1882, 127
    %v1884 = vand.u32 2147483647, %v404
    %v1885 = vand.u32 %v1884, 8388607
    %v1886 = vor.u32 %v1885, 8388608
    %v1887 = vsub.s32 0, %v1886
    %v1888 = vadd.s32 %v1883, 1
    %vm1889 = vcmp.gt.s32.totalorder %v1888, 0
    %v1890 = vsel %vm1889, %v1888, 0
    %v1891 = vshrl.u32 %v1890, 5
    %v1892 = vand.u32 %v1890, 31
    %v1893 = vsub.s32 32, %v1892
    %v1894 = vshrl.u32 683565275, %v1893
    %v1895 = vshll.u32 683565275, %v1892
    %v1896 = vshrl.u32 2475754826, %v1893
    %v1897 = vor.u32 %v1895, %v1896
    %v1898 = vshll.u32 2475754826, %v1892
    %v1899 = vshrl.u32 2131351028, %v1893
    %v1900 = vor.u32 %v1898, %v1899
    %v1901 = vshll.u32 2131351028, %v1892
    %v1902 = vshrl.u32 2102212464, %v1893
    %v1903 = vor.u32 %v1901, %v1902
    %v1904 = vshll.u32 2102212464, %v1892
    %v1905 = vshrl.u32 920167782, %v1893
    %v1906 = vor.u32 %v1904, %v1905
    %v1907 = vshll.u32 920167782, %v1892
    %v1908 = vshrl.u32 1326507024, %v1893
    %v1909 = vor.u32 %v1907, %v1908
    %vm1910 = vcmp.lt.s32.totalorder %v1891, 1
    %vm1911 = vcmp.lt.s32.totalorder %v1891, 2
    %vm1912 = vcmp.lt.s32.totalorder %v1891, 3
    %vm1913 = vcmp.lt.s32.totalorder %v1891, 4
    %v1914 = vsel %vm1910, %v1894, %v1897
    %v1915 = vsel %vm1913, %v1903, 2102212464
    %v1916 = vsel %vm1912, %v1900, %v1915
    %v1917 = vsel %vm1911, %v1914, %v1916
    %v1918 = vsel %vm1910, %v1897, %v1900
    %v1919 = vsel %vm1913, %v1906, 920167782
    %v1920 = vsel %vm1912, %v1903, %v1919
    %v1921 = vsel %vm1911, %v1918, %v1920
    %v1922 = vsel %vm1910, %v1900, %v1903
    %v1923 = vsel %vm1913, %v1909, 1326507024
    %v1924 = vsel %vm1912, %v1906, %v1923
    %v1925 = vsel %vm1911, %v1922, %v1924
    %v1926 = vshll.u32 %v1886, 8
    %v1927 = vmul.u32.u64.compose %v1926, %v1925
    %v1928 = vextract.low.u32 %v1927
    %v1929 = vextract.high.u32 %v1927
    %v1930 = vmul.u32.u64.compose %v1926, %v1921
    %v1931 = vextract.low.u32 %v1930
    %v1932 = vextract.high.u32 %v1930
    %v1933 = vmul.u32 %v1926, %v1917
    %v1934 = vadd.s32 %v1929, %v1931
    %vm1935 = vc.u32 %v1929, %v1931
    %v1936 = vadd.s32 %v1932, 1
    %v1937 = vsel %vm1935, %v1936, %v1932
    %v1938 = vadd.s32 %v1933, %v1937
    %v1939 = vadd.s32 %v1938, 536870912
    %v1940 = vshrl.u32 %v1939, 30
    %v1941 = vshll.u32 %v1940, 30
    %v1942 = vsub.s32 %v1938, %v1941
    %vm1943 = vcmp.lt.s32.totalorder %v1942, 0
    %v1944 = vsub.s32 0, %v1942
    %v1945 = vsel %vm1943, %v1944, %v1942
    %v1946 = vclz %v1945
    %v1947 = vsub.s32 %v1946, 2
    %vm1948 = vcmp.gt.s32.totalorder 0, %v1947
    %v1949 = vsel %vm1948, 0, %v1947
    %v1950 = vsub.s32 32, %v1949
    %v1951 = vshll.u32 %v1942, %v1949
    %v1952 = vshrl.u32 %v1934, %v1950
    %v1953 = vor.u32 %v1951, %v1952
    %v1954 = vsub.s32 4294967266, %v1949
    %v1955 = vadd.s32 %v1954, 127
    %v1956 = vshll.u32 %v1955, 23
    %v1957 = vor.u32 4788187, %v1956
    %v1958 = vand.u32 2147483647, %v1957
    %v1960 = vcvt.s32.f32 %v1953
    %v1961 = vmul.f32 %v1960, %v1958
    %v1962 = vxor.u32 %v1961, 2147483648
    %v1963 = vsel %vm1880, %v1962, %v1961
    %v1964 = vsub.s32 4, %v1940
    %v1965 = vsel %vm1880, %v1964, %v1940
    %v1966 = vsel %vm1879, %v404, %v1963
    %v1967 = vsel %vm1879, 0, %v1965
    %v1968 = vcosq.f32.pop %v1966
    %v1969 = vsinq.f32.pop %v1966
    %vm1970 = vweird.f32 %v404
    %v1971 = vadd.s32 %v1967, 3
    %v1972 = vand.u32 %v1971, 3
    %vm1973 = vcmp.lt.s32.totalorder %v1972, 2
    %vm1974 = vcmp.eq.s32.totalorder %v1972, 0
    %v1975 = vxor.u32 %v1969, 2147483648
    %v1976 = vsel %vm1974, %v1968, %v1975
    %vm1977 = vcmp.eq.s32.totalorder %v1972, 2
    %v1978 = vxor.u32 %v1968, 2147483648
    %v1979 = vsel %vm1977, %v1978, %v1969
    %v1980 = vsel %vm1973, %v1976, %v1979
    %v1981 = vsel %vm1970, nan, %v1980
    %v1982 = vand.u32 2147483647, %v405
    %vm1983 = vcmp.le.f32.partialorder %v1982, 0.7853982
    %vm1984 = vcmp.lt.s32.totalorder %v405, 0
    %v1985 = vand.u32 %v405, 2139095040
    %v1986 = vshrl.u32 %v1985, 23
    %v1987 = vsub.s32 %v1986, 127
    %v1988 = vand.u32 2147483647, %v405
    %v1989 = vand.u32 %v1988, 8388607
    %v1990 = vor.u32 %v1989, 8388608
    %v1991 = vsub.s32 0, %v1990
    %v1992 = vadd.s32 %v1987, 1
    %vm1993 = vcmp.gt.s32.totalorder %v1992, 0
    %v1994 = vsel %vm1993, %v1992, 0
    %v1995 = vshrl.u32 %v1994, 5
    %v1996 = vand.u32 %v1994, 31
    %v1997 = vsub.s32 32, %v1996
    %v1998 = vshrl.u32 683565275, %v1997
    %v1999 = vshll.u32 683565275, %v1996
    %v2000 = vshrl.u32 2475754826, %v1997
    %v2001 = vor.u32 %v1999, %v2000
    %v2002 = vshll.u32 2475754826, %v1996
    %v2003 = vshrl.u32 2131351028, %v1997
    %v2004 = vor.u32 %v2002, %v2003
    %v2005 = vshll.u32 2131351028, %v1996
    %v2006 = vshrl.u32 2102212464, %v1997
    %v2007 = vor.u32 %v2005, %v2006
    %v2008 = vshll.u32 2102212464, %v1996
    %v2009 = vshrl.u32 920167782, %v1997
    %v2010 = vor.u32 %v2008, %v2009
    %v2011 = vshll.u32 920167782, %v1996
    %v2012 = vshrl.u32 1326507024, %v1997
    %v2013 = vor.u32 %v2011, %v2012
    %vm2014 = vcmp.lt.s32.totalorder %v1995, 1
    %vm2015 = vcmp.lt.s32.totalorder %v1995, 2
    %vm2016 = vcmp.lt.s32.totalorder %v1995, 3
    %vm2017 = vcmp.lt.s32.totalorder %v1995, 4
    %v2018 = vsel %vm2014, %v1998, %v2001
    %v2019 = vsel %vm2017, %v2007, 2102212464
    %v2020 = vsel %vm2016, %v2004, %v2019
    %v2021 = vsel %vm2015, %v2018, %v2020
    %v2022 = vsel %vm2014, %v2001, %v2004
    %v2023 = vsel %vm2017, %v2010, 920167782
    %v2024 = vsel %vm2016, %v2007, %v2023
    %v2025 = vsel %vm2015, %v2022, %v2024
    %v2026 = vsel %vm2014, %v2004, %v2007
    %v2027 = vsel %vm2017, %v2013, 1326507024
    %v2028 = vsel %vm2016, %v2010, %v2027
    %v2029 = vsel %vm2015, %v2026, %v2028
    %v2030 = vshll.u32 %v1990, 8
    %v2031 = vmul.u32.u64.compose %v2030, %v2029
    %v2032 = vextract.low.u32 %v2031
    %v2033 = vextract.high.u32 %v2031
    %v2034 = vmul.u32.u64.compose %v2030, %v2025
    %v2035 = vextract.low.u32 %v2034
    %v2036 = vextract.high.u32 %v2034
    %v2037 = vmul.u32 %v2030, %v2021
    %v2038 = vadd.s32 %v2033, %v2035
    %vm2039 = vc.u32 %v2033, %v2035
    %v2040 = vadd.s32 %v2036, 1
    %v2041 = vsel %vm2039, %v2040, %v2036
    %v2042 = vadd.s32 %v2037, %v2041
    %v2043 = vadd.s32 %v2042, 536870912
    %v2044 = vshrl.u32 %v2043, 30
    %v2045 = vshll.u32 %v2044, 30
    %v2046 = vsub.s32 %v2042, %v2045
    %vm2047 = vcmp.lt.s32.totalorder %v2046, 0
    %v2048 = vsub.s32 0, %v2046
    %v2049 = vsel %vm2047, %v2048, %v2046
    %v2050 = vclz %v2049
    %v2051 = vsub.s32 %v2050, 2
    %vm2052 = vcmp.gt.s32.totalorder 0, %v2051
    %v2053 = vsel %vm2052, 0, %v2051
    %v2054 = vsub.s32 32, %v2053
    %v2055 = vshll.u32 %v2046, %v2053
    %v2056 = vshrl.u32 %v2038, %v2054
    %v2057 = vor.u32 %v2055, %v2056
    %v2058 = vsub.s32 4294967266, %v2053
    %v2059 = vadd.s32 %v2058, 127
    %v2060 = vshll.u32 %v2059, 23
    %v2061 = vor.u32 4788187, %v2060
    %v2062 = vand.u32 2147483647, %v2061
    %v2064 = vcvt.s32.f32 %v2057
    %v2065 = vmul.f32 %v2064, %v2062
    %v2066 = vxor.u32 %v2065, 2147483648
    %v2067 = vsel %vm1984, %v2066, %v2065
    %v2068 = vsub.s32 4, %v2044
    %v2069 = vsel %vm1984, %v2068, %v2044
    %v2070 = vsel %vm1983, %v405, %v2067
    %v2071 = vsel %vm1983, 0, %v2069
    %v2072 = vcosq.f32.pop %v2070
    %v2073 = vsinq.f32.pop %v2070
    %vm2074 = vweird.f32 %v405
    %v2075 = vadd.s32 %v2071, 3
    %v2076 = vand.u32 %v2075, 3
    %vm2077 = vcmp.lt.s32.totalorder %v2076, 2
    %vm2078 = vcmp.eq.s32.totalorder %v2076, 0
    %v2079 = vxor.u32 %v2073, 2147483648
    %v2080 = vsel %vm2078, %v2072, %v2079
    %vm2081 = vcmp.eq.s32.totalorder %v2076, 2
    %v2082 = vxor.u32 %v2072, 2147483648
    %v2083 = vsel %vm2081, %v2082, %v2073
    %v2084 = vsel %vm2077, %v2080, %v2083
    %v2085 = vsel %vm2074, nan, %v2084
    %v2086 = vand.u32 2147483647, %v406
    %vm2087 = vcmp.le.f32.partialorder %v2086, 0.7853982
    %vm2088 = vcmp.lt.s32.totalorder %v406, 0
    %v2089 = vand.u32 %v406, 2139095040
    %v2090 = vshrl.u32 %v2089, 23
    %v2091 = vsub.s32 %v2090, 127
    %v2092 = vand.u32 2147483647, %v406
    %v2093 = vand.u32 %v2092, 8388607
    %v2094 = vor.u32 %v2093, 8388608
    %v2095 = vsub.s32 0, %v2094
    %v2096 = vadd.s32 %v2091, 1
    %vm2097 = vcmp.gt.s32.totalorder %v2096, 0
    %v2098 = vsel %vm2097, %v2096, 0
    %v2099 = vshrl.u32 %v2098, 5
    %v2100 = vand.u32 %v2098, 31
    %v2101 = vsub.s32 32, %v2100
    %v2102 = vshrl.u32 683565275, %v2101
    %v2103 = vshll.u32 683565275, %v2100
    %v2104 = vshrl.u32 2475754826, %v2101
    %v2105 = vor.u32 %v2103, %v2104
    %v2106 = vshll.u32 2475754826, %v2100
    %v2107 = vshrl.u32 2131351028, %v2101
    %v2108 = vor.u32 %v2106, %v2107
    %v2109 = vshll.u32 2131351028, %v2100
    %v2110 = vshrl.u32 2102212464, %v2101
    %v2111 = vor.u32 %v2109, %v2110
    %v2112 = vshll.u32 2102212464, %v2100
    %v2113 = vshrl.u32 920167782, %v2101
    %v2114 = vor.u32 %v2112, %v2113
    %v2115 = vshll.u32 920167782, %v2100
    %v2116 = vshrl.u32 1326507024, %v2101
    %v2117 = vor.u32 %v2115, %v2116
    %vm2118 = vcmp.lt.s32.totalorder %v2099, 1
    %vm2119 = vcmp.lt.s32.totalorder %v2099, 2
    %vm2120 = vcmp.lt.s32.totalorder %v2099, 3
    %vm2121 = vcmp.lt.s32.totalorder %v2099, 4
    %v2122 = vsel %vm2118, %v2102, %v2105
    %v2123 = vsel %vm2121, %v2111, 2102212464
    %v2124 = vsel %vm2120, %v2108, %v2123
    %v2125 = vsel %vm2119, %v2122, %v2124
    %v2126 = vsel %vm2118, %v2105, %v2108
    %v2127 = vsel %vm2121, %v2114, 920167782
    %v2128 = vsel %vm2120, %v2111, %v2127
    %v2129 = vsel %vm2119, %v2126, %v2128
    %v2130 = vsel %vm2118, %v2108, %v2111
    %v2131 = vsel %vm2121, %v2117, 1326507024
    %v2132 = vsel %vm2120, %v2114, %v2131
    %v2133 = vsel %vm2119, %v2130, %v2132
    %v2134 = vshll.u32 %v2094, 8
    %v2135 = vmul.u32.u64.compose %v2134, %v2133
    %v2136 = vextract.low.u32 %v2135
    %v2137 = vextract.high.u32 %v2135
    %v2138 = vmul.u32.u64.compose %v2134, %v2129
    %v2139 = vextract.low.u32 %v2138
    %v2140 = vextract.high.u32 %v2138
    %v2141 = vmul.u32 %v2134, %v2125
    %v2142 = vadd.s32 %v2137, %v2139
    %vm2143 = vc.u32 %v2137, %v2139
    %v2144 = vadd.s32 %v2140, 1
    %v2145 = vsel %vm2143, %v2144, %v2140
    %v2146 = vadd.s32 %v2141, %v2145
    %v2147 = vadd.s32 %v2146, 536870912
    %v2148 = vshrl.u32 %v2147, 30
    %v2149 = vshll.u32 %v2148, 30
    %v2150 = vsub.s32 %v2146, %v2149
    %vm2151 = vcmp.lt.s32.totalorder %v2150, 0
    %v2152 = vsub.s32 0, %v2150
    %v2153 = vsel %vm2151, %v2152, %v2150
    %v2154 = vclz %v2153
    %v2155 = vsub.s32 %v2154, 2
    %vm2156 = vcmp.gt.s32.totalorder 0, %v2155
    %v2157 = vsel %vm2156, 0, %v2155
    %v2158 = vsub.s32 32, %v2157
    %v2159 = vshll.u32 %v2150, %v2157
    %v2160 = vshrl.u32 %v2142, %v2158
    %v2161 = vor.u32 %v2159, %v2160
    %v2162 = vsub.s32 4294967266, %v2157
    %v2163 = vadd.s32 %v2162, 127
    %v2164 = vshll.u32 %v2163, 23
    %v2165 = vor.u32 4788187, %v2164
    %v2166 = vand.u32 2147483647, %v2165
    %v2168 = vcvt.s32.f32 %v2161
    %v2169 = vmul.f32 %v2168, %v2166
    %v2170 = vxor.u32 %v2169, 2147483648
    %v2171 = vsel %vm2088, %v2170, %v2169
    %v2172 = vsub.s32 4, %v2148
    %v2173 = vsel %vm2088, %v2172, %v2148
    %v2174 = vsel %vm2087, %v406, %v2171
    %v2175 = vsel %vm2087, 0, %v2173
    %v2176 = vcosq.f32.pop %v2174
    %v2177 = vsinq.f32.pop %v2174
    %vm2178 = vweird.f32 %v406
    %v2179 = vadd.s32 %v2175, 3
    %v2180 = vand.u32 %v2179, 3
    %vm2181 = vcmp.lt.s32.totalorder %v2180, 2
    %vm2182 = vcmp.eq.s32.totalorder %v2180, 0
    %v2183 = vxor.u32 %v2177, 2147483648
    %v2184 = vsel %vm2182, %v2176, %v2183
    %vm2185 = vcmp.eq.s32.totalorder %v2180, 2
    %v2186 = vxor.u32 %v2176, 2147483648
    %v2187 = vsel %vm2185, %v2186, %v2177
    %v2188 = vsel %vm2181, %v2184, %v2187
    %v2189 = vsel %vm2178, nan, %v2188
    %v2190 = vand.u32 2147483647, %v407
    %vm2191 = vcmp.le.f32.partialorder %v2190, 0.7853982
    %vm2192 = vcmp.lt.s32.totalorder %v407, 0
    %v2193 = vand.u32 %v407, 2139095040
    %v2194 = vshrl.u32 %v2193, 23
    %v2195 = vsub.s32 %v2194, 127
    %v2196 = vand.u32 2147483647, %v407
    %v2197 = vand.u32 %v2196, 8388607
    %v2198 = vor.u32 %v2197, 8388608
    %v2199 = vsub.s32 0, %v2198
    %v2200 = vadd.s32 %v2195, 1
    %vm2201 = vcmp.gt.s32.totalorder %v2200, 0
    %v2202 = vsel %vm2201, %v2200, 0
    %v2203 = vshrl.u32 %v2202, 5
    %v2204 = vand.u32 %v2202, 31
    %v2205 = vsub.s32 32, %v2204
    %v2206 = vshrl.u32 683565275, %v2205
    %v2207 = vshll.u32 683565275, %v2204
    %v2208 = vshrl.u32 2475754826, %v2205
    %v2209 = vor.u32 %v2207, %v2208
    %v2210 = vshll.u32 2475754826, %v2204
    %v2211 = vshrl.u32 2131351028, %v2205
    %v2212 = vor.u32 %v2210, %v2211
    %v2213 = vshll.u32 2131351028, %v2204
    %v2214 = vshrl.u32 2102212464, %v2205
    %v2215 = vor.u32 %v2213, %v2214
    %v2216 = vshll.u32 2102212464, %v2204
    %v2217 = vshrl.u32 920167782, %v2205
    %v2218 = vor.u32 %v2216, %v2217
    %v2219 = vshll.u32 920167782, %v2204
    %v2220 = vshrl.u32 1326507024, %v2205
    %v2221 = vor.u32 %v2219, %v2220
    %vm2222 = vcmp.lt.s32.totalorder %v2203, 1
    %vm2223 = vcmp.lt.s32.totalorder %v2203, 2
    %vm2224 = vcmp.lt.s32.totalorder %v2203, 3
    %vm2225 = vcmp.lt.s32.totalorder %v2203, 4
    %v2226 = vsel %vm2222, %v2206, %v2209
    %v2227 = vsel %vm2225, %v2215, 2102212464
    %v2228 = vsel %vm2224, %v2212, %v2227
    %v2229 = vsel %vm2223, %v2226, %v2228
    %v2230 = vsel %vm2222, %v2209, %v2212
    %v2231 = vsel %vm2225, %v2218, 920167782
    %v2232 = vsel %vm2224, %v2215, %v2231
    %v2233 = vsel %vm2223, %v2230, %v2232
    %v2234 = vsel %vm2222, %v2212, %v2215
    %v2235 = vsel %vm2225, %v2221, 1326507024
    %v2236 = vsel %vm2224, %v2218, %v2235
    %v2237 = vsel %vm2223, %v2234, %v2236
    %v2238 = vshll.u32 %v2198, 8
    %v2239 = vmul.u32.u64.compose %v2238, %v2237
    %v2240 = vextract.low.u32 %v2239
    %v2241 = vextract.high.u32 %v2239
    %v2242 = vmul.u32.u64.compose %v2238, %v2233
    %v2243 = vextract.low.u32 %v2242
    %v2244 = vextract.high.u32 %v2242
    %v2245 = vmul.u32 %v2238, %v2229
    %v2246 = vadd.s32 %v2241, %v2243
    %vm2247 = vc.u32 %v2241, %v2243
    %v2248 = vadd.s32 %v2244, 1
    %v2249 = vsel %vm2247, %v2248, %v2244
    %v2250 = vadd.s32 %v2245, %v2249
    %v2251 = vadd.s32 %v2250, 536870912
    %v2252 = vshrl.u32 %v2251, 30
    %v2253 = vshll.u32 %v2252, 30
    %v2254 = vsub.s32 %v2250, %v2253
    %vm2255 = vcmp.lt.s32.totalorder %v2254, 0
    %v2256 = vsub.s32 0, %v2254
    %v2257 = vsel %vm2255, %v2256, %v2254
    %v2258 = vclz %v2257
    %v2259 = vsub.s32 %v2258, 2
    %vm2260 = vcmp.gt.s32.totalorder 0, %v2259
    %v2261 = vsel %vm2260, 0, %v2259
    %v2262 = vsub.s32 32, %v2261
    %v2263 = vshll.u32 %v2254, %v2261
    %v2264 = vshrl.u32 %v2246, %v2262
    %v2265 = vor.u32 %v2263, %v2264
    %v2266 = vsub.s32 4294967266, %v2261
    %v2267 = vadd.s32 %v2266, 127
    %v2268 = vshll.u32 %v2267, 23
    %v2269 = vor.u32 4788187, %v2268
    %v2270 = vand.u32 2147483647, %v2269
    %v2272 = vcvt.s32.f32 %v2265
    %v2273 = vmul.f32 %v2272, %v2270
    %v2274 = vxor.u32 %v2273, 2147483648
    %v2275 = vsel %vm2192, %v2274, %v2273
    %v2276 = vsub.s32 4, %v2252
    %v2277 = vsel %vm2192, %v2276, %v2252
    %v2278 = vsel %vm2191, %v407, %v2275
    %v2279 = vsel %vm2191, 0, %v2277
    %v2280 = vcosq.f32.pop %v2278
    %v2281 = vsinq.f32.pop %v2278
    %vm2282 = vweird.f32 %v407
    %v2283 = vadd.s32 %v2279, 3
    %v2284 = vand.u32 %v2283, 3
    %vm2285 = vcmp.lt.s32.totalorder %v2284, 2
    %vm2286 = vcmp.eq.s32.totalorder %v2284, 0
    %v2287 = vxor.u32 %v2281, 2147483648
    %v2288 = vsel %vm2286, %v2280, %v2287
    %vm2289 = vcmp.eq.s32.totalorder %v2284, 2
    %v2290 = vxor.u32 %v2280, 2147483648
    %v2291 = vsel %vm2289, %v2290, %v2281
    %v2292 = vsel %vm2285, %v2288, %v2291
    %v2293 = vsel %vm2282, nan, %v2292
    %v2294 = vand.u32 2147483647, %v408
    %vm2295 = vcmp.le.f32.partialorder %v2294, 0.7853982
    %vm2296 = vcmp.lt.s32.totalorder %v408, 0
    %v2297 = vand.u32 %v408, 2139095040
    %v2298 = vshrl.u32 %v2297, 23
    %v2299 = vsub.s32 %v2298, 127
    %v2300 = vand.u32 2147483647, %v408
    %v2301 = vand.u32 %v2300, 8388607
    %v2302 = vor.u32 %v2301, 8388608
    %v2303 = vsub.s32 0, %v2302
    %v2304 = vadd.s32 %v2299, 1
    %vm2305 = vcmp.gt.s32.totalorder %v2304, 0
    %v2306 = vsel %vm2305, %v2304, 0
    %v2307 = vshrl.u32 %v2306, 5
    %v2308 = vand.u32 %v2306, 31
    %v2309 = vsub.s32 32, %v2308
    %v2310 = vshrl.u32 683565275, %v2309
    %v2311 = vshll.u32 683565275, %v2308
    %v2312 = vshrl.u32 2475754826, %v2309
    %v2313 = vor.u32 %v2311, %v2312
    %v2314 = vshll.u32 2475754826, %v2308
    %v2315 = vshrl.u32 2131351028, %v2309
    %v2316 = vor.u32 %v2314, %v2315
    %v2317 = vshll.u32 2131351028, %v2308
    %v2318 = vshrl.u32 2102212464, %v2309
    %v2319 = vor.u32 %v2317, %v2318
    %v2320 = vshll.u32 2102212464, %v2308
    %v2321 = vshrl.u32 920167782, %v2309
    %v2322 = vor.u32 %v2320, %v2321
    %v2323 = vshll.u32 920167782, %v2308
    %v2324 = vshrl.u32 1326507024, %v2309
    %v2325 = vor.u32 %v2323, %v2324
    %vm2326 = vcmp.lt.s32.totalorder %v2307, 1
    %vm2327 = vcmp.lt.s32.totalorder %v2307, 2
    %vm2328 = vcmp.lt.s32.totalorder %v2307, 3
    %vm2329 = vcmp.lt.s32.totalorder %v2307, 4
    %v2330 = vsel %vm2326, %v2310, %v2313
    %v2331 = vsel %vm2329, %v2319, 2102212464
    %v2332 = vsel %vm2328, %v2316, %v2331
    %v2333 = vsel %vm2327, %v2330, %v2332
    %v2334 = vsel %vm2326, %v2313, %v2316
    %v2335 = vsel %vm2329, %v2322, 920167782
    %v2336 = vsel %vm2328, %v2319, %v2335
    %v2337 = vsel %vm2327, %v2334, %v2336
    %v2338 = vsel %vm2326, %v2316, %v2319
    %v2339 = vsel %vm2329, %v2325, 1326507024
    %v2340 = vsel %vm2328, %v2322, %v2339
    %v2341 = vsel %vm2327, %v2338, %v2340
    %v2342 = vshll.u32 %v2302, 8
    %v2343 = vmul.u32.u64.compose %v2342, %v2341
    %v2344 = vextract.low.u32 %v2343
    %v2345 = vextract.high.u32 %v2343
    %v2346 = vmul.u32.u64.compose %v2342, %v2337
    %v2347 = vextract.low.u32 %v2346
    %v2348 = vextract.high.u32 %v2346
    %v2349 = vmul.u32 %v2342, %v2333
    %v2350 = vadd.s32 %v2345, %v2347
    %vm2351 = vc.u32 %v2345, %v2347
    %v2352 = vadd.s32 %v2348, 1
    %v2353 = vsel %vm2351, %v2352, %v2348
    %v2354 = vadd.s32 %v2349, %v2353
    %v2355 = vadd.s32 %v2354, 536870912
    %v2356 = vshrl.u32 %v2355, 30
    %v2357 = vshll.u32 %v2356, 30
    %v2358 = vsub.s32 %v2354, %v2357
    %vm2359 = vcmp.lt.s32.totalorder %v2358, 0
    %v2360 = vsub.s32 0, %v2358
    %v2361 = vsel %vm2359, %v2360, %v2358
    %v2362 = vclz %v2361
    %v2363 = vsub.s32 %v2362, 2
    %vm2364 = vcmp.gt.s32.totalorder 0, %v2363
    %v2365 = vsel %vm2364, 0, %v2363
    %v2366 = vsub.s32 32, %v2365
    %v2367 = vshll.u32 %v2358, %v2365
    %v2368 = vshrl.u32 %v2350, %v2366
    %v2369 = vor.u32 %v2367, %v2368
    %v2370 = vsub.s32 4294967266, %v2365
    %v2371 = vadd.s32 %v2370, 127
    %v2372 = vshll.u32 %v2371, 23
    %v2373 = vor.u32 4788187, %v2372
    %v2374 = vand.u32 2147483647, %v2373
    %v2376 = vcvt.s32.f32 %v2369
    %v2377 = vmul.f32 %v2376, %v2374
    %v2378 = vxor.u32 %v2377, 2147483648
    %v2379 = vsel %vm2296, %v2378, %v2377
    %v2380 = vsub.s32 4, %v2356
    %v2381 = vsel %vm2296, %v2380, %v2356
    %v2382 = vsel %vm2295, %v408, %v2379
    %v2383 = vsel %vm2295, 0, %v2381
    %v2384 = vcosq.f32.pop %v2382
    %v2385 = vsinq.f32.pop %v2382
    %vm2386 = vweird.f32 %v408
    %v2387 = vadd.s32 %v2383, 3
    %v2388 = vand.u32 %v2387, 3
    %vm2389 = vcmp.lt.s32.totalorder %v2388, 2
    %vm2390 = vcmp.eq.s32.totalorder %v2388, 0
    %v2391 = vxor.u32 %v2385, 2147483648
    %v2392 = vsel %vm2390, %v2384, %v2391
    %vm2393 = vcmp.eq.s32.totalorder %v2388, 2
    %v2394 = vxor.u32 %v2384, 2147483648
    %v2395 = vsel %vm2393, %v2394, %v2385
    %v2396 = vsel %vm2389, %v2392, %v2395
    %v2397 = vsel %vm2386, nan, %v2396
    %v2398 = vand.u32 2147483647, %v409
    %vm2399 = vcmp.le.f32.partialorder %v2398, 0.7853982
    %vm2400 = vcmp.lt.s32.totalorder %v409, 0
    %v2401 = vand.u32 %v409, 2139095040
    %v2402 = vshrl.u32 %v2401, 23
    %v2403 = vsub.s32 %v2402, 127
    %v2404 = vand.u32 2147483647, %v409
    %v2405 = vand.u32 %v2404, 8388607
    %v2406 = vor.u32 %v2405, 8388608
    %v2407 = vsub.s32 0, %v2406
    %v2408 = vadd.s32 %v2403, 1
    %vm2409 = vcmp.gt.s32.totalorder %v2408, 0
    %v2410 = vsel %vm2409, %v2408, 0
    %v2411 = vshrl.u32 %v2410, 5
    %v2412 = vand.u32 %v2410, 31
    %v2413 = vsub.s32 32, %v2412
    %v2414 = vshrl.u32 683565275, %v2413
    %v2415 = vshll.u32 683565275, %v2412
    %v2416 = vshrl.u32 2475754826, %v2413
    %v2417 = vor.u32 %v2415, %v2416
    %v2418 = vshll.u32 2475754826, %v2412
    %v2419 = vshrl.u32 2131351028, %v2413
    %v2420 = vor.u32 %v2418, %v2419
    %v2421 = vshll.u32 2131351028, %v2412
    %v2422 = vshrl.u32 2102212464, %v2413
    %v2423 = vor.u32 %v2421, %v2422
    %v2424 = vshll.u32 2102212464, %v2412
    %v2425 = vshrl.u32 920167782, %v2413
    %v2426 = vor.u32 %v2424, %v2425
    %v2427 = vshll.u32 920167782, %v2412
    %v2428 = vshrl.u32 1326507024, %v2413
    %v2429 = vor.u32 %v2427, %v2428
    %vm2430 = vcmp.lt.s32.totalorder %v2411, 1
    %vm2431 = vcmp.lt.s32.totalorder %v2411, 2
    %vm2432 = vcmp.lt.s32.totalorder %v2411, 3
    %vm2433 = vcmp.lt.s32.totalorder %v2411, 4
    %v2434 = vsel %vm2430, %v2414, %v2417
    %v2435 = vsel %vm2433, %v2423, 2102212464
    %v2436 = vsel %vm2432, %v2420, %v2435
    %v2437 = vsel %vm2431, %v2434, %v2436
    %v2438 = vsel %vm2430, %v2417, %v2420
    %v2439 = vsel %vm2433, %v2426, 920167782
    %v2440 = vsel %vm2432, %v2423, %v2439
    %v2441 = vsel %vm2431, %v2438, %v2440
    %v2442 = vsel %vm2430, %v2420, %v2423
    %v2443 = vsel %vm2433, %v2429, 1326507024
    %v2444 = vsel %vm2432, %v2426, %v2443
    %v2445 = vsel %vm2431, %v2442, %v2444
    %v2446 = vshll.u32 %v2406, 8
    %v2447 = vmul.u32.u64.compose %v2446, %v2445
    %v2448 = vextract.low.u32 %v2447
    %v2449 = vextract.high.u32 %v2447
    %v2450 = vmul.u32.u64.compose %v2446, %v2441
    %v2451 = vextract.low.u32 %v2450
    %v2452 = vextract.high.u32 %v2450
    %v2453 = vmul.u32 %v2446, %v2437
    %v2454 = vadd.s32 %v2449, %v2451
    %vm2455 = vc.u32 %v2449, %v2451
    %v2456 = vadd.s32 %v2452, 1
    %v2457 = vsel %vm2455, %v2456, %v2452
    %v2458 = vadd.s32 %v2453, %v2457
    %v2459 = vadd.s32 %v2458, 536870912
    %v2460 = vshrl.u32 %v2459, 30
    %v2461 = vshll.u32 %v2460, 30
    %v2462 = vsub.s32 %v2458, %v2461
    %vm2463 = vcmp.lt.s32.totalorder %v2462, 0
    %v2464 = vsub.s32 0, %v2462
    %v2465 = vsel %vm2463, %v2464, %v2462
    %v2466 = vclz %v2465
    %v2467 = vsub.s32 %v2466, 2
    %vm2468 = vcmp.gt.s32.totalorder 0, %v2467
    %v2469 = vsel %vm2468, 0, %v2467
    %v2470 = vsub.s32 32, %v2469
    %v2471 = vshll.u32 %v2462, %v2469
    %v2472 = vshrl.u32 %v2454, %v2470
    %v2473 = vor.u32 %v2471, %v2472
    %v2474 = vsub.s32 4294967266, %v2469
    %v2475 = vadd.s32 %v2474, 127
    %v2476 = vshll.u32 %v2475, 23
    %v2477 = vor.u32 4788187, %v2476
    %v2478 = vand.u32 2147483647, %v2477
    %v2480 = vcvt.s32.f32 %v2473
    %v2481 = vmul.f32 %v2480, %v2478
    %v2482 = vxor.u32 %v2481, 2147483648
    %v2483 = vsel %vm2400, %v2482, %v2481
    %v2484 = vsub.s32 4, %v2460
    %v2485 = vsel %vm2400, %v2484, %v2460
    %v2486 = vsel %vm2399, %v409, %v2483
    %v2487 = vsel %vm2399, 0, %v2485
    %v2488 = vcosq.f32.pop %v2486
    %v2489 = vsinq.f32.pop %v2486
    %vm2490 = vweird.f32 %v409
    %v2491 = vadd.s32 %v2487, 3
    %v2492 = vand.u32 %v2491, 3
    %vm2493 = vcmp.lt.s32.totalorder %v2492, 2
    %vm2494 = vcmp.eq.s32.totalorder %v2492, 0
    %v2495 = vxor.u32 %v2489, 2147483648
    %v2496 = vsel %vm2494, %v2488, %v2495
    %vm2497 = vcmp.eq.s32.totalorder %v2492, 2
    %v2498 = vxor.u32 %v2488, 2147483648
    %v2499 = vsel %vm2497, %v2498, %v2489
    %v2500 = vsel %vm2493, %v2496, %v2499
    %v2501 = vsel %vm2490, nan, %v2500
    %v2502 = vand.u32 2147483647, %v410
    %vm2503 = vcmp.le.f32.partialorder %v2502, 0.7853982
    %vm2504 = vcmp.lt.s32.totalorder %v410, 0
    %v2505 = vand.u32 %v410, 2139095040
    %v2506 = vshrl.u32 %v2505, 23
    %v2507 = vsub.s32 %v2506, 127
    %v2508 = vand.u32 2147483647, %v410
    %v2509 = vand.u32 %v2508, 8388607
    %v2510 = vor.u32 %v2509, 8388608
    %v2511 = vsub.s32 0, %v2510
    %v2512 = vadd.s32 %v2507, 1
    %vm2513 = vcmp.gt.s32.totalorder %v2512, 0
    %v2514 = vsel %vm2513, %v2512, 0
    %v2515 = vshrl.u32 %v2514, 5
    %v2516 = vand.u32 %v2514, 31
    %v2517 = vsub.s32 32, %v2516
    %v2518 = vshrl.u32 683565275, %v2517
    %v2519 = vshll.u32 683565275, %v2516
    %v2520 = vshrl.u32 2475754826, %v2517
    %v2521 = vor.u32 %v2519, %v2520
    %v2522 = vshll.u32 2475754826, %v2516
    %v2523 = vshrl.u32 2131351028, %v2517
    %v2524 = vor.u32 %v2522, %v2523
    %v2525 = vshll.u32 2131351028, %v2516
    %v2526 = vshrl.u32 2102212464, %v2517
    %v2527 = vor.u32 %v2525, %v2526
    %v2528 = vshll.u32 2102212464, %v2516
    %v2529 = vshrl.u32 920167782, %v2517
    %v2530 = vor.u32 %v2528, %v2529
    %v2531 = vshll.u32 920167782, %v2516
    %v2532 = vshrl.u32 1326507024, %v2517
    %v2533 = vor.u32 %v2531, %v2532
    %vm2534 = vcmp.lt.s32.totalorder %v2515, 1
    %vm2535 = vcmp.lt.s32.totalorder %v2515, 2
    %vm2536 = vcmp.lt.s32.totalorder %v2515, 3
    %vm2537 = vcmp.lt.s32.totalorder %v2515, 4
    %v2538 = vsel %vm2534, %v2518, %v2521
    %v2539 = vsel %vm2537, %v2527, 2102212464
    %v2540 = vsel %vm2536, %v2524, %v2539
    %v2541 = vsel %vm2535, %v2538, %v2540
    %v2542 = vsel %vm2534, %v2521, %v2524
    %v2543 = vsel %vm2537, %v2530, 920167782
    %v2544 = vsel %vm2536, %v2527, %v2543
    %v2545 = vsel %vm2535, %v2542, %v2544
    %v2546 = vsel %vm2534, %v2524, %v2527
    %v2547 = vsel %vm2537, %v2533, 1326507024
    %v2548 = vsel %vm2536, %v2530, %v2547
    %v2549 = vsel %vm2535, %v2546, %v2548
    %v2550 = vshll.u32 %v2510, 8
    %v2551 = vmul.u32.u64.compose %v2550, %v2549
    %v2552 = vextract.low.u32 %v2551
    %v2553 = vextract.high.u32 %v2551
    %v2554 = vmul.u32.u64.compose %v2550, %v2545
    %v2555 = vextract.low.u32 %v2554
    %v2556 = vextract.high.u32 %v2554
    %v2557 = vmul.u32 %v2550, %v2541
    %v2558 = vadd.s32 %v2553, %v2555
    %vm2559 = vc.u32 %v2553, %v2555
    %v2560 = vadd.s32 %v2556, 1
    %v2561 = vsel %vm2559, %v2560, %v2556
    %v2562 = vadd.s32 %v2557, %v2561
    %v2563 = vadd.s32 %v2562, 536870912
    %v2564 = vshrl.u32 %v2563, 30
    %v2565 = vshll.u32 %v2564, 30
    %v2566 = vsub.s32 %v2562, %v2565
    %vm2567 = vcmp.lt.s32.totalorder %v2566, 0
    %v2568 = vsub.s32 0, %v2566
    %v2569 = vsel %vm2567, %v2568, %v2566
    %v2570 = vclz %v2569
    %v2571 = vsub.s32 %v2570, 2
    %vm2572 = vcmp.gt.s32.totalorder 0, %v2571
    %v2573 = vsel %vm2572, 0, %v2571
    %v2574 = vsub.s32 32, %v2573
    %v2575 = vshll.u32 %v2566, %v2573
    %v2576 = vshrl.u32 %v2558, %v2574
    %v2577 = vor.u32 %v2575, %v2576
    %v2578 = vsub.s32 4294967266, %v2573
    %v2579 = vadd.s32 %v2578, 127
    %v2580 = vshll.u32 %v2579, 23
    %v2581 = vor.u32 4788187, %v2580
    %v2582 = vand.u32 2147483647, %v2581
    %v2584 = vcvt.s32.f32 %v2577
    %v2585 = vmul.f32 %v2584, %v2582
    %v2586 = vxor.u32 %v2585, 2147483648
    %v2587 = vsel %vm2504, %v2586, %v2585
    %v2588 = vsub.s32 4, %v2564
    %v2589 = vsel %vm2504, %v2588, %v2564
    %v2590 = vsel %vm2503, %v410, %v2587
    %v2591 = vsel %vm2503, 0, %v2589
    %v2592 = vcosq.f32.pop %v2590
    %v2593 = vsinq.f32.pop %v2590
    %vm2594 = vweird.f32 %v410
    %v2595 = vadd.s32 %v2591, 3
    %v2596 = vand.u32 %v2595, 3
    %vm2597 = vcmp.lt.s32.totalorder %v2596, 2
    %vm2598 = vcmp.eq.s32.totalorder %v2596, 0
    %v2599 = vxor.u32 %v2593, 2147483648
    %v2600 = vsel %vm2598, %v2592, %v2599
    %vm2601 = vcmp.eq.s32.totalorder %v2596, 2
    %v2602 = vxor.u32 %v2592, 2147483648
    %v2603 = vsel %vm2601, %v2602, %v2593
    %v2604 = vsel %vm2597, %v2600, %v2603
    %v2605 = vsel %vm2594, nan, %v2604
    %v2606 = vand.u32 2147483647, %v411
    %vm2607 = vcmp.le.f32.partialorder %v2606, 0.7853982
    %vm2608 = vcmp.lt.s32.totalorder %v411, 0
    %v2609 = vand.u32 %v411, 2139095040
    %v2610 = vshrl.u32 %v2609, 23
    %v2611 = vsub.s32 %v2610, 127
    %v2612 = vand.u32 2147483647, %v411
    %v2613 = vand.u32 %v2612, 8388607
    %v2614 = vor.u32 %v2613, 8388608
    %v2615 = vsub.s32 0, %v2614
    %v2616 = vadd.s32 %v2611, 1
    %vm2617 = vcmp.gt.s32.totalorder %v2616, 0
    %v2618 = vsel %vm2617, %v2616, 0
    %v2619 = vshrl.u32 %v2618, 5
    %v2620 = vand.u32 %v2618, 31
    %v2621 = vsub.s32 32, %v2620
    %v2622 = vshrl.u32 683565275, %v2621
    %v2623 = vshll.u32 683565275, %v2620
    %v2624 = vshrl.u32 2475754826, %v2621
    %v2625 = vor.u32 %v2623, %v2624
    %v2626 = vshll.u32 2475754826, %v2620
    %v2627 = vshrl.u32 2131351028, %v2621
    %v2628 = vor.u32 %v2626, %v2627
    %v2629 = vshll.u32 2131351028, %v2620
    %v2630 = vshrl.u32 2102212464, %v2621
    %v2631 = vor.u32 %v2629, %v2630
    %v2632 = vshll.u32 2102212464, %v2620
    %v2633 = vshrl.u32 920167782, %v2621
    %v2634 = vor.u32 %v2632, %v2633
    %v2635 = vshll.u32 920167782, %v2620
    %v2636 = vshrl.u32 1326507024, %v2621
    %v2637 = vor.u32 %v2635, %v2636
    %vm2638 = vcmp.lt.s32.totalorder %v2619, 1
    %vm2639 = vcmp.lt.s32.totalorder %v2619, 2
    %vm2640 = vcmp.lt.s32.totalorder %v2619, 3
    %vm2641 = vcmp.lt.s32.totalorder %v2619, 4
    %v2642 = vsel %vm2638, %v2622, %v2625
    %v2643 = vsel %vm2641, %v2631, 2102212464
    %v2644 = vsel %vm2640, %v2628, %v2643
    %v2645 = vsel %vm2639, %v2642, %v2644
    %v2646 = vsel %vm2638, %v2625, %v2628
    %v2647 = vsel %vm2641, %v2634, 920167782
    %v2648 = vsel %vm2640, %v2631, %v2647
    %v2649 = vsel %vm2639, %v2646, %v2648
    %v2650 = vsel %vm2638, %v2628, %v2631
    %v2651 = vsel %vm2641, %v2637, 1326507024
    %v2652 = vsel %vm2640, %v2634, %v2651
    %v2653 = vsel %vm2639, %v2650, %v2652
    %v2654 = vshll.u32 %v2614, 8
    %v2655 = vmul.u32.u64.compose %v2654, %v2653
    %v2656 = vextract.low.u32 %v2655
    %v2657 = vextract.high.u32 %v2655
    %v2658 = vmul.u32.u64.compose %v2654, %v2649
    %v2659 = vextract.low.u32 %v2658
    %v2660 = vextract.high.u32 %v2658
    %v2661 = vmul.u32 %v2654, %v2645
    %v2662 = vadd.s32 %v2657, %v2659
    %vm2663 = vc.u32 %v2657, %v2659
    %v2664 = vadd.s32 %v2660, 1
    %v2665 = vsel %vm2663, %v2664, %v2660
    %v2666 = vadd.s32 %v2661, %v2665
    %v2667 = vadd.s32 %v2666, 536870912
    %v2668 = vshrl.u32 %v2667, 30
    %v2669 = vshll.u32 %v2668, 30
    %v2670 = vsub.s32 %v2666, %v2669
    %vm2671 = vcmp.lt.s32.totalorder %v2670, 0
    %v2672 = vsub.s32 0, %v2670
    %v2673 = vsel %vm2671, %v2672, %v2670
    %v2674 = vclz %v2673
    %v2675 = vsub.s32 %v2674, 2
    %vm2676 = vcmp.gt.s32.totalorder 0, %v2675
    %v2677 = vsel %vm2676, 0, %v2675
    %v2678 = vsub.s32 32, %v2677
    %v2679 = vshll.u32 %v2670, %v2677
    %v2680 = vshrl.u32 %v2662, %v2678
    %v2681 = vor.u32 %v2679, %v2680
    %v2682 = vsub.s32 4294967266, %v2677
    %v2683 = vadd.s32 %v2682, 127
    %v2684 = vshll.u32 %v2683, 23
    %v2685 = vor.u32 4788187, %v2684
    %v2686 = vand.u32 2147483647, %v2685
    %v2688 = vcvt.s32.f32 %v2681
    %v2689 = vmul.f32 %v2688, %v2686
    %v2690 = vxor.u32 %v2689, 2147483648
    %v2691 = vsel %vm2608, %v2690, %v2689
    %v2692 = vsub.s32 4, %v2668
    %v2693 = vsel %vm2608, %v2692, %v2668
    %v2694 = vsel %vm2607, %v411, %v2691
    %v2695 = vsel %vm2607, 0, %v2693
    %v2696 = vcosq.f32.pop %v2694
    %v2697 = vsinq.f32.pop %v2694
    %vm2698 = vweird.f32 %v411
    %v2699 = vadd.s32 %v2695, 3
    %v2700 = vand.u32 %v2699, 3
    %vm2701 = vcmp.lt.s32.totalorder %v2700, 2
    %vm2702 = vcmp.eq.s32.totalorder %v2700, 0
    %v2703 = vxor.u32 %v2697, 2147483648
    %v2704 = vsel %vm2702, %v2696, %v2703
    %vm2705 = vcmp.eq.s32.totalorder %v2700, 2
    %v2706 = vxor.u32 %v2696, 2147483648
    %v2707 = vsel %vm2705, %v2706, %v2697
    %v2708 = vsel %vm2701, %v2704, %v2707
    %v2709 = vsel %vm2698, nan, %v2708
    %v2710 = vand.u32 2147483647, %v412
    %vm2711 = vcmp.le.f32.partialorder %v2710, 0.7853982
    %vm2712 = vcmp.lt.s32.totalorder %v412, 0
    %v2713 = vand.u32 %v412, 2139095040
    %v2714 = vshrl.u32 %v2713, 23
    %v2715 = vsub.s32 %v2714, 127
    %v2716 = vand.u32 2147483647, %v412
    %v2717 = vand.u32 %v2716, 8388607
    %v2718 = vor.u32 %v2717, 8388608
    %v2719 = vsub.s32 0, %v2718
    %v2720 = vadd.s32 %v2715, 1
    %vm2721 = vcmp.gt.s32.totalorder %v2720, 0
    %v2722 = vsel %vm2721, %v2720, 0
    %v2723 = vshrl.u32 %v2722, 5
    %v2724 = vand.u32 %v2722, 31
    %v2725 = vsub.s32 32, %v2724
    %v2726 = vshrl.u32 683565275, %v2725
    %v2727 = vshll.u32 683565275, %v2724
    %v2728 = vshrl.u32 2475754826, %v2725
    %v2729 = vor.u32 %v2727, %v2728
    %v2730 = vshll.u32 2475754826, %v2724
    %v2731 = vshrl.u32 2131351028, %v2725
    %v2732 = vor.u32 %v2730, %v2731
    %v2733 = vshll.u32 2131351028, %v2724
    %v2734 = vshrl.u32 2102212464, %v2725
    %v2735 = vor.u32 %v2733, %v2734
    %v2736 = vshll.u32 2102212464, %v2724
    %v2737 = vshrl.u32 920167782, %v2725
    %v2738 = vor.u32 %v2736, %v2737
    %v2739 = vshll.u32 920167782, %v2724
    %v2740 = vshrl.u32 1326507024, %v2725
    %v2741 = vor.u32 %v2739, %v2740
    %vm2742 = vcmp.lt.s32.totalorder %v2723, 1
    %vm2743 = vcmp.lt.s32.totalorder %v2723, 2
    %vm2744 = vcmp.lt.s32.totalorder %v2723, 3
    %vm2745 = vcmp.lt.s32.totalorder %v2723, 4
    %v2746 = vsel %vm2742, %v2726, %v2729
    %v2747 = vsel %vm2745, %v2735, 2102212464
    %v2748 = vsel %vm2744, %v2732, %v2747
    %v2749 = vsel %vm2743, %v2746, %v2748
    %v2750 = vsel %vm2742, %v2729, %v2732
    %v2751 = vsel %vm2745, %v2738, 920167782
    %v2752 = vsel %vm2744, %v2735, %v2751
    %v2753 = vsel %vm2743, %v2750, %v2752
    %v2754 = vsel %vm2742, %v2732, %v2735
    %v2755 = vsel %vm2745, %v2741, 1326507024
    %v2756 = vsel %vm2744, %v2738, %v2755
    %v2757 = vsel %vm2743, %v2754, %v2756
    %v2758 = vshll.u32 %v2718, 8
    %v2759 = vmul.u32.u64.compose %v2758, %v2757
    %v2760 = vextract.low.u32 %v2759
    %v2761 = vextract.high.u32 %v2759
    %v2762 = vmul.u32.u64.compose %v2758, %v2753
    %v2763 = vextract.low.u32 %v2762
    %v2764 = vextract.high.u32 %v2762
    %v2765 = vmul.u32 %v2758, %v2749
    %v2766 = vadd.s32 %v2761, %v2763
    %vm2767 = vc.u32 %v2761, %v2763
    %v2768 = vadd.s32 %v2764, 1
    %v2769 = vsel %vm2767, %v2768, %v2764
    %v2770 = vadd.s32 %v2765, %v2769
    %v2771 = vadd.s32 %v2770, 536870912
    %v2772 = vshrl.u32 %v2771, 30
    %v2773 = vshll.u32 %v2772, 30
    %v2774 = vsub.s32 %v2770, %v2773
    %vm2775 = vcmp.lt.s32.totalorder %v2774, 0
    %v2776 = vsub.s32 0, %v2774
    %v2777 = vsel %vm2775, %v2776, %v2774
    %v2778 = vclz %v2777
    %v2779 = vsub.s32 %v2778, 2
    %vm2780 = vcmp.gt.s32.totalorder 0, %v2779
    %v2781 = vsel %vm2780, 0, %v2779
    %v2782 = vsub.s32 32, %v2781
    %v2783 = vshll.u32 %v2774, %v2781
    %v2784 = vshrl.u32 %v2766, %v2782
    %v2785 = vor.u32 %v2783, %v2784
    %v2786 = vsub.s32 4294967266, %v2781
    %v2787 = vadd.s32 %v2786, 127
    %v2788 = vshll.u32 %v2787, 23
    %v2789 = vor.u32 4788187, %v2788
    %v2790 = vand.u32 2147483647, %v2789
    %v2792 = vcvt.s32.f32 %v2785
    %v2793 = vmul.f32 %v2792, %v2790
    %v2794 = vxor.u32 %v2793, 2147483648
    %v2795 = vsel %vm2712, %v2794, %v2793
    %v2796 = vsub.s32 4, %v2772
    %v2797 = vsel %vm2712, %v2796, %v2772
    %v2798 = vsel %vm2711, %v412, %v2795
    %v2799 = vsel %vm2711, 0, %v2797
    %v2800 = vcosq.f32.pop %v2798
    %v2801 = vsinq.f32.pop %v2798
    %vm2802 = vweird.f32 %v412
    %v2803 = vadd.s32 %v2799, 3
    %v2804 = vand.u32 %v2803, 3
    %vm2805 = vcmp.lt.s32.totalorder %v2804, 2
    %vm2806 = vcmp.eq.s32.totalorder %v2804, 0
    %v2807 = vxor.u32 %v2801, 2147483648
    %v2808 = vsel %vm2806, %v2800, %v2807
    %vm2809 = vcmp.eq.s32.totalorder %v2804, 2
    %v2810 = vxor.u32 %v2800, 2147483648
    %v2811 = vsel %vm2809, %v2810, %v2801
    %v2812 = vsel %vm2805, %v2808, %v2811
    %v2813 = vsel %vm2802, nan, %v2812
    %v2814 = vand.u32 2147483647, %v413
    %vm2815 = vcmp.le.f32.partialorder %v2814, 0.7853982
    %vm2816 = vcmp.lt.s32.totalorder %v413, 0
    %v2817 = vand.u32 %v413, 2139095040
    %v2818 = vshrl.u32 %v2817, 23
    %v2819 = vsub.s32 %v2818, 127
    %v2820 = vand.u32 2147483647, %v413
    %v2821 = vand.u32 %v2820, 8388607
    %v2822 = vor.u32 %v2821, 8388608
    %v2823 = vsub.s32 0, %v2822
    %v2824 = vadd.s32 %v2819, 1
    %vm2825 = vcmp.gt.s32.totalorder %v2824, 0
    %v2826 = vsel %vm2825, %v2824, 0
    %v2827 = vshrl.u32 %v2826, 5
    %v2828 = vand.u32 %v2826, 31
    %v2829 = vsub.s32 32, %v2828
    %v2830 = vshrl.u32 683565275, %v2829
    %v2831 = vshll.u32 683565275, %v2828
    %v2832 = vshrl.u32 2475754826, %v2829
    %v2833 = vor.u32 %v2831, %v2832
    %v2834 = vshll.u32 2475754826, %v2828
    %v2835 = vshrl.u32 2131351028, %v2829
    %v2836 = vor.u32 %v2834, %v2835
    %v2837 = vshll.u32 2131351028, %v2828
    %v2838 = vshrl.u32 2102212464, %v2829
    %v2839 = vor.u32 %v2837, %v2838
    %v2840 = vshll.u32 2102212464, %v2828
    %v2841 = vshrl.u32 920167782, %v2829
    %v2842 = vor.u32 %v2840, %v2841
    %v2843 = vshll.u32 920167782, %v2828
    %v2844 = vshrl.u32 1326507024, %v2829
    %v2845 = vor.u32 %v2843, %v2844
    %vm2846 = vcmp.lt.s32.totalorder %v2827, 1
    %vm2847 = vcmp.lt.s32.totalorder %v2827, 2
    %vm2848 = vcmp.lt.s32.totalorder %v2827, 3
    %vm2849 = vcmp.lt.s32.totalorder %v2827, 4
    %v2850 = vsel %vm2846, %v2830, %v2833
    %v2851 = vsel %vm2849, %v2839, 2102212464
    %v2852 = vsel %vm2848, %v2836, %v2851
    %v2853 = vsel %vm2847, %v2850, %v2852
    %v2854 = vsel %vm2846, %v2833, %v2836
    %v2855 = vsel %vm2849, %v2842, 920167782
    %v2856 = vsel %vm2848, %v2839, %v2855
    %v2857 = vsel %vm2847, %v2854, %v2856
    %v2858 = vsel %vm2846, %v2836, %v2839
    %v2859 = vsel %vm2849, %v2845, 1326507024
    %v2860 = vsel %vm2848, %v2842, %v2859
    %v2861 = vsel %vm2847, %v2858, %v2860
    %v2862 = vshll.u32 %v2822, 8
    %v2863 = vmul.u32.u64.compose %v2862, %v2861
    %v2864 = vextract.low.u32 %v2863
    %v2865 = vextract.high.u32 %v2863
    %v2866 = vmul.u32.u64.compose %v2862, %v2857
    %v2867 = vextract.low.u32 %v2866
    %v2868 = vextract.high.u32 %v2866
    %v2869 = vmul.u32 %v2862, %v2853
    %v2870 = vadd.s32 %v2865, %v2867
    %vm2871 = vc.u32 %v2865, %v2867
    %v2872 = vadd.s32 %v2868, 1
    %v2873 = vsel %vm2871, %v2872, %v2868
    %v2874 = vadd.s32 %v2869, %v2873
    %v2875 = vadd.s32 %v2874, 536870912
    %v2876 = vshrl.u32 %v2875, 30
    %v2877 = vshll.u32 %v2876, 30
    %v2878 = vsub.s32 %v2874, %v2877
    %vm2879 = vcmp.lt.s32.totalorder %v2878, 0
    %v2880 = vsub.s32 0, %v2878
    %v2881 = vsel %vm2879, %v2880, %v2878
    %v2882 = vclz %v2881
    %v2883 = vsub.s32 %v2882, 2
    %vm2884 = vcmp.gt.s32.totalorder 0, %v2883
    %v2885 = vsel %vm2884, 0, %v2883
    %v2886 = vsub.s32 32, %v2885
    %v2887 = vshll.u32 %v2878, %v2885
    %v2888 = vshrl.u32 %v2870, %v2886
    %v2889 = vor.u32 %v2887, %v2888
    %v2890 = vsub.s32 4294967266, %v2885
    %v2891 = vadd.s32 %v2890, 127
    %v2892 = vshll.u32 %v2891, 23
    %v2893 = vor.u32 4788187, %v2892
    %v2894 = vand.u32 2147483647, %v2893
    %v2896 = vcvt.s32.f32 %v2889
    %v2897 = vmul.f32 %v2896, %v2894
    %v2898 = vxor.u32 %v2897, 2147483648
    %v2899 = vsel %vm2816, %v2898, %v2897
    %v2900 = vsub.s32 4, %v2876
    %v2901 = vsel %vm2816, %v2900, %v2876
    %v2902 = vsel %vm2815, %v413, %v2899
    %v2903 = vsel %vm2815, 0, %v2901
    %v2904 = vcosq.f32.pop %v2902
    %v2905 = vsinq.f32.pop %v2902
    %vm2906 = vweird.f32 %v413
    %v2907 = vadd.s32 %v2903, 3
    %v2908 = vand.u32 %v2907, 3
    %vm2909 = vcmp.lt.s32.totalorder %v2908, 2
    %vm2910 = vcmp.eq.s32.totalorder %v2908, 0
    %v2911 = vxor.u32 %v2905, 2147483648
    %v2912 = vsel %vm2910, %v2904, %v2911
    %vm2913 = vcmp.eq.s32.totalorder %v2908, 2
    %v2914 = vxor.u32 %v2904, 2147483648
    %v2915 = vsel %vm2913, %v2914, %v2905
    %v2916 = vsel %vm2909, %v2912, %v2915
    %v2917 = vsel %vm2906, nan, %v2916
    %v2918 = vand.u32 2147483647, %v414
    %vm2919 = vcmp.le.f32.partialorder %v2918, 0.7853982
    %vm2920 = vcmp.lt.s32.totalorder %v414, 0
    %v2921 = vand.u32 %v414, 2139095040
    %v2922 = vshrl.u32 %v2921, 23
    %v2923 = vsub.s32 %v2922, 127
    %v2924 = vand.u32 2147483647, %v414
    %v2925 = vand.u32 %v2924, 8388607
    %v2926 = vor.u32 %v2925, 8388608
    %v2927 = vsub.s32 0, %v2926
    %v2928 = vadd.s32 %v2923, 1
    %vm2929 = vcmp.gt.s32.totalorder %v2928, 0
    %v2930 = vsel %vm2929, %v2928, 0
    %v2931 = vshrl.u32 %v2930, 5
    %v2932 = vand.u32 %v2930, 31
    %v2933 = vsub.s32 32, %v2932
    %v2934 = vshrl.u32 683565275, %v2933
    %v2935 = vshll.u32 683565275, %v2932
    %v2936 = vshrl.u32 2475754826, %v2933
    %v2937 = vor.u32 %v2935, %v2936
    %v2938 = vshll.u32 2475754826, %v2932
    %v2939 = vshrl.u32 2131351028, %v2933
    %v2940 = vor.u32 %v2938, %v2939
    %v2941 = vshll.u32 2131351028, %v2932
    %v2942 = vshrl.u32 2102212464, %v2933
    %v2943 = vor.u32 %v2941, %v2942
    %v2944 = vshll.u32 2102212464, %v2932
    %v2945 = vshrl.u32 920167782, %v2933
    %v2946 = vor.u32 %v2944, %v2945
    %v2947 = vshll.u32 920167782, %v2932
    %v2948 = vshrl.u32 1326507024, %v2933
    %v2949 = vor.u32 %v2947, %v2948
    %vm2950 = vcmp.lt.s32.totalorder %v2931, 1
    %vm2951 = vcmp.lt.s32.totalorder %v2931, 2
    %vm2952 = vcmp.lt.s32.totalorder %v2931, 3
    %vm2953 = vcmp.lt.s32.totalorder %v2931, 4
    %v2954 = vsel %vm2950, %v2934, %v2937
    %v2955 = vsel %vm2953, %v2943, 2102212464
    %v2956 = vsel %vm2952, %v2940, %v2955
    %v2957 = vsel %vm2951, %v2954, %v2956
    %v2958 = vsel %vm2950, %v2937, %v2940
    %v2959 = vsel %vm2953, %v2946, 920167782
    %v2960 = vsel %vm2952, %v2943, %v2959
    %v2961 = vsel %vm2951, %v2958, %v2960
    %v2962 = vsel %vm2950, %v2940, %v2943
    %v2963 = vsel %vm2953, %v2949, 1326507024
    %v2964 = vsel %vm2952, %v2946, %v2963
    %v2965 = vsel %vm2951, %v2962, %v2964
    %v2966 = vshll.u32 %v2926, 8
    %v2967 = vmul.u32.u64.compose %v2966, %v2965
    %v2968 = vextract.low.u32 %v2967
    %v2969 = vextract.high.u32 %v2967
    %v2970 = vmul.u32.u64.compose %v2966, %v2961
    %v2971 = vextract.low.u32 %v2970
    %v2972 = vextract.high.u32 %v2970
    %v2973 = vmul.u32 %v2966, %v2957
    %v2974 = vadd.s32 %v2969, %v2971
    %vm2975 = vc.u32 %v2969, %v2971
    %v2976 = vadd.s32 %v2972, 1
    %v2977 = vsel %vm2975, %v2976, %v2972
    %v2978 = vadd.s32 %v2973, %v2977
    %v2979 = vadd.s32 %v2978, 536870912
    %v2980 = vshrl.u32 %v2979, 30
    %v2981 = vshll.u32 %v2980, 30
    %v2982 = vsub.s32 %v2978, %v2981
    %vm2983 = vcmp.lt.s32.totalorder %v2982, 0
    %v2984 = vsub.s32 0, %v2982
    %v2985 = vsel %vm2983, %v2984, %v2982
    %v2986 = vclz %v2985
    %v2987 = vsub.s32 %v2986, 2
    %vm2988 = vcmp.gt.s32.totalorder 0, %v2987
    %v2989 = vsel %vm2988, 0, %v2987
    %v2990 = vsub.s32 32, %v2989
    %v2991 = vshll.u32 %v2982, %v2989
    %v2992 = vshrl.u32 %v2974, %v2990
    %v2993 = vor.u32 %v2991, %v2992
    %v2994 = vsub.s32 4294967266, %v2989
    %v2995 = vadd.s32 %v2994, 127
    %v2996 = vshll.u32 %v2995, 23
    %v2997 = vor.u32 4788187, %v2996
    %v2998 = vand.u32 2147483647, %v2997
    %v3000 = vcvt.s32.f32 %v2993
    %v3001 = vmul.f32 %v3000, %v2998
    %v3002 = vxor.u32 %v3001, 2147483648
    %v3003 = vsel %vm2920, %v3002, %v3001
    %v3004 = vsub.s32 4, %v2980
    %v3005 = vsel %vm2920, %v3004, %v2980
    %v3006 = vsel %vm2919, %v414, %v3003
    %v3007 = vsel %vm2919, 0, %v3005
    %v3008 = vcosq.f32.pop %v3006
    %v3009 = vsinq.f32.pop %v3006
    %vm3010 = vweird.f32 %v414
    %v3011 = vadd.s32 %v3007, 3
    %v3012 = vand.u32 %v3011, 3
    %vm3013 = vcmp.lt.s32.totalorder %v3012, 2
    %vm3014 = vcmp.eq.s32.totalorder %v3012, 0
    %v3015 = vxor.u32 %v3009, 2147483648
    %v3016 = vsel %vm3014, %v3008, %v3015
    %vm3017 = vcmp.eq.s32.totalorder %v3012, 2
    %v3018 = vxor.u32 %v3008, 2147483648
    %v3019 = vsel %vm3017, %v3018, %v3009
    %v3020 = vsel %vm3013, %v3016, %v3019
    %v3021 = vsel %vm3010, nan, %v3020
    %v3022 = vand.u32 2147483647, %v415
    %vm3023 = vcmp.le.f32.partialorder %v3022, 0.7853982
    %vm3024 = vcmp.lt.s32.totalorder %v415, 0
    %v3025 = vand.u32 %v415, 2139095040
    %v3026 = vshrl.u32 %v3025, 23
    %v3027 = vsub.s32 %v3026, 127
    %v3028 = vand.u32 2147483647, %v415
    %v3029 = vand.u32 %v3028, 8388607
    %v3030 = vor.u32 %v3029, 8388608
    %v3031 = vsub.s32 0, %v3030
    %v3032 = vadd.s32 %v3027, 1
    %vm3033 = vcmp.gt.s32.totalorder %v3032, 0
    %v3034 = vsel %vm3033, %v3032, 0
    %v3035 = vshrl.u32 %v3034, 5
    %v3036 = vand.u32 %v3034, 31
    %v3037 = vsub.s32 32, %v3036
    %v3038 = vshrl.u32 683565275, %v3037
    %v3039 = vshll.u32 683565275, %v3036
    %v3040 = vshrl.u32 2475754826, %v3037
    %v3041 = vor.u32 %v3039, %v3040
    %v3042 = vshll.u32 2475754826, %v3036
    %v3043 = vshrl.u32 2131351028, %v3037
    %v3044 = vor.u32 %v3042, %v3043
    %v3045 = vshll.u32 2131351028, %v3036
    %v3046 = vshrl.u32 2102212464, %v3037
    %v3047 = vor.u32 %v3045, %v3046
    %v3048 = vshll.u32 2102212464, %v3036
    %v3049 = vshrl.u32 920167782, %v3037
    %v3050 = vor.u32 %v3048, %v3049
    %v3051 = vshll.u32 920167782, %v3036
    %v3052 = vshrl.u32 1326507024, %v3037
    %v3053 = vor.u32 %v3051, %v3052
    %vm3054 = vcmp.lt.s32.totalorder %v3035, 1
    %vm3055 = vcmp.lt.s32.totalorder %v3035, 2
    %vm3056 = vcmp.lt.s32.totalorder %v3035, 3
    %vm3057 = vcmp.lt.s32.totalorder %v3035, 4
    %v3058 = vsel %vm3054, %v3038, %v3041
    %v3059 = vsel %vm3057, %v3047, 2102212464
    %v3060 = vsel %vm3056, %v3044, %v3059
    %v3061 = vsel %vm3055, %v3058, %v3060
    %v3062 = vsel %vm3054, %v3041, %v3044
    %v3063 = vsel %vm3057, %v3050, 920167782
    %v3064 = vsel %vm3056, %v3047, %v3063
    %v3065 = vsel %vm3055, %v3062, %v3064
    %v3066 = vsel %vm3054, %v3044, %v3047
    %v3067 = vsel %vm3057, %v3053, 1326507024
    %v3068 = vsel %vm3056, %v3050, %v3067
    %v3069 = vsel %vm3055, %v3066, %v3068
    %v3070 = vshll.u32 %v3030, 8
    %v3071 = vmul.u32.u64.compose %v3070, %v3069
    %v3072 = vextract.low.u32 %v3071
    %v3073 = vextract.high.u32 %v3071
    %v3074 = vmul.u32.u64.compose %v3070, %v3065
    %v3075 = vextract.low.u32 %v3074
    %v3076 = vextract.high.u32 %v3074
    %v3077 = vmul.u32 %v3070, %v3061
    %v3078 = vadd.s32 %v3073, %v3075
    %vm3079 = vc.u32 %v3073, %v3075
    %v3080 = vadd.s32 %v3076, 1
    %v3081 = vsel %vm3079, %v3080, %v3076
    %v3082 = vadd.s32 %v3077, %v3081
    %v3083 = vadd.s32 %v3082, 536870912
    %v3084 = vshrl.u32 %v3083, 30
    %v3085 = vshll.u32 %v3084, 30
    %v3086 = vsub.s32 %v3082, %v3085
    %vm3087 = vcmp.lt.s32.totalorder %v3086, 0
    %v3088 = vsub.s32 0, %v3086
    %v3089 = vsel %vm3087, %v3088, %v3086
    %v3090 = vclz %v3089
    %v3091 = vsub.s32 %v3090, 2
    %vm3092 = vcmp.gt.s32.totalorder 0, %v3091
    %v3093 = vsel %vm3092, 0, %v3091
    %v3094 = vsub.s32 32, %v3093
    %v3095 = vshll.u32 %v3086, %v3093
    %v3096 = vshrl.u32 %v3078, %v3094
    %v3097 = vor.u32 %v3095, %v3096
    %v3098 = vsub.s32 4294967266, %v3093
    %v3099 = vadd.s32 %v3098, 127
    %v3100 = vshll.u32 %v3099, 23
    %v3101 = vor.u32 4788187, %v3100
    %v3102 = vand.u32 2147483647, %v3101
    %v3104 = vcvt.s32.f32 %v3097
    %v3105 = vmul.f32 %v3104, %v3102
    %v3106 = vxor.u32 %v3105, 2147483648
    %v3107 = vsel %vm3024, %v3106, %v3105
    %v3108 = vsub.s32 4, %v3084
    %v3109 = vsel %vm3024, %v3108, %v3084
    %v3110 = vsel %vm3023, %v415, %v3107
    %v3111 = vsel %vm3023, 0, %v3109
    %v3112 = vcosq.f32.pop %v3110
    %v3113 = vsinq.f32.pop %v3110
    %vm3114 = vweird.f32 %v415
    %v3115 = vadd.s32 %v3111, 3
    %v3116 = vand.u32 %v3115, 3
    %vm3117 = vcmp.lt.s32.totalorder %v3116, 2
    %vm3118 = vcmp.eq.s32.totalorder %v3116, 0
    %v3119 = vxor.u32 %v3113, 2147483648
    %v3120 = vsel %vm3118, %v3112, %v3119
    %vm3121 = vcmp.eq.s32.totalorder %v3116, 2
    %v3122 = vxor.u32 %v3112, 2147483648
    %v3123 = vsel %vm3121, %v3122, %v3113
    %v3124 = vsel %vm3117, %v3120, %v3123
    %v3125 = vsel %vm3114, nan, %v3124
    %v3126 = vand.u32 2147483647, %v416
    %vm3127 = vcmp.le.f32.partialorder %v3126, 0.7853982
    %vm3128 = vcmp.lt.s32.totalorder %v416, 0
    %v3129 = vand.u32 %v416, 2139095040
    %v3130 = vshrl.u32 %v3129, 23
    %v3131 = vsub.s32 %v3130, 127
    %v3132 = vand.u32 2147483647, %v416
    %v3133 = vand.u32 %v3132, 8388607
    %v3134 = vor.u32 %v3133, 8388608
    %v3135 = vsub.s32 0, %v3134
    %v3136 = vadd.s32 %v3131, 1
    %vm3137 = vcmp.gt.s32.totalorder %v3136, 0
    %v3138 = vsel %vm3137, %v3136, 0
    %v3139 = vshrl.u32 %v3138, 5
    %v3140 = vand.u32 %v3138, 31
    %v3141 = vsub.s32 32, %v3140
    %v3142 = vshrl.u32 683565275, %v3141
    %v3143 = vshll.u32 683565275, %v3140
    %v3144 = vshrl.u32 2475754826, %v3141
    %v3145 = vor.u32 %v3143, %v3144
    %v3146 = vshll.u32 2475754826, %v3140
    %v3147 = vshrl.u32 2131351028, %v3141
    %v3148 = vor.u32 %v3146, %v3147
    %v3149 = vshll.u32 2131351028, %v3140
    %v3150 = vshrl.u32 2102212464, %v3141
    %v3151 = vor.u32 %v3149, %v3150
    %v3152 = vshll.u32 2102212464, %v3140
    %v3153 = vshrl.u32 920167782, %v3141
    %v3154 = vor.u32 %v3152, %v3153
    %v3155 = vshll.u32 920167782, %v3140
    %v3156 = vshrl.u32 1326507024, %v3141
    %v3157 = vor.u32 %v3155, %v3156
    %vm3158 = vcmp.lt.s32.totalorder %v3139, 1
    %vm3159 = vcmp.lt.s32.totalorder %v3139, 2
    %vm3160 = vcmp.lt.s32.totalorder %v3139, 3
    %vm3161 = vcmp.lt.s32.totalorder %v3139, 4
    %v3162 = vsel %vm3158, %v3142, %v3145
    %v3163 = vsel %vm3161, %v3151, 2102212464
    %v3164 = vsel %vm3160, %v3148, %v3163
    %v3165 = vsel %vm3159, %v3162, %v3164
    %v3166 = vsel %vm3158, %v3145, %v3148
    %v3167 = vsel %vm3161, %v3154, 920167782
    %v3168 = vsel %vm3160, %v3151, %v3167
    %v3169 = vsel %vm3159, %v3166, %v3168
    %v3170 = vsel %vm3158, %v3148, %v3151
    %v3171 = vsel %vm3161, %v3157, 1326507024
    %v3172 = vsel %vm3160, %v3154, %v3171
    %v3173 = vsel %vm3159, %v3170, %v3172
    %v3174 = vshll.u32 %v3134, 8
    %v3175 = vmul.u32.u64.compose %v3174, %v3173
    %v3176 = vextract.low.u32 %v3175
    %v3177 = vextract.high.u32 %v3175
    %v3178 = vmul.u32.u64.compose %v3174, %v3169
    %v3179 = vextract.low.u32 %v3178
    %v3180 = vextract.high.u32 %v3178
    %v3181 = vmul.u32 %v3174, %v3165
    %v3182 = vadd.s32 %v3177, %v3179
    %vm3183 = vc.u32 %v3177, %v3179
    %v3184 = vadd.s32 %v3180, 1
    %v3185 = vsel %vm3183, %v3184, %v3180
    %v3186 = vadd.s32 %v3181, %v3185
    %v3187 = vadd.s32 %v3186, 536870912
    %v3188 = vshrl.u32 %v3187, 30
    %v3189 = vshll.u32 %v3188, 30
    %v3190 = vsub.s32 %v3186, %v3189
    %vm3191 = vcmp.lt.s32.totalorder %v3190, 0
    %v3192 = vsub.s32 0, %v3190
    %v3193 = vsel %vm3191, %v3192, %v3190
    %v3194 = vclz %v3193
    %v3195 = vsub.s32 %v3194, 2
    %vm3196 = vcmp.gt.s32.totalorder 0, %v3195
    %v3197 = vsel %vm3196, 0, %v3195
    %v3198 = vsub.s32 32, %v3197
    %v3199 = vshll.u32 %v3190, %v3197
    %v3200 = vshrl.u32 %v3182, %v3198
    %v3201 = vor.u32 %v3199, %v3200
    %v3202 = vsub.s32 4294967266, %v3197
    %v3203 = vadd.s32 %v3202, 127
    %v3204 = vshll.u32 %v3203, 23
    %v3205 = vor.u32 4788187, %v3204
    %v3206 = vand.u32 2147483647, %v3205
    %v3208 = vcvt.s32.f32 %v3201
    %v3209 = vmul.f32 %v3208, %v3206
    %v3210 = vxor.u32 %v3209, 2147483648
    %v3211 = vsel %vm3128, %v3210, %v3209
    %v3212 = vsub.s32 4, %v3188
    %v3213 = vsel %vm3128, %v3212, %v3188
    %v3214 = vsel %vm3127, %v416, %v3211
    %v3215 = vsel %vm3127, 0, %v3213
    %v3216 = vcosq.f32.pop %v3214
    %v3217 = vsinq.f32.pop %v3214
    %vm3218 = vweird.f32 %v416
    %v3219 = vadd.s32 %v3215, 3
    %v3220 = vand.u32 %v3219, 3
    %vm3221 = vcmp.lt.s32.totalorder %v3220, 2
    %vm3222 = vcmp.eq.s32.totalorder %v3220, 0
    %v3223 = vxor.u32 %v3217, 2147483648
    %v3224 = vsel %vm3222, %v3216, %v3223
    %vm3225 = vcmp.eq.s32.totalorder %v3220, 2
    %v3226 = vxor.u32 %v3216, 2147483648
    %v3227 = vsel %vm3225, %v3226, %v3217
    %v3228 = vsel %vm3221, %v3224, %v3227
    %v3229 = vsel %vm3218, nan, %v3228
    %v3230 = vand.u32 2147483647, %v417
    %vm3231 = vcmp.le.f32.partialorder %v3230, 0.7853982
    %vm3232 = vcmp.lt.s32.totalorder %v417, 0
    %v3233 = vand.u32 %v417, 2139095040
    %v3234 = vshrl.u32 %v3233, 23
    %v3235 = vsub.s32 %v3234, 127
    %v3236 = vand.u32 2147483647, %v417
    %v3237 = vand.u32 %v3236, 8388607
    %v3238 = vor.u32 %v3237, 8388608
    %v3239 = vsub.s32 0, %v3238
    %v3240 = vadd.s32 %v3235, 1
    %vm3241 = vcmp.gt.s32.totalorder %v3240, 0
    %v3242 = vsel %vm3241, %v3240, 0
    %v3243 = vshrl.u32 %v3242, 5
    %v3244 = vand.u32 %v3242, 31
    %v3245 = vsub.s32 32, %v3244
    %v3246 = vshrl.u32 683565275, %v3245
    %v3247 = vshll.u32 683565275, %v3244
    %v3248 = vshrl.u32 2475754826, %v3245
    %v3249 = vor.u32 %v3247, %v3248
    %v3250 = vshll.u32 2475754826, %v3244
    %v3251 = vshrl.u32 2131351028, %v3245
    %v3252 = vor.u32 %v3250, %v3251
    %v3253 = vshll.u32 2131351028, %v3244
    %v3254 = vshrl.u32 2102212464, %v3245
    %v3255 = vor.u32 %v3253, %v3254
    %v3256 = vshll.u32 2102212464, %v3244
    %v3257 = vshrl.u32 920167782, %v3245
    %v3258 = vor.u32 %v3256, %v3257
    %v3259 = vshll.u32 920167782, %v3244
    %v3260 = vshrl.u32 1326507024, %v3245
    %v3261 = vor.u32 %v3259, %v3260
    %vm3262 = vcmp.lt.s32.totalorder %v3243, 1
    %vm3263 = vcmp.lt.s32.totalorder %v3243, 2
    %vm3264 = vcmp.lt.s32.totalorder %v3243, 3
    %vm3265 = vcmp.lt.s32.totalorder %v3243, 4
    %v3266 = vsel %vm3262, %v3246, %v3249
    %v3267 = vsel %vm3265, %v3255, 2102212464
    %v3268 = vsel %vm3264, %v3252, %v3267
    %v3269 = vsel %vm3263, %v3266, %v3268
    %v3270 = vsel %vm3262, %v3249, %v3252
    %v3271 = vsel %vm3265, %v3258, 920167782
    %v3272 = vsel %vm3264, %v3255, %v3271
    %v3273 = vsel %vm3263, %v3270, %v3272
    %v3274 = vsel %vm3262, %v3252, %v3255
    %v3275 = vsel %vm3265, %v3261, 1326507024
    %v3276 = vsel %vm3264, %v3258, %v3275
    %v3277 = vsel %vm3263, %v3274, %v3276
    %v3278 = vshll.u32 %v3238, 8
    %v3279 = vmul.u32.u64.compose %v3278, %v3277
    %v3280 = vextract.low.u32 %v3279
    %v3281 = vextract.high.u32 %v3279
    %v3282 = vmul.u32.u64.compose %v3278, %v3273
    %v3283 = vextract.low.u32 %v3282
    %v3284 = vextract.high.u32 %v3282
    %v3285 = vmul.u32 %v3278, %v3269
    %v3286 = vadd.s32 %v3281, %v3283
    %vm3287 = vc.u32 %v3281, %v3283
    %v3288 = vadd.s32 %v3284, 1
    %v3289 = vsel %vm3287, %v3288, %v3284
    %v3290 = vadd.s32 %v3285, %v3289
    %v3291 = vadd.s32 %v3290, 536870912
    %v3292 = vshrl.u32 %v3291, 30
    %v3293 = vshll.u32 %v3292, 30
    %v3294 = vsub.s32 %v3290, %v3293
    %vm3295 = vcmp.lt.s32.totalorder %v3294, 0
    %v3296 = vsub.s32 0, %v3294
    %v3297 = vsel %vm3295, %v3296, %v3294
    %v3298 = vclz %v3297
    %v3299 = vsub.s32 %v3298, 2
    %vm3300 = vcmp.gt.s32.totalorder 0, %v3299
    %v3301 = vsel %vm3300, 0, %v3299
    %v3302 = vsub.s32 32, %v3301
    %v3303 = vshll.u32 %v3294, %v3301
    %v3304 = vshrl.u32 %v3286, %v3302
    %v3305 = vor.u32 %v3303, %v3304
    %v3306 = vsub.s32 4294967266, %v3301
    %v3307 = vadd.s32 %v3306, 127
    %v3308 = vshll.u32 %v3307, 23
    %v3309 = vor.u32 4788187, %v3308
    %v3310 = vand.u32 2147483647, %v3309
    %v3312 = vcvt.s32.f32 %v3305
    %v3313 = vmul.f32 %v3312, %v3310
    %v3314 = vxor.u32 %v3313, 2147483648
    %v3315 = vsel %vm3232, %v3314, %v3313
    %v3316 = vsub.s32 4, %v3292
    %v3317 = vsel %vm3232, %v3316, %v3292
    %v3318 = vsel %vm3231, %v417, %v3315
    %v3319 = vsel %vm3231, 0, %v3317
    %v3320 = vcosq.f32.pop %v3318
    %v3321 = vsinq.f32.pop %v3318
    %vm3322 = vweird.f32 %v417
    %v3323 = vadd.s32 %v3319, 3
    %v3324 = vand.u32 %v3323, 3
    %vm3325 = vcmp.lt.s32.totalorder %v3324, 2
    %vm3326 = vcmp.eq.s32.totalorder %v3324, 0
    %v3327 = vxor.u32 %v3321, 2147483648
    %v3328 = vsel %vm3326, %v3320, %v3327
    %vm3329 = vcmp.eq.s32.totalorder %v3324, 2
    %v3330 = vxor.u32 %v3320, 2147483648
    %v3331 = vsel %vm3329, %v3330, %v3321
    %v3332 = vsel %vm3325, %v3328, %v3331
    %v3333 = vsel %vm3322, nan, %v3332
    %v3334 = vand.u32 2147483647, %v418
    %vm3335 = vcmp.le.f32.partialorder %v3334, 0.7853982
    %vm3336 = vcmp.lt.s32.totalorder %v418, 0
    %v3337 = vand.u32 %v418, 2139095040
    %v3338 = vshrl.u32 %v3337, 23
    %v3339 = vsub.s32 %v3338, 127
    %v3340 = vand.u32 2147483647, %v418
    %v3341 = vand.u32 %v3340, 8388607
    %v3342 = vor.u32 %v3341, 8388608
    %v3343 = vsub.s32 0, %v3342
    %v3344 = vadd.s32 %v3339, 1
    %vm3345 = vcmp.gt.s32.totalorder %v3344, 0
    %v3346 = vsel %vm3345, %v3344, 0
    %v3347 = vshrl.u32 %v3346, 5
    %v3348 = vand.u32 %v3346, 31
    %v3349 = vsub.s32 32, %v3348
    %v3350 = vshrl.u32 683565275, %v3349
    %v3351 = vshll.u32 683565275, %v3348
    %v3352 = vshrl.u32 2475754826, %v3349
    %v3353 = vor.u32 %v3351, %v3352
    %v3354 = vshll.u32 2475754826, %v3348
    %v3355 = vshrl.u32 2131351028, %v3349
    %v3356 = vor.u32 %v3354, %v3355
    %v3357 = vshll.u32 2131351028, %v3348
    %v3358 = vshrl.u32 2102212464, %v3349
    %v3359 = vor.u32 %v3357, %v3358
    %v3360 = vshll.u32 2102212464, %v3348
    %v3361 = vshrl.u32 920167782, %v3349
    %v3362 = vor.u32 %v3360, %v3361
    %v3363 = vshll.u32 920167782, %v3348
    %v3364 = vshrl.u32 1326507024, %v3349
    %v3365 = vor.u32 %v3363, %v3364
    %vm3366 = vcmp.lt.s32.totalorder %v3347, 1
    %vm3367 = vcmp.lt.s32.totalorder %v3347, 2
    %vm3368 = vcmp.lt.s32.totalorder %v3347, 3
    %vm3369 = vcmp.lt.s32.totalorder %v3347, 4
    %v3370 = vsel %vm3366, %v3350, %v3353
    %v3371 = vsel %vm3369, %v3359, 2102212464
    %v3372 = vsel %vm3368, %v3356, %v3371
    %v3373 = vsel %vm3367, %v3370, %v3372
    %v3374 = vsel %vm3366, %v3353, %v3356
    %v3375 = vsel %vm3369, %v3362, 920167782
    %v3376 = vsel %vm3368, %v3359, %v3375
    %v3377 = vsel %vm3367, %v3374, %v3376
    %v3378 = vsel %vm3366, %v3356, %v3359
    %v3379 = vsel %vm3369, %v3365, 1326507024
    %v3380 = vsel %vm3368, %v3362, %v3379
    %v3381 = vsel %vm3367, %v3378, %v3380
    %v3382 = vshll.u32 %v3342, 8
    %v3383 = vmul.u32.u64.compose %v3382, %v3381
    %v3384 = vextract.low.u32 %v3383
    %v3385 = vextract.high.u32 %v3383
    %v3386 = vmul.u32.u64.compose %v3382, %v3377
    %v3387 = vextract.low.u32 %v3386
    %v3388 = vextract.high.u32 %v3386
    %v3389 = vmul.u32 %v3382, %v3373
    %v3390 = vadd.s32 %v3385, %v3387
    %vm3391 = vc.u32 %v3385, %v3387
    %v3392 = vadd.s32 %v3388, 1
    %v3393 = vsel %vm3391, %v3392, %v3388
    %v3394 = vadd.s32 %v3389, %v3393
    %v3395 = vadd.s32 %v3394, 536870912
    %v3396 = vshrl.u32 %v3395, 30
    %v3397 = vshll.u32 %v3396, 30
    %v3398 = vsub.s32 %v3394, %v3397
    %vm3399 = vcmp.lt.s32.totalorder %v3398, 0
    %v3400 = vsub.s32 0, %v3398
    %v3401 = vsel %vm3399, %v3400, %v3398
    %v3402 = vclz %v3401
    %v3403 = vsub.s32 %v3402, 2
    %vm3404 = vcmp.gt.s32.totalorder 0, %v3403
    %v3405 = vsel %vm3404, 0, %v3403
    %v3406 = vsub.s32 32, %v3405
    %v3407 = vshll.u32 %v3398, %v3405
    %v3408 = vshrl.u32 %v3390, %v3406
    %v3409 = vor.u32 %v3407, %v3408
    %v3410 = vsub.s32 4294967266, %v3405
    %v3411 = vadd.s32 %v3410, 127
    %v3412 = vshll.u32 %v3411, 23
    %v3413 = vor.u32 4788187, %v3412
    %v3414 = vand.u32 2147483647, %v3413
    %v3416 = vcvt.s32.f32 %v3409
    %v3417 = vmul.f32 %v3416, %v3414
    %v3418 = vxor.u32 %v3417, 2147483648
    %v3419 = vsel %vm3336, %v3418, %v3417
    %v3420 = vsub.s32 4, %v3396
    %v3421 = vsel %vm3336, %v3420, %v3396
    %v3422 = vsel %vm3335, %v418, %v3419
    %v3423 = vsel %vm3335, 0, %v3421
    %v3424 = vcosq.f32.pop %v3422
    %v3425 = vsinq.f32.pop %v3422
    %vm3426 = vweird.f32 %v418
    %v3427 = vadd.s32 %v3423, 3
    %v3428 = vand.u32 %v3427, 3
    %vm3429 = vcmp.lt.s32.totalorder %v3428, 2
    %vm3430 = vcmp.eq.s32.totalorder %v3428, 0
    %v3431 = vxor.u32 %v3425, 2147483648
    %v3432 = vsel %vm3430, %v3424, %v3431
    %vm3433 = vcmp.eq.s32.totalorder %v3428, 2
    %v3434 = vxor.u32 %v3424, 2147483648
    %v3435 = vsel %vm3433, %v3434, %v3425
    %v3436 = vsel %vm3429, %v3432, %v3435
    %v3437 = vsel %vm3426, nan, %v3436
    %v3438 = vand.u32 2147483647, %v419
    %vm3439 = vcmp.le.f32.partialorder %v3438, 0.7853982
    %vm3440 = vcmp.lt.s32.totalorder %v419, 0
    %v3441 = vand.u32 %v419, 2139095040
    %v3442 = vshrl.u32 %v3441, 23
    %v3443 = vsub.s32 %v3442, 127
    %v3444 = vand.u32 2147483647, %v419
    %v3445 = vand.u32 %v3444, 8388607
    %v3446 = vor.u32 %v3445, 8388608
    %v3447 = vsub.s32 0, %v3446
    %v3448 = vadd.s32 %v3443, 1
    %vm3449 = vcmp.gt.s32.totalorder %v3448, 0
    %v3450 = vsel %vm3449, %v3448, 0
    %v3451 = vshrl.u32 %v3450, 5
    %v3452 = vand.u32 %v3450, 31
    %v3453 = vsub.s32 32, %v3452
    %v3454 = vshrl.u32 683565275, %v3453
    %v3455 = vshll.u32 683565275, %v3452
    %v3456 = vshrl.u32 2475754826, %v3453
    %v3457 = vor.u32 %v3455, %v3456
    %v3458 = vshll.u32 2475754826, %v3452
    %v3459 = vshrl.u32 2131351028, %v3453
    %v3460 = vor.u32 %v3458, %v3459
    %v3461 = vshll.u32 2131351028, %v3452
    %v3462 = vshrl.u32 2102212464, %v3453
    %v3463 = vor.u32 %v3461, %v3462
    %v3464 = vshll.u32 2102212464, %v3452
    %v3465 = vshrl.u32 920167782, %v3453
    %v3466 = vor.u32 %v3464, %v3465
    %v3467 = vshll.u32 920167782, %v3452
    %v3468 = vshrl.u32 1326507024, %v3453
    %v3469 = vor.u32 %v3467, %v3468
    %vm3470 = vcmp.lt.s32.totalorder %v3451, 1
    %vm3471 = vcmp.lt.s32.totalorder %v3451, 2
    %vm3472 = vcmp.lt.s32.totalorder %v3451, 3
    %vm3473 = vcmp.lt.s32.totalorder %v3451, 4
    %v3474 = vsel %vm3470, %v3454, %v3457
    %v3475 = vsel %vm3473, %v3463, 2102212464
    %v3476 = vsel %vm3472, %v3460, %v3475
    %v3477 = vsel %vm3471, %v3474, %v3476
    %v3478 = vsel %vm3470, %v3457, %v3460
    %v3479 = vsel %vm3473, %v3466, 920167782
    %v3480 = vsel %vm3472, %v3463, %v3479
    %v3481 = vsel %vm3471, %v3478, %v3480
    %v3482 = vsel %vm3470, %v3460, %v3463
    %v3483 = vsel %vm3473, %v3469, 1326507024
    %v3484 = vsel %vm3472, %v3466, %v3483
    %v3485 = vsel %vm3471, %v3482, %v3484
    %v3486 = vshll.u32 %v3446, 8
    %v3487 = vmul.u32.u64.compose %v3486, %v3485
    %v3488 = vextract.low.u32 %v3487
    %v3489 = vextract.high.u32 %v3487
    %v3490 = vmul.u32.u64.compose %v3486, %v3481
    %v3491 = vextract.low.u32 %v3490
    %v3492 = vextract.high.u32 %v3490
    %v3493 = vmul.u32 %v3486, %v3477
    %v3494 = vadd.s32 %v3489, %v3491
    %vm3495 = vc.u32 %v3489, %v3491
    %v3496 = vadd.s32 %v3492, 1
    %v3497 = vsel %vm3495, %v3496, %v3492
    %v3498 = vadd.s32 %v3493, %v3497
    %v3499 = vadd.s32 %v3498, 536870912
    %v3500 = vshrl.u32 %v3499, 30
    %v3501 = vshll.u32 %v3500, 30
    %v3502 = vsub.s32 %v3498, %v3501
    %vm3503 = vcmp.lt.s32.totalorder %v3502, 0
    %v3504 = vsub.s32 0, %v3502
    %v3505 = vsel %vm3503, %v3504, %v3502
    %v3506 = vclz %v3505
    %v3507 = vsub.s32 %v3506, 2
    %vm3508 = vcmp.gt.s32.totalorder 0, %v3507
    %v3509 = vsel %vm3508, 0, %v3507
    %v3510 = vsub.s32 32, %v3509
    %v3511 = vshll.u32 %v3502, %v3509
    %v3512 = vshrl.u32 %v3494, %v3510
    %v3513 = vor.u32 %v3511, %v3512
    %v3514 = vsub.s32 4294967266, %v3509
    %v3515 = vadd.s32 %v3514, 127
    %v3516 = vshll.u32 %v3515, 23
    %v3517 = vor.u32 4788187, %v3516
    %v3518 = vand.u32 2147483647, %v3517
    %v3520 = vcvt.s32.f32 %v3513
    %v3521 = vmul.f32 %v3520, %v3518
    %v3522 = vxor.u32 %v3521, 2147483648
    %v3523 = vsel %vm3440, %v3522, %v3521
    %v3524 = vsub.s32 4, %v3500
    %v3525 = vsel %vm3440, %v3524, %v3500
    %v3526 = vsel %vm3439, %v419, %v3523
    %v3527 = vsel %vm3439, 0, %v3525
    %v3528 = vcosq.f32.pop %v3526
    %v3529 = vsinq.f32.pop %v3526
    %vm3530 = vweird.f32 %v419
    %v3531 = vadd.s32 %v3527, 3
    %v3532 = vand.u32 %v3531, 3
    %vm3533 = vcmp.lt.s32.totalorder %v3532, 2
    %vm3534 = vcmp.eq.s32.totalorder %v3532, 0
    %v3535 = vxor.u32 %v3529, 2147483648
    %v3536 = vsel %vm3534, %v3528, %v3535
    %vm3537 = vcmp.eq.s32.totalorder %v3532, 2
    %v3538 = vxor.u32 %v3528, 2147483648
    %v3539 = vsel %vm3537, %v3538, %v3529
    %v3540 = vsel %vm3533, %v3536, %v3539
    %v3541 = vsel %vm3530, nan, %v3540
    %v3542 = vand.u32 2147483647, %v420
    %vm3543 = vcmp.le.f32.partialorder %v3542, 0.7853982
    %vm3544 = vcmp.lt.s32.totalorder %v420, 0
    %v3545 = vand.u32 %v420, 2139095040
    %v3546 = vshrl.u32 %v3545, 23
    %v3547 = vsub.s32 %v3546, 127
    %v3548 = vand.u32 2147483647, %v420
    %v3549 = vand.u32 %v3548, 8388607
    %v3550 = vor.u32 %v3549, 8388608
    %v3551 = vsub.s32 0, %v3550
    %v3552 = vadd.s32 %v3547, 1
    %vm3553 = vcmp.gt.s32.totalorder %v3552, 0
    %v3554 = vsel %vm3553, %v3552, 0
    %v3555 = vshrl.u32 %v3554, 5
    %v3556 = vand.u32 %v3554, 31
    %v3557 = vsub.s32 32, %v3556
    %v3558 = vshrl.u32 683565275, %v3557
    %v3559 = vshll.u32 683565275, %v3556
    %v3560 = vshrl.u32 2475754826, %v3557
    %v3561 = vor.u32 %v3559, %v3560
    %v3562 = vshll.u32 2475754826, %v3556
    %v3563 = vshrl.u32 2131351028, %v3557
    %v3564 = vor.u32 %v3562, %v3563
    %v3565 = vshll.u32 2131351028, %v3556
    %v3566 = vshrl.u32 2102212464, %v3557
    %v3567 = vor.u32 %v3565, %v3566
    %v3568 = vshll.u32 2102212464, %v3556
    %v3569 = vshrl.u32 920167782, %v3557
    %v3570 = vor.u32 %v3568, %v3569
    %v3571 = vshll.u32 920167782, %v3556
    %v3572 = vshrl.u32 1326507024, %v3557
    %v3573 = vor.u32 %v3571, %v3572
    %vm3574 = vcmp.lt.s32.totalorder %v3555, 1
    %vm3575 = vcmp.lt.s32.totalorder %v3555, 2
    %vm3576 = vcmp.lt.s32.totalorder %v3555, 3
    %vm3577 = vcmp.lt.s32.totalorder %v3555, 4
    %v3578 = vsel %vm3574, %v3558, %v3561
    %v3579 = vsel %vm3577, %v3567, 2102212464
    %v3580 = vsel %vm3576, %v3564, %v3579
    %v3581 = vsel %vm3575, %v3578, %v3580
    %v3582 = vsel %vm3574, %v3561, %v3564
    %v3583 = vsel %vm3577, %v3570, 920167782
    %v3584 = vsel %vm3576, %v3567, %v3583
    %v3585 = vsel %vm3575, %v3582, %v3584
    %v3586 = vsel %vm3574, %v3564, %v3567
    %v3587 = vsel %vm3577, %v3573, 1326507024
    %v3588 = vsel %vm3576, %v3570, %v3587
    %v3589 = vsel %vm3575, %v3586, %v3588
    %v3590 = vshll.u32 %v3550, 8
    %v3591 = vmul.u32.u64.compose %v3590, %v3589
    %v3592 = vextract.low.u32 %v3591
    %v3593 = vextract.high.u32 %v3591
    %v3594 = vmul.u32.u64.compose %v3590, %v3585
    %v3595 = vextract.low.u32 %v3594
    %v3596 = vextract.high.u32 %v3594
    %v3597 = vmul.u32 %v3590, %v3581
    %v3598 = vadd.s32 %v3593, %v3595
    %vm3599 = vc.u32 %v3593, %v3595
    %v3600 = vadd.s32 %v3596, 1
    %v3601 = vsel %vm3599, %v3600, %v3596
    %v3602 = vadd.s32 %v3597, %v3601
    %v3603 = vadd.s32 %v3602, 536870912
    %v3604 = vshrl.u32 %v3603, 30
    %v3605 = vshll.u32 %v3604, 30
    %v3606 = vsub.s32 %v3602, %v3605
    %vm3607 = vcmp.lt.s32.totalorder %v3606, 0
    %v3608 = vsub.s32 0, %v3606
    %v3609 = vsel %vm3607, %v3608, %v3606
    %v3610 = vclz %v3609
    %v3611 = vsub.s32 %v3610, 2
    %vm3612 = vcmp.gt.s32.totalorder 0, %v3611
    %v3613 = vsel %vm3612, 0, %v3611
    %v3614 = vsub.s32 32, %v3613
    %v3615 = vshll.u32 %v3606, %v3613
    %v3616 = vshrl.u32 %v3598, %v3614
    %v3617 = vor.u32 %v3615, %v3616
    %v3618 = vsub.s32 4294967266, %v3613
    %v3619 = vadd.s32 %v3618, 127
    %v3620 = vshll.u32 %v3619, 23
    %v3621 = vor.u32 4788187, %v3620
    %v3622 = vand.u32 2147483647, %v3621
    %v3624 = vcvt.s32.f32 %v3617
    %v3625 = vmul.f32 %v3624, %v3622
    %v3626 = vxor.u32 %v3625, 2147483648
    %v3627 = vsel %vm3544, %v3626, %v3625
    %v3628 = vsub.s32 4, %v3604
    %v3629 = vsel %vm3544, %v3628, %v3604
    %v3630 = vsel %vm3543, %v420, %v3627
    %v3631 = vsel %vm3543, 0, %v3629
    %v3632 = vcosq.f32.pop %v3630
    %v3633 = vsinq.f32.pop %v3630
    %vm3634 = vweird.f32 %v420
    %v3635 = vadd.s32 %v3631, 3
    %v3636 = vand.u32 %v3635, 3
    %vm3637 = vcmp.lt.s32.totalorder %v3636, 2
    %vm3638 = vcmp.eq.s32.totalorder %v3636, 0
    %v3639 = vxor.u32 %v3633, 2147483648
    %v3640 = vsel %vm3638, %v3632, %v3639
    %vm3641 = vcmp.eq.s32.totalorder %v3636, 2
    %v3642 = vxor.u32 %v3632, 2147483648
    %v3643 = vsel %vm3641, %v3642, %v3633
    %v3644 = vsel %vm3637, %v3640, %v3643
    %v3645 = vsel %vm3634, nan, %v3644
    %v3646 = vand.u32 2147483647, %v421
    %vm3647 = vcmp.le.f32.partialorder %v3646, 0.7853982
    %vm3648 = vcmp.lt.s32.totalorder %v421, 0
    %v3649 = vand.u32 %v421, 2139095040
    %v3650 = vshrl.u32 %v3649, 23
    %v3651 = vsub.s32 %v3650, 127
    %v3652 = vand.u32 2147483647, %v421
    %v3653 = vand.u32 %v3652, 8388607
    %v3654 = vor.u32 %v3653, 8388608
    %v3655 = vsub.s32 0, %v3654
    %v3656 = vadd.s32 %v3651, 1
    %vm3657 = vcmp.gt.s32.totalorder %v3656, 0
    %v3658 = vsel %vm3657, %v3656, 0
    %v3659 = vshrl.u32 %v3658, 5
    %v3660 = vand.u32 %v3658, 31
    %v3661 = vsub.s32 32, %v3660
    %v3662 = vshrl.u32 683565275, %v3661
    %v3663 = vshll.u32 683565275, %v3660
    %v3664 = vshrl.u32 2475754826, %v3661
    %v3665 = vor.u32 %v3663, %v3664
    %v3666 = vshll.u32 2475754826, %v3660
    %v3667 = vshrl.u32 2131351028, %v3661
    %v3668 = vor.u32 %v3666, %v3667
    %v3669 = vshll.u32 2131351028, %v3660
    %v3670 = vshrl.u32 2102212464, %v3661
    %v3671 = vor.u32 %v3669, %v3670
    %v3672 = vshll.u32 2102212464, %v3660
    %v3673 = vshrl.u32 920167782, %v3661
    %v3674 = vor.u32 %v3672, %v3673
    %v3675 = vshll.u32 920167782, %v3660
    %v3676 = vshrl.u32 1326507024, %v3661
    %v3677 = vor.u32 %v3675, %v3676
    %vm3678 = vcmp.lt.s32.totalorder %v3659, 1
    %vm3679 = vcmp.lt.s32.totalorder %v3659, 2
    %vm3680 = vcmp.lt.s32.totalorder %v3659, 3
    %vm3681 = vcmp.lt.s32.totalorder %v3659, 4
    %v3682 = vsel %vm3678, %v3662, %v3665
    %v3683 = vsel %vm3681, %v3671, 2102212464
    %v3684 = vsel %vm3680, %v3668, %v3683
    %v3685 = vsel %vm3679, %v3682, %v3684
    %v3686 = vsel %vm3678, %v3665, %v3668
    %v3687 = vsel %vm3681, %v3674, 920167782
    %v3688 = vsel %vm3680, %v3671, %v3687
    %v3689 = vsel %vm3679, %v3686, %v3688
    %v3690 = vsel %vm3678, %v3668, %v3671
    %v3691 = vsel %vm3681, %v3677, 1326507024
    %v3692 = vsel %vm3680, %v3674, %v3691
    %v3693 = vsel %vm3679, %v3690, %v3692
    %v3694 = vshll.u32 %v3654, 8
    %v3695 = vmul.u32.u64.compose %v3694, %v3693
    %v3696 = vextract.low.u32 %v3695
    %v3697 = vextract.high.u32 %v3695
    %v3698 = vmul.u32.u64.compose %v3694, %v3689
    %v3699 = vextract.low.u32 %v3698
    %v3700 = vextract.high.u32 %v3698
    %v3701 = vmul.u32 %v3694, %v3685
    %v3702 = vadd.s32 %v3697, %v3699
    %vm3703 = vc.u32 %v3697, %v3699
    %v3704 = vadd.s32 %v3700, 1
    %v3705 = vsel %vm3703, %v3704, %v3700
    %v3706 = vadd.s32 %v3701, %v3705
    %v3707 = vadd.s32 %v3706, 536870912
    %v3708 = vshrl.u32 %v3707, 30
    %v3709 = vshll.u32 %v3708, 30
    %v3710 = vsub.s32 %v3706, %v3709
    %vm3711 = vcmp.lt.s32.totalorder %v3710, 0
    %v3712 = vsub.s32 0, %v3710
    %v3713 = vsel %vm3711, %v3712, %v3710
    %v3714 = vclz %v3713
    %v3715 = vsub.s32 %v3714, 2
    %vm3716 = vcmp.gt.s32.totalorder 0, %v3715
    %v3717 = vsel %vm3716, 0, %v3715
    %v3718 = vsub.s32 32, %v3717
    %v3719 = vshll.u32 %v3710, %v3717
    %v3720 = vshrl.u32 %v3702, %v3718
    %v3721 = vor.u32 %v3719, %v3720
    %v3722 = vsub.s32 4294967266, %v3717
    %v3723 = vadd.s32 %v3722, 127
    %v3724 = vshll.u32 %v3723, 23
    %v3725 = vor.u32 4788187, %v3724
    %v3726 = vand.u32 2147483647, %v3725
    %v3728 = vcvt.s32.f32 %v3721
    %v3729 = vmul.f32 %v3728, %v3726
    %v3730 = vxor.u32 %v3729, 2147483648
    %v3731 = vsel %vm3648, %v3730, %v3729
    %v3732 = vsub.s32 4, %v3708
    %v3733 = vsel %vm3648, %v3732, %v3708
    %v3734 = vsel %vm3647, %v421, %v3731
    %v3735 = vsel %vm3647, 0, %v3733
    %v3736 = vcosq.f32.pop %v3734
    %v3737 = vsinq.f32.pop %v3734
    %vm3738 = vweird.f32 %v421
    %v3739 = vadd.s32 %v3735, 3
    %v3740 = vand.u32 %v3739, 3
    %vm3741 = vcmp.lt.s32.totalorder %v3740, 2
    %vm3742 = vcmp.eq.s32.totalorder %v3740, 0
    %v3743 = vxor.u32 %v3737, 2147483648
    %v3744 = vsel %vm3742, %v3736, %v3743
    %vm3745 = vcmp.eq.s32.totalorder %v3740, 2
    %v3746 = vxor.u32 %v3736, 2147483648
    %v3747 = vsel %vm3745, %v3746, %v3737
    %v3748 = vsel %vm3741, %v3744, %v3747
    %v3749 = vsel %vm3738, nan, %v3748
    %v3750 = vand.u32 2147483647, %v390
    %vm3751 = vcmp.le.f32.partialorder %v3750, 0.7853982
    %vm3752 = vcmp.lt.s32.totalorder %v390, 0
    %v3753 = vand.u32 %v390, 2139095040
    %v3754 = vshrl.u32 %v3753, 23
    %v3755 = vsub.s32 %v3754, 127
    %v3756 = vand.u32 2147483647, %v390
    %v3757 = vand.u32 %v3756, 8388607
    %v3758 = vor.u32 %v3757, 8388608
    %v3759 = vsub.s32 0, %v3758
    %v3760 = vadd.s32 %v3755, 1
    %vm3761 = vcmp.gt.s32.totalorder %v3760, 0
    %v3762 = vsel %vm3761, %v3760, 0
    %v3763 = vshrl.u32 %v3762, 5
    %v3764 = vand.u32 %v3762, 31
    %v3765 = vsub.s32 32, %v3764
    %v3766 = vshrl.u32 683565275, %v3765
    %v3767 = vshll.u32 683565275, %v3764
    %v3768 = vshrl.u32 2475754826, %v3765
    %v3769 = vor.u32 %v3767, %v3768
    %v3770 = vshll.u32 2475754826, %v3764
    %v3771 = vshrl.u32 2131351028, %v3765
    %v3772 = vor.u32 %v3770, %v3771
    %v3773 = vshll.u32 2131351028, %v3764
    %v3774 = vshrl.u32 2102212464, %v3765
    %v3775 = vor.u32 %v3773, %v3774
    %v3776 = vshll.u32 2102212464, %v3764
    %v3777 = vshrl.u32 920167782, %v3765
    %v3778 = vor.u32 %v3776, %v3777
    %v3779 = vshll.u32 920167782, %v3764
    %v3780 = vshrl.u32 1326507024, %v3765
    %v3781 = vor.u32 %v3779, %v3780
    %vm3782 = vcmp.lt.s32.totalorder %v3763, 1
    %vm3783 = vcmp.lt.s32.totalorder %v3763, 2
    %vm3784 = vcmp.lt.s32.totalorder %v3763, 3
    %vm3785 = vcmp.lt.s32.totalorder %v3763, 4
    %v3786 = vsel %vm3782, %v3766, %v3769
    %v3787 = vsel %vm3785, %v3775, 2102212464
    %v3788 = vsel %vm3784, %v3772, %v3787
    %v3789 = vsel %vm3783, %v3786, %v3788
    %v3790 = vsel %vm3782, %v3769, %v3772
    %v3791 = vsel %vm3785, %v3778, 920167782
    %v3792 = vsel %vm3784, %v3775, %v3791
    %v3793 = vsel %vm3783, %v3790, %v3792
    %v3794 = vsel %vm3782, %v3772, %v3775
    %v3795 = vsel %vm3785, %v3781, 1326507024
    %v3796 = vsel %vm3784, %v3778, %v3795
    %v3797 = vsel %vm3783, %v3794, %v3796
    %v3798 = vshll.u32 %v3758, 8
    %v3799 = vmul.u32.u64.compose %v3798, %v3797
    %v3800 = vextract.low.u32 %v3799
    %v3801 = vextract.high.u32 %v3799
    %v3802 = vmul.u32.u64.compose %v3798, %v3793
    %v3803 = vextract.low.u32 %v3802
    %v3804 = vextract.high.u32 %v3802
    %v3805 = vmul.u32 %v3798, %v3789
    %v3806 = vadd.s32 %v3801, %v3803
    %vm3807 = vc.u32 %v3801, %v3803
    %v3808 = vadd.s32 %v3804, 1
    %v3809 = vsel %vm3807, %v3808, %v3804
    %v3810 = vadd.s32 %v3805, %v3809
    %v3811 = vadd.s32 %v3810, 536870912
    %v3812 = vshrl.u32 %v3811, 30
    %v3813 = vshll.u32 %v3812, 30
    %v3814 = vsub.s32 %v3810, %v3813
    %vm3815 = vcmp.lt.s32.totalorder %v3814, 0
    %v3816 = vsub.s32 0, %v3814
    %v3817 = vsel %vm3815, %v3816, %v3814
    %v3818 = vclz %v3817
    %v3819 = vsub.s32 %v3818, 2
    %vm3820 = vcmp.gt.s32.totalorder 0, %v3819
    %v3821 = vsel %vm3820, 0, %v3819
    %v3822 = vsub.s32 32, %v3821
    %v3823 = vshll.u32 %v3814, %v3821
    %v3824 = vshrl.u32 %v3806, %v3822
    %v3825 = vor.u32 %v3823, %v3824
    %v3826 = vsub.s32 4294967266, %v3821
    %v3827 = vadd.s32 %v3826, 127
    %v3828 = vshll.u32 %v3827, 23
    %v3829 = vor.u32 4788187, %v3828
    %v3830 = vand.u32 2147483647, %v3829
    %v3832 = vcvt.s32.f32 %v3825
    %v3833 = vmul.f32 %v3832, %v3830
    %v3834 = vxor.u32 %v3833, 2147483648
    %v3835 = vsel %vm3752, %v3834, %v3833
    %v3836 = vsub.s32 4, %v3812
    %v3837 = vsel %vm3752, %v3836, %v3812
    %v3838 = vsel %vm3751, %v390, %v3835
    %v3839 = vsel %vm3751, 0, %v3837
    %v3840 = vcosq.f32.pop %v3838
    %v3841 = vsinq.f32.pop %v3838
    %vm3842 = vweird.f32 %v390
    %v3843 = vand.u32 %v3839, 3
    %vm3844 = vcmp.lt.s32.totalorder %v3843, 2
    %vm3845 = vcmp.eq.s32.totalorder %v3843, 0
    %v3846 = vxor.u32 %v3841, 2147483648
    %v3847 = vsel %vm3845, %v3840, %v3846
    %vm3848 = vcmp.eq.s32.totalorder %v3843, 2
    %v3849 = vxor.u32 %v3840, 2147483648
    %v3850 = vsel %vm3848, %v3849, %v3841
    %v3851 = vsel %vm3844, %v3847, %v3850
    %v3852 = vsel %vm3842, nan, %v3851
    %v3853 = vand.u32 2147483647, %v391
    %vm3854 = vcmp.le.f32.partialorder %v3853, 0.7853982
    %vm3855 = vcmp.lt.s32.totalorder %v391, 0
    %v3856 = vand.u32 %v391, 2139095040
    %v3857 = vshrl.u32 %v3856, 23
    %v3858 = vsub.s32 %v3857, 127
    %v3859 = vand.u32 2147483647, %v391
    %v3860 = vand.u32 %v3859, 8388607
    %v3861 = vor.u32 %v3860, 8388608
    %v3862 = vsub.s32 0, %v3861
    %v3863 = vadd.s32 %v3858, 1
    %vm3864 = vcmp.gt.s32.totalorder %v3863, 0
    %v3865 = vsel %vm3864, %v3863, 0
    %v3866 = vshrl.u32 %v3865, 5
    %v3867 = vand.u32 %v3865, 31
    %v3868 = vsub.s32 32, %v3867
    %v3869 = vshrl.u32 683565275, %v3868
    %v3870 = vshll.u32 683565275, %v3867
    %v3871 = vshrl.u32 2475754826, %v3868
    %v3872 = vor.u32 %v3870, %v3871
    %v3873 = vshll.u32 2475754826, %v3867
    %v3874 = vshrl.u32 2131351028, %v3868
    %v3875 = vor.u32 %v3873, %v3874
    %v3876 = vshll.u32 2131351028, %v3867
    %v3877 = vshrl.u32 2102212464, %v3868
    %v3878 = vor.u32 %v3876, %v3877
    %v3879 = vshll.u32 2102212464, %v3867
    %v3880 = vshrl.u32 920167782, %v3868
    %v3881 = vor.u32 %v3879, %v3880
    %v3882 = vshll.u32 920167782, %v3867
    %v3883 = vshrl.u32 1326507024, %v3868
    %v3884 = vor.u32 %v3882, %v3883
    %vm3885 = vcmp.lt.s32.totalorder %v3866, 1
    %vm3886 = vcmp.lt.s32.totalorder %v3866, 2
    %vm3887 = vcmp.lt.s32.totalorder %v3866, 3
    %vm3888 = vcmp.lt.s32.totalorder %v3866, 4
    %v3889 = vsel %vm3885, %v3869, %v3872
    %v3890 = vsel %vm3888, %v3878, 2102212464
    %v3891 = vsel %vm3887, %v3875, %v3890
    %v3892 = vsel %vm3886, %v3889, %v3891
    %v3893 = vsel %vm3885, %v3872, %v3875
    %v3894 = vsel %vm3888, %v3881, 920167782
    %v3895 = vsel %vm3887, %v3878, %v3894
    %v3896 = vsel %vm3886, %v3893, %v3895
    %v3897 = vsel %vm3885, %v3875, %v3878
    %v3898 = vsel %vm3888, %v3884, 1326507024
    %v3899 = vsel %vm3887, %v3881, %v3898
    %v3900 = vsel %vm3886, %v3897, %v3899
    %v3901 = vshll.u32 %v3861, 8
    %v3902 = vmul.u32.u64.compose %v3901, %v3900
    %v3903 = vextract.low.u32 %v3902
    %v3904 = vextract.high.u32 %v3902
    %v3905 = vmul.u32.u64.compose %v3901, %v3896
    %v3906 = vextract.low.u32 %v3905
    %v3907 = vextract.high.u32 %v3905
    %v3908 = vmul.u32 %v3901, %v3892
    %v3909 = vadd.s32 %v3904, %v3906
    %vm3910 = vc.u32 %v3904, %v3906
    %v3911 = vadd.s32 %v3907, 1
    %v3912 = vsel %vm3910, %v3911, %v3907
    %v3913 = vadd.s32 %v3908, %v3912
    %v3914 = vadd.s32 %v3913, 536870912
    %v3915 = vshrl.u32 %v3914, 30
    %v3916 = vshll.u32 %v3915, 30
    %v3917 = vsub.s32 %v3913, %v3916
    %vm3918 = vcmp.lt.s32.totalorder %v3917, 0
    %v3919 = vsub.s32 0, %v3917
    %v3920 = vsel %vm3918, %v3919, %v3917
    %v3921 = vclz %v3920
    %v3922 = vsub.s32 %v3921, 2
    %vm3923 = vcmp.gt.s32.totalorder 0, %v3922
    %v3924 = vsel %vm3923, 0, %v3922
    %v3925 = vsub.s32 32, %v3924
    %v3926 = vshll.u32 %v3917, %v3924
    %v3927 = vshrl.u32 %v3909, %v3925
    %v3928 = vor.u32 %v3926, %v3927
    %v3929 = vsub.s32 4294967266, %v3924
    %v3930 = vadd.s32 %v3929, 127
    %v3931 = vshll.u32 %v3930, 23
    %v3932 = vor.u32 4788187, %v3931
    %v3933 = vand.u32 2147483647, %v3932
    %v3935 = vcvt.s32.f32 %v3928
    %v3936 = vmul.f32 %v3935, %v3933
    %v3937 = vxor.u32 %v3936, 2147483648
    %v3938 = vsel %vm3855, %v3937, %v3936
    %v3939 = vsub.s32 4, %v3915
    %v3940 = vsel %vm3855, %v3939, %v3915
    %v3941 = vsel %vm3854, %v391, %v3938
    %v3942 = vsel %vm3854, 0, %v3940
    %v3943 = vcosq.f32.pop %v3941
    %v3944 = vsinq.f32.pop %v3941
    %vm3945 = vweird.f32 %v391
    %v3946 = vand.u32 %v3942, 3
    %vm3947 = vcmp.lt.s32.totalorder %v3946, 2
    %vm3948 = vcmp.eq.s32.totalorder %v3946, 0
    %v3949 = vxor.u32 %v3944, 2147483648
    %v3950 = vsel %vm3948, %v3943, %v3949
    %vm3951 = vcmp.eq.s32.totalorder %v3946, 2
    %v3952 = vxor.u32 %v3943, 2147483648
    %v3953 = vsel %vm3951, %v3952, %v3944
    %v3954 = vsel %vm3947, %v3950, %v3953
    %v3955 = vsel %vm3945, nan, %v3954
    %v3956 = vand.u32 2147483647, %v392
    %vm3957 = vcmp.le.f32.partialorder %v3956, 0.7853982
    %vm3958 = vcmp.lt.s32.totalorder %v392, 0
    %v3959 = vand.u32 %v392, 2139095040
    %v3960 = vshrl.u32 %v3959, 23
    %v3961 = vsub.s32 %v3960, 127
    %v3962 = vand.u32 2147483647, %v392
    %v3963 = vand.u32 %v3962, 8388607
    %v3964 = vor.u32 %v3963, 8388608
    %v3965 = vsub.s32 0, %v3964
    %v3966 = vadd.s32 %v3961, 1
    %vm3967 = vcmp.gt.s32.totalorder %v3966, 0
    %v3968 = vsel %vm3967, %v3966, 0
    %v3969 = vshrl.u32 %v3968, 5
    %v3970 = vand.u32 %v3968, 31
    %v3971 = vsub.s32 32, %v3970
    %v3972 = vshrl.u32 683565275, %v3971
    %v3973 = vshll.u32 683565275, %v3970
    %v3974 = vshrl.u32 2475754826, %v3971
    %v3975 = vor.u32 %v3973, %v3974
    %v3976 = vshll.u32 2475754826, %v3970
    %v3977 = vshrl.u32 2131351028, %v3971
    %v3978 = vor.u32 %v3976, %v3977
    %v3979 = vshll.u32 2131351028, %v3970
    %v3980 = vshrl.u32 2102212464, %v3971
    %v3981 = vor.u32 %v3979, %v3980
    %v3982 = vshll.u32 2102212464, %v3970
    %v3983 = vshrl.u32 920167782, %v3971
    %v3984 = vor.u32 %v3982, %v3983
    %v3985 = vshll.u32 920167782, %v3970
    %v3986 = vshrl.u32 1326507024, %v3971
    %v3987 = vor.u32 %v3985, %v3986
    %vm3988 = vcmp.lt.s32.totalorder %v3969, 1
    %vm3989 = vcmp.lt.s32.totalorder %v3969, 2
    %vm3990 = vcmp.lt.s32.totalorder %v3969, 3
    %vm3991 = vcmp.lt.s32.totalorder %v3969, 4
    %v3992 = vsel %vm3988, %v3972, %v3975
    %v3993 = vsel %vm3991, %v3981, 2102212464
    %v3994 = vsel %vm3990, %v3978, %v3993
    %v3995 = vsel %vm3989, %v3992, %v3994
    %v3996 = vsel %vm3988, %v3975, %v3978
    %v3997 = vsel %vm3991, %v3984, 920167782
    %v3998 = vsel %vm3990, %v3981, %v3997
    %v3999 = vsel %vm3989, %v3996, %v3998
    %v4000 = vsel %vm3988, %v3978, %v3981
    %v4001 = vsel %vm3991, %v3987, 1326507024
    %v4002 = vsel %vm3990, %v3984, %v4001
    %v4003 = vsel %vm3989, %v4000, %v4002
    %v4004 = vshll.u32 %v3964, 8
    %v4005 = vmul.u32.u64.compose %v4004, %v4003
    %v4006 = vextract.low.u32 %v4005
    %v4007 = vextract.high.u32 %v4005
    %v4008 = vmul.u32.u64.compose %v4004, %v3999
    %v4009 = vextract.low.u32 %v4008
    %v4010 = vextract.high.u32 %v4008
    %v4011 = vmul.u32 %v4004, %v3995
    %v4012 = vadd.s32 %v4007, %v4009
    %vm4013 = vc.u32 %v4007, %v4009
    %v4014 = vadd.s32 %v4010, 1
    %v4015 = vsel %vm4013, %v4014, %v4010
    %v4016 = vadd.s32 %v4011, %v4015
    %v4017 = vadd.s32 %v4016, 536870912
    %v4018 = vshrl.u32 %v4017, 30
    %v4019 = vshll.u32 %v4018, 30
    %v4020 = vsub.s32 %v4016, %v4019
    %vm4021 = vcmp.lt.s32.totalorder %v4020, 0
    %v4022 = vsub.s32 0, %v4020
    %v4023 = vsel %vm4021, %v4022, %v4020
    %v4024 = vclz %v4023
    %v4025 = vsub.s32 %v4024, 2
    %vm4026 = vcmp.gt.s32.totalorder 0, %v4025
    %v4027 = vsel %vm4026, 0, %v4025
    %v4028 = vsub.s32 32, %v4027
    %v4029 = vshll.u32 %v4020, %v4027
    %v4030 = vshrl.u32 %v4012, %v4028
    %v4031 = vor.u32 %v4029, %v4030
    %v4032 = vsub.s32 4294967266, %v4027
    %v4033 = vadd.s32 %v4032, 127
    %v4034 = vshll.u32 %v4033, 23
    %v4035 = vor.u32 4788187, %v4034
    %v4036 = vand.u32 2147483647, %v4035
    %v4038 = vcvt.s32.f32 %v4031
    %v4039 = vmul.f32 %v4038, %v4036
    %v4040 = vxor.u32 %v4039, 2147483648
    %v4041 = vsel %vm3958, %v4040, %v4039
    %v4042 = vsub.s32 4, %v4018
    %v4043 = vsel %vm3958, %v4042, %v4018
    %v4044 = vsel %vm3957, %v392, %v4041
    %v4045 = vsel %vm3957, 0, %v4043
    %v4046 = vcosq.f32.pop %v4044
    %v4047 = vsinq.f32.pop %v4044
    %vm4048 = vweird.f32 %v392
    %v4049 = vand.u32 %v4045, 3
    %vm4050 = vcmp.lt.s32.totalorder %v4049, 2
    %vm4051 = vcmp.eq.s32.totalorder %v4049, 0
    %v4052 = vxor.u32 %v4047, 2147483648
    %v4053 = vsel %vm4051, %v4046, %v4052
    %vm4054 = vcmp.eq.s32.totalorder %v4049, 2
    %v4055 = vxor.u32 %v4046, 2147483648
    %v4056 = vsel %vm4054, %v4055, %v4047
    %v4057 = vsel %vm4050, %v4053, %v4056
    %v4058 = vsel %vm4048, nan, %v4057
    %v4059 = vand.u32 2147483647, %v393
    %vm4060 = vcmp.le.f32.partialorder %v4059, 0.7853982
    %vm4061 = vcmp.lt.s32.totalorder %v393, 0
    %v4062 = vand.u32 %v393, 2139095040
    %v4063 = vshrl.u32 %v4062, 23
    %v4064 = vsub.s32 %v4063, 127
    %v4065 = vand.u32 2147483647, %v393
    %v4066 = vand.u32 %v4065, 8388607
    %v4067 = vor.u32 %v4066, 8388608
    %v4068 = vsub.s32 0, %v4067
    %v4069 = vadd.s32 %v4064, 1
    %vm4070 = vcmp.gt.s32.totalorder %v4069, 0
    %v4071 = vsel %vm4070, %v4069, 0
    %v4072 = vshrl.u32 %v4071, 5
    %v4073 = vand.u32 %v4071, 31
    %v4074 = vsub.s32 32, %v4073
    %v4075 = vshrl.u32 683565275, %v4074
    %v4076 = vshll.u32 683565275, %v4073
    %v4077 = vshrl.u32 2475754826, %v4074
    %v4078 = vor.u32 %v4076, %v4077
    %v4079 = vshll.u32 2475754826, %v4073
    %v4080 = vshrl.u32 2131351028, %v4074
    %v4081 = vor.u32 %v4079, %v4080
    %v4082 = vshll.u32 2131351028, %v4073
    %v4083 = vshrl.u32 2102212464, %v4074
    %v4084 = vor.u32 %v4082, %v4083
    %v4085 = vshll.u32 2102212464, %v4073
    %v4086 = vshrl.u32 920167782, %v4074
    %v4087 = vor.u32 %v4085, %v4086
    %v4088 = vshll.u32 920167782, %v4073
    %v4089 = vshrl.u32 1326507024, %v4074
    %v4090 = vor.u32 %v4088, %v4089
    %vm4091 = vcmp.lt.s32.totalorder %v4072, 1
    %vm4092 = vcmp.lt.s32.totalorder %v4072, 2
    %vm4093 = vcmp.lt.s32.totalorder %v4072, 3
    %vm4094 = vcmp.lt.s32.totalorder %v4072, 4
    %v4095 = vsel %vm4091, %v4075, %v4078
    %v4096 = vsel %vm4094, %v4084, 2102212464
    %v4097 = vsel %vm4093, %v4081, %v4096
    %v4098 = vsel %vm4092, %v4095, %v4097
    %v4099 = vsel %vm4091, %v4078, %v4081
    %v4100 = vsel %vm4094, %v4087, 920167782
    %v4101 = vsel %vm4093, %v4084, %v4100
    %v4102 = vsel %vm4092, %v4099, %v4101
    %v4103 = vsel %vm4091, %v4081, %v4084
    %v4104 = vsel %vm4094, %v4090, 1326507024
    %v4105 = vsel %vm4093, %v4087, %v4104
    %v4106 = vsel %vm4092, %v4103, %v4105
    %v4107 = vshll.u32 %v4067, 8
    %v4108 = vmul.u32.u64.compose %v4107, %v4106
    %v4109 = vextract.low.u32 %v4108
    %v4110 = vextract.high.u32 %v4108
    %v4111 = vmul.u32.u64.compose %v4107, %v4102
    %v4112 = vextract.low.u32 %v4111
    %v4113 = vextract.high.u32 %v4111
    %v4114 = vmul.u32 %v4107, %v4098
    %v4115 = vadd.s32 %v4110, %v4112
    %vm4116 = vc.u32 %v4110, %v4112
    %v4117 = vadd.s32 %v4113, 1
    %v4118 = vsel %vm4116, %v4117, %v4113
    %v4119 = vadd.s32 %v4114, %v4118
    %v4120 = vadd.s32 %v4119, 536870912
    %v4121 = vshrl.u32 %v4120, 30
    %v4122 = vshll.u32 %v4121, 30
    %v4123 = vsub.s32 %v4119, %v4122
    %vm4124 = vcmp.lt.s32.totalorder %v4123, 0
    %v4125 = vsub.s32 0, %v4123
    %v4126 = vsel %vm4124, %v4125, %v4123
    %v4127 = vclz %v4126
    %v4128 = vsub.s32 %v4127, 2
    %vm4129 = vcmp.gt.s32.totalorder 0, %v4128
    %v4130 = vsel %vm4129, 0, %v4128
    %v4131 = vsub.s32 32, %v4130
    %v4132 = vshll.u32 %v4123, %v4130
    %v4133 = vshrl.u32 %v4115, %v4131
    %v4134 = vor.u32 %v4132, %v4133
    %v4135 = vsub.s32 4294967266, %v4130
    %v4136 = vadd.s32 %v4135, 127
    %v4137 = vshll.u32 %v4136, 23
    %v4138 = vor.u32 4788187, %v4137
    %v4139 = vand.u32 2147483647, %v4138
    %v4141 = vcvt.s32.f32 %v4134
    %v4142 = vmul.f32 %v4141, %v4139
    %v4143 = vxor.u32 %v4142, 2147483648
    %v4144 = vsel %vm4061, %v4143, %v4142
    %v4145 = vsub.s32 4, %v4121
    %v4146 = vsel %vm4061, %v4145, %v4121
    %v4147 = vsel %vm4060, %v393, %v4144
    %v4148 = vsel %vm4060, 0, %v4146
    %v4149 = vcosq.f32.pop %v4147
    %v4150 = vsinq.f32.pop %v4147
    %vm4151 = vweird.f32 %v393
    %v4152 = vand.u32 %v4148, 3
    %vm4153 = vcmp.lt.s32.totalorder %v4152, 2
    %vm4154 = vcmp.eq.s32.totalorder %v4152, 0
    %v4155 = vxor.u32 %v4150, 2147483648
    %v4156 = vsel %vm4154, %v4149, %v4155
    %vm4157 = vcmp.eq.s32.totalorder %v4152, 2
    %v4158 = vxor.u32 %v4149, 2147483648
    %v4159 = vsel %vm4157, %v4158, %v4150
    %v4160 = vsel %vm4153, %v4156, %v4159
    %v4161 = vsel %vm4151, nan, %v4160
    %v4162 = vand.u32 2147483647, %v394
    %vm4163 = vcmp.le.f32.partialorder %v4162, 0.7853982
    %vm4164 = vcmp.lt.s32.totalorder %v394, 0
    %v4165 = vand.u32 %v394, 2139095040
    %v4166 = vshrl.u32 %v4165, 23
    %v4167 = vsub.s32 %v4166, 127
    %v4168 = vand.u32 2147483647, %v394
    %v4169 = vand.u32 %v4168, 8388607
    %v4170 = vor.u32 %v4169, 8388608
    %v4171 = vsub.s32 0, %v4170
    %v4172 = vadd.s32 %v4167, 1
    %vm4173 = vcmp.gt.s32.totalorder %v4172, 0
    %v4174 = vsel %vm4173, %v4172, 0
    %v4175 = vshrl.u32 %v4174, 5
    %v4176 = vand.u32 %v4174, 31
    %v4177 = vsub.s32 32, %v4176
    %v4178 = vshrl.u32 683565275, %v4177
    %v4179 = vshll.u32 683565275, %v4176
    %v4180 = vshrl.u32 2475754826, %v4177
    %v4181 = vor.u32 %v4179, %v4180
    %v4182 = vshll.u32 2475754826, %v4176
    %v4183 = vshrl.u32 2131351028, %v4177
    %v4184 = vor.u32 %v4182, %v4183
    %v4185 = vshll.u32 2131351028, %v4176
    %v4186 = vshrl.u32 2102212464, %v4177
    %v4187 = vor.u32 %v4185, %v4186
    %v4188 = vshll.u32 2102212464, %v4176
    %v4189 = vshrl.u32 920167782, %v4177
    %v4190 = vor.u32 %v4188, %v4189
    %v4191 = vshll.u32 920167782, %v4176
    %v4192 = vshrl.u32 1326507024, %v4177
    %v4193 = vor.u32 %v4191, %v4192
    %vm4194 = vcmp.lt.s32.totalorder %v4175, 1
    %vm4195 = vcmp.lt.s32.totalorder %v4175, 2
    %vm4196 = vcmp.lt.s32.totalorder %v4175, 3
    %vm4197 = vcmp.lt.s32.totalorder %v4175, 4
    %v4198 = vsel %vm4194, %v4178, %v4181
    %v4199 = vsel %vm4197, %v4187, 2102212464
    %v4200 = vsel %vm4196, %v4184, %v4199
    %v4201 = vsel %vm4195, %v4198, %v4200
    %v4202 = vsel %vm4194, %v4181, %v4184
    %v4203 = vsel %vm4197, %v4190, 920167782
    %v4204 = vsel %vm4196, %v4187, %v4203
    %v4205 = vsel %vm4195, %v4202, %v4204
    %v4206 = vsel %vm4194, %v4184, %v4187
    %v4207 = vsel %vm4197, %v4193, 1326507024
    %v4208 = vsel %vm4196, %v4190, %v4207
    %v4209 = vsel %vm4195, %v4206, %v4208
    %v4210 = vshll.u32 %v4170, 8
    %v4211 = vmul.u32.u64.compose %v4210, %v4209
    %v4212 = vextract.low.u32 %v4211
    %v4213 = vextract.high.u32 %v4211
    %v4214 = vmul.u32.u64.compose %v4210, %v4205
    %v4215 = vextract.low.u32 %v4214
    %v4216 = vextract.high.u32 %v4214
    %v4217 = vmul.u32 %v4210, %v4201
    %v4218 = vadd.s32 %v4213, %v4215
    %vm4219 = vc.u32 %v4213, %v4215
    %v4220 = vadd.s32 %v4216, 1
    %v4221 = vsel %vm4219, %v4220, %v4216
    %v4222 = vadd.s32 %v4217, %v4221
    %v4223 = vadd.s32 %v4222, 536870912
    %v4224 = vshrl.u32 %v4223, 30
    %v4225 = vshll.u32 %v4224, 30
    %v4226 = vsub.s32 %v4222, %v4225
    %vm4227 = vcmp.lt.s32.totalorder %v4226, 0
    %v4228 = vsub.s32 0, %v4226
    %v4229 = vsel %vm4227, %v4228, %v4226
    %v4230 = vclz %v4229
    %v4231 = vsub.s32 %v4230, 2
    %vm4232 = vcmp.gt.s32.totalorder 0, %v4231
    %v4233 = vsel %vm4232, 0, %v4231
    %v4234 = vsub.s32 32, %v4233
    %v4235 = vshll.u32 %v4226, %v4233
    %v4236 = vshrl.u32 %v4218, %v4234
    %v4237 = vor.u32 %v4235, %v4236
    %v4238 = vsub.s32 4294967266, %v4233
    %v4239 = vadd.s32 %v4238, 127
    %v4240 = vshll.u32 %v4239, 23
    %v4241 = vor.u32 4788187, %v4240
    %v4242 = vand.u32 2147483647, %v4241
    %v4244 = vcvt.s32.f32 %v4237
    %v4245 = vmul.f32 %v4244, %v4242
    %v4246 = vxor.u32 %v4245, 2147483648
    %v4247 = vsel %vm4164, %v4246, %v4245
    %v4248 = vsub.s32 4, %v4224
    %v4249 = vsel %vm4164, %v4248, %v4224
    %v4250 = vsel %vm4163, %v394, %v4247
    %v4251 = vsel %vm4163, 0, %v4249
    %v4252 = vcosq.f32.pop %v4250
    %v4253 = vsinq.f32.pop %v4250
    %vm4254 = vweird.f32 %v394
    %v4255 = vand.u32 %v4251, 3
    %vm4256 = vcmp.lt.s32.totalorder %v4255, 2
    %vm4257 = vcmp.eq.s32.totalorder %v4255, 0
    %v4258 = vxor.u32 %v4253, 2147483648
    %v4259 = vsel %vm4257, %v4252, %v4258
    %vm4260 = vcmp.eq.s32.totalorder %v4255, 2
    %v4261 = vxor.u32 %v4252, 2147483648
    %v4262 = vsel %vm4260, %v4261, %v4253
    %v4263 = vsel %vm4256, %v4259, %v4262
    %v4264 = vsel %vm4254, nan, %v4263
    %v4265 = vand.u32 2147483647, %v395
    %vm4266 = vcmp.le.f32.partialorder %v4265, 0.7853982
    %vm4267 = vcmp.lt.s32.totalorder %v395, 0
    %v4268 = vand.u32 %v395, 2139095040
    %v4269 = vshrl.u32 %v4268, 23
    %v4270 = vsub.s32 %v4269, 127
    %v4271 = vand.u32 2147483647, %v395
    %v4272 = vand.u32 %v4271, 8388607
    %v4273 = vor.u32 %v4272, 8388608
    %v4274 = vsub.s32 0, %v4273
    %v4275 = vadd.s32 %v4270, 1
    %vm4276 = vcmp.gt.s32.totalorder %v4275, 0
    %v4277 = vsel %vm4276, %v4275, 0
    %v4278 = vshrl.u32 %v4277, 5
    %v4279 = vand.u32 %v4277, 31
    %v4280 = vsub.s32 32, %v4279
    %v4281 = vshrl.u32 683565275, %v4280
    %v4282 = vshll.u32 683565275, %v4279
    %v4283 = vshrl.u32 2475754826, %v4280
    %v4284 = vor.u32 %v4282, %v4283
    %v4285 = vshll.u32 2475754826, %v4279
    %v4286 = vshrl.u32 2131351028, %v4280
    %v4287 = vor.u32 %v4285, %v4286
    %v4288 = vshll.u32 2131351028, %v4279
    %v4289 = vshrl.u32 2102212464, %v4280
    %v4290 = vor.u32 %v4288, %v4289
    %v4291 = vshll.u32 2102212464, %v4279
    %v4292 = vshrl.u32 920167782, %v4280
    %v4293 = vor.u32 %v4291, %v4292
    %v4294 = vshll.u32 920167782, %v4279
    %v4295 = vshrl.u32 1326507024, %v4280
    %v4296 = vor.u32 %v4294, %v4295
    %vm4297 = vcmp.lt.s32.totalorder %v4278, 1
    %vm4298 = vcmp.lt.s32.totalorder %v4278, 2
    %vm4299 = vcmp.lt.s32.totalorder %v4278, 3
    %vm4300 = vcmp.lt.s32.totalorder %v4278, 4
    %v4301 = vsel %vm4297, %v4281, %v4284
    %v4302 = vsel %vm4300, %v4290, 2102212464
    %v4303 = vsel %vm4299, %v4287, %v4302
    %v4304 = vsel %vm4298, %v4301, %v4303
    %v4305 = vsel %vm4297, %v4284, %v4287
    %v4306 = vsel %vm4300, %v4293, 920167782
    %v4307 = vsel %vm4299, %v4290, %v4306
    %v4308 = vsel %vm4298, %v4305, %v4307
    %v4309 = vsel %vm4297, %v4287, %v4290
    %v4310 = vsel %vm4300, %v4296, 1326507024
    %v4311 = vsel %vm4299, %v4293, %v4310
    %v4312 = vsel %vm4298, %v4309, %v4311
    %v4313 = vshll.u32 %v4273, 8
    %v4314 = vmul.u32.u64.compose %v4313, %v4312
    %v4315 = vextract.low.u32 %v4314
    %v4316 = vextract.high.u32 %v4314
    %v4317 = vmul.u32.u64.compose %v4313, %v4308
    %v4318 = vextract.low.u32 %v4317
    %v4319 = vextract.high.u32 %v4317
    %v4320 = vmul.u32 %v4313, %v4304
    %v4321 = vadd.s32 %v4316, %v4318
    %vm4322 = vc.u32 %v4316, %v4318
    %v4323 = vadd.s32 %v4319, 1
    %v4324 = vsel %vm4322, %v4323, %v4319
    %v4325 = vadd.s32 %v4320, %v4324
    %v4326 = vadd.s32 %v4325, 536870912
    %v4327 = vshrl.u32 %v4326, 30
    %v4328 = vshll.u32 %v4327, 30
    %v4329 = vsub.s32 %v4325, %v4328
    %vm4330 = vcmp.lt.s32.totalorder %v4329, 0
    %v4331 = vsub.s32 0, %v4329
    %v4332 = vsel %vm4330, %v4331, %v4329
    %v4333 = vclz %v4332
    %v4334 = vsub.s32 %v4333, 2
    %vm4335 = vcmp.gt.s32.totalorder 0, %v4334
    %v4336 = vsel %vm4335, 0, %v4334
    %v4337 = vsub.s32 32, %v4336
    %v4338 = vshll.u32 %v4329, %v4336
    %v4339 = vshrl.u32 %v4321, %v4337
    %v4340 = vor.u32 %v4338, %v4339
    %v4341 = vsub.s32 4294967266, %v4336
    %v4342 = vadd.s32 %v4341, 127
    %v4343 = vshll.u32 %v4342, 23
    %v4344 = vor.u32 4788187, %v4343
    %v4345 = vand.u32 2147483647, %v4344
    %v4347 = vcvt.s32.f32 %v4340
    %v4348 = vmul.f32 %v4347, %v4345
    %v4349 = vxor.u32 %v4348, 2147483648
    %v4350 = vsel %vm4267, %v4349, %v4348
    %v4351 = vsub.s32 4, %v4327
    %v4352 = vsel %vm4267, %v4351, %v4327
    %v4353 = vsel %vm4266, %v395, %v4350
    %v4354 = vsel %vm4266, 0, %v4352
    %v4355 = vcosq.f32.pop %v4353
    %v4356 = vsinq.f32.pop %v4353
    %vm4357 = vweird.f32 %v395
    %v4358 = vand.u32 %v4354, 3
    %vm4359 = vcmp.lt.s32.totalorder %v4358, 2
    %vm4360 = vcmp.eq.s32.totalorder %v4358, 0
    %v4361 = vxor.u32 %v4356, 2147483648
    %v4362 = vsel %vm4360, %v4355, %v4361
    %vm4363 = vcmp.eq.s32.totalorder %v4358, 2
    %v4364 = vxor.u32 %v4355, 2147483648
    %v4365 = vsel %vm4363, %v4364, %v4356
    %v4366 = vsel %vm4359, %v4362, %v4365
    %v4367 = vsel %vm4357, nan, %v4366
    %v4368 = vand.u32 2147483647, %v396
    %vm4369 = vcmp.le.f32.partialorder %v4368, 0.7853982
    %vm4370 = vcmp.lt.s32.totalorder %v396, 0
    %v4371 = vand.u32 %v396, 2139095040
    %v4372 = vshrl.u32 %v4371, 23
    %v4373 = vsub.s32 %v4372, 127
    %v4374 = vand.u32 2147483647, %v396
    %v4375 = vand.u32 %v4374, 8388607
    %v4376 = vor.u32 %v4375, 8388608
    %v4377 = vsub.s32 0, %v4376
    %v4378 = vadd.s32 %v4373, 1
    %vm4379 = vcmp.gt.s32.totalorder %v4378, 0
    %v4380 = vsel %vm4379, %v4378, 0
    %v4381 = vshrl.u32 %v4380, 5
    %v4382 = vand.u32 %v4380, 31
    %v4383 = vsub.s32 32, %v4382
    %v4384 = vshrl.u32 683565275, %v4383
    %v4385 = vshll.u32 683565275, %v4382
    %v4386 = vshrl.u32 2475754826, %v4383
    %v4387 = vor.u32 %v4385, %v4386
    %v4388 = vshll.u32 2475754826, %v4382
    %v4389 = vshrl.u32 2131351028, %v4383
    %v4390 = vor.u32 %v4388, %v4389
    %v4391 = vshll.u32 2131351028, %v4382
    %v4392 = vshrl.u32 2102212464, %v4383
    %v4393 = vor.u32 %v4391, %v4392
    %v4394 = vshll.u32 2102212464, %v4382
    %v4395 = vshrl.u32 920167782, %v4383
    %v4396 = vor.u32 %v4394, %v4395
    %v4397 = vshll.u32 920167782, %v4382
    %v4398 = vshrl.u32 1326507024, %v4383
    %v4399 = vor.u32 %v4397, %v4398
    %vm4400 = vcmp.lt.s32.totalorder %v4381, 1
    %vm4401 = vcmp.lt.s32.totalorder %v4381, 2
    %vm4402 = vcmp.lt.s32.totalorder %v4381, 3
    %vm4403 = vcmp.lt.s32.totalorder %v4381, 4
    %v4404 = vsel %vm4400, %v4384, %v4387
    %v4405 = vsel %vm4403, %v4393, 2102212464
    %v4406 = vsel %vm4402, %v4390, %v4405
    %v4407 = vsel %vm4401, %v4404, %v4406
    %v4408 = vsel %vm4400, %v4387, %v4390
    %v4409 = vsel %vm4403, %v4396, 920167782
    %v4410 = vsel %vm4402, %v4393, %v4409
    %v4411 = vsel %vm4401, %v4408, %v4410
    %v4412 = vsel %vm4400, %v4390, %v4393
    %v4413 = vsel %vm4403, %v4399, 1326507024
    %v4414 = vsel %vm4402, %v4396, %v4413
    %v4415 = vsel %vm4401, %v4412, %v4414
    %v4416 = vshll.u32 %v4376, 8
    %v4417 = vmul.u32.u64.compose %v4416, %v4415
    %v4418 = vextract.low.u32 %v4417
    %v4419 = vextract.high.u32 %v4417
    %v4420 = vmul.u32.u64.compose %v4416, %v4411
    %v4421 = vextract.low.u32 %v4420
    %v4422 = vextract.high.u32 %v4420
    %v4423 = vmul.u32 %v4416, %v4407
    %v4424 = vadd.s32 %v4419, %v4421
    %vm4425 = vc.u32 %v4419, %v4421
    %v4426 = vadd.s32 %v4422, 1
    %v4427 = vsel %vm4425, %v4426, %v4422
    %v4428 = vadd.s32 %v4423, %v4427
    %v4429 = vadd.s32 %v4428, 536870912
    %v4430 = vshrl.u32 %v4429, 30
    %v4431 = vshll.u32 %v4430, 30
    %v4432 = vsub.s32 %v4428, %v4431
    %vm4433 = vcmp.lt.s32.totalorder %v4432, 0
    %v4434 = vsub.s32 0, %v4432
    %v4435 = vsel %vm4433, %v4434, %v4432
    %v4436 = vclz %v4435
    %v4437 = vsub.s32 %v4436, 2
    %vm4438 = vcmp.gt.s32.totalorder 0, %v4437
    %v4439 = vsel %vm4438, 0, %v4437
    %v4440 = vsub.s32 32, %v4439
    %v4441 = vshll.u32 %v4432, %v4439
    %v4442 = vshrl.u32 %v4424, %v4440
    %v4443 = vor.u32 %v4441, %v4442
    %v4444 = vsub.s32 4294967266, %v4439
    %v4445 = vadd.s32 %v4444, 127
    %v4446 = vshll.u32 %v4445, 23
    %v4447 = vor.u32 4788187, %v4446
    %v4448 = vand.u32 2147483647, %v4447
    %v4450 = vcvt.s32.f32 %v4443
    %v4451 = vmul.f32 %v4450, %v4448
    %v4452 = vxor.u32 %v4451, 2147483648
    %v4453 = vsel %vm4370, %v4452, %v4451
    %v4454 = vsub.s32 4, %v4430
    %v4455 = vsel %vm4370, %v4454, %v4430
    %v4456 = vsel %vm4369, %v396, %v4453
    %v4457 = vsel %vm4369, 0, %v4455
    %v4458 = vcosq.f32.pop %v4456
    %v4459 = vsinq.f32.pop %v4456
    %vm4460 = vweird.f32 %v396
    %v4461 = vand.u32 %v4457, 3
    %vm4462 = vcmp.lt.s32.totalorder %v4461, 2
    %vm4463 = vcmp.eq.s32.totalorder %v4461, 0
    %v4464 = vxor.u32 %v4459, 2147483648
    %v4465 = vsel %vm4463, %v4458, %v4464
    %vm4466 = vcmp.eq.s32.totalorder %v4461, 2
    %v4467 = vxor.u32 %v4458, 2147483648
    %v4468 = vsel %vm4466, %v4467, %v4459
    %v4469 = vsel %vm4462, %v4465, %v4468
    %v4470 = vsel %vm4460, nan, %v4469
    %v4471 = vand.u32 2147483647, %v397
    %vm4472 = vcmp.le.f32.partialorder %v4471, 0.7853982
    %vm4473 = vcmp.lt.s32.totalorder %v397, 0
    %v4474 = vand.u32 %v397, 2139095040
    %v4475 = vshrl.u32 %v4474, 23
    %v4476 = vsub.s32 %v4475, 127
    %v4477 = vand.u32 2147483647, %v397
    %v4478 = vand.u32 %v4477, 8388607
    %v4479 = vor.u32 %v4478, 8388608
    %v4480 = vsub.s32 0, %v4479
    %v4481 = vadd.s32 %v4476, 1
    %vm4482 = vcmp.gt.s32.totalorder %v4481, 0
    %v4483 = vsel %vm4482, %v4481, 0
    %v4484 = vshrl.u32 %v4483, 5
    %v4485 = vand.u32 %v4483, 31
    %v4486 = vsub.s32 32, %v4485
    %v4487 = vshrl.u32 683565275, %v4486
    %v4488 = vshll.u32 683565275, %v4485
    %v4489 = vshrl.u32 2475754826, %v4486
    %v4490 = vor.u32 %v4488, %v4489
    %v4491 = vshll.u32 2475754826, %v4485
    %v4492 = vshrl.u32 2131351028, %v4486
    %v4493 = vor.u32 %v4491, %v4492
    %v4494 = vshll.u32 2131351028, %v4485
    %v4495 = vshrl.u32 2102212464, %v4486
    %v4496 = vor.u32 %v4494, %v4495
    %v4497 = vshll.u32 2102212464, %v4485
    %v4498 = vshrl.u32 920167782, %v4486
    %v4499 = vor.u32 %v4497, %v4498
    %v4500 = vshll.u32 920167782, %v4485
    %v4501 = vshrl.u32 1326507024, %v4486
    %v4502 = vor.u32 %v4500, %v4501
    %vm4503 = vcmp.lt.s32.totalorder %v4484, 1
    %vm4504 = vcmp.lt.s32.totalorder %v4484, 2
    %vm4505 = vcmp.lt.s32.totalorder %v4484, 3
    %vm4506 = vcmp.lt.s32.totalorder %v4484, 4
    %v4507 = vsel %vm4503, %v4487, %v4490
    %v4508 = vsel %vm4506, %v4496, 2102212464
    %v4509 = vsel %vm4505, %v4493, %v4508
    %v4510 = vsel %vm4504, %v4507, %v4509
    %v4511 = vsel %vm4503, %v4490, %v4493
    %v4512 = vsel %vm4506, %v4499, 920167782
    %v4513 = vsel %vm4505, %v4496, %v4512
    %v4514 = vsel %vm4504, %v4511, %v4513
    %v4515 = vsel %vm4503, %v4493, %v4496
    %v4516 = vsel %vm4506, %v4502, 1326507024
    %v4517 = vsel %vm4505, %v4499, %v4516
    %v4518 = vsel %vm4504, %v4515, %v4517
    %v4519 = vshll.u32 %v4479, 8
    %v4520 = vmul.u32.u64.compose %v4519, %v4518
    %v4521 = vextract.low.u32 %v4520
    %v4522 = vextract.high.u32 %v4520
    %v4523 = vmul.u32.u64.compose %v4519, %v4514
    %v4524 = vextract.low.u32 %v4523
    %v4525 = vextract.high.u32 %v4523
    %v4526 = vmul.u32 %v4519, %v4510
    %v4527 = vadd.s32 %v4522, %v4524
    %vm4528 = vc.u32 %v4522, %v4524
    %v4529 = vadd.s32 %v4525, 1
    %v4530 = vsel %vm4528, %v4529, %v4525
    %v4531 = vadd.s32 %v4526, %v4530
    %v4532 = vadd.s32 %v4531, 536870912
    %v4533 = vshrl.u32 %v4532, 30
    %v4534 = vshll.u32 %v4533, 30
    %v4535 = vsub.s32 %v4531, %v4534
    %vm4536 = vcmp.lt.s32.totalorder %v4535, 0
    %v4537 = vsub.s32 0, %v4535
    %v4538 = vsel %vm4536, %v4537, %v4535
    %v4539 = vclz %v4538
    %v4540 = vsub.s32 %v4539, 2
    %vm4541 = vcmp.gt.s32.totalorder 0, %v4540
    %v4542 = vsel %vm4541, 0, %v4540
    %v4543 = vsub.s32 32, %v4542
    %v4544 = vshll.u32 %v4535, %v4542
    %v4545 = vshrl.u32 %v4527, %v4543
    %v4546 = vor.u32 %v4544, %v4545
    %v4547 = vsub.s32 4294967266, %v4542
    %v4548 = vadd.s32 %v4547, 127
    %v4549 = vshll.u32 %v4548, 23
    %v4550 = vor.u32 4788187, %v4549
    %v4551 = vand.u32 2147483647, %v4550
    %v4553 = vcvt.s32.f32 %v4546
    %v4554 = vmul.f32 %v4553, %v4551
    %v4555 = vxor.u32 %v4554, 2147483648
    %v4556 = vsel %vm4473, %v4555, %v4554
    %v4557 = vsub.s32 4, %v4533
    %v4558 = vsel %vm4473, %v4557, %v4533
    %v4559 = vsel %vm4472, %v397, %v4556
    %v4560 = vsel %vm4472, 0, %v4558
    %v4561 = vcosq.f32.pop %v4559
    %v4562 = vsinq.f32.pop %v4559
    %vm4563 = vweird.f32 %v397
    %v4564 = vand.u32 %v4560, 3
    %vm4565 = vcmp.lt.s32.totalorder %v4564, 2
    %vm4566 = vcmp.eq.s32.totalorder %v4564, 0
    %v4567 = vxor.u32 %v4562, 2147483648
    %v4568 = vsel %vm4566, %v4561, %v4567
    %vm4569 = vcmp.eq.s32.totalorder %v4564, 2
    %v4570 = vxor.u32 %v4561, 2147483648
    %v4571 = vsel %vm4569, %v4570, %v4562
    %v4572 = vsel %vm4565, %v4568, %v4571
    %v4573 = vsel %vm4563, nan, %v4572
    %v4574 = vand.u32 2147483647, %v398
    %vm4575 = vcmp.le.f32.partialorder %v4574, 0.7853982
    %vm4576 = vcmp.lt.s32.totalorder %v398, 0
    %v4577 = vand.u32 %v398, 2139095040
    %v4578 = vshrl.u32 %v4577, 23
    %v4579 = vsub.s32 %v4578, 127
    %v4580 = vand.u32 2147483647, %v398
    %v4581 = vand.u32 %v4580, 8388607
    %v4582 = vor.u32 %v4581, 8388608
    %v4583 = vsub.s32 0, %v4582
    %v4584 = vadd.s32 %v4579, 1
    %vm4585 = vcmp.gt.s32.totalorder %v4584, 0
    %v4586 = vsel %vm4585, %v4584, 0
    %v4587 = vshrl.u32 %v4586, 5
    %v4588 = vand.u32 %v4586, 31
    %v4589 = vsub.s32 32, %v4588
    %v4590 = vshrl.u32 683565275, %v4589
    %v4591 = vshll.u32 683565275, %v4588
    %v4592 = vshrl.u32 2475754826, %v4589
    %v4593 = vor.u32 %v4591, %v4592
    %v4594 = vshll.u32 2475754826, %v4588
    %v4595 = vshrl.u32 2131351028, %v4589
    %v4596 = vor.u32 %v4594, %v4595
    %v4597 = vshll.u32 2131351028, %v4588
    %v4598 = vshrl.u32 2102212464, %v4589
    %v4599 = vor.u32 %v4597, %v4598
    %v4600 = vshll.u32 2102212464, %v4588
    %v4601 = vshrl.u32 920167782, %v4589
    %v4602 = vor.u32 %v4600, %v4601
    %v4603 = vshll.u32 920167782, %v4588
    %v4604 = vshrl.u32 1326507024, %v4589
    %v4605 = vor.u32 %v4603, %v4604
    %vm4606 = vcmp.lt.s32.totalorder %v4587, 1
    %vm4607 = vcmp.lt.s32.totalorder %v4587, 2
    %vm4608 = vcmp.lt.s32.totalorder %v4587, 3
    %vm4609 = vcmp.lt.s32.totalorder %v4587, 4
    %v4610 = vsel %vm4606, %v4590, %v4593
    %v4611 = vsel %vm4609, %v4599, 2102212464
    %v4612 = vsel %vm4608, %v4596, %v4611
    %v4613 = vsel %vm4607, %v4610, %v4612
    %v4614 = vsel %vm4606, %v4593, %v4596
    %v4615 = vsel %vm4609, %v4602, 920167782
    %v4616 = vsel %vm4608, %v4599, %v4615
    %v4617 = vsel %vm4607, %v4614, %v4616
    %v4618 = vsel %vm4606, %v4596, %v4599
    %v4619 = vsel %vm4609, %v4605, 1326507024
    %v4620 = vsel %vm4608, %v4602, %v4619
    %v4621 = vsel %vm4607, %v4618, %v4620
    %v4622 = vshll.u32 %v4582, 8
    %v4623 = vmul.u32.u64.compose %v4622, %v4621
    %v4624 = vextract.low.u32 %v4623
    %v4625 = vextract.high.u32 %v4623
    %v4626 = vmul.u32.u64.compose %v4622, %v4617
    %v4627 = vextract.low.u32 %v4626
    %v4628 = vextract.high.u32 %v4626
    %v4629 = vmul.u32 %v4622, %v4613
    %v4630 = vadd.s32 %v4625, %v4627
    %vm4631 = vc.u32 %v4625, %v4627
    %v4632 = vadd.s32 %v4628, 1
    %v4633 = vsel %vm4631, %v4632, %v4628
    %v4634 = vadd.s32 %v4629, %v4633
    %v4635 = vadd.s32 %v4634, 536870912
    %v4636 = vshrl.u32 %v4635, 30
    %v4637 = vshll.u32 %v4636, 30
    %v4638 = vsub.s32 %v4634, %v4637
    %vm4639 = vcmp.lt.s32.totalorder %v4638, 0
    %v4640 = vsub.s32 0, %v4638
    %v4641 = vsel %vm4639, %v4640, %v4638
    %v4642 = vclz %v4641
    %v4643 = vsub.s32 %v4642, 2
    %vm4644 = vcmp.gt.s32.totalorder 0, %v4643
    %v4645 = vsel %vm4644, 0, %v4643
    %v4646 = vsub.s32 32, %v4645
    %v4647 = vshll.u32 %v4638, %v4645
    %v4648 = vshrl.u32 %v4630, %v4646
    %v4649 = vor.u32 %v4647, %v4648
    %v4650 = vsub.s32 4294967266, %v4645
    %v4651 = vadd.s32 %v4650, 127
    %v4652 = vshll.u32 %v4651, 23
    %v4653 = vor.u32 4788187, %v4652
    %v4654 = vand.u32 2147483647, %v4653
    %v4656 = vcvt.s32.f32 %v4649
    %v4657 = vmul.f32 %v4656, %v4654
    %v4658 = vxor.u32 %v4657, 2147483648
    %v4659 = vsel %vm4576, %v4658, %v4657
    %v4660 = vsub.s32 4, %v4636
    %v4661 = vsel %vm4576, %v4660, %v4636
    %v4662 = vsel %vm4575, %v398, %v4659
    %v4663 = vsel %vm4575, 0, %v4661
    %v4664 = vcosq.f32.pop %v4662
    %v4665 = vsinq.f32.pop %v4662
    %vm4666 = vweird.f32 %v398
    %v4667 = vand.u32 %v4663, 3
    %vm4668 = vcmp.lt.s32.totalorder %v4667, 2
    %vm4669 = vcmp.eq.s32.totalorder %v4667, 0
    %v4670 = vxor.u32 %v4665, 2147483648
    %v4671 = vsel %vm4669, %v4664, %v4670
    %vm4672 = vcmp.eq.s32.totalorder %v4667, 2
    %v4673 = vxor.u32 %v4664, 2147483648
    %v4674 = vsel %vm4672, %v4673, %v4665
    %v4675 = vsel %vm4668, %v4671, %v4674
    %v4676 = vsel %vm4666, nan, %v4675
    %v4677 = vand.u32 2147483647, %v399
    %vm4678 = vcmp.le.f32.partialorder %v4677, 0.7853982
    %vm4679 = vcmp.lt.s32.totalorder %v399, 0
    %v4680 = vand.u32 %v399, 2139095040
    %v4681 = vshrl.u32 %v4680, 23
    %v4682 = vsub.s32 %v4681, 127
    %v4683 = vand.u32 2147483647, %v399
    %v4684 = vand.u32 %v4683, 8388607
    %v4685 = vor.u32 %v4684, 8388608
    %v4686 = vsub.s32 0, %v4685
    %v4687 = vadd.s32 %v4682, 1
    %vm4688 = vcmp.gt.s32.totalorder %v4687, 0
    %v4689 = vsel %vm4688, %v4687, 0
    %v4690 = vshrl.u32 %v4689, 5
    %v4691 = vand.u32 %v4689, 31
    %v4692 = vsub.s32 32, %v4691
    %v4693 = vshrl.u32 683565275, %v4692
    %v4694 = vshll.u32 683565275, %v4691
    %v4695 = vshrl.u32 2475754826, %v4692
    %v4696 = vor.u32 %v4694, %v4695
    %v4697 = vshll.u32 2475754826, %v4691
    %v4698 = vshrl.u32 2131351028, %v4692
    %v4699 = vor.u32 %v4697, %v4698
    %v4700 = vshll.u32 2131351028, %v4691
    %v4701 = vshrl.u32 2102212464, %v4692
    %v4702 = vor.u32 %v4700, %v4701
    %v4703 = vshll.u32 2102212464, %v4691
    %v4704 = vshrl.u32 920167782, %v4692
    %v4705 = vor.u32 %v4703, %v4704
    %v4706 = vshll.u32 920167782, %v4691
    %v4707 = vshrl.u32 1326507024, %v4692
    %v4708 = vor.u32 %v4706, %v4707
    %vm4709 = vcmp.lt.s32.totalorder %v4690, 1
    %vm4710 = vcmp.lt.s32.totalorder %v4690, 2
    %vm4711 = vcmp.lt.s32.totalorder %v4690, 3
    %vm4712 = vcmp.lt.s32.totalorder %v4690, 4
    %v4713 = vsel %vm4709, %v4693, %v4696
    %v4714 = vsel %vm4712, %v4702, 2102212464
    %v4715 = vsel %vm4711, %v4699, %v4714
    %v4716 = vsel %vm4710, %v4713, %v4715
    %v4717 = vsel %vm4709, %v4696, %v4699
    %v4718 = vsel %vm4712, %v4705, 920167782
    %v4719 = vsel %vm4711, %v4702, %v4718
    %v4720 = vsel %vm4710, %v4717, %v4719
    %v4721 = vsel %vm4709, %v4699, %v4702
    %v4722 = vsel %vm4712, %v4708, 1326507024
    %v4723 = vsel %vm4711, %v4705, %v4722
    %v4724 = vsel %vm4710, %v4721, %v4723
    %v4725 = vshll.u32 %v4685, 8
    %v4726 = vmul.u32.u64.compose %v4725, %v4724
    %v4727 = vextract.low.u32 %v4726
    %v4728 = vextract.high.u32 %v4726
    %v4729 = vmul.u32.u64.compose %v4725, %v4720
    %v4730 = vextract.low.u32 %v4729
    %v4731 = vextract.high.u32 %v4729
    %v4732 = vmul.u32 %v4725, %v4716
    %v4733 = vadd.s32 %v4728, %v4730
    %vm4734 = vc.u32 %v4728, %v4730
    %v4735 = vadd.s32 %v4731, 1
    %v4736 = vsel %vm4734, %v4735, %v4731
    %v4737 = vadd.s32 %v4732, %v4736
    %v4738 = vadd.s32 %v4737, 536870912
    %v4739 = vshrl.u32 %v4738, 30
    %v4740 = vshll.u32 %v4739, 30
    %v4741 = vsub.s32 %v4737, %v4740
    %vm4742 = vcmp.lt.s32.totalorder %v4741, 0
    %v4743 = vsub.s32 0, %v4741
    %v4744 = vsel %vm4742, %v4743, %v4741
    %v4745 = vclz %v4744
    %v4746 = vsub.s32 %v4745, 2
    %vm4747 = vcmp.gt.s32.totalorder 0, %v4746
    %v4748 = vsel %vm4747, 0, %v4746
    %v4749 = vsub.s32 32, %v4748
    %v4750 = vshll.u32 %v4741, %v4748
    %v4751 = vshrl.u32 %v4733, %v4749
    %v4752 = vor.u32 %v4750, %v4751
    %v4753 = vsub.s32 4294967266, %v4748
    %v4754 = vadd.s32 %v4753, 127
    %v4755 = vshll.u32 %v4754, 23
    %v4756 = vor.u32 4788187, %v4755
    %v4757 = vand.u32 2147483647, %v4756
    %v4759 = vcvt.s32.f32 %v4752
    %v4760 = vmul.f32 %v4759, %v4757
    %v4761 = vxor.u32 %v4760, 2147483648
    %v4762 = vsel %vm4679, %v4761, %v4760
    %v4763 = vsub.s32 4, %v4739
    %v4764 = vsel %vm4679, %v4763, %v4739
    %v4765 = vsel %vm4678, %v399, %v4762
    %v4766 = vsel %vm4678, 0, %v4764
    %v4767 = vcosq.f32.pop %v4765
    %v4768 = vsinq.f32.pop %v4765
    %vm4769 = vweird.f32 %v399
    %v4770 = vand.u32 %v4766, 3
    %vm4771 = vcmp.lt.s32.totalorder %v4770, 2
    %vm4772 = vcmp.eq.s32.totalorder %v4770, 0
    %v4773 = vxor.u32 %v4768, 2147483648
    %v4774 = vsel %vm4772, %v4767, %v4773
    %vm4775 = vcmp.eq.s32.totalorder %v4770, 2
    %v4776 = vxor.u32 %v4767, 2147483648
    %v4777 = vsel %vm4775, %v4776, %v4768
    %v4778 = vsel %vm4771, %v4774, %v4777
    %v4779 = vsel %vm4769, nan, %v4778
    %v4780 = vand.u32 2147483647, %v400
    %vm4781 = vcmp.le.f32.partialorder %v4780, 0.7853982
    %vm4782 = vcmp.lt.s32.totalorder %v400, 0
    %v4783 = vand.u32 %v400, 2139095040
    %v4784 = vshrl.u32 %v4783, 23
    %v4785 = vsub.s32 %v4784, 127
    %v4786 = vand.u32 2147483647, %v400
    %v4787 = vand.u32 %v4786, 8388607
    %v4788 = vor.u32 %v4787, 8388608
    %v4789 = vsub.s32 0, %v4788
    %v4790 = vadd.s32 %v4785, 1
    %vm4791 = vcmp.gt.s32.totalorder %v4790, 0
    %v4792 = vsel %vm4791, %v4790, 0
    %v4793 = vshrl.u32 %v4792, 5
    %v4794 = vand.u32 %v4792, 31
    %v4795 = vsub.s32 32, %v4794
    %v4796 = vshrl.u32 683565275, %v4795
    %v4797 = vshll.u32 683565275, %v4794
    %v4798 = vshrl.u32 2475754826, %v4795
    %v4799 = vor.u32 %v4797, %v4798
    %v4800 = vshll.u32 2475754826, %v4794
    %v4801 = vshrl.u32 2131351028, %v4795
    %v4802 = vor.u32 %v4800, %v4801
    %v4803 = vshll.u32 2131351028, %v4794
    %v4804 = vshrl.u32 2102212464, %v4795
    %v4805 = vor.u32 %v4803, %v4804
    %v4806 = vshll.u32 2102212464, %v4794
    %v4807 = vshrl.u32 920167782, %v4795
    %v4808 = vor.u32 %v4806, %v4807
    %v4809 = vshll.u32 920167782, %v4794
    %v4810 = vshrl.u32 1326507024, %v4795
    %v4811 = vor.u32 %v4809, %v4810
    %vm4812 = vcmp.lt.s32.totalorder %v4793, 1
    %vm4813 = vcmp.lt.s32.totalorder %v4793, 2
    %vm4814 = vcmp.lt.s32.totalorder %v4793, 3
    %vm4815 = vcmp.lt.s32.totalorder %v4793, 4
    %v4816 = vsel %vm4812, %v4796, %v4799
    %v4817 = vsel %vm4815, %v4805, 2102212464
    %v4818 = vsel %vm4814, %v4802, %v4817
    %v4819 = vsel %vm4813, %v4816, %v4818
    %v4820 = vsel %vm4812, %v4799, %v4802
    %v4821 = vsel %vm4815, %v4808, 920167782
    %v4822 = vsel %vm4814, %v4805, %v4821
    %v4823 = vsel %vm4813, %v4820, %v4822
    %v4824 = vsel %vm4812, %v4802, %v4805
    %v4825 = vsel %vm4815, %v4811, 1326507024
    %v4826 = vsel %vm4814, %v4808, %v4825
    %v4827 = vsel %vm4813, %v4824, %v4826
    %v4828 = vshll.u32 %v4788, 8
    %v4829 = vmul.u32.u64.compose %v4828, %v4827
    %v4830 = vextract.low.u32 %v4829
    %v4831 = vextract.high.u32 %v4829
    %v4832 = vmul.u32.u64.compose %v4828, %v4823
    %v4833 = vextract.low.u32 %v4832
    %v4834 = vextract.high.u32 %v4832
    %v4835 = vmul.u32 %v4828, %v4819
    %v4836 = vadd.s32 %v4831, %v4833
    %vm4837 = vc.u32 %v4831, %v4833
    %v4838 = vadd.s32 %v4834, 1
    %v4839 = vsel %vm4837, %v4838, %v4834
    %v4840 = vadd.s32 %v4835, %v4839
    %v4841 = vadd.s32 %v4840, 536870912
    %v4842 = vshrl.u32 %v4841, 30
    %v4843 = vshll.u32 %v4842, 30
    %v4844 = vsub.s32 %v4840, %v4843
    %vm4845 = vcmp.lt.s32.totalorder %v4844, 0
    %v4846 = vsub.s32 0, %v4844
    %v4847 = vsel %vm4845, %v4846, %v4844
    %v4848 = vclz %v4847
    %v4849 = vsub.s32 %v4848, 2
    %vm4850 = vcmp.gt.s32.totalorder 0, %v4849
    %v4851 = vsel %vm4850, 0, %v4849
    %v4852 = vsub.s32 32, %v4851
    %v4853 = vshll.u32 %v4844, %v4851
    %v4854 = vshrl.u32 %v4836, %v4852
    %v4855 = vor.u32 %v4853, %v4854
    %v4856 = vsub.s32 4294967266, %v4851
    %v4857 = vadd.s32 %v4856, 127
    %v4858 = vshll.u32 %v4857, 23
    %v4859 = vor.u32 4788187, %v4858
    %v4860 = vand.u32 2147483647, %v4859
    %v4862 = vcvt.s32.f32 %v4855
    %v4863 = vmul.f32 %v4862, %v4860
    %v4864 = vxor.u32 %v4863, 2147483648
    %v4865 = vsel %vm4782, %v4864, %v4863
    %v4866 = vsub.s32 4, %v4842
    %v4867 = vsel %vm4782, %v4866, %v4842
    %v4868 = vsel %vm4781, %v400, %v4865
    %v4869 = vsel %vm4781, 0, %v4867
    %v4870 = vcosq.f32.pop %v4868
    %v4871 = vsinq.f32.pop %v4868
    %vm4872 = vweird.f32 %v400
    %v4873 = vand.u32 %v4869, 3
    %vm4874 = vcmp.lt.s32.totalorder %v4873, 2
    %vm4875 = vcmp.eq.s32.totalorder %v4873, 0
    %v4876 = vxor.u32 %v4871, 2147483648
    %v4877 = vsel %vm4875, %v4870, %v4876
    %vm4878 = vcmp.eq.s32.totalorder %v4873, 2
    %v4879 = vxor.u32 %v4870, 2147483648
    %v4880 = vsel %vm4878, %v4879, %v4871
    %v4881 = vsel %vm4874, %v4877, %v4880
    %v4882 = vsel %vm4872, nan, %v4881
    %v4883 = vand.u32 2147483647, %v401
    %vm4884 = vcmp.le.f32.partialorder %v4883, 0.7853982
    %vm4885 = vcmp.lt.s32.totalorder %v401, 0
    %v4886 = vand.u32 %v401, 2139095040
    %v4887 = vshrl.u32 %v4886, 23
    %v4888 = vsub.s32 %v4887, 127
    %v4889 = vand.u32 2147483647, %v401
    %v4890 = vand.u32 %v4889, 8388607
    %v4891 = vor.u32 %v4890, 8388608
    %v4892 = vsub.s32 0, %v4891
    %v4893 = vadd.s32 %v4888, 1
    %vm4894 = vcmp.gt.s32.totalorder %v4893, 0
    %v4895 = vsel %vm4894, %v4893, 0
    %v4896 = vshrl.u32 %v4895, 5
    %v4897 = vand.u32 %v4895, 31
    %v4898 = vsub.s32 32, %v4897
    %v4899 = vshrl.u32 683565275, %v4898
    %v4900 = vshll.u32 683565275, %v4897
    %v4901 = vshrl.u32 2475754826, %v4898
    %v4902 = vor.u32 %v4900, %v4901
    %v4903 = vshll.u32 2475754826, %v4897
    %v4904 = vshrl.u32 2131351028, %v4898
    %v4905 = vor.u32 %v4903, %v4904
    %v4906 = vshll.u32 2131351028, %v4897
    %v4907 = vshrl.u32 2102212464, %v4898
    %v4908 = vor.u32 %v4906, %v4907
    %v4909 = vshll.u32 2102212464, %v4897
    %v4910 = vshrl.u32 920167782, %v4898
    %v4911 = vor.u32 %v4909, %v4910
    %v4912 = vshll.u32 920167782, %v4897
    %v4913 = vshrl.u32 1326507024, %v4898
    %v4914 = vor.u32 %v4912, %v4913
    %vm4915 = vcmp.lt.s32.totalorder %v4896, 1
    %vm4916 = vcmp.lt.s32.totalorder %v4896, 2
    %vm4917 = vcmp.lt.s32.totalorder %v4896, 3
    %vm4918 = vcmp.lt.s32.totalorder %v4896, 4
    %v4919 = vsel %vm4915, %v4899, %v4902
    %v4920 = vsel %vm4918, %v4908, 2102212464
    %v4921 = vsel %vm4917, %v4905, %v4920
    %v4922 = vsel %vm4916, %v4919, %v4921
    %v4923 = vsel %vm4915, %v4902, %v4905
    %v4924 = vsel %vm4918, %v4911, 920167782
    %v4925 = vsel %vm4917, %v4908, %v4924
    %v4926 = vsel %vm4916, %v4923, %v4925
    %v4927 = vsel %vm4915, %v4905, %v4908
    %v4928 = vsel %vm4918, %v4914, 1326507024
    %v4929 = vsel %vm4917, %v4911, %v4928
    %v4930 = vsel %vm4916, %v4927, %v4929
    %v4931 = vshll.u32 %v4891, 8
    %v4932 = vmul.u32.u64.compose %v4931, %v4930
    %v4933 = vextract.low.u32 %v4932
    %v4934 = vextract.high.u32 %v4932
    %v4935 = vmul.u32.u64.compose %v4931, %v4926
    %v4936 = vextract.low.u32 %v4935
    %v4937 = vextract.high.u32 %v4935
    %v4938 = vmul.u32 %v4931, %v4922
    %v4939 = vadd.s32 %v4934, %v4936
    %vm4940 = vc.u32 %v4934, %v4936
    %v4941 = vadd.s32 %v4937, 1
    %v4942 = vsel %vm4940, %v4941, %v4937
    %v4943 = vadd.s32 %v4938, %v4942
    %v4944 = vadd.s32 %v4943, 536870912
    %v4945 = vshrl.u32 %v4944, 30
    %v4946 = vshll.u32 %v4945, 30
    %v4947 = vsub.s32 %v4943, %v4946
    %vm4948 = vcmp.lt.s32.totalorder %v4947, 0
    %v4949 = vsub.s32 0, %v4947
    %v4950 = vsel %vm4948, %v4949, %v4947
    %v4951 = vclz %v4950
    %v4952 = vsub.s32 %v4951, 2
    %vm4953 = vcmp.gt.s32.totalorder 0, %v4952
    %v4954 = vsel %vm4953, 0, %v4952
    %v4955 = vsub.s32 32, %v4954
    %v4956 = vshll.u32 %v4947, %v4954
    %v4957 = vshrl.u32 %v4939, %v4955
    %v4958 = vor.u32 %v4956, %v4957
    %v4959 = vsub.s32 4294967266, %v4954
    %v4960 = vadd.s32 %v4959, 127
    %v4961 = vshll.u32 %v4960, 23
    %v4962 = vor.u32 4788187, %v4961
    %v4963 = vand.u32 2147483647, %v4962
    %v4965 = vcvt.s32.f32 %v4958
    %v4966 = vmul.f32 %v4965, %v4963
    %v4967 = vxor.u32 %v4966, 2147483648
    %v4968 = vsel %vm4885, %v4967, %v4966
    %v4969 = vsub.s32 4, %v4945
    %v4970 = vsel %vm4885, %v4969, %v4945
    %v4971 = vsel %vm4884, %v401, %v4968
    %v4972 = vsel %vm4884, 0, %v4970
    %v4973 = vcosq.f32.pop %v4971
    %v4974 = vsinq.f32.pop %v4971
    %vm4975 = vweird.f32 %v401
    %v4976 = vand.u32 %v4972, 3
    %vm4977 = vcmp.lt.s32.totalorder %v4976, 2
    %vm4978 = vcmp.eq.s32.totalorder %v4976, 0
    %v4979 = vxor.u32 %v4974, 2147483648
    %v4980 = vsel %vm4978, %v4973, %v4979
    %vm4981 = vcmp.eq.s32.totalorder %v4976, 2
    %v4982 = vxor.u32 %v4973, 2147483648
    %v4983 = vsel %vm4981, %v4982, %v4974
    %v4984 = vsel %vm4977, %v4980, %v4983
    %v4985 = vsel %vm4975, nan, %v4984
    %v4986 = vand.u32 2147483647, %v402
    %vm4987 = vcmp.le.f32.partialorder %v4986, 0.7853982
    %vm4988 = vcmp.lt.s32.totalorder %v402, 0
    %v4989 = vand.u32 %v402, 2139095040
    %v4990 = vshrl.u32 %v4989, 23
    %v4991 = vsub.s32 %v4990, 127
    %v4992 = vand.u32 2147483647, %v402
    %v4993 = vand.u32 %v4992, 8388607
    %v4994 = vor.u32 %v4993, 8388608
    %v4995 = vsub.s32 0, %v4994
    %v4996 = vadd.s32 %v4991, 1
    %vm4997 = vcmp.gt.s32.totalorder %v4996, 0
    %v4998 = vsel %vm4997, %v4996, 0
    %v4999 = vshrl.u32 %v4998, 5
    %v5000 = vand.u32 %v4998, 31
    %v5001 = vsub.s32 32, %v5000
    %v5002 = vshrl.u32 683565275, %v5001
    %v5003 = vshll.u32 683565275, %v5000
    %v5004 = vshrl.u32 2475754826, %v5001
    %v5005 = vor.u32 %v5003, %v5004
    %v5006 = vshll.u32 2475754826, %v5000
    %v5007 = vshrl.u32 2131351028, %v5001
    %v5008 = vor.u32 %v5006, %v5007
    %v5009 = vshll.u32 2131351028, %v5000
    %v5010 = vshrl.u32 2102212464, %v5001
    %v5011 = vor.u32 %v5009, %v5010
    %v5012 = vshll.u32 2102212464, %v5000
    %v5013 = vshrl.u32 920167782, %v5001
    %v5014 = vor.u32 %v5012, %v5013
    %v5015 = vshll.u32 920167782, %v5000
    %v5016 = vshrl.u32 1326507024, %v5001
    %v5017 = vor.u32 %v5015, %v5016
    %vm5018 = vcmp.lt.s32.totalorder %v4999, 1
    %vm5019 = vcmp.lt.s32.totalorder %v4999, 2
    %vm5020 = vcmp.lt.s32.totalorder %v4999, 3
    %vm5021 = vcmp.lt.s32.totalorder %v4999, 4
    %v5022 = vsel %vm5018, %v5002, %v5005
    %v5023 = vsel %vm5021, %v5011, 2102212464
    %v5024 = vsel %vm5020, %v5008, %v5023
    %v5025 = vsel %vm5019, %v5022, %v5024
    %v5026 = vsel %vm5018, %v5005, %v5008
    %v5027 = vsel %vm5021, %v5014, 920167782
    %v5028 = vsel %vm5020, %v5011, %v5027
    %v5029 = vsel %vm5019, %v5026, %v5028
    %v5030 = vsel %vm5018, %v5008, %v5011
    %v5031 = vsel %vm5021, %v5017, 1326507024
    %v5032 = vsel %vm5020, %v5014, %v5031
    %v5033 = vsel %vm5019, %v5030, %v5032
    %v5034 = vshll.u32 %v4994, 8
    %v5035 = vmul.u32.u64.compose %v5034, %v5033
    %v5036 = vextract.low.u32 %v5035
    %v5037 = vextract.high.u32 %v5035
    %v5038 = vmul.u32.u64.compose %v5034, %v5029
    %v5039 = vextract.low.u32 %v5038
    %v5040 = vextract.high.u32 %v5038
    %v5041 = vmul.u32 %v5034, %v5025
    %v5042 = vadd.s32 %v5037, %v5039
    %vm5043 = vc.u32 %v5037, %v5039
    %v5044 = vadd.s32 %v5040, 1
    %v5045 = vsel %vm5043, %v5044, %v5040
    %v5046 = vadd.s32 %v5041, %v5045
    %v5047 = vadd.s32 %v5046, 536870912
    %v5048 = vshrl.u32 %v5047, 30
    %v5049 = vshll.u32 %v5048, 30
    %v5050 = vsub.s32 %v5046, %v5049
    %vm5051 = vcmp.lt.s32.totalorder %v5050, 0
    %v5052 = vsub.s32 0, %v5050
    %v5053 = vsel %vm5051, %v5052, %v5050
    %v5054 = vclz %v5053
    %v5055 = vsub.s32 %v5054, 2
    %vm5056 = vcmp.gt.s32.totalorder 0, %v5055
    %v5057 = vsel %vm5056, 0, %v5055
    %v5058 = vsub.s32 32, %v5057
    %v5059 = vshll.u32 %v5050, %v5057
    %v5060 = vshrl.u32 %v5042, %v5058
    %v5061 = vor.u32 %v5059, %v5060
    %v5062 = vsub.s32 4294967266, %v5057
    %v5063 = vadd.s32 %v5062, 127
    %v5064 = vshll.u32 %v5063, 23
    %v5065 = vor.u32 4788187, %v5064
    %v5066 = vand.u32 2147483647, %v5065
    %v5068 = vcvt.s32.f32 %v5061
    %v5069 = vmul.f32 %v5068, %v5066
    %v5070 = vxor.u32 %v5069, 2147483648
    %v5071 = vsel %vm4988, %v5070, %v5069
    %v5072 = vsub.s32 4, %v5048
    %v5073 = vsel %vm4988, %v5072, %v5048
    %v5074 = vsel %vm4987, %v402, %v5071
    %v5075 = vsel %vm4987, 0, %v5073
    %v5076 = vcosq.f32.pop %v5074
    %v5077 = vsinq.f32.pop %v5074
    %vm5078 = vweird.f32 %v402
    %v5079 = vand.u32 %v5075, 3
    %vm5080 = vcmp.lt.s32.totalorder %v5079, 2
    %vm5081 = vcmp.eq.s32.totalorder %v5079, 0
    %v5082 = vxor.u32 %v5077, 2147483648
    %v5083 = vsel %vm5081, %v5076, %v5082
    %vm5084 = vcmp.eq.s32.totalorder %v5079, 2
    %v5085 = vxor.u32 %v5076, 2147483648
    %v5086 = vsel %vm5084, %v5085, %v5077
    %v5087 = vsel %vm5080, %v5083, %v5086
    %v5088 = vsel %vm5078, nan, %v5087
    %v5089 = vand.u32 2147483647, %v403
    %vm5090 = vcmp.le.f32.partialorder %v5089, 0.7853982
    %vm5091 = vcmp.lt.s32.totalorder %v403, 0
    %v5092 = vand.u32 %v403, 2139095040
    %v5093 = vshrl.u32 %v5092, 23
    %v5094 = vsub.s32 %v5093, 127
    %v5095 = vand.u32 2147483647, %v403
    %v5096 = vand.u32 %v5095, 8388607
    %v5097 = vor.u32 %v5096, 8388608
    %v5098 = vsub.s32 0, %v5097
    %v5099 = vadd.s32 %v5094, 1
    %vm5100 = vcmp.gt.s32.totalorder %v5099, 0
    %v5101 = vsel %vm5100, %v5099, 0
    %v5102 = vshrl.u32 %v5101, 5
    %v5103 = vand.u32 %v5101, 31
    %v5104 = vsub.s32 32, %v5103
    %v5105 = vshrl.u32 683565275, %v5104
    %v5106 = vshll.u32 683565275, %v5103
    %v5107 = vshrl.u32 2475754826, %v5104
    %v5108 = vor.u32 %v5106, %v5107
    %v5109 = vshll.u32 2475754826, %v5103
    %v5110 = vshrl.u32 2131351028, %v5104
    %v5111 = vor.u32 %v5109, %v5110
    %v5112 = vshll.u32 2131351028, %v5103
    %v5113 = vshrl.u32 2102212464, %v5104
    %v5114 = vor.u32 %v5112, %v5113
    %v5115 = vshll.u32 2102212464, %v5103
    %v5116 = vshrl.u32 920167782, %v5104
    %v5117 = vor.u32 %v5115, %v5116
    %v5118 = vshll.u32 920167782, %v5103
    %v5119 = vshrl.u32 1326507024, %v5104
    %v5120 = vor.u32 %v5118, %v5119
    %vm5121 = vcmp.lt.s32.totalorder %v5102, 1
    %vm5122 = vcmp.lt.s32.totalorder %v5102, 2
    %vm5123 = vcmp.lt.s32.totalorder %v5102, 3
    %vm5124 = vcmp.lt.s32.totalorder %v5102, 4
    %v5125 = vsel %vm5121, %v5105, %v5108
    %v5126 = vsel %vm5124, %v5114, 2102212464
    %v5127 = vsel %vm5123, %v5111, %v5126
    %v5128 = vsel %vm5122, %v5125, %v5127
    %v5129 = vsel %vm5121, %v5108, %v5111
    %v5130 = vsel %vm5124, %v5117, 920167782
    %v5131 = vsel %vm5123, %v5114, %v5130
    %v5132 = vsel %vm5122, %v5129, %v5131
    %v5133 = vsel %vm5121, %v5111, %v5114
    %v5134 = vsel %vm5124, %v5120, 1326507024
    %v5135 = vsel %vm5123, %v5117, %v5134
    %v5136 = vsel %vm5122, %v5133, %v5135
    %v5137 = vshll.u32 %v5097, 8
    %v5138 = vmul.u32.u64.compose %v5137, %v5136
    %v5139 = vextract.low.u32 %v5138
    %v5140 = vextract.high.u32 %v5138
    %v5141 = vmul.u32.u64.compose %v5137, %v5132
    %v5142 = vextract.low.u32 %v5141
    %v5143 = vextract.high.u32 %v5141
    %v5144 = vmul.u32 %v5137, %v5128
    %v5145 = vadd.s32 %v5140, %v5142
    %vm5146 = vc.u32 %v5140, %v5142
    %v5147 = vadd.s32 %v5143, 1
    %v5148 = vsel %vm5146, %v5147, %v5143
    %v5149 = vadd.s32 %v5144, %v5148
    %v5150 = vadd.s32 %v5149, 536870912
    %v5151 = vshrl.u32 %v5150, 30
    %v5152 = vshll.u32 %v5151, 30
    %v5153 = vsub.s32 %v5149, %v5152
    %vm5154 = vcmp.lt.s32.totalorder %v5153, 0
    %v5155 = vsub.s32 0, %v5153
    %v5156 = vsel %vm5154, %v5155, %v5153
    %v5157 = vclz %v5156
    %v5158 = vsub.s32 %v5157, 2
    %vm5159 = vcmp.gt.s32.totalorder 0, %v5158
    %v5160 = vsel %vm5159, 0, %v5158
    %v5161 = vsub.s32 32, %v5160
    %v5162 = vshll.u32 %v5153, %v5160
    %v5163 = vshrl.u32 %v5145, %v5161
    %v5164 = vor.u32 %v5162, %v5163
    %v5165 = vsub.s32 4294967266, %v5160
    %v5166 = vadd.s32 %v5165, 127
    %v5167 = vshll.u32 %v5166, 23
    %v5168 = vor.u32 4788187, %v5167
    %v5169 = vand.u32 2147483647, %v5168
    %v5171 = vcvt.s32.f32 %v5164
    %v5172 = vmul.f32 %v5171, %v5169
    %v5173 = vxor.u32 %v5172, 2147483648
    %v5174 = vsel %vm5091, %v5173, %v5172
    %v5175 = vsub.s32 4, %v5151
    %v5176 = vsel %vm5091, %v5175, %v5151
    %v5177 = vsel %vm5090, %v403, %v5174
    %v5178 = vsel %vm5090, 0, %v5176
    %v5179 = vcosq.f32.pop %v5177
    %v5180 = vsinq.f32.pop %v5177
    %vm5181 = vweird.f32 %v403
    %v5182 = vand.u32 %v5178, 3
    %vm5183 = vcmp.lt.s32.totalorder %v5182, 2
    %vm5184 = vcmp.eq.s32.totalorder %v5182, 0
    %v5185 = vxor.u32 %v5180, 2147483648
    %v5186 = vsel %vm5184, %v5179, %v5185
    %vm5187 = vcmp.eq.s32.totalorder %v5182, 2
    %v5188 = vxor.u32 %v5179, 2147483648
    %v5189 = vsel %vm5187, %v5188, %v5180
    %v5190 = vsel %vm5183, %v5186, %v5189
    %v5191 = vsel %vm5181, nan, %v5190
    %v5192 = vand.u32 2147483647, %v404
    %vm5193 = vcmp.le.f32.partialorder %v5192, 0.7853982
    %vm5194 = vcmp.lt.s32.totalorder %v404, 0
    %v5195 = vand.u32 %v404, 2139095040
    %v5196 = vshrl.u32 %v5195, 23
    %v5197 = vsub.s32 %v5196, 127
    %v5198 = vand.u32 2147483647, %v404
    %v5199 = vand.u32 %v5198, 8388607
    %v5200 = vor.u32 %v5199, 8388608
    %v5201 = vsub.s32 0, %v5200
    %v5202 = vadd.s32 %v5197, 1
    %vm5203 = vcmp.gt.s32.totalorder %v5202, 0
    %v5204 = vsel %vm5203, %v5202, 0
    %v5205 = vshrl.u32 %v5204, 5
    %v5206 = vand.u32 %v5204, 31
    %v5207 = vsub.s32 32, %v5206
    %v5208 = vshrl.u32 683565275, %v5207
    %v5209 = vshll.u32 683565275, %v5206
    %v5210 = vshrl.u32 2475754826, %v5207
    %v5211 = vor.u32 %v5209, %v5210
    %v5212 = vshll.u32 2475754826, %v5206
    %v5213 = vshrl.u32 2131351028, %v5207
    %v5214 = vor.u32 %v5212, %v5213
    %v5215 = vshll.u32 2131351028, %v5206
    %v5216 = vshrl.u32 2102212464, %v5207
    %v5217 = vor.u32 %v5215, %v5216
    %v5218 = vshll.u32 2102212464, %v5206
    %v5219 = vshrl.u32 920167782, %v5207
    %v5220 = vor.u32 %v5218, %v5219
    %v5221 = vshll.u32 920167782, %v5206
    %v5222 = vshrl.u32 1326507024, %v5207
    %v5223 = vor.u32 %v5221, %v5222
    %vm5224 = vcmp.lt.s32.totalorder %v5205, 1
    %vm5225 = vcmp.lt.s32.totalorder %v5205, 2
    %vm5226 = vcmp.lt.s32.totalorder %v5205, 3
    %vm5227 = vcmp.lt.s32.totalorder %v5205, 4
    %v5228 = vsel %vm5224, %v5208, %v5211
    %v5229 = vsel %vm5227, %v5217, 2102212464
    %v5230 = vsel %vm5226, %v5214, %v5229
    %v5231 = vsel %vm5225, %v5228, %v5230
    %v5232 = vsel %vm5224, %v5211, %v5214
    %v5233 = vsel %vm5227, %v5220, 920167782
    %v5234 = vsel %vm5226, %v5217, %v5233
    %v5235 = vsel %vm5225, %v5232, %v5234
    %v5236 = vsel %vm5224, %v5214, %v5217
    %v5237 = vsel %vm5227, %v5223, 1326507024
    %v5238 = vsel %vm5226, %v5220, %v5237
    %v5239 = vsel %vm5225, %v5236, %v5238
    %v5240 = vshll.u32 %v5200, 8
    %v5241 = vmul.u32.u64.compose %v5240, %v5239
    %v5242 = vextract.low.u32 %v5241
    %v5243 = vextract.high.u32 %v5241
    %v5244 = vmul.u32.u64.compose %v5240, %v5235
    %v5245 = vextract.low.u32 %v5244
    %v5246 = vextract.high.u32 %v5244
    %v5247 = vmul.u32 %v5240, %v5231
    %v5248 = vadd.s32 %v5243, %v5245
    %vm5249 = vc.u32 %v5243, %v5245
    %v5250 = vadd.s32 %v5246, 1
    %v5251 = vsel %vm5249, %v5250, %v5246
    %v5252 = vadd.s32 %v5247, %v5251
    %v5253 = vadd.s32 %v5252, 536870912
    %v5254 = vshrl.u32 %v5253, 30
    %v5255 = vshll.u32 %v5254, 30
    %v5256 = vsub.s32 %v5252, %v5255
    %vm5257 = vcmp.lt.s32.totalorder %v5256, 0
    %v5258 = vsub.s32 0, %v5256
    %v5259 = vsel %vm5257, %v5258, %v5256
    %v5260 = vclz %v5259
    %v5261 = vsub.s32 %v5260, 2
    %vm5262 = vcmp.gt.s32.totalorder 0, %v5261
    %v5263 = vsel %vm5262, 0, %v5261
    %v5264 = vsub.s32 32, %v5263
    %v5265 = vshll.u32 %v5256, %v5263
    %v5266 = vshrl.u32 %v5248, %v5264
    %v5267 = vor.u32 %v5265, %v5266
    %v5268 = vsub.s32 4294967266, %v5263
    %v5269 = vadd.s32 %v5268, 127
    %v5270 = vshll.u32 %v5269, 23
    %v5271 = vor.u32 4788187, %v5270
    %v5272 = vand.u32 2147483647, %v5271
    %v5274 = vcvt.s32.f32 %v5267
    %v5275 = vmul.f32 %v5274, %v5272
    %v5276 = vxor.u32 %v5275, 2147483648
    %v5277 = vsel %vm5194, %v5276, %v5275
    %v5278 = vsub.s32 4, %v5254
    %v5279 = vsel %vm5194, %v5278, %v5254
    %v5280 = vsel %vm5193, %v404, %v5277
    %v5281 = vsel %vm5193, 0, %v5279
    %v5282 = vcosq.f32.pop %v5280
    %v5283 = vsinq.f32.pop %v5280
    %vm5284 = vweird.f32 %v404
    %v5285 = vand.u32 %v5281, 3
    %vm5286 = vcmp.lt.s32.totalorder %v5285, 2
    %vm5287 = vcmp.eq.s32.totalorder %v5285, 0
    %v5288 = vxor.u32 %v5283, 2147483648
    %v5289 = vsel %vm5287, %v5282, %v5288
    %vm5290 = vcmp.eq.s32.totalorder %v5285, 2
    %v5291 = vxor.u32 %v5282, 2147483648
    %v5292 = vsel %vm5290, %v5291, %v5283
    %v5293 = vsel %vm5286, %v5289, %v5292
    %v5294 = vsel %vm5284, nan, %v5293
    %v5295 = vand.u32 2147483647, %v405
    %vm5296 = vcmp.le.f32.partialorder %v5295, 0.7853982
    %vm5297 = vcmp.lt.s32.totalorder %v405, 0
    %v5298 = vand.u32 %v405, 2139095040
    %v5299 = vshrl.u32 %v5298, 23
    %v5300 = vsub.s32 %v5299, 127
    %v5301 = vand.u32 2147483647, %v405
    %v5302 = vand.u32 %v5301, 8388607
    %v5303 = vor.u32 %v5302, 8388608
    %v5304 = vsub.s32 0, %v5303
    %v5305 = vadd.s32 %v5300, 1
    %vm5306 = vcmp.gt.s32.totalorder %v5305, 0
    %v5307 = vsel %vm5306, %v5305, 0
    %v5308 = vshrl.u32 %v5307, 5
    %v5309 = vand.u32 %v5307, 31
    %v5310 = vsub.s32 32, %v5309
    %v5311 = vshrl.u32 683565275, %v5310
    %v5312 = vshll.u32 683565275, %v5309
    %v5313 = vshrl.u32 2475754826, %v5310
    %v5314 = vor.u32 %v5312, %v5313
    %v5315 = vshll.u32 2475754826, %v5309
    %v5316 = vshrl.u32 2131351028, %v5310
    %v5317 = vor.u32 %v5315, %v5316
    %v5318 = vshll.u32 2131351028, %v5309
    %v5319 = vshrl.u32 2102212464, %v5310
    %v5320 = vor.u32 %v5318, %v5319
    %v5321 = vshll.u32 2102212464, %v5309
    %v5322 = vshrl.u32 920167782, %v5310
    %v5323 = vor.u32 %v5321, %v5322
    %v5324 = vshll.u32 920167782, %v5309
    %v5325 = vshrl.u32 1326507024, %v5310
    %v5326 = vor.u32 %v5324, %v5325
    %vm5327 = vcmp.lt.s32.totalorder %v5308, 1
    %vm5328 = vcmp.lt.s32.totalorder %v5308, 2
    %vm5329 = vcmp.lt.s32.totalorder %v5308, 3
    %vm5330 = vcmp.lt.s32.totalorder %v5308, 4
    %v5331 = vsel %vm5327, %v5311, %v5314
    %v5332 = vsel %vm5330, %v5320, 2102212464
    %v5333 = vsel %vm5329, %v5317, %v5332
    %v5334 = vsel %vm5328, %v5331, %v5333
    %v5335 = vsel %vm5327, %v5314, %v5317
    %v5336 = vsel %vm5330, %v5323, 920167782
    %v5337 = vsel %vm5329, %v5320, %v5336
    %v5338 = vsel %vm5328, %v5335, %v5337
    %v5339 = vsel %vm5327, %v5317, %v5320
    %v5340 = vsel %vm5330, %v5326, 1326507024
    %v5341 = vsel %vm5329, %v5323, %v5340
    %v5342 = vsel %vm5328, %v5339, %v5341
    %v5343 = vshll.u32 %v5303, 8
    %v5344 = vmul.u32.u64.compose %v5343, %v5342
    %v5345 = vextract.low.u32 %v5344
    %v5346 = vextract.high.u32 %v5344
    %v5347 = vmul.u32.u64.compose %v5343, %v5338
    %v5348 = vextract.low.u32 %v5347
    %v5349 = vextract.high.u32 %v5347
    %v5350 = vmul.u32 %v5343, %v5334
    %v5351 = vadd.s32 %v5346, %v5348
    %vm5352 = vc.u32 %v5346, %v5348
    %v5353 = vadd.s32 %v5349, 1
    %v5354 = vsel %vm5352, %v5353, %v5349
    %v5355 = vadd.s32 %v5350, %v5354
    %v5356 = vadd.s32 %v5355, 536870912
    %v5357 = vshrl.u32 %v5356, 30
    %v5358 = vshll.u32 %v5357, 30
    %v5359 = vsub.s32 %v5355, %v5358
    %vm5360 = vcmp.lt.s32.totalorder %v5359, 0
    %v5361 = vsub.s32 0, %v5359
    %v5362 = vsel %vm5360, %v5361, %v5359
    %v5363 = vclz %v5362
    %v5364 = vsub.s32 %v5363, 2
    %vm5365 = vcmp.gt.s32.totalorder 0, %v5364
    %v5366 = vsel %vm5365, 0, %v5364
    %v5367 = vsub.s32 32, %v5366
    %v5368 = vshll.u32 %v5359, %v5366
    %v5369 = vshrl.u32 %v5351, %v5367
    %v5370 = vor.u32 %v5368, %v5369
    %v5371 = vsub.s32 4294967266, %v5366
    %v5372 = vadd.s32 %v5371, 127
    %v5373 = vshll.u32 %v5372, 23
    %v5374 = vor.u32 4788187, %v5373
    %v5375 = vand.u32 2147483647, %v5374
    %v5377 = vcvt.s32.f32 %v5370
    %v5378 = vmul.f32 %v5377, %v5375
    %v5379 = vxor.u32 %v5378, 2147483648
    %v5380 = vsel %vm5297, %v5379, %v5378
    %v5381 = vsub.s32 4, %v5357
    %v5382 = vsel %vm5297, %v5381, %v5357
    %v5383 = vsel %vm5296, %v405, %v5380
    %v5384 = vsel %vm5296, 0, %v5382
    %v5385 = vcosq.f32.pop %v5383
    %v5386 = vsinq.f32.pop %v5383
    %vm5387 = vweird.f32 %v405
    %v5388 = vand.u32 %v5384, 3
    %vm5389 = vcmp.lt.s32.totalorder %v5388, 2
    %vm5390 = vcmp.eq.s32.totalorder %v5388, 0
    %v5391 = vxor.u32 %v5386, 2147483648
    %v5392 = vsel %vm5390, %v5385, %v5391
    %vm5393 = vcmp.eq.s32.totalorder %v5388, 2
    %v5394 = vxor.u32 %v5385, 2147483648
    %v5395 = vsel %vm5393, %v5394, %v5386
    %v5396 = vsel %vm5389, %v5392, %v5395
    %v5397 = vsel %vm5387, nan, %v5396
    %v5398 = vand.u32 2147483647, %v406
    %vm5399 = vcmp.le.f32.partialorder %v5398, 0.7853982
    %vm5400 = vcmp.lt.s32.totalorder %v406, 0
    %v5401 = vand.u32 %v406, 2139095040
    %v5402 = vshrl.u32 %v5401, 23
    %v5403 = vsub.s32 %v5402, 127
    %v5404 = vand.u32 2147483647, %v406
    %v5405 = vand.u32 %v5404, 8388607
    %v5406 = vor.u32 %v5405, 8388608
    %v5407 = vsub.s32 0, %v5406
    %v5408 = vadd.s32 %v5403, 1
    %vm5409 = vcmp.gt.s32.totalorder %v5408, 0
    %v5410 = vsel %vm5409, %v5408, 0
    %v5411 = vshrl.u32 %v5410, 5
    %v5412 = vand.u32 %v5410, 31
    %v5413 = vsub.s32 32, %v5412
    %v5414 = vshrl.u32 683565275, %v5413
    %v5415 = vshll.u32 683565275, %v5412
    %v5416 = vshrl.u32 2475754826, %v5413
    %v5417 = vor.u32 %v5415, %v5416
    %v5418 = vshll.u32 2475754826, %v5412
    %v5419 = vshrl.u32 2131351028, %v5413
    %v5420 = vor.u32 %v5418, %v5419
    %v5421 = vshll.u32 2131351028, %v5412
    %v5422 = vshrl.u32 2102212464, %v5413
    %v5423 = vor.u32 %v5421, %v5422
    %v5424 = vshll.u32 2102212464, %v5412
    %v5425 = vshrl.u32 920167782, %v5413
    %v5426 = vor.u32 %v5424, %v5425
    %v5427 = vshll.u32 920167782, %v5412
    %v5428 = vshrl.u32 1326507024, %v5413
    %v5429 = vor.u32 %v5427, %v5428
    %vm5430 = vcmp.lt.s32.totalorder %v5411, 1
    %vm5431 = vcmp.lt.s32.totalorder %v5411, 2
    %vm5432 = vcmp.lt.s32.totalorder %v5411, 3
    %vm5433 = vcmp.lt.s32.totalorder %v5411, 4
    %v5434 = vsel %vm5430, %v5414, %v5417
    %v5435 = vsel %vm5433, %v5423, 2102212464
    %v5436 = vsel %vm5432, %v5420, %v5435
    %v5437 = vsel %vm5431, %v5434, %v5436
    %v5438 = vsel %vm5430, %v5417, %v5420
    %v5439 = vsel %vm5433, %v5426, 920167782
    %v5440 = vsel %vm5432, %v5423, %v5439
    %v5441 = vsel %vm5431, %v5438, %v5440
    %v5442 = vsel %vm5430, %v5420, %v5423
    %v5443 = vsel %vm5433, %v5429, 1326507024
    %v5444 = vsel %vm5432, %v5426, %v5443
    %v5445 = vsel %vm5431, %v5442, %v5444
    %v5446 = vshll.u32 %v5406, 8
    %v5447 = vmul.u32.u64.compose %v5446, %v5445
    %v5448 = vextract.low.u32 %v5447
    %v5449 = vextract.high.u32 %v5447
    %v5450 = vmul.u32.u64.compose %v5446, %v5441
    %v5451 = vextract.low.u32 %v5450
    %v5452 = vextract.high.u32 %v5450
    %v5453 = vmul.u32 %v5446, %v5437
    %v5454 = vadd.s32 %v5449, %v5451
    %vm5455 = vc.u32 %v5449, %v5451
    %v5456 = vadd.s32 %v5452, 1
    %v5457 = vsel %vm5455, %v5456, %v5452
    %v5458 = vadd.s32 %v5453, %v5457
    %v5459 = vadd.s32 %v5458, 536870912
    %v5460 = vshrl.u32 %v5459, 30
    %v5461 = vshll.u32 %v5460, 30
    %v5462 = vsub.s32 %v5458, %v5461
    %vm5463 = vcmp.lt.s32.totalorder %v5462, 0
    %v5464 = vsub.s32 0, %v5462
    %v5465 = vsel %vm5463, %v5464, %v5462
    %v5466 = vclz %v5465
    %v5467 = vsub.s32 %v5466, 2
    %vm5468 = vcmp.gt.s32.totalorder 0, %v5467
    %v5469 = vsel %vm5468, 0, %v5467
    %v5470 = vsub.s32 32, %v5469
    %v5471 = vshll.u32 %v5462, %v5469
    %v5472 = vshrl.u32 %v5454, %v5470
    %v5473 = vor.u32 %v5471, %v5472
    %v5474 = vsub.s32 4294967266, %v5469
    %v5475 = vadd.s32 %v5474, 127
    %v5476 = vshll.u32 %v5475, 23
    %v5477 = vor.u32 4788187, %v5476
    %v5478 = vand.u32 2147483647, %v5477
    %v5480 = vcvt.s32.f32 %v5473
    %v5481 = vmul.f32 %v5480, %v5478
    %v5482 = vxor.u32 %v5481, 2147483648
    %v5483 = vsel %vm5400, %v5482, %v5481
    %v5484 = vsub.s32 4, %v5460
    %v5485 = vsel %vm5400, %v5484, %v5460
    %v5486 = vsel %vm5399, %v406, %v5483
    %v5487 = vsel %vm5399, 0, %v5485
    %v5488 = vcosq.f32.pop %v5486
    %v5489 = vsinq.f32.pop %v5486
    %vm5490 = vweird.f32 %v406
    %v5491 = vand.u32 %v5487, 3
    %vm5492 = vcmp.lt.s32.totalorder %v5491, 2
    %vm5493 = vcmp.eq.s32.totalorder %v5491, 0
    %v5494 = vxor.u32 %v5489, 2147483648
    %v5495 = vsel %vm5493, %v5488, %v5494
    %vm5496 = vcmp.eq.s32.totalorder %v5491, 2
    %v5497 = vxor.u32 %v5488, 2147483648
    %v5498 = vsel %vm5496, %v5497, %v5489
    %v5499 = vsel %vm5492, %v5495, %v5498
    %v5500 = vsel %vm5490, nan, %v5499
    %v5501 = vand.u32 2147483647, %v407
    %vm5502 = vcmp.le.f32.partialorder %v5501, 0.7853982
    %vm5503 = vcmp.lt.s32.totalorder %v407, 0
    %v5504 = vand.u32 %v407, 2139095040
    %v5505 = vshrl.u32 %v5504, 23
    %v5506 = vsub.s32 %v5505, 127
    %v5507 = vand.u32 2147483647, %v407
    %v5508 = vand.u32 %v5507, 8388607
    %v5509 = vor.u32 %v5508, 8388608
    %v5510 = vsub.s32 0, %v5509
    %v5511 = vadd.s32 %v5506, 1
    %vm5512 = vcmp.gt.s32.totalorder %v5511, 0
    %v5513 = vsel %vm5512, %v5511, 0
    %v5514 = vshrl.u32 %v5513, 5
    %v5515 = vand.u32 %v5513, 31
    %v5516 = vsub.s32 32, %v5515
    %v5517 = vshrl.u32 683565275, %v5516
    %v5518 = vshll.u32 683565275, %v5515
    %v5519 = vshrl.u32 2475754826, %v5516
    %v5520 = vor.u32 %v5518, %v5519
    %v5521 = vshll.u32 2475754826, %v5515
    %v5522 = vshrl.u32 2131351028, %v5516
    %v5523 = vor.u32 %v5521, %v5522
    %v5524 = vshll.u32 2131351028, %v5515
    %v5525 = vshrl.u32 2102212464, %v5516
    %v5526 = vor.u32 %v5524, %v5525
    %v5527 = vshll.u32 2102212464, %v5515
    %v5528 = vshrl.u32 920167782, %v5516
    %v5529 = vor.u32 %v5527, %v5528
    %v5530 = vshll.u32 920167782, %v5515
    %v5531 = vshrl.u32 1326507024, %v5516
    %v5532 = vor.u32 %v5530, %v5531
    %vm5533 = vcmp.lt.s32.totalorder %v5514, 1
    %vm5534 = vcmp.lt.s32.totalorder %v5514, 2
    %vm5535 = vcmp.lt.s32.totalorder %v5514, 3
    %vm5536 = vcmp.lt.s32.totalorder %v5514, 4
    %v5537 = vsel %vm5533, %v5517, %v5520
    %v5538 = vsel %vm5536, %v5526, 2102212464
    %v5539 = vsel %vm5535, %v5523, %v5538
    %v5540 = vsel %vm5534, %v5537, %v5539
    %v5541 = vsel %vm5533, %v5520, %v5523
    %v5542 = vsel %vm5536, %v5529, 920167782
    %v5543 = vsel %vm5535, %v5526, %v5542
    %v5544 = vsel %vm5534, %v5541, %v5543
    %v5545 = vsel %vm5533, %v5523, %v5526
    %v5546 = vsel %vm5536, %v5532, 1326507024
    %v5547 = vsel %vm5535, %v5529, %v5546
    %v5548 = vsel %vm5534, %v5545, %v5547
    %v5549 = vshll.u32 %v5509, 8
    %v5550 = vmul.u32.u64.compose %v5549, %v5548
    %v5551 = vextract.low.u32 %v5550
    %v5552 = vextract.high.u32 %v5550
    %v5553 = vmul.u32.u64.compose %v5549, %v5544
    %v5554 = vextract.low.u32 %v5553
    %v5555 = vextract.high.u32 %v5553
    %v5556 = vmul.u32 %v5549, %v5540
    %v5557 = vadd.s32 %v5552, %v5554
    %vm5558 = vc.u32 %v5552, %v5554
    %v5559 = vadd.s32 %v5555, 1
    %v5560 = vsel %vm5558, %v5559, %v5555
    %v5561 = vadd.s32 %v5556, %v5560
    %v5562 = vadd.s32 %v5561, 536870912
    %v5563 = vshrl.u32 %v5562, 30
    %v5564 = vshll.u32 %v5563, 30
    %v5565 = vsub.s32 %v5561, %v5564
    %vm5566 = vcmp.lt.s32.totalorder %v5565, 0
    %v5567 = vsub.s32 0, %v5565
    %v5568 = vsel %vm5566, %v5567, %v5565
    %v5569 = vclz %v5568
    %v5570 = vsub.s32 %v5569, 2
    %vm5571 = vcmp.gt.s32.totalorder 0, %v5570
    %v5572 = vsel %vm5571, 0, %v5570
    %v5573 = vsub.s32 32, %v5572
    %v5574 = vshll.u32 %v5565, %v5572
    %v5575 = vshrl.u32 %v5557, %v5573
    %v5576 = vor.u32 %v5574, %v5575
    %v5577 = vsub.s32 4294967266, %v5572
    %v5578 = vadd.s32 %v5577, 127
    %v5579 = vshll.u32 %v5578, 23
    %v5580 = vor.u32 4788187, %v5579
    %v5581 = vand.u32 2147483647, %v5580
    %v5583 = vcvt.s32.f32 %v5576
    %v5584 = vmul.f32 %v5583, %v5581
    %v5585 = vxor.u32 %v5584, 2147483648
    %v5586 = vsel %vm5503, %v5585, %v5584
    %v5587 = vsub.s32 4, %v5563
    %v5588 = vsel %vm5503, %v5587, %v5563
    %v5589 = vsel %vm5502, %v407, %v5586
    %v5590 = vsel %vm5502, 0, %v5588
    %v5591 = vcosq.f32.pop %v5589
    %v5592 = vsinq.f32.pop %v5589
    %vm5593 = vweird.f32 %v407
    %v5594 = vand.u32 %v5590, 3
    %vm5595 = vcmp.lt.s32.totalorder %v5594, 2
    %vm5596 = vcmp.eq.s32.totalorder %v5594, 0
    %v5597 = vxor.u32 %v5592, 2147483648
    %v5598 = vsel %vm5596, %v5591, %v5597
    %vm5599 = vcmp.eq.s32.totalorder %v5594, 2
    %v5600 = vxor.u32 %v5591, 2147483648
    %v5601 = vsel %vm5599, %v5600, %v5592
    %v5602 = vsel %vm5595, %v5598, %v5601
    %v5603 = vsel %vm5593, nan, %v5602
    %v5604 = vand.u32 2147483647, %v408
    %vm5605 = vcmp.le.f32.partialorder %v5604, 0.7853982
    %vm5606 = vcmp.lt.s32.totalorder %v408, 0
    %v5607 = vand.u32 %v408, 2139095040
    %v5608 = vshrl.u32 %v5607, 23
    %v5609 = vsub.s32 %v5608, 127
    %v5610 = vand.u32 2147483647, %v408
    %v5611 = vand.u32 %v5610, 8388607
    %v5612 = vor.u32 %v5611, 8388608
    %v5613 = vsub.s32 0, %v5612
    %v5614 = vadd.s32 %v5609, 1
    %vm5615 = vcmp.gt.s32.totalorder %v5614, 0
    %v5616 = vsel %vm5615, %v5614, 0
    %v5617 = vshrl.u32 %v5616, 5
    %v5618 = vand.u32 %v5616, 31
    %v5619 = vsub.s32 32, %v5618
    %v5620 = vshrl.u32 683565275, %v5619
    %v5621 = vshll.u32 683565275, %v5618
    %v5622 = vshrl.u32 2475754826, %v5619
    %v5623 = vor.u32 %v5621, %v5622
    %v5624 = vshll.u32 2475754826, %v5618
    %v5625 = vshrl.u32 2131351028, %v5619
    %v5626 = vor.u32 %v5624, %v5625
    %v5627 = vshll.u32 2131351028, %v5618
    %v5628 = vshrl.u32 2102212464, %v5619
    %v5629 = vor.u32 %v5627, %v5628
    %v5630 = vshll.u32 2102212464, %v5618
    %v5631 = vshrl.u32 920167782, %v5619
    %v5632 = vor.u32 %v5630, %v5631
    %v5633 = vshll.u32 920167782, %v5618
    %v5634 = vshrl.u32 1326507024, %v5619
    %v5635 = vor.u32 %v5633, %v5634
    %vm5636 = vcmp.lt.s32.totalorder %v5617, 1
    %vm5637 = vcmp.lt.s32.totalorder %v5617, 2
    %vm5638 = vcmp.lt.s32.totalorder %v5617, 3
    %vm5639 = vcmp.lt.s32.totalorder %v5617, 4
    %v5640 = vsel %vm5636, %v5620, %v5623
    %v5641 = vsel %vm5639, %v5629, 2102212464
    %v5642 = vsel %vm5638, %v5626, %v5641
    %v5643 = vsel %vm5637, %v5640, %v5642
    %v5644 = vsel %vm5636, %v5623, %v5626
    %v5645 = vsel %vm5639, %v5632, 920167782
    %v5646 = vsel %vm5638, %v5629, %v5645
    %v5647 = vsel %vm5637, %v5644, %v5646
    %v5648 = vsel %vm5636, %v5626, %v5629
    %v5649 = vsel %vm5639, %v5635, 1326507024
    %v5650 = vsel %vm5638, %v5632, %v5649
    %v5651 = vsel %vm5637, %v5648, %v5650
    %v5652 = vshll.u32 %v5612, 8
    %v5653 = vmul.u32.u64.compose %v5652, %v5651
    %v5654 = vextract.low.u32 %v5653
    %v5655 = vextract.high.u32 %v5653
    %v5656 = vmul.u32.u64.compose %v5652, %v5647
    %v5657 = vextract.low.u32 %v5656
    %v5658 = vextract.high.u32 %v5656
    %v5659 = vmul.u32 %v5652, %v5643
    %v5660 = vadd.s32 %v5655, %v5657
    %vm5661 = vc.u32 %v5655, %v5657
    %v5662 = vadd.s32 %v5658, 1
    %v5663 = vsel %vm5661, %v5662, %v5658
    %v5664 = vadd.s32 %v5659, %v5663
    %v5665 = vadd.s32 %v5664, 536870912
    %v5666 = vshrl.u32 %v5665, 30
    %v5667 = vshll.u32 %v5666, 30
    %v5668 = vsub.s32 %v5664, %v5667
    %vm5669 = vcmp.lt.s32.totalorder %v5668, 0
    %v5670 = vsub.s32 0, %v5668
    %v5671 = vsel %vm5669, %v5670, %v5668
    %v5672 = vclz %v5671
    %v5673 = vsub.s32 %v5672, 2
    %vm5674 = vcmp.gt.s32.totalorder 0, %v5673
    %v5675 = vsel %vm5674, 0, %v5673
    %v5676 = vsub.s32 32, %v5675
    %v5677 = vshll.u32 %v5668, %v5675
    %v5678 = vshrl.u32 %v5660, %v5676
    %v5679 = vor.u32 %v5677, %v5678
    %v5680 = vsub.s32 4294967266, %v5675
    %v5681 = vadd.s32 %v5680, 127
    %v5682 = vshll.u32 %v5681, 23
    %v5683 = vor.u32 4788187, %v5682
    %v5684 = vand.u32 2147483647, %v5683
    %v5686 = vcvt.s32.f32 %v5679
    %v5687 = vmul.f32 %v5686, %v5684
    %v5688 = vxor.u32 %v5687, 2147483648
    %v5689 = vsel %vm5606, %v5688, %v5687
    %v5690 = vsub.s32 4, %v5666
    %v5691 = vsel %vm5606, %v5690, %v5666
    %v5692 = vsel %vm5605, %v408, %v5689
    %v5693 = vsel %vm5605, 0, %v5691
    %v5694 = vcosq.f32.pop %v5692
    %v5695 = vsinq.f32.pop %v5692
    %vm5696 = vweird.f32 %v408
    %v5697 = vand.u32 %v5693, 3
    %vm5698 = vcmp.lt.s32.totalorder %v5697, 2
    %vm5699 = vcmp.eq.s32.totalorder %v5697, 0
    %v5700 = vxor.u32 %v5695, 2147483648
    %v5701 = vsel %vm5699, %v5694, %v5700
    %vm5702 = vcmp.eq.s32.totalorder %v5697, 2
    %v5703 = vxor.u32 %v5694, 2147483648
    %v5704 = vsel %vm5702, %v5703, %v5695
    %v5705 = vsel %vm5698, %v5701, %v5704
    %v5706 = vsel %vm5696, nan, %v5705
    %v5707 = vand.u32 2147483647, %v409
    %vm5708 = vcmp.le.f32.partialorder %v5707, 0.7853982
    %vm5709 = vcmp.lt.s32.totalorder %v409, 0
    %v5710 = vand.u32 %v409, 2139095040
    %v5711 = vshrl.u32 %v5710, 23
    %v5712 = vsub.s32 %v5711, 127
    %v5713 = vand.u32 2147483647, %v409
    %v5714 = vand.u32 %v5713, 8388607
    %v5715 = vor.u32 %v5714, 8388608
    %v5716 = vsub.s32 0, %v5715
    %v5717 = vadd.s32 %v5712, 1
    %vm5718 = vcmp.gt.s32.totalorder %v5717, 0
    %v5719 = vsel %vm5718, %v5717, 0
    %v5720 = vshrl.u32 %v5719, 5
    %v5721 = vand.u32 %v5719, 31
    %v5722 = vsub.s32 32, %v5721
    %v5723 = vshrl.u32 683565275, %v5722
    %v5724 = vshll.u32 683565275, %v5721
    %v5725 = vshrl.u32 2475754826, %v5722
    %v5726 = vor.u32 %v5724, %v5725
    %v5727 = vshll.u32 2475754826, %v5721
    %v5728 = vshrl.u32 2131351028, %v5722
    %v5729 = vor.u32 %v5727, %v5728
    %v5730 = vshll.u32 2131351028, %v5721
    %v5731 = vshrl.u32 2102212464, %v5722
    %v5732 = vor.u32 %v5730, %v5731
    %v5733 = vshll.u32 2102212464, %v5721
    %v5734 = vshrl.u32 920167782, %v5722
    %v5735 = vor.u32 %v5733, %v5734
    %v5736 = vshll.u32 920167782, %v5721
    %v5737 = vshrl.u32 1326507024, %v5722
    %v5738 = vor.u32 %v5736, %v5737
    %vm5739 = vcmp.lt.s32.totalorder %v5720, 1
    %vm5740 = vcmp.lt.s32.totalorder %v5720, 2
    %vm5741 = vcmp.lt.s32.totalorder %v5720, 3
    %vm5742 = vcmp.lt.s32.totalorder %v5720, 4
    %v5743 = vsel %vm5739, %v5723, %v5726
    %v5744 = vsel %vm5742, %v5732, 2102212464
    %v5745 = vsel %vm5741, %v5729, %v5744
    %v5746 = vsel %vm5740, %v5743, %v5745
    %v5747 = vsel %vm5739, %v5726, %v5729
    %v5748 = vsel %vm5742, %v5735, 920167782
    %v5749 = vsel %vm5741, %v5732, %v5748
    %v5750 = vsel %vm5740, %v5747, %v5749
    %v5751 = vsel %vm5739, %v5729, %v5732
    %v5752 = vsel %vm5742, %v5738, 1326507024
    %v5753 = vsel %vm5741, %v5735, %v5752
    %v5754 = vsel %vm5740, %v5751, %v5753
    %v5755 = vshll.u32 %v5715, 8
    %v5756 = vmul.u32.u64.compose %v5755, %v5754
    %v5757 = vextract.low.u32 %v5756
    %v5758 = vextract.high.u32 %v5756
    %v5759 = vmul.u32.u64.compose %v5755, %v5750
    %v5760 = vextract.low.u32 %v5759
    %v5761 = vextract.high.u32 %v5759
    %v5762 = vmul.u32 %v5755, %v5746
    %v5763 = vadd.s32 %v5758, %v5760
    %vm5764 = vc.u32 %v5758, %v5760
    %v5765 = vadd.s32 %v5761, 1
    %v5766 = vsel %vm5764, %v5765, %v5761
    %v5767 = vadd.s32 %v5762, %v5766
    %v5768 = vadd.s32 %v5767, 536870912
    %v5769 = vshrl.u32 %v5768, 30
    %v5770 = vshll.u32 %v5769, 30
    %v5771 = vsub.s32 %v5767, %v5770
    %vm5772 = vcmp.lt.s32.totalorder %v5771, 0
    %v5773 = vsub.s32 0, %v5771
    %v5774 = vsel %vm5772, %v5773, %v5771
    %v5775 = vclz %v5774
    %v5776 = vsub.s32 %v5775, 2
    %vm5777 = vcmp.gt.s32.totalorder 0, %v5776
    %v5778 = vsel %vm5777, 0, %v5776
    %v5779 = vsub.s32 32, %v5778
    %v5780 = vshll.u32 %v5771, %v5778
    %v5781 = vshrl.u32 %v5763, %v5779
    %v5782 = vor.u32 %v5780, %v5781
    %v5783 = vsub.s32 4294967266, %v5778
    %v5784 = vadd.s32 %v5783, 127
    %v5785 = vshll.u32 %v5784, 23
    %v5786 = vor.u32 4788187, %v5785
    %v5787 = vand.u32 2147483647, %v5786
    %v5789 = vcvt.s32.f32 %v5782
    %v5790 = vmul.f32 %v5789, %v5787
    %v5791 = vxor.u32 %v5790, 2147483648
    %v5792 = vsel %vm5709, %v5791, %v5790
    %v5793 = vsub.s32 4, %v5769
    %v5794 = vsel %vm5709, %v5793, %v5769
    %v5795 = vsel %vm5708, %v409, %v5792
    %v5796 = vsel %vm5708, 0, %v5794
    %v5797 = vcosq.f32.pop %v5795
    %v5798 = vsinq.f32.pop %v5795
    %vm5799 = vweird.f32 %v409
    %v5800 = vand.u32 %v5796, 3
    %vm5801 = vcmp.lt.s32.totalorder %v5800, 2
    %vm5802 = vcmp.eq.s32.totalorder %v5800, 0
    %v5803 = vxor.u32 %v5798, 2147483648
    %v5804 = vsel %vm5802, %v5797, %v5803
    %vm5805 = vcmp.eq.s32.totalorder %v5800, 2
    %v5806 = vxor.u32 %v5797, 2147483648
    %v5807 = vsel %vm5805, %v5806, %v5798
    %v5808 = vsel %vm5801, %v5804, %v5807
    %v5809 = vsel %vm5799, nan, %v5808
    %v5810 = vand.u32 2147483647, %v410
    %vm5811 = vcmp.le.f32.partialorder %v5810, 0.7853982
    %vm5812 = vcmp.lt.s32.totalorder %v410, 0
    %v5813 = vand.u32 %v410, 2139095040
    %v5814 = vshrl.u32 %v5813, 23
    %v5815 = vsub.s32 %v5814, 127
    %v5816 = vand.u32 2147483647, %v410
    %v5817 = vand.u32 %v5816, 8388607
    %v5818 = vor.u32 %v5817, 8388608
    %v5819 = vsub.s32 0, %v5818
    %v5820 = vadd.s32 %v5815, 1
    %vm5821 = vcmp.gt.s32.totalorder %v5820, 0
    %v5822 = vsel %vm5821, %v5820, 0
    %v5823 = vshrl.u32 %v5822, 5
    %v5824 = vand.u32 %v5822, 31
    %v5825 = vsub.s32 32, %v5824
    %v5826 = vshrl.u32 683565275, %v5825
    %v5827 = vshll.u32 683565275, %v5824
    %v5828 = vshrl.u32 2475754826, %v5825
    %v5829 = vor.u32 %v5827, %v5828
    %v5830 = vshll.u32 2475754826, %v5824
    %v5831 = vshrl.u32 2131351028, %v5825
    %v5832 = vor.u32 %v5830, %v5831
    %v5833 = vshll.u32 2131351028, %v5824
    %v5834 = vshrl.u32 2102212464, %v5825
    %v5835 = vor.u32 %v5833, %v5834
    %v5836 = vshll.u32 2102212464, %v5824
    %v5837 = vshrl.u32 920167782, %v5825
    %v5838 = vor.u32 %v5836, %v5837
    %v5839 = vshll.u32 920167782, %v5824
    %v5840 = vshrl.u32 1326507024, %v5825
    %v5841 = vor.u32 %v5839, %v5840
    %vm5842 = vcmp.lt.s32.totalorder %v5823, 1
    %vm5843 = vcmp.lt.s32.totalorder %v5823, 2
    %vm5844 = vcmp.lt.s32.totalorder %v5823, 3
    %vm5845 = vcmp.lt.s32.totalorder %v5823, 4
    %v5846 = vsel %vm5842, %v5826, %v5829
    %v5847 = vsel %vm5845, %v5835, 2102212464
    %v5848 = vsel %vm5844, %v5832, %v5847
    %v5849 = vsel %vm5843, %v5846, %v5848
    %v5850 = vsel %vm5842, %v5829, %v5832
    %v5851 = vsel %vm5845, %v5838, 920167782
    %v5852 = vsel %vm5844, %v5835, %v5851
    %v5853 = vsel %vm5843, %v5850, %v5852
    %v5854 = vsel %vm5842, %v5832, %v5835
    %v5855 = vsel %vm5845, %v5841, 1326507024
    %v5856 = vsel %vm5844, %v5838, %v5855
    %v5857 = vsel %vm5843, %v5854, %v5856
    %v5858 = vshll.u32 %v5818, 8
    %v5859 = vmul.u32.u64.compose %v5858, %v5857
    %v5860 = vextract.low.u32 %v5859
    %v5861 = vextract.high.u32 %v5859
    %v5862 = vmul.u32.u64.compose %v5858, %v5853
    %v5863 = vextract.low.u32 %v5862
    %v5864 = vextract.high.u32 %v5862
    %v5865 = vmul.u32 %v5858, %v5849
    %v5866 = vadd.s32 %v5861, %v5863
    %vm5867 = vc.u32 %v5861, %v5863
    %v5868 = vadd.s32 %v5864, 1
    %v5869 = vsel %vm5867, %v5868, %v5864
    %v5870 = vadd.s32 %v5865, %v5869
    %v5871 = vadd.s32 %v5870, 536870912
    %v5872 = vshrl.u32 %v5871, 30
    %v5873 = vshll.u32 %v5872, 30
    %v5874 = vsub.s32 %v5870, %v5873
    %vm5875 = vcmp.lt.s32.totalorder %v5874, 0
    %v5876 = vsub.s32 0, %v5874
    %v5877 = vsel %vm5875, %v5876, %v5874
    %v5878 = vclz %v5877
    %v5879 = vsub.s32 %v5878, 2
    %vm5880 = vcmp.gt.s32.totalorder 0, %v5879
    %v5881 = vsel %vm5880, 0, %v5879
    %v5882 = vsub.s32 32, %v5881
    %v5883 = vshll.u32 %v5874, %v5881
    %v5884 = vshrl.u32 %v5866, %v5882
    %v5885 = vor.u32 %v5883, %v5884
    %v5886 = vsub.s32 4294967266, %v5881
    %v5887 = vadd.s32 %v5886, 127
    %v5888 = vshll.u32 %v5887, 23
    %v5889 = vor.u32 4788187, %v5888
    %v5890 = vand.u32 2147483647, %v5889
    %v5892 = vcvt.s32.f32 %v5885
    %v5893 = vmul.f32 %v5892, %v5890
    %v5894 = vxor.u32 %v5893, 2147483648
    %v5895 = vsel %vm5812, %v5894, %v5893
    %v5896 = vsub.s32 4, %v5872
    %v5897 = vsel %vm5812, %v5896, %v5872
    %v5898 = vsel %vm5811, %v410, %v5895
    %v5899 = vsel %vm5811, 0, %v5897
    %v5900 = vcosq.f32.pop %v5898
    %v5901 = vsinq.f32.pop %v5898
    %vm5902 = vweird.f32 %v410
    %v5903 = vand.u32 %v5899, 3
    %vm5904 = vcmp.lt.s32.totalorder %v5903, 2
    %vm5905 = vcmp.eq.s32.totalorder %v5903, 0
    %v5906 = vxor.u32 %v5901, 2147483648
    %v5907 = vsel %vm5905, %v5900, %v5906
    %vm5908 = vcmp.eq.s32.totalorder %v5903, 2
    %v5909 = vxor.u32 %v5900, 2147483648
    %v5910 = vsel %vm5908, %v5909, %v5901
    %v5911 = vsel %vm5904, %v5907, %v5910
    %v5912 = vsel %vm5902, nan, %v5911
    %v5913 = vand.u32 2147483647, %v411
    %vm5914 = vcmp.le.f32.partialorder %v5913, 0.7853982
    %vm5915 = vcmp.lt.s32.totalorder %v411, 0
    %v5916 = vand.u32 %v411, 2139095040
    %v5917 = vshrl.u32 %v5916, 23
    %v5918 = vsub.s32 %v5917, 127
    %v5919 = vand.u32 2147483647, %v411
    %v5920 = vand.u32 %v5919, 8388607
    %v5921 = vor.u32 %v5920, 8388608
    %v5922 = vsub.s32 0, %v5921
    %v5923 = vadd.s32 %v5918, 1
    %vm5924 = vcmp.gt.s32.totalorder %v5923, 0
    %v5925 = vsel %vm5924, %v5923, 0
    %v5926 = vshrl.u32 %v5925, 5
    %v5927 = vand.u32 %v5925, 31
    %v5928 = vsub.s32 32, %v5927
    %v5929 = vshrl.u32 683565275, %v5928
    %v5930 = vshll.u32 683565275, %v5927
    %v5931 = vshrl.u32 2475754826, %v5928
    %v5932 = vor.u32 %v5930, %v5931
    %v5933 = vshll.u32 2475754826, %v5927
    %v5934 = vshrl.u32 2131351028, %v5928
    %v5935 = vor.u32 %v5933, %v5934
    %v5936 = vshll.u32 2131351028, %v5927
    %v5937 = vshrl.u32 2102212464, %v5928
    %v5938 = vor.u32 %v5936, %v5937
    %v5939 = vshll.u32 2102212464, %v5927
    %v5940 = vshrl.u32 920167782, %v5928
    %v5941 = vor.u32 %v5939, %v5940
    %v5942 = vshll.u32 920167782, %v5927
    %v5943 = vshrl.u32 1326507024, %v5928
    %v5944 = vor.u32 %v5942, %v5943
    %vm5945 = vcmp.lt.s32.totalorder %v5926, 1
    %vm5946 = vcmp.lt.s32.totalorder %v5926, 2
    %vm5947 = vcmp.lt.s32.totalorder %v5926, 3
    %vm5948 = vcmp.lt.s32.totalorder %v5926, 4
    %v5949 = vsel %vm5945, %v5929, %v5932
    %v5950 = vsel %vm5948, %v5938, 2102212464
    %v5951 = vsel %vm5947, %v5935, %v5950
    %v5952 = vsel %vm5946, %v5949, %v5951
    %v5953 = vsel %vm5945, %v5932, %v5935
    %v5954 = vsel %vm5948, %v5941, 920167782
    %v5955 = vsel %vm5947, %v5938, %v5954
    %v5956 = vsel %vm5946, %v5953, %v5955
    %v5957 = vsel %vm5945, %v5935, %v5938
    %v5958 = vsel %vm5948, %v5944, 1326507024
    %v5959 = vsel %vm5947, %v5941, %v5958
    %v5960 = vsel %vm5946, %v5957, %v5959
    %v5961 = vshll.u32 %v5921, 8
    %v5962 = vmul.u32.u64.compose %v5961, %v5960
    %v5963 = vextract.low.u32 %v5962
    %v5964 = vextract.high.u32 %v5962
    %v5965 = vmul.u32.u64.compose %v5961, %v5956
    %v5966 = vextract.low.u32 %v5965
    %v5967 = vextract.high.u32 %v5965
    %v5968 = vmul.u32 %v5961, %v5952
    %v5969 = vadd.s32 %v5964, %v5966
    %vm5970 = vc.u32 %v5964, %v5966
    %v5971 = vadd.s32 %v5967, 1
    %v5972 = vsel %vm5970, %v5971, %v5967
    %v5973 = vadd.s32 %v5968, %v5972
    %v5974 = vadd.s32 %v5973, 536870912
    %v5975 = vshrl.u32 %v5974, 30
    %v5976 = vshll.u32 %v5975, 30
    %v5977 = vsub.s32 %v5973, %v5976
    %vm5978 = vcmp.lt.s32.totalorder %v5977, 0
    %v5979 = vsub.s32 0, %v5977
    %v5980 = vsel %vm5978, %v5979, %v5977
    %v5981 = vclz %v5980
    %v5982 = vsub.s32 %v5981, 2
    %vm5983 = vcmp.gt.s32.totalorder 0, %v5982
    %v5984 = vsel %vm5983, 0, %v5982
    %v5985 = vsub.s32 32, %v5984
    %v5986 = vshll.u32 %v5977, %v5984
    %v5987 = vshrl.u32 %v5969, %v5985
    %v5988 = vor.u32 %v5986, %v5987
    %v5989 = vsub.s32 4294967266, %v5984
    %v5990 = vadd.s32 %v5989, 127
    %v5991 = vshll.u32 %v5990, 23
    %v5992 = vor.u32 4788187, %v5991
    %v5993 = vand.u32 2147483647, %v5992
    %v5995 = vcvt.s32.f32 %v5988
    %v5996 = vmul.f32 %v5995, %v5993
    %v5997 = vxor.u32 %v5996, 2147483648
    %v5998 = vsel %vm5915, %v5997, %v5996
    %v5999 = vsub.s32 4, %v5975
    %v6000 = vsel %vm5915, %v5999, %v5975
    %v6001 = vsel %vm5914, %v411, %v5998
    %v6002 = vsel %vm5914, 0, %v6000
    %v6003 = vcosq.f32.pop %v6001
    %v6004 = vsinq.f32.pop %v6001
    %vm6005 = vweird.f32 %v411
    %v6006 = vand.u32 %v6002, 3
    %vm6007 = vcmp.lt.s32.totalorder %v6006, 2
    %vm6008 = vcmp.eq.s32.totalorder %v6006, 0
    %v6009 = vxor.u32 %v6004, 2147483648
    %v6010 = vsel %vm6008, %v6003, %v6009
    %vm6011 = vcmp.eq.s32.totalorder %v6006, 2
    %v6012 = vxor.u32 %v6003, 2147483648
    %v6013 = vsel %vm6011, %v6012, %v6004
    %v6014 = vsel %vm6007, %v6010, %v6013
    %v6015 = vsel %vm6005, nan, %v6014
    %v6016 = vand.u32 2147483647, %v412
    %vm6017 = vcmp.le.f32.partialorder %v6016, 0.7853982
    %vm6018 = vcmp.lt.s32.totalorder %v412, 0
    %v6019 = vand.u32 %v412, 2139095040
    %v6020 = vshrl.u32 %v6019, 23
    %v6021 = vsub.s32 %v6020, 127
    %v6022 = vand.u32 2147483647, %v412
    %v6023 = vand.u32 %v6022, 8388607
    %v6024 = vor.u32 %v6023, 8388608
    %v6025 = vsub.s32 0, %v6024
    %v6026 = vadd.s32 %v6021, 1
    %vm6027 = vcmp.gt.s32.totalorder %v6026, 0
    %v6028 = vsel %vm6027, %v6026, 0
    %v6029 = vshrl.u32 %v6028, 5
    %v6030 = vand.u32 %v6028, 31
    %v6031 = vsub.s32 32, %v6030
    %v6032 = vshrl.u32 683565275, %v6031
    %v6033 = vshll.u32 683565275, %v6030
    %v6034 = vshrl.u32 2475754826, %v6031
    %v6035 = vor.u32 %v6033, %v6034
    %v6036 = vshll.u32 2475754826, %v6030
    %v6037 = vshrl.u32 2131351028, %v6031
    %v6038 = vor.u32 %v6036, %v6037
    %v6039 = vshll.u32 2131351028, %v6030
    %v6040 = vshrl.u32 2102212464, %v6031
    %v6041 = vor.u32 %v6039, %v6040
    %v6042 = vshll.u32 2102212464, %v6030
    %v6043 = vshrl.u32 920167782, %v6031
    %v6044 = vor.u32 %v6042, %v6043
    %v6045 = vshll.u32 920167782, %v6030
    %v6046 = vshrl.u32 1326507024, %v6031
    %v6047 = vor.u32 %v6045, %v6046
    %vm6048 = vcmp.lt.s32.totalorder %v6029, 1
    %vm6049 = vcmp.lt.s32.totalorder %v6029, 2
    %vm6050 = vcmp.lt.s32.totalorder %v6029, 3
    %vm6051 = vcmp.lt.s32.totalorder %v6029, 4
    %v6052 = vsel %vm6048, %v6032, %v6035
    %v6053 = vsel %vm6051, %v6041, 2102212464
    %v6054 = vsel %vm6050, %v6038, %v6053
    %v6055 = vsel %vm6049, %v6052, %v6054
    %v6056 = vsel %vm6048, %v6035, %v6038
    %v6057 = vsel %vm6051, %v6044, 920167782
    %v6058 = vsel %vm6050, %v6041, %v6057
    %v6059 = vsel %vm6049, %v6056, %v6058
    %v6060 = vsel %vm6048, %v6038, %v6041
    %v6061 = vsel %vm6051, %v6047, 1326507024
    %v6062 = vsel %vm6050, %v6044, %v6061
    %v6063 = vsel %vm6049, %v6060, %v6062
    %v6064 = vshll.u32 %v6024, 8
    %v6065 = vmul.u32.u64.compose %v6064, %v6063
    %v6066 = vextract.low.u32 %v6065
    %v6067 = vextract.high.u32 %v6065
    %v6068 = vmul.u32.u64.compose %v6064, %v6059
    %v6069 = vextract.low.u32 %v6068
    %v6070 = vextract.high.u32 %v6068
    %v6071 = vmul.u32 %v6064, %v6055
    %v6072 = vadd.s32 %v6067, %v6069
    %vm6073 = vc.u32 %v6067, %v6069
    %v6074 = vadd.s32 %v6070, 1
    %v6075 = vsel %vm6073, %v6074, %v6070
    %v6076 = vadd.s32 %v6071, %v6075
    %v6077 = vadd.s32 %v6076, 536870912
    %v6078 = vshrl.u32 %v6077, 30
    %v6079 = vshll.u32 %v6078, 30
    %v6080 = vsub.s32 %v6076, %v6079
    %vm6081 = vcmp.lt.s32.totalorder %v6080, 0
    %v6082 = vsub.s32 0, %v6080
    %v6083 = vsel %vm6081, %v6082, %v6080
    %v6084 = vclz %v6083
    %v6085 = vsub.s32 %v6084, 2
    %vm6086 = vcmp.gt.s32.totalorder 0, %v6085
    %v6087 = vsel %vm6086, 0, %v6085
    %v6088 = vsub.s32 32, %v6087
    %v6089 = vshll.u32 %v6080, %v6087
    %v6090 = vshrl.u32 %v6072, %v6088
    %v6091 = vor.u32 %v6089, %v6090
    %v6092 = vsub.s32 4294967266, %v6087
    %v6093 = vadd.s32 %v6092, 127
    %v6094 = vshll.u32 %v6093, 23
    %v6095 = vor.u32 4788187, %v6094
    %v6096 = vand.u32 2147483647, %v6095
    %v6098 = vcvt.s32.f32 %v6091
    %v6099 = vmul.f32 %v6098, %v6096
    %v6100 = vxor.u32 %v6099, 2147483648
    %v6101 = vsel %vm6018, %v6100, %v6099
    %v6102 = vsub.s32 4, %v6078
    %v6103 = vsel %vm6018, %v6102, %v6078
    %v6104 = vsel %vm6017, %v412, %v6101
    %v6105 = vsel %vm6017, 0, %v6103
    %v6106 = vcosq.f32.pop %v6104
    %v6107 = vsinq.f32.pop %v6104
    %vm6108 = vweird.f32 %v412
    %v6109 = vand.u32 %v6105, 3
    %vm6110 = vcmp.lt.s32.totalorder %v6109, 2
    %vm6111 = vcmp.eq.s32.totalorder %v6109, 0
    %v6112 = vxor.u32 %v6107, 2147483648
    %v6113 = vsel %vm6111, %v6106, %v6112
    %vm6114 = vcmp.eq.s32.totalorder %v6109, 2
    %v6115 = vxor.u32 %v6106, 2147483648
    %v6116 = vsel %vm6114, %v6115, %v6107
    %v6117 = vsel %vm6110, %v6113, %v6116
    %v6118 = vsel %vm6108, nan, %v6117
    %v6119 = vand.u32 2147483647, %v413
    %vm6120 = vcmp.le.f32.partialorder %v6119, 0.7853982
    %vm6121 = vcmp.lt.s32.totalorder %v413, 0
    %v6122 = vand.u32 %v413, 2139095040
    %v6123 = vshrl.u32 %v6122, 23
    %v6124 = vsub.s32 %v6123, 127
    %v6125 = vand.u32 2147483647, %v413
    %v6126 = vand.u32 %v6125, 8388607
    %v6127 = vor.u32 %v6126, 8388608
    %v6128 = vsub.s32 0, %v6127
    %v6129 = vadd.s32 %v6124, 1
    %vm6130 = vcmp.gt.s32.totalorder %v6129, 0
    %v6131 = vsel %vm6130, %v6129, 0
    %v6132 = vshrl.u32 %v6131, 5
    %v6133 = vand.u32 %v6131, 31
    %v6134 = vsub.s32 32, %v6133
    %v6135 = vshrl.u32 683565275, %v6134
    %v6136 = vshll.u32 683565275, %v6133
    %v6137 = vshrl.u32 2475754826, %v6134
    %v6138 = vor.u32 %v6136, %v6137
    %v6139 = vshll.u32 2475754826, %v6133
    %v6140 = vshrl.u32 2131351028, %v6134
    %v6141 = vor.u32 %v6139, %v6140
    %v6142 = vshll.u32 2131351028, %v6133
    %v6143 = vshrl.u32 2102212464, %v6134
    %v6144 = vor.u32 %v6142, %v6143
    %v6145 = vshll.u32 2102212464, %v6133
    %v6146 = vshrl.u32 920167782, %v6134
    %v6147 = vor.u32 %v6145, %v6146
    %v6148 = vshll.u32 920167782, %v6133
    %v6149 = vshrl.u32 1326507024, %v6134
    %v6150 = vor.u32 %v6148, %v6149
    %vm6151 = vcmp.lt.s32.totalorder %v6132, 1
    %vm6152 = vcmp.lt.s32.totalorder %v6132, 2
    %vm6153 = vcmp.lt.s32.totalorder %v6132, 3
    %vm6154 = vcmp.lt.s32.totalorder %v6132, 4
    %v6155 = vsel %vm6151, %v6135, %v6138
    %v6156 = vsel %vm6154, %v6144, 2102212464
    %v6157 = vsel %vm6153, %v6141, %v6156
    %v6158 = vsel %vm6152, %v6155, %v6157
    %v6159 = vsel %vm6151, %v6138, %v6141
    %v6160 = vsel %vm6154, %v6147, 920167782
    %v6161 = vsel %vm6153, %v6144, %v6160
    %v6162 = vsel %vm6152, %v6159, %v6161
    %v6163 = vsel %vm6151, %v6141, %v6144
    %v6164 = vsel %vm6154, %v6150, 1326507024
    %v6165 = vsel %vm6153, %v6147, %v6164
    %v6166 = vsel %vm6152, %v6163, %v6165
    %v6167 = vshll.u32 %v6127, 8
    %v6168 = vmul.u32.u64.compose %v6167, %v6166
    %v6169 = vextract.low.u32 %v6168
    %v6170 = vextract.high.u32 %v6168
    %v6171 = vmul.u32.u64.compose %v6167, %v6162
    %v6172 = vextract.low.u32 %v6171
    %v6173 = vextract.high.u32 %v6171
    %v6174 = vmul.u32 %v6167, %v6158
    %v6175 = vadd.s32 %v6170, %v6172
    %vm6176 = vc.u32 %v6170, %v6172
    %v6177 = vadd.s32 %v6173, 1
    %v6178 = vsel %vm6176, %v6177, %v6173
    %v6179 = vadd.s32 %v6174, %v6178
    %v6180 = vadd.s32 %v6179, 536870912
    %v6181 = vshrl.u32 %v6180, 30
    %v6182 = vshll.u32 %v6181, 30
    %v6183 = vsub.s32 %v6179, %v6182
    %vm6184 = vcmp.lt.s32.totalorder %v6183, 0
    %v6185 = vsub.s32 0, %v6183
    %v6186 = vsel %vm6184, %v6185, %v6183
    %v6187 = vclz %v6186
    %v6188 = vsub.s32 %v6187, 2
    %vm6189 = vcmp.gt.s32.totalorder 0, %v6188
    %v6190 = vsel %vm6189, 0, %v6188
    %v6191 = vsub.s32 32, %v6190
    %v6192 = vshll.u32 %v6183, %v6190
    %v6193 = vshrl.u32 %v6175, %v6191
    %v6194 = vor.u32 %v6192, %v6193
    %v6195 = vsub.s32 4294967266, %v6190
    %v6196 = vadd.s32 %v6195, 127
    %v6197 = vshll.u32 %v6196, 23
    %v6198 = vor.u32 4788187, %v6197
    %v6199 = vand.u32 2147483647, %v6198
    %v6201 = vcvt.s32.f32 %v6194
    %v6202 = vmul.f32 %v6201, %v6199
    %v6203 = vxor.u32 %v6202, 2147483648
    %v6204 = vsel %vm6121, %v6203, %v6202
    %v6205 = vsub.s32 4, %v6181
    %v6206 = vsel %vm6121, %v6205, %v6181
    %v6207 = vsel %vm6120, %v413, %v6204
    %v6208 = vsel %vm6120, 0, %v6206
    %v6209 = vcosq.f32.pop %v6207
    %v6210 = vsinq.f32.pop %v6207
    %vm6211 = vweird.f32 %v413
    %v6212 = vand.u32 %v6208, 3
    %vm6213 = vcmp.lt.s32.totalorder %v6212, 2
    %vm6214 = vcmp.eq.s32.totalorder %v6212, 0
    %v6215 = vxor.u32 %v6210, 2147483648
    %v6216 = vsel %vm6214, %v6209, %v6215
    %vm6217 = vcmp.eq.s32.totalorder %v6212, 2
    %v6218 = vxor.u32 %v6209, 2147483648
    %v6219 = vsel %vm6217, %v6218, %v6210
    %v6220 = vsel %vm6213, %v6216, %v6219
    %v6221 = vsel %vm6211, nan, %v6220
    %v6222 = vand.u32 2147483647, %v414
    %vm6223 = vcmp.le.f32.partialorder %v6222, 0.7853982
    %vm6224 = vcmp.lt.s32.totalorder %v414, 0
    %v6225 = vand.u32 %v414, 2139095040
    %v6226 = vshrl.u32 %v6225, 23
    %v6227 = vsub.s32 %v6226, 127
    %v6228 = vand.u32 2147483647, %v414
    %v6229 = vand.u32 %v6228, 8388607
    %v6230 = vor.u32 %v6229, 8388608
    %v6231 = vsub.s32 0, %v6230
    %v6232 = vadd.s32 %v6227, 1
    %vm6233 = vcmp.gt.s32.totalorder %v6232, 0
    %v6234 = vsel %vm6233, %v6232, 0
    %v6235 = vshrl.u32 %v6234, 5
    %v6236 = vand.u32 %v6234, 31
    %v6237 = vsub.s32 32, %v6236
    %v6238 = vshrl.u32 683565275, %v6237
    %v6239 = vshll.u32 683565275, %v6236
    %v6240 = vshrl.u32 2475754826, %v6237
    %v6241 = vor.u32 %v6239, %v6240
    %v6242 = vshll.u32 2475754826, %v6236
    %v6243 = vshrl.u32 2131351028, %v6237
    %v6244 = vor.u32 %v6242, %v6243
    %v6245 = vshll.u32 2131351028, %v6236
    %v6246 = vshrl.u32 2102212464, %v6237
    %v6247 = vor.u32 %v6245, %v6246
    %v6248 = vshll.u32 2102212464, %v6236
    %v6249 = vshrl.u32 920167782, %v6237
    %v6250 = vor.u32 %v6248, %v6249
    %v6251 = vshll.u32 920167782, %v6236
    %v6252 = vshrl.u32 1326507024, %v6237
    %v6253 = vor.u32 %v6251, %v6252
    %vm6254 = vcmp.lt.s32.totalorder %v6235, 1
    %vm6255 = vcmp.lt.s32.totalorder %v6235, 2
    %vm6256 = vcmp.lt.s32.totalorder %v6235, 3
    %vm6257 = vcmp.lt.s32.totalorder %v6235, 4
    %v6258 = vsel %vm6254, %v6238, %v6241
    %v6259 = vsel %vm6257, %v6247, 2102212464
    %v6260 = vsel %vm6256, %v6244, %v6259
    %v6261 = vsel %vm6255, %v6258, %v6260
    %v6262 = vsel %vm6254, %v6241, %v6244
    %v6263 = vsel %vm6257, %v6250, 920167782
    %v6264 = vsel %vm6256, %v6247, %v6263
    %v6265 = vsel %vm6255, %v6262, %v6264
    %v6266 = vsel %vm6254, %v6244, %v6247
    %v6267 = vsel %vm6257, %v6253, 1326507024
    %v6268 = vsel %vm6256, %v6250, %v6267
    %v6269 = vsel %vm6255, %v6266, %v6268
    %v6270 = vshll.u32 %v6230, 8
    %v6271 = vmul.u32.u64.compose %v6270, %v6269
    %v6272 = vextract.low.u32 %v6271
    %v6273 = vextract.high.u32 %v6271
    %v6274 = vmul.u32.u64.compose %v6270, %v6265
    %v6275 = vextract.low.u32 %v6274
    %v6276 = vextract.high.u32 %v6274
    %v6277 = vmul.u32 %v6270, %v6261
    %v6278 = vadd.s32 %v6273, %v6275
    %vm6279 = vc.u32 %v6273, %v6275
    %v6280 = vadd.s32 %v6276, 1
    %v6281 = vsel %vm6279, %v6280, %v6276
    %v6282 = vadd.s32 %v6277, %v6281
    %v6283 = vadd.s32 %v6282, 536870912
    %v6284 = vshrl.u32 %v6283, 30
    %v6285 = vshll.u32 %v6284, 30
    %v6286 = vsub.s32 %v6282, %v6285
    %vm6287 = vcmp.lt.s32.totalorder %v6286, 0
    %v6288 = vsub.s32 0, %v6286
    %v6289 = vsel %vm6287, %v6288, %v6286
    %v6290 = vclz %v6289
    %v6291 = vsub.s32 %v6290, 2
    %vm6292 = vcmp.gt.s32.totalorder 0, %v6291
    %v6293 = vsel %vm6292, 0, %v6291
    %v6294 = vsub.s32 32, %v6293
    %v6295 = vshll.u32 %v6286, %v6293
    %v6296 = vshrl.u32 %v6278, %v6294
    %v6297 = vor.u32 %v6295, %v6296
    %v6298 = vsub.s32 4294967266, %v6293
    %v6299 = vadd.s32 %v6298, 127
    %v6300 = vshll.u32 %v6299, 23
    %v6301 = vor.u32 4788187, %v6300
    %v6302 = vand.u32 2147483647, %v6301
    %v6304 = vcvt.s32.f32 %v6297
    %v6305 = vmul.f32 %v6304, %v6302
    %v6306 = vxor.u32 %v6305, 2147483648
    %v6307 = vsel %vm6224, %v6306, %v6305
    %v6308 = vsub.s32 4, %v6284
    %v6309 = vsel %vm6224, %v6308, %v6284
    %v6310 = vsel %vm6223, %v414, %v6307
    %v6311 = vsel %vm6223, 0, %v6309
    %v6312 = vcosq.f32.pop %v6310
    %v6313 = vsinq.f32.pop %v6310
    %vm6314 = vweird.f32 %v414
    %v6315 = vand.u32 %v6311, 3
    %vm6316 = vcmp.lt.s32.totalorder %v6315, 2
    %vm6317 = vcmp.eq.s32.totalorder %v6315, 0
    %v6318 = vxor.u32 %v6313, 2147483648
    %v6319 = vsel %vm6317, %v6312, %v6318
    %vm6320 = vcmp.eq.s32.totalorder %v6315, 2
    %v6321 = vxor.u32 %v6312, 2147483648
    %v6322 = vsel %vm6320, %v6321, %v6313
    %v6323 = vsel %vm6316, %v6319, %v6322
    %v6324 = vsel %vm6314, nan, %v6323
    %v6325 = vand.u32 2147483647, %v415
    %vm6326 = vcmp.le.f32.partialorder %v6325, 0.7853982
    %vm6327 = vcmp.lt.s32.totalorder %v415, 0
    %v6328 = vand.u32 %v415, 2139095040
    %v6329 = vshrl.u32 %v6328, 23
    %v6330 = vsub.s32 %v6329, 127
    %v6331 = vand.u32 2147483647, %v415
    %v6332 = vand.u32 %v6331, 8388607
    %v6333 = vor.u32 %v6332, 8388608
    %v6334 = vsub.s32 0, %v6333
    %v6335 = vadd.s32 %v6330, 1
    %vm6336 = vcmp.gt.s32.totalorder %v6335, 0
    %v6337 = vsel %vm6336, %v6335, 0
    %v6338 = vshrl.u32 %v6337, 5
    %v6339 = vand.u32 %v6337, 31
    %v6340 = vsub.s32 32, %v6339
    %v6341 = vshrl.u32 683565275, %v6340
    %v6342 = vshll.u32 683565275, %v6339
    %v6343 = vshrl.u32 2475754826, %v6340
    %v6344 = vor.u32 %v6342, %v6343
    %v6345 = vshll.u32 2475754826, %v6339
    %v6346 = vshrl.u32 2131351028, %v6340
    %v6347 = vor.u32 %v6345, %v6346
    %v6348 = vshll.u32 2131351028, %v6339
    %v6349 = vshrl.u32 2102212464, %v6340
    %v6350 = vor.u32 %v6348, %v6349
    %v6351 = vshll.u32 2102212464, %v6339
    %v6352 = vshrl.u32 920167782, %v6340
    %v6353 = vor.u32 %v6351, %v6352
    %v6354 = vshll.u32 920167782, %v6339
    %v6355 = vshrl.u32 1326507024, %v6340
    %v6356 = vor.u32 %v6354, %v6355
    %vm6357 = vcmp.lt.s32.totalorder %v6338, 1
    %vm6358 = vcmp.lt.s32.totalorder %v6338, 2
    %vm6359 = vcmp.lt.s32.totalorder %v6338, 3
    %vm6360 = vcmp.lt.s32.totalorder %v6338, 4
    %v6361 = vsel %vm6357, %v6341, %v6344
    %v6362 = vsel %vm6360, %v6350, 2102212464
    %v6363 = vsel %vm6359, %v6347, %v6362
    %v6364 = vsel %vm6358, %v6361, %v6363
    %v6365 = vsel %vm6357, %v6344, %v6347
    %v6366 = vsel %vm6360, %v6353, 920167782
    %v6367 = vsel %vm6359, %v6350, %v6366
    %v6368 = vsel %vm6358, %v6365, %v6367
    %v6369 = vsel %vm6357, %v6347, %v6350
    %v6370 = vsel %vm6360, %v6356, 1326507024
    %v6371 = vsel %vm6359, %v6353, %v6370
    %v6372 = vsel %vm6358, %v6369, %v6371
    %v6373 = vshll.u32 %v6333, 8
    %v6374 = vmul.u32.u64.compose %v6373, %v6372
    %v6375 = vextract.low.u32 %v6374
    %v6376 = vextract.high.u32 %v6374
    %v6377 = vmul.u32.u64.compose %v6373, %v6368
    %v6378 = vextract.low.u32 %v6377
    %v6379 = vextract.high.u32 %v6377
    %v6380 = vmul.u32 %v6373, %v6364
    %v6381 = vadd.s32 %v6376, %v6378
    %vm6382 = vc.u32 %v6376, %v6378
    %v6383 = vadd.s32 %v6379, 1
    %v6384 = vsel %vm6382, %v6383, %v6379
    %v6385 = vadd.s32 %v6380, %v6384
    %v6386 = vadd.s32 %v6385, 536870912
    %v6387 = vshrl.u32 %v6386, 30
    %v6388 = vshll.u32 %v6387, 30
    %v6389 = vsub.s32 %v6385, %v6388
    %vm6390 = vcmp.lt.s32.totalorder %v6389, 0
    %v6391 = vsub.s32 0, %v6389
    %v6392 = vsel %vm6390, %v6391, %v6389
    %v6393 = vclz %v6392
    %v6394 = vsub.s32 %v6393, 2
    %vm6395 = vcmp.gt.s32.totalorder 0, %v6394
    %v6396 = vsel %vm6395, 0, %v6394
    %v6397 = vsub.s32 32, %v6396
    %v6398 = vshll.u32 %v6389, %v6396
    %v6399 = vshrl.u32 %v6381, %v6397
    %v6400 = vor.u32 %v6398, %v6399
    %v6401 = vsub.s32 4294967266, %v6396
    %v6402 = vadd.s32 %v6401, 127
    %v6403 = vshll.u32 %v6402, 23
    %v6404 = vor.u32 4788187, %v6403
    %v6405 = vand.u32 2147483647, %v6404
    %v6407 = vcvt.s32.f32 %v6400
    %v6408 = vmul.f32 %v6407, %v6405
    %v6409 = vxor.u32 %v6408, 2147483648
    %v6410 = vsel %vm6327, %v6409, %v6408
    %v6411 = vsub.s32 4, %v6387
    %v6412 = vsel %vm6327, %v6411, %v6387
    %v6413 = vsel %vm6326, %v415, %v6410
    %v6414 = vsel %vm6326, 0, %v6412
    %v6415 = vcosq.f32.pop %v6413
    %v6416 = vsinq.f32.pop %v6413
    %vm6417 = vweird.f32 %v415
    %v6418 = vand.u32 %v6414, 3
    %vm6419 = vcmp.lt.s32.totalorder %v6418, 2
    %vm6420 = vcmp.eq.s32.totalorder %v6418, 0
    %v6421 = vxor.u32 %v6416, 2147483648
    %v6422 = vsel %vm6420, %v6415, %v6421
    %vm6423 = vcmp.eq.s32.totalorder %v6418, 2
    %v6424 = vxor.u32 %v6415, 2147483648
    %v6425 = vsel %vm6423, %v6424, %v6416
    %v6426 = vsel %vm6419, %v6422, %v6425
    %v6427 = vsel %vm6417, nan, %v6426
    %v6428 = vand.u32 2147483647, %v416
    %vm6429 = vcmp.le.f32.partialorder %v6428, 0.7853982
    %vm6430 = vcmp.lt.s32.totalorder %v416, 0
    %v6431 = vand.u32 %v416, 2139095040
    %v6432 = vshrl.u32 %v6431, 23
    %v6433 = vsub.s32 %v6432, 127
    %v6434 = vand.u32 2147483647, %v416
    %v6435 = vand.u32 %v6434, 8388607
    %v6436 = vor.u32 %v6435, 8388608
    %v6437 = vsub.s32 0, %v6436
    %v6438 = vadd.s32 %v6433, 1
    %vm6439 = vcmp.gt.s32.totalorder %v6438, 0
    %v6440 = vsel %vm6439, %v6438, 0
    %v6441 = vshrl.u32 %v6440, 5
    %v6442 = vand.u32 %v6440, 31
    %v6443 = vsub.s32 32, %v6442
    %v6444 = vshrl.u32 683565275, %v6443
    %v6445 = vshll.u32 683565275, %v6442
    %v6446 = vshrl.u32 2475754826, %v6443
    %v6447 = vor.u32 %v6445, %v6446
    %v6448 = vshll.u32 2475754826, %v6442
    %v6449 = vshrl.u32 2131351028, %v6443
    %v6450 = vor.u32 %v6448, %v6449
    %v6451 = vshll.u32 2131351028, %v6442
    %v6452 = vshrl.u32 2102212464, %v6443
    %v6453 = vor.u32 %v6451, %v6452
    %v6454 = vshll.u32 2102212464, %v6442
    %v6455 = vshrl.u32 920167782, %v6443
    %v6456 = vor.u32 %v6454, %v6455
    %v6457 = vshll.u32 920167782, %v6442
    %v6458 = vshrl.u32 1326507024, %v6443
    %v6459 = vor.u32 %v6457, %v6458
    %vm6460 = vcmp.lt.s32.totalorder %v6441, 1
    %vm6461 = vcmp.lt.s32.totalorder %v6441, 2
    %vm6462 = vcmp.lt.s32.totalorder %v6441, 3
    %vm6463 = vcmp.lt.s32.totalorder %v6441, 4
    %v6464 = vsel %vm6460, %v6444, %v6447
    %v6465 = vsel %vm6463, %v6453, 2102212464
    %v6466 = vsel %vm6462, %v6450, %v6465
    %v6467 = vsel %vm6461, %v6464, %v6466
    %v6468 = vsel %vm6460, %v6447, %v6450
    %v6469 = vsel %vm6463, %v6456, 920167782
    %v6470 = vsel %vm6462, %v6453, %v6469
    %v6471 = vsel %vm6461, %v6468, %v6470
    %v6472 = vsel %vm6460, %v6450, %v6453
    %v6473 = vsel %vm6463, %v6459, 1326507024
    %v6474 = vsel %vm6462, %v6456, %v6473
    %v6475 = vsel %vm6461, %v6472, %v6474
    %v6476 = vshll.u32 %v6436, 8
    %v6477 = vmul.u32.u64.compose %v6476, %v6475
    %v6478 = vextract.low.u32 %v6477
    %v6479 = vextract.high.u32 %v6477
    %v6480 = vmul.u32.u64.compose %v6476, %v6471
    %v6481 = vextract.low.u32 %v6480
    %v6482 = vextract.high.u32 %v6480
    %v6483 = vmul.u32 %v6476, %v6467
    %v6484 = vadd.s32 %v6479, %v6481
    %vm6485 = vc.u32 %v6479, %v6481
    %v6486 = vadd.s32 %v6482, 1
    %v6487 = vsel %vm6485, %v6486, %v6482
    %v6488 = vadd.s32 %v6483, %v6487
    %v6489 = vadd.s32 %v6488, 536870912
    %v6490 = vshrl.u32 %v6489, 30
    %v6491 = vshll.u32 %v6490, 30
    %v6492 = vsub.s32 %v6488, %v6491
    %vm6493 = vcmp.lt.s32.totalorder %v6492, 0
    %v6494 = vsub.s32 0, %v6492
    %v6495 = vsel %vm6493, %v6494, %v6492
    %v6496 = vclz %v6495
    %v6497 = vsub.s32 %v6496, 2
    %vm6498 = vcmp.gt.s32.totalorder 0, %v6497
    %v6499 = vsel %vm6498, 0, %v6497
    %v6500 = vsub.s32 32, %v6499
    %v6501 = vshll.u32 %v6492, %v6499
    %v6502 = vshrl.u32 %v6484, %v6500
    %v6503 = vor.u32 %v6501, %v6502
    %v6504 = vsub.s32 4294967266, %v6499
    %v6505 = vadd.s32 %v6504, 127
    %v6506 = vshll.u32 %v6505, 23
    %v6507 = vor.u32 4788187, %v6506
    %v6508 = vand.u32 2147483647, %v6507
    %v6510 = vcvt.s32.f32 %v6503
    %v6511 = vmul.f32 %v6510, %v6508
    %v6512 = vxor.u32 %v6511, 2147483648
    %v6513 = vsel %vm6430, %v6512, %v6511
    %v6514 = vsub.s32 4, %v6490
    %v6515 = vsel %vm6430, %v6514, %v6490
    %v6516 = vsel %vm6429, %v416, %v6513
    %v6517 = vsel %vm6429, 0, %v6515
    %v6518 = vcosq.f32.pop %v6516
    %v6519 = vsinq.f32.pop %v6516
    %vm6520 = vweird.f32 %v416
    %v6521 = vand.u32 %v6517, 3
    %vm6522 = vcmp.lt.s32.totalorder %v6521, 2
    %vm6523 = vcmp.eq.s32.totalorder %v6521, 0
    %v6524 = vxor.u32 %v6519, 2147483648
    %v6525 = vsel %vm6523, %v6518, %v6524
    %vm6526 = vcmp.eq.s32.totalorder %v6521, 2
    %v6527 = vxor.u32 %v6518, 2147483648
    %v6528 = vsel %vm6526, %v6527, %v6519
    %v6529 = vsel %vm6522, %v6525, %v6528
    %v6530 = vsel %vm6520, nan, %v6529
    %v6531 = vand.u32 2147483647, %v417
    %vm6532 = vcmp.le.f32.partialorder %v6531, 0.7853982
    %vm6533 = vcmp.lt.s32.totalorder %v417, 0
    %v6534 = vand.u32 %v417, 2139095040
    %v6535 = vshrl.u32 %v6534, 23
    %v6536 = vsub.s32 %v6535, 127
    %v6537 = vand.u32 2147483647, %v417
    %v6538 = vand.u32 %v6537, 8388607
    %v6539 = vor.u32 %v6538, 8388608
    %v6540 = vsub.s32 0, %v6539
    %v6541 = vadd.s32 %v6536, 1
    %vm6542 = vcmp.gt.s32.totalorder %v6541, 0
    %v6543 = vsel %vm6542, %v6541, 0
    %v6544 = vshrl.u32 %v6543, 5
    %v6545 = vand.u32 %v6543, 31
    %v6546 = vsub.s32 32, %v6545
    %v6547 = vshrl.u32 683565275, %v6546
    %v6548 = vshll.u32 683565275, %v6545
    %v6549 = vshrl.u32 2475754826, %v6546
    %v6550 = vor.u32 %v6548, %v6549
    %v6551 = vshll.u32 2475754826, %v6545
    %v6552 = vshrl.u32 2131351028, %v6546
    %v6553 = vor.u32 %v6551, %v6552
    %v6554 = vshll.u32 2131351028, %v6545
    %v6555 = vshrl.u32 2102212464, %v6546
    %v6556 = vor.u32 %v6554, %v6555
    %v6557 = vshll.u32 2102212464, %v6545
    %v6558 = vshrl.u32 920167782, %v6546
    %v6559 = vor.u32 %v6557, %v6558
    %v6560 = vshll.u32 920167782, %v6545
    %v6561 = vshrl.u32 1326507024, %v6546
    %v6562 = vor.u32 %v6560, %v6561
    %vm6563 = vcmp.lt.s32.totalorder %v6544, 1
    %vm6564 = vcmp.lt.s32.totalorder %v6544, 2
    %vm6565 = vcmp.lt.s32.totalorder %v6544, 3
    %vm6566 = vcmp.lt.s32.totalorder %v6544, 4
    %v6567 = vsel %vm6563, %v6547, %v6550
    %v6568 = vsel %vm6566, %v6556, 2102212464
    %v6569 = vsel %vm6565, %v6553, %v6568
    %v6570 = vsel %vm6564, %v6567, %v6569
    %v6571 = vsel %vm6563, %v6550, %v6553
    %v6572 = vsel %vm6566, %v6559, 920167782
    %v6573 = vsel %vm6565, %v6556, %v6572
    %v6574 = vsel %vm6564, %v6571, %v6573
    %v6575 = vsel %vm6563, %v6553, %v6556
    %v6576 = vsel %vm6566, %v6562, 1326507024
    %v6577 = vsel %vm6565, %v6559, %v6576
    %v6578 = vsel %vm6564, %v6575, %v6577
    %v6579 = vshll.u32 %v6539, 8
    %v6580 = vmul.u32.u64.compose %v6579, %v6578
    %v6581 = vextract.low.u32 %v6580
    %v6582 = vextract.high.u32 %v6580
    %v6583 = vmul.u32.u64.compose %v6579, %v6574
    %v6584 = vextract.low.u32 %v6583
    %v6585 = vextract.high.u32 %v6583
    %v6586 = vmul.u32 %v6579, %v6570
    %v6587 = vadd.s32 %v6582, %v6584
    %vm6588 = vc.u32 %v6582, %v6584
    %v6589 = vadd.s32 %v6585, 1
    %v6590 = vsel %vm6588, %v6589, %v6585
    %v6591 = vadd.s32 %v6586, %v6590
    %v6592 = vadd.s32 %v6591, 536870912
    %v6593 = vshrl.u32 %v6592, 30
    %v6594 = vshll.u32 %v6593, 30
    %v6595 = vsub.s32 %v6591, %v6594
    %vm6596 = vcmp.lt.s32.totalorder %v6595, 0
    %v6597 = vsub.s32 0, %v6595
    %v6598 = vsel %vm6596, %v6597, %v6595
    %v6599 = vclz %v6598
    %v6600 = vsub.s32 %v6599, 2
    %vm6601 = vcmp.gt.s32.totalorder 0, %v6600
    %v6602 = vsel %vm6601, 0, %v6600
    %v6603 = vsub.s32 32, %v6602
    %v6604 = vshll.u32 %v6595, %v6602
    %v6605 = vshrl.u32 %v6587, %v6603
    %v6606 = vor.u32 %v6604, %v6605
    %v6607 = vsub.s32 4294967266, %v6602
    %v6608 = vadd.s32 %v6607, 127
    %v6609 = vshll.u32 %v6608, 23
    %v6610 = vor.u32 4788187, %v6609
    %v6611 = vand.u32 2147483647, %v6610
    %v6613 = vcvt.s32.f32 %v6606
    %v6614 = vmul.f32 %v6613, %v6611
    %v6615 = vxor.u32 %v6614, 2147483648
    %v6616 = vsel %vm6533, %v6615, %v6614
    %v6617 = vsub.s32 4, %v6593
    %v6618 = vsel %vm6533, %v6617, %v6593
    %v6619 = vsel %vm6532, %v417, %v6616
    %v6620 = vsel %vm6532, 0, %v6618
    %v6621 = vcosq.f32.pop %v6619
    %v6622 = vsinq.f32.pop %v6619
    %vm6623 = vweird.f32 %v417
    %v6624 = vand.u32 %v6620, 3
    %vm6625 = vcmp.lt.s32.totalorder %v6624, 2
    %vm6626 = vcmp.eq.s32.totalorder %v6624, 0
    %v6627 = vxor.u32 %v6622, 2147483648
    %v6628 = vsel %vm6626, %v6621, %v6627
    %vm6629 = vcmp.eq.s32.totalorder %v6624, 2
    %v6630 = vxor.u32 %v6621, 2147483648
    %v6631 = vsel %vm6629, %v6630, %v6622
    %v6632 = vsel %vm6625, %v6628, %v6631
    %v6633 = vsel %vm6623, nan, %v6632
    %v6634 = vand.u32 2147483647, %v418
    %vm6635 = vcmp.le.f32.partialorder %v6634, 0.7853982
    %vm6636 = vcmp.lt.s32.totalorder %v418, 0
    %v6637 = vand.u32 %v418, 2139095040
    %v6638 = vshrl.u32 %v6637, 23
    %v6639 = vsub.s32 %v6638, 127
    %v6640 = vand.u32 2147483647, %v418
    %v6641 = vand.u32 %v6640, 8388607
    %v6642 = vor.u32 %v6641, 8388608
    %v6643 = vsub.s32 0, %v6642
    %v6644 = vadd.s32 %v6639, 1
    %vm6645 = vcmp.gt.s32.totalorder %v6644, 0
    %v6646 = vsel %vm6645, %v6644, 0
    %v6647 = vshrl.u32 %v6646, 5
    %v6648 = vand.u32 %v6646, 31
    %v6649 = vsub.s32 32, %v6648
    %v6650 = vshrl.u32 683565275, %v6649
    %v6651 = vshll.u32 683565275, %v6648
    %v6652 = vshrl.u32 2475754826, %v6649
    %v6653 = vor.u32 %v6651, %v6652
    %v6654 = vshll.u32 2475754826, %v6648
    %v6655 = vshrl.u32 2131351028, %v6649
    %v6656 = vor.u32 %v6654, %v6655
    %v6657 = vshll.u32 2131351028, %v6648
    %v6658 = vshrl.u32 2102212464, %v6649
    %v6659 = vor.u32 %v6657, %v6658
    %v6660 = vshll.u32 2102212464, %v6648
    %v6661 = vshrl.u32 920167782, %v6649
    %v6662 = vor.u32 %v6660, %v6661
    %v6663 = vshll.u32 920167782, %v6648
    %v6664 = vshrl.u32 1326507024, %v6649
    %v6665 = vor.u32 %v6663, %v6664
    %vm6666 = vcmp.lt.s32.totalorder %v6647, 1
    %vm6667 = vcmp.lt.s32.totalorder %v6647, 2
    %vm6668 = vcmp.lt.s32.totalorder %v6647, 3
    %vm6669 = vcmp.lt.s32.totalorder %v6647, 4
    %v6670 = vsel %vm6666, %v6650, %v6653
    %v6671 = vsel %vm6669, %v6659, 2102212464
    %v6672 = vsel %vm6668, %v6656, %v6671
    %v6673 = vsel %vm6667, %v6670, %v6672
    %v6674 = vsel %vm6666, %v6653, %v6656
    %v6675 = vsel %vm6669, %v6662, 920167782
    %v6676 = vsel %vm6668, %v6659, %v6675
    %v6677 = vsel %vm6667, %v6674, %v6676
    %v6678 = vsel %vm6666, %v6656, %v6659
    %v6679 = vsel %vm6669, %v6665, 1326507024
    %v6680 = vsel %vm6668, %v6662, %v6679
    %v6681 = vsel %vm6667, %v6678, %v6680
    %v6682 = vshll.u32 %v6642, 8
    %v6683 = vmul.u32.u64.compose %v6682, %v6681
    %v6684 = vextract.low.u32 %v6683
    %v6685 = vextract.high.u32 %v6683
    %v6686 = vmul.u32.u64.compose %v6682, %v6677
    %v6687 = vextract.low.u32 %v6686
    %v6688 = vextract.high.u32 %v6686
    %v6689 = vmul.u32 %v6682, %v6673
    %v6690 = vadd.s32 %v6685, %v6687
    %vm6691 = vc.u32 %v6685, %v6687
    %v6692 = vadd.s32 %v6688, 1
    %v6693 = vsel %vm6691, %v6692, %v6688
    %v6694 = vadd.s32 %v6689, %v6693
    %v6695 = vadd.s32 %v6694, 536870912
    %v6696 = vshrl.u32 %v6695, 30
    %v6697 = vshll.u32 %v6696, 30
    %v6698 = vsub.s32 %v6694, %v6697
    %vm6699 = vcmp.lt.s32.totalorder %v6698, 0
    %v6700 = vsub.s32 0, %v6698
    %v6701 = vsel %vm6699, %v6700, %v6698
    %v6702 = vclz %v6701
    %v6703 = vsub.s32 %v6702, 2
    %vm6704 = vcmp.gt.s32.totalorder 0, %v6703
    %v6705 = vsel %vm6704, 0, %v6703
    %v6706 = vsub.s32 32, %v6705
    %v6707 = vshll.u32 %v6698, %v6705
    %v6708 = vshrl.u32 %v6690, %v6706
    %v6709 = vor.u32 %v6707, %v6708
    %v6710 = vsub.s32 4294967266, %v6705
    %v6711 = vadd.s32 %v6710, 127
    %v6712 = vshll.u32 %v6711, 23
    %v6713 = vor.u32 4788187, %v6712
    %v6714 = vand.u32 2147483647, %v6713
    %v6716 = vcvt.s32.f32 %v6709
    %v6717 = vmul.f32 %v6716, %v6714
    %v6718 = vxor.u32 %v6717, 2147483648
    %v6719 = vsel %vm6636, %v6718, %v6717
    %v6720 = vsub.s32 4, %v6696
    %v6721 = vsel %vm6636, %v6720, %v6696
    %v6722 = vsel %vm6635, %v418, %v6719
    %v6723 = vsel %vm6635, 0, %v6721
    %v6724 = vcosq.f32.pop %v6722
    %v6725 = vsinq.f32.pop %v6722
    %vm6726 = vweird.f32 %v418
    %v6727 = vand.u32 %v6723, 3
    %vm6728 = vcmp.lt.s32.totalorder %v6727, 2
    %vm6729 = vcmp.eq.s32.totalorder %v6727, 0
    %v6730 = vxor.u32 %v6725, 2147483648
    %v6731 = vsel %vm6729, %v6724, %v6730
    %vm6732 = vcmp.eq.s32.totalorder %v6727, 2
    %v6733 = vxor.u32 %v6724, 2147483648
    %v6734 = vsel %vm6732, %v6733, %v6725
    %v6735 = vsel %vm6728, %v6731, %v6734
    %v6736 = vsel %vm6726, nan, %v6735
    %v6737 = vand.u32 2147483647, %v419
    %vm6738 = vcmp.le.f32.partialorder %v6737, 0.7853982
    %vm6739 = vcmp.lt.s32.totalorder %v419, 0
    %v6740 = vand.u32 %v419, 2139095040
    %v6741 = vshrl.u32 %v6740, 23
    %v6742 = vsub.s32 %v6741, 127
    %v6743 = vand.u32 2147483647, %v419
    %v6744 = vand.u32 %v6743, 8388607
    %v6745 = vor.u32 %v6744, 8388608
    %v6746 = vsub.s32 0, %v6745
    %v6747 = vadd.s32 %v6742, 1
    %vm6748 = vcmp.gt.s32.totalorder %v6747, 0
    %v6749 = vsel %vm6748, %v6747, 0
    %v6750 = vshrl.u32 %v6749, 5
    %v6751 = vand.u32 %v6749, 31
    %v6752 = vsub.s32 32, %v6751
    %v6753 = vshrl.u32 683565275, %v6752
    %v6754 = vshll.u32 683565275, %v6751
    %v6755 = vshrl.u32 2475754826, %v6752
    %v6756 = vor.u32 %v6754, %v6755
    %v6757 = vshll.u32 2475754826, %v6751
    %v6758 = vshrl.u32 2131351028, %v6752
    %v6759 = vor.u32 %v6757, %v6758
    %v6760 = vshll.u32 2131351028, %v6751
    %v6761 = vshrl.u32 2102212464, %v6752
    %v6762 = vor.u32 %v6760, %v6761
    %v6763 = vshll.u32 2102212464, %v6751
    %v6764 = vshrl.u32 920167782, %v6752
    %v6765 = vor.u32 %v6763, %v6764
    %v6766 = vshll.u32 920167782, %v6751
    %v6767 = vshrl.u32 1326507024, %v6752
    %v6768 = vor.u32 %v6766, %v6767
    %vm6769 = vcmp.lt.s32.totalorder %v6750, 1
    %vm6770 = vcmp.lt.s32.totalorder %v6750, 2
    %vm6771 = vcmp.lt.s32.totalorder %v6750, 3
    %vm6772 = vcmp.lt.s32.totalorder %v6750, 4
    %v6773 = vsel %vm6769, %v6753, %v6756
    %v6774 = vsel %vm6772, %v6762, 2102212464
    %v6775 = vsel %vm6771, %v6759, %v6774
    %v6776 = vsel %vm6770, %v6773, %v6775
    %v6777 = vsel %vm6769, %v6756, %v6759
    %v6778 = vsel %vm6772, %v6765, 920167782
    %v6779 = vsel %vm6771, %v6762, %v6778
    %v6780 = vsel %vm6770, %v6777, %v6779
    %v6781 = vsel %vm6769, %v6759, %v6762
    %v6782 = vsel %vm6772, %v6768, 1326507024
    %v6783 = vsel %vm6771, %v6765, %v6782
    %v6784 = vsel %vm6770, %v6781, %v6783
    %v6785 = vshll.u32 %v6745, 8
    %v6786 = vmul.u32.u64.compose %v6785, %v6784
    %v6787 = vextract.low.u32 %v6786
    %v6788 = vextract.high.u32 %v6786
    %v6789 = vmul.u32.u64.compose %v6785, %v6780
    %v6790 = vextract.low.u32 %v6789
    %v6791 = vextract.high.u32 %v6789
    %v6792 = vmul.u32 %v6785, %v6776
    %v6793 = vadd.s32 %v6788, %v6790
    %vm6794 = vc.u32 %v6788, %v6790
    %v6795 = vadd.s32 %v6791, 1
    %v6796 = vsel %vm6794, %v6795, %v6791
    %v6797 = vadd.s32 %v6792, %v6796
    %v6798 = vadd.s32 %v6797, 536870912
    %v6799 = vshrl.u32 %v6798, 30
    %v6800 = vshll.u32 %v6799, 30
    %v6801 = vsub.s32 %v6797, %v6800
    %vm6802 = vcmp.lt.s32.totalorder %v6801, 0
    %v6803 = vsub.s32 0, %v6801
    %v6804 = vsel %vm6802, %v6803, %v6801
    %v6805 = vclz %v6804
    %v6806 = vsub.s32 %v6805, 2
    %vm6807 = vcmp.gt.s32.totalorder 0, %v6806
    %v6808 = vsel %vm6807, 0, %v6806
    %v6809 = vsub.s32 32, %v6808
    %v6810 = vshll.u32 %v6801, %v6808
    %v6811 = vshrl.u32 %v6793, %v6809
    %v6812 = vor.u32 %v6810, %v6811
    %v6813 = vsub.s32 4294967266, %v6808
    %v6814 = vadd.s32 %v6813, 127
    %v6815 = vshll.u32 %v6814, 23
    %v6816 = vor.u32 4788187, %v6815
    %v6817 = vand.u32 2147483647, %v6816
    %v6819 = vcvt.s32.f32 %v6812
    %v6820 = vmul.f32 %v6819, %v6817
    %v6821 = vxor.u32 %v6820, 2147483648
    %v6822 = vsel %vm6739, %v6821, %v6820
    %v6823 = vsub.s32 4, %v6799
    %v6824 = vsel %vm6739, %v6823, %v6799
    %v6825 = vsel %vm6738, %v419, %v6822
    %v6826 = vsel %vm6738, 0, %v6824
    %v6827 = vcosq.f32.pop %v6825
    %v6828 = vsinq.f32.pop %v6825
    %vm6829 = vweird.f32 %v419
    %v6830 = vand.u32 %v6826, 3
    %vm6831 = vcmp.lt.s32.totalorder %v6830, 2
    %vm6832 = vcmp.eq.s32.totalorder %v6830, 0
    %v6833 = vxor.u32 %v6828, 2147483648
    %v6834 = vsel %vm6832, %v6827, %v6833
    %vm6835 = vcmp.eq.s32.totalorder %v6830, 2
    %v6836 = vxor.u32 %v6827, 2147483648
    %v6837 = vsel %vm6835, %v6836, %v6828
    %v6838 = vsel %vm6831, %v6834, %v6837
    %v6839 = vsel %vm6829, nan, %v6838
    %v6840 = vand.u32 2147483647, %v420
    %vm6841 = vcmp.le.f32.partialorder %v6840, 0.7853982
    %vm6842 = vcmp.lt.s32.totalorder %v420, 0
    %v6843 = vand.u32 %v420, 2139095040
    %v6844 = vshrl.u32 %v6843, 23
    %v6845 = vsub.s32 %v6844, 127
    %v6846 = vand.u32 2147483647, %v420
    %v6847 = vand.u32 %v6846, 8388607
    %v6848 = vor.u32 %v6847, 8388608
    %v6849 = vsub.s32 0, %v6848
    %v6850 = vadd.s32 %v6845, 1
    %vm6851 = vcmp.gt.s32.totalorder %v6850, 0
    %v6852 = vsel %vm6851, %v6850, 0
    %v6853 = vshrl.u32 %v6852, 5
    %v6854 = vand.u32 %v6852, 31
    %v6855 = vsub.s32 32, %v6854
    %v6856 = vshrl.u32 683565275, %v6855
    %v6857 = vshll.u32 683565275, %v6854
    %v6858 = vshrl.u32 2475754826, %v6855
    %v6859 = vor.u32 %v6857, %v6858
    %v6860 = vshll.u32 2475754826, %v6854
    %v6861 = vshrl.u32 2131351028, %v6855
    %v6862 = vor.u32 %v6860, %v6861
    %v6863 = vshll.u32 2131351028, %v6854
    %v6864 = vshrl.u32 2102212464, %v6855
    %v6865 = vor.u32 %v6863, %v6864
    %v6866 = vshll.u32 2102212464, %v6854
    %v6867 = vshrl.u32 920167782, %v6855
    %v6868 = vor.u32 %v6866, %v6867
    %v6869 = vshll.u32 920167782, %v6854
    %v6870 = vshrl.u32 1326507024, %v6855
    %v6871 = vor.u32 %v6869, %v6870
    %vm6872 = vcmp.lt.s32.totalorder %v6853, 1
    %vm6873 = vcmp.lt.s32.totalorder %v6853, 2
    %vm6874 = vcmp.lt.s32.totalorder %v6853, 3
    %vm6875 = vcmp.lt.s32.totalorder %v6853, 4
    %v6876 = vsel %vm6872, %v6856, %v6859
    %v6877 = vsel %vm6875, %v6865, 2102212464
    %v6878 = vsel %vm6874, %v6862, %v6877
    %v6879 = vsel %vm6873, %v6876, %v6878
    %v6880 = vsel %vm6872, %v6859, %v6862
    %v6881 = vsel %vm6875, %v6868, 920167782
    %v6882 = vsel %vm6874, %v6865, %v6881
    %v6883 = vsel %vm6873, %v6880, %v6882
    %v6884 = vsel %vm6872, %v6862, %v6865
    %v6885 = vsel %vm6875, %v6871, 1326507024
    %v6886 = vsel %vm6874, %v6868, %v6885
    %v6887 = vsel %vm6873, %v6884, %v6886
    %v6888 = vshll.u32 %v6848, 8
    %v6889 = vmul.u32.u64.compose %v6888, %v6887
    %v6890 = vextract.low.u32 %v6889
    %v6891 = vextract.high.u32 %v6889
    %v6892 = vmul.u32.u64.compose %v6888, %v6883
    %v6893 = vextract.low.u32 %v6892
    %v6894 = vextract.high.u32 %v6892
    %v6895 = vmul.u32 %v6888, %v6879
    %v6896 = vadd.s32 %v6891, %v6893
    %vm6897 = vc.u32 %v6891, %v6893
    %v6898 = vadd.s32 %v6894, 1
    %v6899 = vsel %vm6897, %v6898, %v6894
    %v6900 = vadd.s32 %v6895, %v6899
    %v6901 = vadd.s32 %v6900, 536870912
    %v6902 = vshrl.u32 %v6901, 30
    %v6903 = vshll.u32 %v6902, 30
    %v6904 = vsub.s32 %v6900, %v6903
    %vm6905 = vcmp.lt.s32.totalorder %v6904, 0
    %v6906 = vsub.s32 0, %v6904
    %v6907 = vsel %vm6905, %v6906, %v6904
    %v6908 = vclz %v6907
    %v6909 = vsub.s32 %v6908, 2
    %vm6910 = vcmp.gt.s32.totalorder 0, %v6909
    %v6911 = vsel %vm6910, 0, %v6909
    %v6912 = vsub.s32 32, %v6911
    %v6913 = vshll.u32 %v6904, %v6911
    %v6914 = vshrl.u32 %v6896, %v6912
    %v6915 = vor.u32 %v6913, %v6914
    %v6916 = vsub.s32 4294967266, %v6911
    %v6917 = vadd.s32 %v6916, 127
    %v6918 = vshll.u32 %v6917, 23
    %v6919 = vor.u32 4788187, %v6918
    %v6920 = vand.u32 2147483647, %v6919
    %v6922 = vcvt.s32.f32 %v6915
    %v6923 = vmul.f32 %v6922, %v6920
    %v6924 = vxor.u32 %v6923, 2147483648
    %v6925 = vsel %vm6842, %v6924, %v6923
    %v6926 = vsub.s32 4, %v6902
    %v6927 = vsel %vm6842, %v6926, %v6902
    %v6928 = vsel %vm6841, %v420, %v6925
    %v6929 = vsel %vm6841, 0, %v6927
    %v6930 = vcosq.f32.pop %v6928
    %v6931 = vsinq.f32.pop %v6928
    %vm6932 = vweird.f32 %v420
    %v6933 = vand.u32 %v6929, 3
    %vm6934 = vcmp.lt.s32.totalorder %v6933, 2
    %vm6935 = vcmp.eq.s32.totalorder %v6933, 0
    %v6936 = vxor.u32 %v6931, 2147483648
    %v6937 = vsel %vm6935, %v6930, %v6936
    %vm6938 = vcmp.eq.s32.totalorder %v6933, 2
    %v6939 = vxor.u32 %v6930, 2147483648
    %v6940 = vsel %vm6938, %v6939, %v6931
    %v6941 = vsel %vm6934, %v6937, %v6940
    %v6942 = vsel %vm6932, nan, %v6941
    %v6943 = vand.u32 2147483647, %v421
    %vm6944 = vcmp.le.f32.partialorder %v6943, 0.7853982
    %vm6945 = vcmp.lt.s32.totalorder %v421, 0
    %v6946 = vand.u32 %v421, 2139095040
    %v6947 = vshrl.u32 %v6946, 23
    %v6948 = vsub.s32 %v6947, 127
    %v6949 = vand.u32 2147483647, %v421
    %v6950 = vand.u32 %v6949, 8388607
    %v6951 = vor.u32 %v6950, 8388608
    %v6952 = vsub.s32 0, %v6951
    %v6953 = vadd.s32 %v6948, 1
    %vm6954 = vcmp.gt.s32.totalorder %v6953, 0
    %v6955 = vsel %vm6954, %v6953, 0
    %v6956 = vshrl.u32 %v6955, 5
    %v6957 = vand.u32 %v6955, 31
    %v6958 = vsub.s32 32, %v6957
    %v6959 = vshrl.u32 683565275, %v6958
    %v6960 = vshll.u32 683565275, %v6957
    %v6961 = vshrl.u32 2475754826, %v6958
    %v6962 = vor.u32 %v6960, %v6961
    %v6963 = vshll.u32 2475754826, %v6957
    %v6964 = vshrl.u32 2131351028, %v6958
    %v6965 = vor.u32 %v6963, %v6964
    %v6966 = vshll.u32 2131351028, %v6957
    %v6967 = vshrl.u32 2102212464, %v6958
    %v6968 = vor.u32 %v6966, %v6967
    %v6969 = vshll.u32 2102212464, %v6957
    %v6970 = vshrl.u32 920167782, %v6958
    %v6971 = vor.u32 %v6969, %v6970
    %v6972 = vshll.u32 920167782, %v6957
    %v6973 = vshrl.u32 1326507024, %v6958
    %v6974 = vor.u32 %v6972, %v6973
    %vm6975 = vcmp.lt.s32.totalorder %v6956, 1
    %vm6976 = vcmp.lt.s32.totalorder %v6956, 2
    %vm6977 = vcmp.lt.s32.totalorder %v6956, 3
    %vm6978 = vcmp.lt.s32.totalorder %v6956, 4
    %v6979 = vsel %vm6975, %v6959, %v6962
    %v6980 = vsel %vm6978, %v6968, 2102212464
    %v6981 = vsel %vm6977, %v6965, %v6980
    %v6982 = vsel %vm6976, %v6979, %v6981
    %v6983 = vsel %vm6975, %v6962, %v6965
    %v6984 = vsel %vm6978, %v6971, 920167782
    %v6985 = vsel %vm6977, %v6968, %v6984
    %v6986 = vsel %vm6976, %v6983, %v6985
    %v6987 = vsel %vm6975, %v6965, %v6968
    %v6988 = vsel %vm6978, %v6974, 1326507024
    %v6989 = vsel %vm6977, %v6971, %v6988
    %v6990 = vsel %vm6976, %v6987, %v6989
    %v6991 = vshll.u32 %v6951, 8
    %v6992 = vmul.u32.u64.compose %v6991, %v6990
    %v6993 = vextract.low.u32 %v6992
    %v6994 = vextract.high.u32 %v6992
    %v6995 = vmul.u32.u64.compose %v6991, %v6986
    %v6996 = vextract.low.u32 %v6995
    %v6997 = vextract.high.u32 %v6995
    %v6998 = vmul.u32 %v6991, %v6982
    %v6999 = vadd.s32 %v6994, %v6996
    %vm7000 = vc.u32 %v6994, %v6996
    %v7001 = vadd.s32 %v6997, 1
    %v7002 = vsel %vm7000, %v7001, %v6997
    %v7003 = vadd.s32 %v6998, %v7002
    %v7004 = vadd.s32 %v7003, 536870912
    %v7005 = vshrl.u32 %v7004, 30
    %v7006 = vshll.u32 %v7005, 30
    %v7007 = vsub.s32 %v7003, %v7006
    %vm7008 = vcmp.lt.s32.totalorder %v7007, 0
    %v7009 = vsub.s32 0, %v7007
    %v7010 = vsel %vm7008, %v7009, %v7007
    %v7011 = vclz %v7010
    %v7012 = vsub.s32 %v7011, 2
    %vm7013 = vcmp.gt.s32.totalorder 0, %v7012
    %v7014 = vsel %vm7013, 0, %v7012
    %v7015 = vsub.s32 32, %v7014
    %v7016 = vshll.u32 %v7007, %v7014
    %v7017 = vshrl.u32 %v6999, %v7015
    %v7018 = vor.u32 %v7016, %v7017
    %v7019 = vsub.s32 4294967266, %v7014
    %v7020 = vadd.s32 %v7019, 127
    %v7021 = vshll.u32 %v7020, 23
    %v7022 = vor.u32 4788187, %v7021
    %v7023 = vand.u32 2147483647, %v7022
    %v7025 = vcvt.s32.f32 %v7018
    %v7026 = vmul.f32 %v7025, %v7023
    %v7027 = vxor.u32 %v7026, 2147483648
    %v7028 = vsel %vm6945, %v7027, %v7026
    %v7029 = vsub.s32 4, %v7005
    %v7030 = vsel %vm6945, %v7029, %v7005
    %v7031 = vsel %vm6944, %v421, %v7028
    %v7032 = vsel %vm6944, 0, %v7030
    %v7033 = vcosq.f32.pop %v7031
    %v7034 = vsinq.f32.pop %v7031
    %vm7035 = vweird.f32 %v421
    %v7036 = vand.u32 %v7032, 3
    %vm7037 = vcmp.lt.s32.totalorder %v7036, 2
    %vm7038 = vcmp.eq.s32.totalorder %v7036, 0
    %v7039 = vxor.u32 %v7034, 2147483648
    %v7040 = vsel %vm7038, %v7033, %v7039
    %vm7041 = vcmp.eq.s32.totalorder %v7036, 2
    %v7042 = vxor.u32 %v7033, 2147483648
    %v7043 = vsel %vm7041, %v7042, %v7034
    %v7044 = vsel %vm7037, %v7040, %v7043
    %v7045 = vsel %vm7035, nan, %v7044
    %v7046 = vpack.c.bf16 %v629, %v525
    %v7047 = vpack.c.bf16 %v837, %v733
    %v7048 = vpack.c.bf16 %v1045, %v941
    %v7049 = vpack.c.bf16 %v1253, %v1149
    %v7050 = vpack.c.bf16 %v1461, %v1357
    %v7051 = vpack.c.bf16 %v1669, %v1565
    %v7052 = vpack.c.bf16 %v1877, %v1773
    %v7053 = vpack.c.bf16 %v2085, %v1981
    %v7054 = vpack.c.bf16 %v2293, %v2189
    %v7055 = vpack.c.bf16 %v2501, %v2397
    %v7056 = vpack.c.bf16 %v2709, %v2605
    %v7057 = vpack.c.bf16 %v2917, %v2813
    %v7058 = vpack.c.bf16 %v3125, %v3021
    %v7059 = vpack.c.bf16 %v3333, %v3229
    %v7060 = vpack.c.bf16 %v3541, %v3437
    %v7061 = vpack.c.bf16 %v3749, %v3645
    %v7062 = vld [vmem:[%s3] sm:$0xf]
    %v7063 = vld [vmem:[%s3 + $0x4] sm:$0xf]
    %v7064 = vld [vmem:[%s3 + $0x8] sm:$0xf]
    %v7065 = vld [vmem:[%s3 + $0xc] sm:$0xf]
    %v7066 = vld [vmem:[%s3 + $0x10] sm:$0xf]
    %v7067 = vld [vmem:[%s3 + $0x14] sm:$0xf]
    %v7068 = vld [vmem:[%s3 + $0x18] sm:$0xf]
    %v7069 = vld [vmem:[%s3 + $0x1c] sm:$0xf]
    %v7070 = vpack.c.bf16 %v3955, %v3852
    %v7071 = vpack.c.bf16 %v4161, %v4058
    %v7072 = vpack.c.bf16 %v4367, %v4264
    %v7073 = vpack.c.bf16 %v4573, %v4470
    %v7074 = vpack.c.bf16 %v4779, %v4676
    %v7075 = vpack.c.bf16 %v4985, %v4882
    %v7076 = vpack.c.bf16 %v5191, %v5088
    %v7077 = vpack.c.bf16 %v5397, %v5294
    %v7078 = vpack.c.bf16 %v5603, %v5500
    %v7079 = vpack.c.bf16 %v5809, %v5706
    %v7080 = vpack.c.bf16 %v6015, %v5912
    %v7081 = vpack.c.bf16 %v6221, %v6118
    %v7082 = vpack.c.bf16 %v6427, %v6324
    %v7083 = vpack.c.bf16 %v6633, %v6530
    %v7084 = vpack.c.bf16 %v6839, %v6736
    %v7085 = vpack.c.bf16 %v7045, %v6942
    %v7086 = vld [vmem:[%s4] sm:$0xf]
    %v7087 = vld [vmem:[%s4 + $0x4] sm:$0xf]
    %v7088 = vld [vmem:[%s4 + $0x8] sm:$0xf]
    %v7089 = vld [vmem:[%s4 + $0xc] sm:$0xf]
    %v7090 = vld [vmem:[%s4 + $0x10] sm:$0xf]
    %v7091 = vld [vmem:[%s4 + $0x14] sm:$0xf]
    %v7092 = vld [vmem:[%s4 + $0x18] sm:$0xf]
    %v7093 = vld [vmem:[%s4 + $0x1c] sm:$0xf]
    %v7102 = vunpack.c.l.b16 %v7086
    %v7103 = vunpack.c.l.b16 %v7087
    %v7104 = vunpack.c.l.b16 %v7088
    %v7105 = vunpack.c.l.b16 %v7089
    %v7106 = vunpack.c.l.b16 %v7090
    %v7107 = vunpack.c.l.b16 %v7091
    %v7108 = vunpack.c.l.b16 %v7092
    %v7109 = vunpack.c.l.b16 %v7093
    %v7110 = vpack.c.b16 %v7103, %v7102
    %v7111 = vpack.c.b16 %v7105, %v7104
    %v7112 = vpack.c.b16 %v7107, %v7106
    %v7113 = vpack.c.b16 %v7109, %v7108
    %vm7118 = vcmask 523264
    %v7120 = vsel %vm7118, %v7070, 0
    %v7123 = vsel %vm7118, %v7071, 0
    %v7126 = vsel %vm7118, %v7072, 0
    %v7129 = vsel %vm7118, %v7073, 0
    %v7132 = vsel %vm7118, %v7074, 0
    %v7135 = vsel %vm7118, %v7075, 0
    %v7138 = vsel %vm7118, %v7076, 0
    %v7141 = vsel %vm7118, %v7077, 0
    %v7144 = vsel %vm7118, %v7078, 0
    %v7147 = vsel %vm7118, %v7079, 0
    %v7150 = vsel %vm7118, %v7080, 0
    %v7153 = vsel %vm7118, %v7081, 0
    %v7156 = vsel %vm7118, %v7082, 0
    %v7159 = vsel %vm7118, %v7083, 0
    %v7162 = vsel %vm7118, %v7084, 0
    %v7165 = vsel %vm7118, %v7085, 0
    %7167 = vmatprep.subr.bf16.mxu0 0
    %7168 = vmatpush1.bf16.msra.mxu0 %v7110
    %7169 = vmatprep.subr.bf16.mxu0 0
    %7170 = vmatpush1.bf16.msra.mxu0 %v7111
    %7171 = vmatprep.subr.bf16.mxu0 0
    %7172 = vmatpush1.bf16.msra.mxu0 %v7112
    %7173 = vmatprep.subr.bf16.mxu0 0
    %7174 = vmatpush1.bf16.msra.mxu0 %v7113
    %7175 = vmatprep.subr.bf16.mxu0 0
    %7176 = vmatpush1.bf16.msra.mxu0 0
    %7177 = vmatprep.subr.bf16.mxu0 0
    %7178 = vmatpush1.bf16.msra.mxu0 0
    %7179 = vmatprep.subr.bf16.mxu0 0
    %7180 = vmatpush1.bf16.msra.mxu0 0
    %7181 = vmatprep.subr.bf16.mxu0 0
    %7182 = vmatpush1.bf16.msra.mxu0 0
    %7183 = vmatprep.subr.bf16.mxu0 0
    %7184 = vmatpush1.bf16.msra.mxu0 0
    %7185 = vmatprep.subr.bf16.mxu0 0
    %7186 = vmatpush1.bf16.msra.mxu0 0
    %7187 = vmatprep.subr.bf16.mxu0 0
    %7188 = vmatpush1.bf16.msra.mxu0 0
    %7189 = vmatprep.subr.bf16.mxu0 0
    %7190 = vmatpush1.bf16.msra.mxu0 0
    %7191 = vmatprep.subr.bf16.mxu0 0
    %7192 = vmatpush1.bf16.msra.mxu0 0
    %7193 = vmatprep.subr.bf16.mxu0 0
    %7194 = vmatpush1.bf16.msra.mxu0 0
    %7195 = vmatprep.subr.bf16.mxu0 0
    %7196 = vmatpush1.bf16.msra.mxu0 0
    %7197 = vmatprep.subr.bf16.mxu0 0
    %7198 = vmatpush1.bf16.msra.mxu0 0
    %7199 = vmatprep.mubr.bf16.mxu0 0
    %7200 = vmatmul.mubr.bf16.gmra.mrb[0].mxu0 %v7120
    %v7201 = vpop.f32.mrb[0].mxu0
    %v7202 = vadd.f32 0.0, %v7201
    %v7203 = vpop.f32.mrb[0].mxu0
    %v7204 = vpop.f32.mrb[0].mxu0
    %v7205 = vadd.f32 0.0, %v7204
    %v7206 = vpop.f32.mrb[0].mxu0
    %7207 = vmatprep.mubr.bf16.mxu0 0
    %7208 = vmatmul.mubr.bf16.gmra.mrb[0].mxu0 %v7123
    %v7209 = vpop.f32.mrb[0].mxu0
    %v7210 = vadd.f32 0.0, %v7209
    %v7211 = vpop.f32.mrb[0].mxu0
    %v7212 = vpop.f32.mrb[0].mxu0
    %v7213 = vadd.f32 0.0, %v7212
    %v7214 = vpop.f32.mrb[0].mxu0
    %7215 = vmatprep.mubr.bf16.mxu0 0
    %7216 = vmatmul.mubr.bf16.gmra.mrb[0].mxu0 %v7126
    %v7217 = vpop.f32.mrb[0].mxu0
    %v7218 = vadd.f32 0.0, %v7217
    %v7219 = vpop.f32.mrb[0].mxu0
    %v7220 = vpop.f32.mrb[0].mxu0
    %v7221 = vadd.f32 0.0, %v7220
    %v7222 = vpop.f32.mrb[0].mxu0
    %7223 = vmatprep.mubr.bf16.mxu0 0
    %7224 = vmatmul.mubr.bf16.gmra.mrb[0].mxu0 %v7129
    %v7225 = vpop.f32.mrb[0].mxu0
    %v7226 = vadd.f32 0.0, %v7225
    %v7227 = vpop.f32.mrb[0].mxu0
    %v7228 = vpop.f32.mrb[0].mxu0
    %v7229 = vadd.f32 0.0, %v7228
    %v7230 = vpop.f32.mrb[0].mxu0
    %7231 = vmatprep.mubr.bf16.mxu0 0
    %7232 = vmatmul.mubr.bf16.gmra.mrb[0].mxu0 %v7132
    %v7233 = vpop.f32.mrb[0].mxu0
    %v7234 = vadd.f32 0.0, %v7233
    %v7235 = vpop.f32.mrb[0].mxu0
    %v7236 = vpop.f32.mrb[0].mxu0
    %v7237 = vadd.f32 0.0, %v7236
    %v7238 = vpop.f32.mrb[0].mxu0
    %7239 = vmatprep.mubr.bf16.mxu0 0
    %7240 = vmatmul.mubr.bf16.gmra.mrb[0].mxu0 %v7135
    %v7241 = vpop.f32.mrb[0].mxu0
    %v7242 = vadd.f32 0.0, %v7241
    %v7243 = vpop.f32.mrb[0].mxu0
    %v7244 = vpop.f32.mrb[0].mxu0
    %v7245 = vadd.f32 0.0, %v7244
    %v7246 = vpop.f32.mrb[0].mxu0
    %7247 = vmatprep.mubr.bf16.mxu0 0
    %7248 = vmatmul.mubr.bf16.gmra.mrb[0].mxu0 %v7138
    %v7249 = vpop.f32.mrb[0].mxu0
    %v7250 = vadd.f32 0.0, %v7249
    %v7251 = vpop.f32.mrb[0].mxu0
    %v7252 = vpop.f32.mrb[0].mxu0
    %v7253 = vadd.f32 0.0, %v7252
    %v7254 = vpop.f32.mrb[0].mxu0
    %7255 = vmatprep.mubr.bf16.mxu0 0
    %7256 = vmatmul.mubr.bf16.gmra.mrb[0].mxu0 %v7141
    %v7257 = vpop.f32.mrb[0].mxu0
    %v7258 = vadd.f32 0.0, %v7257
    %v7259 = vpop.f32.mrb[0].mxu0
    %v7260 = vpop.f32.mrb[0].mxu0
    %v7261 = vadd.f32 0.0, %v7260
    %v7262 = vpop.f32.mrb[0].mxu0
    %7263 = vmatprep.mubr.bf16.mxu0 0
    %7264 = vmatmul.mubr.bf16.gmra.mrb[0].mxu0 %v7144
    %v7265 = vpop.f32.mrb[0].mxu0
    %v7266 = vadd.f32 0.0, %v7265
    %v7267 = vpop.f32.mrb[0].mxu0
    %v7268 = vpop.f32.mrb[0].mxu0
    %v7269 = vadd.f32 0.0, %v7268
    %v7270 = vpop.f32.mrb[0].mxu0
    %7271 = vmatprep.mubr.bf16.mxu0 0
    %7272 = vmatmul.mubr.bf16.gmra.mrb[0].mxu0 %v7147
    %v7273 = vpop.f32.mrb[0].mxu0
    %v7274 = vadd.f32 0.0, %v7273
    %v7275 = vpop.f32.mrb[0].mxu0
    %v7276 = vpop.f32.mrb[0].mxu0
    %v7277 = vadd.f32 0.0, %v7276
    %v7278 = vpop.f32.mrb[0].mxu0
    %7279 = vmatprep.mubr.bf16.mxu0 0
    %7280 = vmatmul.mubr.bf16.gmra.mrb[0].mxu0 %v7150
    %v7281 = vpop.f32.mrb[0].mxu0
    %v7282 = vadd.f32 0.0, %v7281
    %v7283 = vpop.f32.mrb[0].mxu0
    %v7284 = vpop.f32.mrb[0].mxu0
    %v7285 = vadd.f32 0.0, %v7284
    %v7286 = vpop.f32.mrb[0].mxu0
    %7287 = vmatprep.mubr.bf16.mxu0 0
    %7288 = vmatmul.mubr.bf16.gmra.mrb[0].mxu0 %v7153
    %v7289 = vpop.f32.mrb[0].mxu0
    %v7290 = vadd.f32 0.0, %v7289
    %v7291 = vpop.f32.mrb[0].mxu0
    %v7292 = vpop.f32.mrb[0].mxu0
    %v7293 = vadd.f32 0.0, %v7292
    %v7294 = vpop.f32.mrb[0].mxu0
    %7295 = vmatprep.mubr.bf16.mxu0 0
    %7296 = vmatmul.mubr.bf16.gmra.mrb[0].mxu0 %v7156
    %v7297 = vpop.f32.mrb[0].mxu0
    %v7298 = vadd.f32 0.0, %v7297
    %v7299 = vpop.f32.mrb[0].mxu0
    %v7300 = vpop.f32.mrb[0].mxu0
    %v7301 = vadd.f32 0.0, %v7300
    %v7302 = vpop.f32.mrb[0].mxu0
    %7303 = vmatprep.mubr.bf16.mxu0 0
    %7304 = vmatmul.mubr.bf16.gmra.mrb[0].mxu0 %v7159
    %v7305 = vpop.f32.mrb[0].mxu0
    %v7306 = vadd.f32 0.0, %v7305
    %v7307 = vpop.f32.mrb[0].mxu0
    %v7308 = vpop.f32.mrb[0].mxu0
    %v7309 = vadd.f32 0.0, %v7308
    %v7310 = vpop.f32.mrb[0].mxu0
    %7311 = vmatprep.mubr.bf16.mxu0 0
    %7312 = vmatmul.mubr.bf16.gmra.mrb[0].mxu0 %v7162
    %v7313 = vpop.f32.mrb[0].mxu0
    %v7314 = vadd.f32 0.0, %v7313
    %v7315 = vpop.f32.mrb[0].mxu0
    %v7316 = vpop.f32.mrb[0].mxu0
    %v7317 = vadd.f32 0.0, %v7316
    %v7318 = vpop.f32.mrb[0].mxu0
    %7319 = vmatprep.mubr.bf16.mxu0 0
    %7320 = vmatmul.mubr.bf16.gmra.mrb[0].mxu0 %v7165
    %v7321 = vpop.f32.mrb[0].mxu0
    %v7322 = vadd.f32 0.0, %v7321
    %v7323 = vpop.f32.mrb[0].mxu0
    %v7324 = vpop.f32.mrb[0].mxu0
    %v7325 = vadd.f32 0.0, %v7324
    %v7326 = vpop.f32.mrb[0].mxu0
    %7327 = vdwg.mxu0
    %v7336 = vunpack.c.l.b16 %v7062
    %v7337 = vunpack.c.l.b16 %v7063
    %v7338 = vunpack.c.l.b16 %v7064
    %v7339 = vunpack.c.l.b16 %v7065
    %v7340 = vunpack.c.l.b16 %v7066
    %v7341 = vunpack.c.l.b16 %v7067
    %v7342 = vunpack.c.l.b16 %v7068
    %v7343 = vunpack.c.l.b16 %v7069
    %v7344 = vpack.c.b16 %v7337, %v7336
    %v7345 = vpack.c.b16 %v7339, %v7338
    %v7346 = vpack.c.b16 %v7341, %v7340
    %v7347 = vpack.c.b16 %v7343, %v7342
    %v7353 = vsel %vm7118, %v7046, 0
    %v7356 = vsel %vm7118, %v7047, 0
    %v7359 = vsel %vm7118, %v7048, 0
    %v7362 = vsel %vm7118, %v7049, 0
    %v7365 = vsel %vm7118, %v7050, 0
    %v7368 = vsel %vm7118, %v7051, 0
    %v7371 = vsel %vm7118, %v7052, 0
    %v7374 = vsel %vm7118, %v7053, 0
    %v7377 = vsel %vm7118, %v7054, 0
    %v7380 = vsel %vm7118, %v7055, 0
    %v7383 = vsel %vm7118, %v7056, 0
    %v7386 = vsel %vm7118, %v7057, 0
    %v7389 = vsel %vm7118, %v7058, 0
    %v7392 = vsel %vm7118, %v7059, 0
    %v7395 = vsel %vm7118, %v7060, 0
    %v7398 = vsel %vm7118, %v7061, 0
    %7400 = vmatprep.subr.bf16.mxu0 0
    %7401 = vmatpush1.bf16.msra.mxu0 %v7344
    %7402 = vmatprep.subr.bf16.mxu0 0
    %7403 = vmatpush1.bf16.msra.mxu0 %v7345
    %7404 = vmatprep.subr.bf16.mxu0 0
    %7405 = vmatpush1.bf16.msra.mxu0 %v7346
    %7406 = vmatprep.subr.bf16.mxu0 0
    %7407 = vmatpush1.bf16.msra.mxu0 %v7347
    %7408 = vmatprep.subr.bf16.mxu0 0
    %7409 = vmatpush1.bf16.msra.mxu0 0
    %7410 = vmatprep.subr.bf16.mxu0 0
    %7411 = vmatpush1.bf16.msra.mxu0 0
    %7412 = vmatprep.subr.bf16.mxu0 0
    %7413 = vmatpush1.bf16.msra.mxu0 0
    %7414 = vmatprep.subr.bf16.mxu0 0
    %7415 = vmatpush1.bf16.msra.mxu0 0
    %7416 = vmatprep.subr.bf16.mxu0 0
    %7417 = vmatpush1.bf16.msra.mxu0 0
    %7418 = vmatprep.subr.bf16.mxu0 0
    %7419 = vmatpush1.bf16.msra.mxu0 0
    %7420 = vmatprep.subr.bf16.mxu0 0
    %7421 = vmatpush1.bf16.msra.mxu0 0
    %7422 = vmatprep.subr.bf16.mxu0 0
    %7423 = vmatpush1.bf16.msra.mxu0 0
    %7424 = vmatprep.subr.bf16.mxu0 0
    %7425 = vmatpush1.bf16.msra.mxu0 0
    %7426 = vmatprep.subr.bf16.mxu0 0
    %7427 = vmatpush1.bf16.msra.mxu0 0
    %7428 = vmatprep.subr.bf16.mxu0 0
    %7429 = vmatpush1.bf16.msra.mxu0 0
    %7430 = vmatprep.subr.bf16.mxu0 0
    %7431 = vmatpush1.bf16.msra.mxu0 0
    %7432 = vmatprep.mubr.bf16.mxu0 0
    %7433 = vmatmul.mubr.bf16.gmra.mrb[0].mxu0 %v7353
    %v7434 = vpop.f32.mrb[0].mxu0
    %v7435 = vadd.f32 %v7202, %v7434
    %v7436 = vpop.f32.mrb[0].mxu0
    %v7437 = vpop.f32.mrb[0].mxu0
    %v7438 = vadd.f32 %v7205, %v7437
    %v7439 = vpop.f32.mrb[0].mxu0
    %7440 = vmatprep.mubr.bf16.mxu0 0
    %7441 = vmatmul.mubr.bf16.gmra.mrb[0].mxu0 %v7356
    %v7442 = vpop.f32.mrb[0].mxu0
    %v7443 = vadd.f32 %v7210, %v7442
    %v7444 = vpop.f32.mrb[0].mxu0
    %v7445 = vpop.f32.mrb[0].mxu0
    %v7446 = vadd.f32 %v7213, %v7445
    %v7447 = vpop.f32.mrb[0].mxu0
    %7448 = vmatprep.mubr.bf16.mxu0 0
    %7449 = vmatmul.mubr.bf16.gmra.mrb[0].mxu0 %v7359
    %v7450 = vpop.f32.mrb[0].mxu0
    %v7451 = vadd.f32 %v7218, %v7450
    %v7452 = vpop.f32.mrb[0].mxu0
    %v7453 = vpop.f32.mrb[0].mxu0
    %v7454 = vadd.f32 %v7221, %v7453
    %v7455 = vpop.f32.mrb[0].mxu0
    %7456 = vmatprep.mubr.bf16.mxu0 0
    %7457 = vmatmul.mubr.bf16.gmra.mrb[0].mxu0 %v7362
    %v7458 = vpop.f32.mrb[0].mxu0
    %v7459 = vadd.f32 %v7226, %v7458
    %v7460 = vpop.f32.mrb[0].mxu0
    %v7461 = vpop.f32.mrb[0].mxu0
    %v7462 = vadd.f32 %v7229, %v7461
    %v7463 = vpop.f32.mrb[0].mxu0
    %7464 = vmatprep.mubr.bf16.mxu0 0
    %7465 = vmatmul.mubr.bf16.gmra.mrb[0].mxu0 %v7365
    %v7466 = vpop.f32.mrb[0].mxu0
    %v7467 = vadd.f32 %v7234, %v7466
    %v7468 = vpop.f32.mrb[0].mxu0
    %v7469 = vpop.f32.mrb[0].mxu0
    %v7470 = vadd.f32 %v7237, %v7469
    %v7471 = vpop.f32.mrb[0].mxu0
    %7472 = vmatprep.mubr.bf16.mxu0 0
    %7473 = vmatmul.mubr.bf16.gmra.mrb[0].mxu0 %v7368
    %v7474 = vpop.f32.mrb[0].mxu0
    %v7475 = vadd.f32 %v7242, %v7474
    %v7476 = vpop.f32.mrb[0].mxu0
    %v7477 = vpop.f32.mrb[0].mxu0
    %v7478 = vadd.f32 %v7245, %v7477
    %v7479 = vpop.f32.mrb[0].mxu0
    %7480 = vmatprep.mubr.bf16.mxu0 0
    %7481 = vmatmul.mubr.bf16.gmra.mrb[0].mxu0 %v7371
    %v7482 = vpop.f32.mrb[0].mxu0
    %v7483 = vadd.f32 %v7250, %v7482
    %v7484 = vpop.f32.mrb[0].mxu0
    %v7485 = vpop.f32.mrb[0].mxu0
    %v7486 = vadd.f32 %v7253, %v7485
    %v7487 = vpop.f32.mrb[0].mxu0
    %7488 = vmatprep.mubr.bf16.mxu0 0
    %7489 = vmatmul.mubr.bf16.gmra.mrb[0].mxu0 %v7374
    %v7490 = vpop.f32.mrb[0].mxu0
    %v7491 = vadd.f32 %v7258, %v7490
    %v7492 = vpop.f32.mrb[0].mxu0
    %v7493 = vpop.f32.mrb[0].mxu0
    %v7494 = vadd.f32 %v7261, %v7493
    %v7495 = vpop.f32.mrb[0].mxu0
    %7496 = vmatprep.mubr.bf16.mxu0 0
    %7497 = vmatmul.mubr.bf16.gmra.mrb[0].mxu0 %v7377
    %v7498 = vpop.f32.mrb[0].mxu0
    %v7499 = vadd.f32 %v7266, %v7498
    %v7500 = vpop.f32.mrb[0].mxu0
    %v7501 = vpop.f32.mrb[0].mxu0
    %v7502 = vadd.f32 %v7269, %v7501
    %v7503 = vpop.f32.mrb[0].mxu0
    %7504 = vmatprep.mubr.bf16.mxu0 0
    %7505 = vmatmul.mubr.bf16.gmra.mrb[0].mxu0 %v7380
    %v7506 = vpop.f32.mrb[0].mxu0
    %v7507 = vadd.f32 %v7274, %v7506
    %v7508 = vpop.f32.mrb[0].mxu0
    %v7509 = vpop.f32.mrb[0].mxu0
    %v7510 = vadd.f32 %v7277, %v7509
    %v7511 = vpop.f32.mrb[0].mxu0
    %7512 = vmatprep.mubr.bf16.mxu0 0
    %7513 = vmatmul.mubr.bf16.gmra.mrb[0].mxu0 %v7383
    %v7514 = vpop.f32.mrb[0].mxu0
    %v7515 = vadd.f32 %v7282, %v7514
    %v7516 = vpop.f32.mrb[0].mxu0
    %v7517 = vpop.f32.mrb[0].mxu0
    %v7518 = vadd.f32 %v7285, %v7517
    %v7519 = vpop.f32.mrb[0].mxu0
    %7520 = vmatprep.mubr.bf16.mxu0 0
    %7521 = vmatmul.mubr.bf16.gmra.mrb[0].mxu0 %v7386
    %v7522 = vpop.f32.mrb[0].mxu0
    %v7523 = vadd.f32 %v7290, %v7522
    %v7524 = vpop.f32.mrb[0].mxu0
    %v7525 = vpop.f32.mrb[0].mxu0
    %v7526 = vadd.f32 %v7293, %v7525
    %v7527 = vpop.f32.mrb[0].mxu0
    %7528 = vmatprep.mubr.bf16.mxu0 0
    %7529 = vmatmul.mubr.bf16.gmra.mrb[0].mxu0 %v7389
    %v7530 = vpop.f32.mrb[0].mxu0
    %v7531 = vadd.f32 %v7298, %v7530
    %v7532 = vpop.f32.mrb[0].mxu0
    %v7533 = vpop.f32.mrb[0].mxu0
    %v7534 = vadd.f32 %v7301, %v7533
    %v7535 = vpop.f32.mrb[0].mxu0
    %7536 = vmatprep.mubr.bf16.mxu0 0
    %7537 = vmatmul.mubr.bf16.gmra.mrb[0].mxu0 %v7392
    %v7538 = vpop.f32.mrb[0].mxu0
    %v7539 = vadd.f32 %v7306, %v7538
    %v7540 = vpop.f32.mrb[0].mxu0
    %v7541 = vpop.f32.mrb[0].mxu0
    %v7542 = vadd.f32 %v7309, %v7541
    %v7543 = vpop.f32.mrb[0].mxu0
    %7544 = vmatprep.mubr.bf16.mxu0 0
    %7545 = vmatmul.mubr.bf16.gmra.mrb[0].mxu0 %v7395
    %v7546 = vpop.f32.mrb[0].mxu0
    %v7547 = vadd.f32 %v7314, %v7546
    %v7548 = vpop.f32.mrb[0].mxu0
    %v7549 = vpop.f32.mrb[0].mxu0
    %v7550 = vadd.f32 %v7317, %v7549
    %v7551 = vpop.f32.mrb[0].mxu0
    %7552 = vmatprep.mubr.bf16.mxu0 0
    %7553 = vmatmul.mubr.bf16.gmra.mrb[0].mxu0 %v7398
    %v7554 = vpop.f32.mrb[0].mxu0
    %v7555 = vadd.f32 %v7322, %v7554
    %v7556 = vpop.f32.mrb[0].mxu0
    %v7557 = vpop.f32.mrb[0].mxu0
    %v7558 = vadd.f32 %v7325, %v7557
    %v7559 = vpop.f32.mrb[0].mxu0
    %7560 = vdwg.mxu0
    %v7561 = vld [vmem:[%s5] sm:$0x1]
    %v7563 = vlaneseq
    %v7564 = vshrl.u32 %v7563, 7
    %v7565 = vsub.s32 0, %v7564
    %v7566 = vrot.slane %v7561, %v7565
    %v7568 = vadd.f32 %v7435, %v7566
    %v7569 = vadd.f32 %v7438, %v7566
    %v7570 = vadd.f32 %v7443, %v7566
    %v7571 = vadd.f32 %v7446, %v7566
    %v7572 = vadd.f32 %v7451, %v7566
    %v7573 = vadd.f32 %v7454, %v7566
    %v7574 = vadd.f32 %v7459, %v7566
    %v7575 = vadd.f32 %v7462, %v7566
    %v7576 = vadd.f32 %v7467, %v7566
    %v7577 = vadd.f32 %v7470, %v7566
    %v7578 = vadd.f32 %v7475, %v7566
    %v7579 = vadd.f32 %v7478, %v7566
    %v7580 = vadd.f32 %v7483, %v7566
    %v7581 = vadd.f32 %v7486, %v7566
    %v7582 = vadd.f32 %v7491, %v7566
    %v7583 = vadd.f32 %v7494, %v7566
    %v7584 = vadd.f32 %v7499, %v7566
    %v7585 = vadd.f32 %v7502, %v7566
    %v7586 = vadd.f32 %v7507, %v7566
    %v7587 = vadd.f32 %v7510, %v7566
    %v7588 = vadd.f32 %v7515, %v7566
    %v7589 = vadd.f32 %v7518, %v7566
    %v7590 = vadd.f32 %v7523, %v7566
    %v7591 = vadd.f32 %v7526, %v7566
    %v7592 = vadd.f32 %v7531, %v7566
    %v7593 = vadd.f32 %v7534, %v7566
    %v7594 = vadd.f32 %v7539, %v7566
    %v7595 = vadd.f32 %v7542, %v7566
    %v7596 = vadd.f32 %v7547, %v7566
    %v7597 = vadd.f32 %v7550, %v7566
    %v7598 = vadd.f32 %v7555, %v7566
    %v7599 = vadd.f32 %v7558, %v7566
    %v7600 = vmax.f32 %v7568, 0.0
    %v7601 = vmax.f32 %v7569, 0.0
    %v7602 = vmax.f32 %v7570, 0.0
    %v7603 = vmax.f32 %v7571, 0.0
    %v7604 = vmax.f32 %v7572, 0.0
    %v7605 = vmax.f32 %v7573, 0.0
    %v7606 = vmax.f32 %v7574, 0.0
    %v7607 = vmax.f32 %v7575, 0.0
    %v7608 = vmax.f32 %v7576, 0.0
    %v7609 = vmax.f32 %v7577, 0.0
    %v7610 = vmax.f32 %v7578, 0.0
    %v7611 = vmax.f32 %v7579, 0.0
    %v7612 = vmax.f32 %v7580, 0.0
    %v7613 = vmax.f32 %v7581, 0.0
    %v7614 = vmax.f32 %v7582, 0.0
    %v7615 = vmax.f32 %v7583, 0.0
    %v7616 = vmax.f32 %v7584, 0.0
    %v7617 = vmax.f32 %v7585, 0.0
    %v7618 = vmax.f32 %v7586, 0.0
    %v7619 = vmax.f32 %v7587, 0.0
    %v7620 = vmax.f32 %v7588, 0.0
    %v7621 = vmax.f32 %v7589, 0.0
    %v7622 = vmax.f32 %v7590, 0.0
    %v7623 = vmax.f32 %v7591, 0.0
    %v7624 = vmax.f32 %v7592, 0.0
    %v7625 = vmax.f32 %v7593, 0.0
    %v7626 = vmax.f32 %v7594, 0.0
    %v7627 = vmax.f32 %v7595, 0.0
    %v7628 = vmax.f32 %v7596, 0.0
    %v7629 = vmax.f32 %v7597, 0.0
    %v7630 = vmax.f32 %v7598, 0.0
    %v7631 = vmax.f32 %v7599, 0.0
    %v7632 = vld [vmem:[%s0] sm:$0xff]
    %v7633 = vld [vmem:[%s0 + $0x8] sm:$0xff]
    %v7634 = vld [vmem:[%s0 + $0x10] sm:$0xff]
    %v7635 = vld [vmem:[%s0 + $0x18] sm:$0xff]
    %v7636 = vld [vmem:[%s0 + $0x20] sm:$0xff]
    %v7637 = vld [vmem:[%s0 + $0x28] sm:$0xff]
    %v7638 = vld [vmem:[%s0 + $0x30] sm:$0xff]
    %v7639 = vld [vmem:[%s0 + $0x38] sm:$0xff]
    %v7640 = vld [vmem:[%s0 + $0x40] sm:$0xff]
    %v7641 = vld [vmem:[%s0 + $0x48] sm:$0xff]
    %v7642 = vld [vmem:[%s0 + $0x50] sm:$0xff]
    %v7643 = vld [vmem:[%s0 + $0x58] sm:$0xff]
    %v7644 = vld [vmem:[%s0 + $0x60] sm:$0xff]
    %v7645 = vld [vmem:[%s0 + $0x68] sm:$0xff]
    %v7646 = vld [vmem:[%s0 + $0x70] sm:$0xff]
    %v7647 = vld [vmem:[%s0 + $0x78] sm:$0xff]
    %v7648 = vld [vmem:[%s0 + $0x80] sm:$0xff]
    %v7649 = vld [vmem:[%s0 + $0x88] sm:$0xff]
    %v7650 = vld [vmem:[%s0 + $0x90] sm:$0xff]
    %v7651 = vld [vmem:[%s0 + $0x98] sm:$0xff]
    %v7652 = vld [vmem:[%s0 + $0xa0] sm:$0xff]
    %v7653 = vld [vmem:[%s0 + $0xa8] sm:$0xff]
    %v7654 = vld [vmem:[%s0 + $0xb0] sm:$0xff]
    %v7655 = vld [vmem:[%s0 + $0xb8] sm:$0xff]
    %v7656 = vld [vmem:[%s0 + $0xc0] sm:$0xff]
    %v7657 = vld [vmem:[%s0 + $0xc8] sm:$0xff]
    %v7658 = vld [vmem:[%s0 + $0xd0] sm:$0xff]
    %v7659 = vld [vmem:[%s0 + $0xd8] sm:$0xff]
    %v7660 = vld [vmem:[%s0 + $0xe0] sm:$0xff]
    %v7661 = vld [vmem:[%s0 + $0xe8] sm:$0xff]
    %v7662 = vld [vmem:[%s0 + $0xf0] sm:$0xff]
    %v7663 = vld [vmem:[%s0 + $0xf8] sm:$0xff]
    %v7664 = vpack.c.bf16 %v7633, %v7632
    %v7665 = vpack.c.bf16 %v7635, %v7634
    %v7666 = vpack.c.bf16 %v7637, %v7636
    %v7667 = vpack.c.bf16 %v7639, %v7638
    %v7668 = vpack.c.bf16 %v7641, %v7640
    %v7669 = vpack.c.bf16 %v7643, %v7642
    %v7670 = vpack.c.bf16 %v7645, %v7644
    %v7671 = vpack.c.bf16 %v7647, %v7646
    %v7672 = vpack.c.bf16 %v7649, %v7648
    %v7673 = vpack.c.bf16 %v7651, %v7650
    %v7674 = vpack.c.bf16 %v7653, %v7652
    %v7675 = vpack.c.bf16 %v7655, %v7654
    %v7676 = vpack.c.bf16 %v7657, %v7656
    %v7677 = vpack.c.bf16 %v7659, %v7658
    %v7678 = vpack.c.bf16 %v7661, %v7660
    %v7679 = vpack.c.bf16 %v7663, %v7662
    %v7680 = vld [vmem:[#allocation3] sm:$0xff]
    %v7681 = vld [vmem:[#allocation3 + $0x8] sm:$0xff]
    %v7682 = vpack.c.bf16 %v7601, %v7600
    %v7683 = vpack.c.bf16 %v7603, %v7602
    %v7684 = vpack.c.bf16 %v7605, %v7604
    %v7685 = vpack.c.bf16 %v7607, %v7606
    %v7686 = vpack.c.bf16 %v7609, %v7608
    %v7687 = vpack.c.bf16 %v7611, %v7610
    %v7688 = vpack.c.bf16 %v7613, %v7612
    %v7689 = vpack.c.bf16 %v7615, %v7614
    %v7690 = vpack.c.bf16 %v7617, %v7616
    %v7691 = vpack.c.bf16 %v7619, %v7618
    %v7692 = vpack.c.bf16 %v7621, %v7620
    %v7693 = vpack.c.bf16 %v7623, %v7622
    %v7694 = vpack.c.bf16 %v7625, %v7624
    %v7695 = vpack.c.bf16 %v7627, %v7626
    %v7696 = vpack.c.bf16 %v7629, %v7628
    %v7697 = vpack.c.bf16 %v7631, %v7630
    %v7698 = vld [vmem:[#allocation5] sm:$0xff]
    %v7699 = vld [vmem:[#allocation5 + $0x8] sm:$0xff]
    %v7700 = vld [vmem:[#allocation5 + $0x10] sm:$0xff]
    %v7701 = vld [vmem:[#allocation5 + $0x18] sm:$0xff]
    %v7702 = vld [vmem:[#allocation5 + $0x20] sm:$0xff]
    %v7703 = vld [vmem:[#allocation5 + $0x28] sm:$0xff]
    %v7704 = vld [vmem:[#allocation5 + $0x30] sm:$0xff]
    %v7705 = vld [vmem:[#allocation5 + $0x38] sm:$0xff]
    %v7706 = vld [vmem:[#allocation5 + $0x40] sm:$0xff]
    %v7707 = vld [vmem:[#allocation5 + $0x48] sm:$0xff]
    %v7708 = vld [vmem:[#allocation5 + $0x50] sm:$0xff]
    %v7709 = vld [vmem:[#allocation5 + $0x58] sm:$0xff]
    %v7710 = vld [vmem:[#allocation5 + $0x60] sm:$0xff]
    %v7711 = vld [vmem:[#allocation5 + $0x68] sm:$0xff]
    %v7712 = vld [vmem:[#allocation5 + $0x70] sm:$0xff]
    %v7713 = vld [vmem:[#allocation5 + $0x78] sm:$0xff]
    %v7730 = vunpack.c.l.b16 %v7698
    %v7731 = vunpack.c.h.b16 %v7698
    %v7732 = vunpack.c.l.b16 %v7699
    %v7733 = vunpack.c.h.b16 %v7699
    %v7734 = vunpack.c.l.b16 %v7700
    %v7735 = vunpack.c.h.b16 %v7700
    %v7736 = vunpack.c.l.b16 %v7701
    %v7737 = vunpack.c.h.b16 %v7701
    %v7738 = vunpack.c.l.b16 %v7702
    %v7739 = vunpack.c.h.b16 %v7702
    %v7740 = vunpack.c.l.b16 %v7703
    %v7741 = vunpack.c.h.b16 %v7703
    %v7742 = vunpack.c.l.b16 %v7704
    %v7743 = vunpack.c.h.b16 %v7704
    %v7744 = vunpack.c.l.b16 %v7705
    %v7745 = vunpack.c.h.b16 %v7705
    %v7746 = vunpack.c.l.b16 %v7706
    %v7747 = vunpack.c.h.b16 %v7706
    %v7748 = vunpack.c.l.b16 %v7707
    %v7749 = vunpack.c.h.b16 %v7707
    %v7750 = vunpack.c.l.b16 %v7708
    %v7751 = vunpack.c.h.b16 %v7708
    %v7752 = vunpack.c.l.b16 %v7709
    %v7753 = vunpack.c.h.b16 %v7709
    %v7754 = vunpack.c.l.b16 %v7710
    %v7755 = vunpack.c.h.b16 %v7710
    %v7756 = vunpack.c.l.b16 %v7711
    %v7757 = vunpack.c.h.b16 %v7711
    %v7758 = vunpack.c.l.b16 %v7712
    %v7759 = vunpack.c.h.b16 %v7712
    %v7760 = vunpack.c.l.b16 %v7713
    %v7761 = vunpack.c.h.b16 %v7713
    %v7762 = vpack.c.b16 %v7732, %v7730
    %v7763 = vpack.c.b16 %v7733, %v7731
    %v7764 = vpack.c.b16 %v7736, %v7734
    %v7765 = vpack.c.b16 %v7737, %v7735
    %v7766 = vpack.c.b16 %v7740, %v7738
    %v7767 = vpack.c.b16 %v7741, %v7739
    %v7768 = vpack.c.b16 %v7744, %v7742
    %v7769 = vpack.c.b16 %v7745, %v7743
    %v7770 = vpack.c.b16 %v7748, %v7746
    %v7771 = vpack.c.b16 %v7749, %v7747
    %v7772 = vpack.c.b16 %v7752, %v7750
    %v7773 = vpack.c.b16 %v7753, %v7751
    %v7774 = vpack.c.b16 %v7756, %v7754
    %v7775 = vpack.c.b16 %v7757, %v7755
    %v7776 = vpack.c.b16 %v7760, %v7758
    %v7777 = vpack.c.b16 %v7761, %v7759
    %7794 = vmatprep.subr.bf16.mxu0 %v7763
    %7795 = vmatpush1.bf16.msra.mxu0 %v7762
    %7796 = vmatprep.subr.bf16.mxu0 %v7765
    %7797 = vmatpush1.bf16.msra.mxu0 %v7764
    %7798 = vmatprep.subr.bf16.mxu0 %v7767
    %7799 = vmatpush1.bf16.msra.mxu0 %v7766
    %7800 = vmatprep.subr.bf16.mxu0 %v7769
    %7801 = vmatpush1.bf16.msra.mxu0 %v7768
    %7802 = vmatprep.subr.bf16.mxu0 %v7771
    %7803 = vmatpush1.bf16.msra.mxu0 %v7770
    %7804 = vmatprep.subr.bf16.mxu0 %v7773
    %7805 = vmatpush1.bf16.msra.mxu0 %v7772
    %7806 = vmatprep.subr.bf16.mxu0 %v7775
    %7807 = vmatpush1.bf16.msra.mxu0 %v7774
    %7808 = vmatprep.subr.bf16.mxu0 %v7777
    %7809 = vmatpush1.bf16.msra.mxu0 %v7776
    %7810 = vmatprep.subr.bf16.mxu0 0
    %7811 = vmatpush1.bf16.msra.mxu0 0
    %7812 = vmatprep.subr.bf16.mxu0 0
    %7813 = vmatpush1.bf16.msra.mxu0 0
    %7814 = vmatprep.subr.bf16.mxu0 0
    %7815 = vmatpush1.bf16.msra.mxu0 0
    %7816 = vmatprep.subr.bf16.mxu0 0
    %7817 = vmatpush1.bf16.msra.mxu0 0
    %7818 = vmatprep.subr.bf16.mxu0 0
    %7819 = vmatpush1.bf16.msra.mxu0 0
    %7820 = vmatprep.subr.bf16.mxu0 0
    %7821 = vmatpush1.bf16.msra.mxu0 0
    %7822 = vmatprep.subr.bf16.mxu0 0
    %7823 = vmatpush1.bf16.msra.mxu0 0
    %7824 = vmatprep.subr.bf16.mxu0 0
    %7825 = vmatpush1.bf16.msra.mxu0 0
    %7826 = vmatprep.mubr.bf16.mxu0 0
    %7827 = vmatmul.mubr.bf16.gmra.mrb[0].mxu0 %v7682
    %v7828 = vpop.f32.mrb[0].mxu0
    %v7829 = vadd.f32 0.0, %v7828
    %v7830 = vpop.f32.mrb[0].mxu0
    %v7831 = vadd.f32 0.0, %v7830
    %v7832 = vpop.f32.mrb[0].mxu0
    %v7833 = vadd.f32 0.0, %v7832
    %v7834 = vpop.f32.mrb[0].mxu0
    %v7835 = vadd.f32 0.0, %v7834
    %7836 = vmatprep.mubr.bf16.mxu0 0
    %7837 = vmatmul.mubr.bf16.gmra.mrb[0].mxu0 %v7683
    %v7838 = vpop.f32.mrb[0].mxu0
    %v7839 = vadd.f32 0.0, %v7838
    %v7840 = vpop.f32.mrb[0].mxu0
    %v7841 = vadd.f32 0.0, %v7840
    %v7842 = vpop.f32.mrb[0].mxu0
    %v7843 = vadd.f32 0.0, %v7842
    %v7844 = vpop.f32.mrb[0].mxu0
    %v7845 = vadd.f32 0.0, %v7844
    %7846 = vmatprep.mubr.bf16.mxu0 0
    %7847 = vmatmul.mubr.bf16.gmra.mrb[0].mxu0 %v7684
    %v7848 = vpop.f32.mrb[0].mxu0
    %v7849 = vadd.f32 0.0, %v7848
    %v7850 = vpop.f32.mrb[0].mxu0
    %v7851 = vadd.f32 0.0, %v7850
    %v7852 = vpop.f32.mrb[0].mxu0
    %v7853 = vadd.f32 0.0, %v7852
    %v7854 = vpop.f32.mrb[0].mxu0
    %v7855 = vadd.f32 0.0, %v7854
    %7856 = vmatprep.mubr.bf16.mxu0 0
    %7857 = vmatmul.mubr.bf16.gmra.mrb[0].mxu0 %v7685
    %v7858 = vpop.f32.mrb[0].mxu0
    %v7859 = vadd.f32 0.0, %v7858
    %v7860 = vpop.f32.mrb[0].mxu0
    %v7861 = vadd.f32 0.0, %v7860
    %v7862 = vpop.f32.mrb[0].mxu0
    %v7863 = vadd.f32 0.0, %v7862
    %v7864 = vpop.f32.mrb[0].mxu0
    %v7865 = vadd.f32 0.0, %v7864
    %7866 = vmatprep.mubr.bf16.mxu0 0
    %7867 = vmatmul.mubr.bf16.gmra.mrb[0].mxu0 %v7686
    %v7868 = vpop.f32.mrb[0].mxu0
    %v7869 = vadd.f32 0.0, %v7868
    %v7870 = vpop.f32.mrb[0].mxu0
    %v7871 = vadd.f32 0.0, %v7870
    %v7872 = vpop.f32.mrb[0].mxu0
    %v7873 = vadd.f32 0.0, %v7872
    %v7874 = vpop.f32.mrb[0].mxu0
    %v7875 = vadd.f32 0.0, %v7874
    %7876 = vmatprep.mubr.bf16.mxu0 0
    %7877 = vmatmul.mubr.bf16.gmra.mrb[0].mxu0 %v7687
    %v7878 = vpop.f32.mrb[0].mxu0
    %v7879 = vadd.f32 0.0, %v7878
    %v7880 = vpop.f32.mrb[0].mxu0
    %v7881 = vadd.f32 0.0, %v7880
    %v7882 = vpop.f32.mrb[0].mxu0
    %v7883 = vadd.f32 0.0, %v7882
    %v7884 = vpop.f32.mrb[0].mxu0
    %v7885 = vadd.f32 0.0, %v7884
    %7886 = vmatprep.mubr.bf16.mxu0 0
    %7887 = vmatmul.mubr.bf16.gmra.mrb[0].mxu0 %v7688
    %v7888 = vpop.f32.mrb[0].mxu0
    %v7889 = vadd.f32 0.0, %v7888
    %v7890 = vpop.f32.mrb[0].mxu0
    %v7891 = vadd.f32 0.0, %v7890
    %v7892 = vpop.f32.mrb[0].mxu0
    %v7893 = vadd.f32 0.0, %v7892
    %v7894 = vpop.f32.mrb[0].mxu0
    %v7895 = vadd.f32 0.0, %v7894
    %7896 = vmatprep.mubr.bf16.mxu0 0
    %7897 = vmatmul.mubr.bf16.gmra.mrb[0].mxu0 %v7689
    %v7898 = vpop.f32.mrb[0].mxu0
    %v7899 = vadd.f32 0.0, %v7898
    %v7900 = vpop.f32.mrb[0].mxu0
    %v7901 = vadd.f32 0.0, %v7900
    %v7902 = vpop.f32.mrb[0].mxu0
    %v7903 = vadd.f32 0.0, %v7902
    %v7904 = vpop.f32.mrb[0].mxu0
    %v7905 = vadd.f32 0.0, %v7904
    %7906 = vmatprep.mubr.bf16.mxu0 0
    %7907 = vmatmul.mubr.bf16.gmra.mrb[0].mxu0 %v7690
    %v7908 = vpop.f32.mrb[0].mxu0
    %v7909 = vadd.f32 0.0, %v7908
    %v7910 = vpop.f32.mrb[0].mxu0
    %v7911 = vadd.f32 0.0, %v7910
    %v7912 = vpop.f32.mrb[0].mxu0
    %v7913 = vadd.f32 0.0, %v7912
    %v7914 = vpop.f32.mrb[0].mxu0
    %v7915 = vadd.f32 0.0, %v7914
    %7916 = vmatprep.mubr.bf16.mxu0 0
    %7917 = vmatmul.mubr.bf16.gmra.mrb[0].mxu0 %v7691
    %v7918 = vpop.f32.mrb[0].mxu0
    %v7919 = vadd.f32 0.0, %v7918
    %v7920 = vpop.f32.mrb[0].mxu0
    %v7921 = vadd.f32 0.0, %v7920
    %v7922 = vpop.f32.mrb[0].mxu0
    %v7923 = vadd.f32 0.0, %v7922
    %v7924 = vpop.f32.mrb[0].mxu0
    %v7925 = vadd.f32 0.0, %v7924
    %7926 = vmatprep.mubr.bf16.mxu0 0
    %7927 = vmatmul.mubr.bf16.gmra.mrb[0].mxu0 %v7692
    %v7928 = vpop.f32.mrb[0].mxu0
    %v7929 = vadd.f32 0.0, %v7928
    %v7930 = vpop.f32.mrb[0].mxu0
    %v7931 = vadd.f32 0.0, %v7930
    %v7932 = vpop.f32.mrb[0].mxu0
    %v7933 = vadd.f32 0.0, %v7932
    %v7934 = vpop.f32.mrb[0].mxu0
    %v7935 = vadd.f32 0.0, %v7934
    %7936 = vmatprep.mubr.bf16.mxu0 0
    %7937 = vmatmul.mubr.bf16.gmra.mrb[0].mxu0 %v7693
    %v7938 = vpop.f32.mrb[0].mxu0
    %v7939 = vadd.f32 0.0, %v7938
    %v7940 = vpop.f32.mrb[0].mxu0
    %v7941 = vadd.f32 0.0, %v7940
    %v7942 = vpop.f32.mrb[0].mxu0
    %v7943 = vadd.f32 0.0, %v7942
    %v7944 = vpop.f32.mrb[0].mxu0
    %v7945 = vadd.f32 0.0, %v7944
    %7946 = vmatprep.mubr.bf16.mxu0 0
    %7947 = vmatmul.mubr.bf16.gmra.mrb[0].mxu0 %v7694
    %v7948 = vpop.f32.mrb[0].mxu0
    %v7949 = vadd.f32 0.0, %v7948
    %v7950 = vpop.f32.mrb[0].mxu0
    %v7951 = vadd.f32 0.0, %v7950
    %v7952 = vpop.f32.mrb[0].mxu0
    %v7953 = vadd.f32 0.0, %v7952
    %v7954 = vpop.f32.mrb[0].mxu0
    %v7955 = vadd.f32 0.0, %v7954
    %7956 = vmatprep.mubr.bf16.mxu0 0
    %7957 = vmatmul.mubr.bf16.gmra.mrb[0].mxu0 %v7695
    %v7958 = vpop.f32.mrb[0].mxu0
    %v7959 = vadd.f32 0.0, %v7958
    %v7960 = vpop.f32.mrb[0].mxu0
    %v7961 = vadd.f32 0.0, %v7960
    %v7962 = vpop.f32.mrb[0].mxu0
    %v7963 = vadd.f32 0.0, %v7962
    %v7964 = vpop.f32.mrb[0].mxu0
    %v7965 = vadd.f32 0.0, %v7964
    %7966 = vmatprep.mubr.bf16.mxu0 0
    %7967 = vmatmul.mubr.bf16.gmra.mrb[0].mxu0 %v7696
    %v7968 = vpop.f32.mrb[0].mxu0
    %v7969 = vadd.f32 0.0, %v7968
    %v7970 = vpop.f32.mrb[0].mxu0
    %v7971 = vadd.f32 0.0, %v7970
    %v7972 = vpop.f32.mrb[0].mxu0
    %v7973 = vadd.f32 0.0, %v7972
    %v7974 = vpop.f32.mrb[0].mxu0
    %v7975 = vadd.f32 0.0, %v7974
    %7976 = vmatprep.mubr.bf16.mxu0 0
    %7977 = vmatmul.mubr.bf16.gmra.mrb[0].mxu0 %v7697
    %v7978 = vpop.f32.mrb[0].mxu0
    %v7979 = vadd.f32 0.0, %v7978
    %v7980 = vpop.f32.mrb[0].mxu0
    %v7981 = vadd.f32 0.0, %v7980
    %v7982 = vpop.f32.mrb[0].mxu0
    %v7983 = vadd.f32 0.0, %v7982
    %v7984 = vpop.f32.mrb[0].mxu0
    %v7985 = vadd.f32 0.0, %v7984
    %7986 = vdwg.mxu0
    %v7989 = vunpack.c.l.b16 %v7680
    %v7990 = vunpack.c.h.b16 %v7680
    %v7991 = vunpack.c.l.b16 %v7681
    %v7992 = vunpack.c.h.b16 %v7681
    %v7993 = vpack.c.b16 %v7991, %v7989
    %v7994 = vpack.c.b16 %v7992, %v7990
    %vm7997 = vcmask 130048
    %v7999 = vsel %vm7997, %v7664, 0
    %v8002 = vsel %vm7997, %v7665, 0
    %v8005 = vsel %vm7997, %v7666, 0
    %v8008 = vsel %vm7997, %v7667, 0
    %v8011 = vsel %vm7997, %v7668, 0
    %v8014 = vsel %vm7997, %v7669, 0
    %v8017 = vsel %vm7997, %v7670, 0
    %v8020 = vsel %vm7997, %v7671, 0
    %v8023 = vsel %vm7997, %v7672, 0
    %v8026 = vsel %vm7997, %v7673, 0
    %v8029 = vsel %vm7997, %v7674, 0
    %v8032 = vsel %vm7997, %v7675, 0
    %v8035 = vsel %vm7997, %v7676, 0
    %v8038 = vsel %vm7997, %v7677, 0
    %v8041 = vsel %vm7997, %v7678, 0
    %v8044 = vsel %vm7997, %v7679, 0
    %8046 = vmatprep.subr.bf16.mxu0 %v7994
    %8047 = vmatpush1.bf16.msra.mxu0 %v7993
    %8048 = vmatprep.subr.bf16.mxu0 0
    %8049 = vmatpush1.bf16.msra.mxu0 0
    %8050 = vmatprep.subr.bf16.mxu0 0
    %8051 = vmatpush1.bf16.msra.mxu0 0
    %8052 = vmatprep.subr.bf16.mxu0 0
    %8053 = vmatpush1.bf16.msra.mxu0 0
    %8054 = vmatprep.subr.bf16.mxu0 0
    %8055 = vmatpush1.bf16.msra.mxu0 0
    %8056 = vmatprep.subr.bf16.mxu0 0
    %8057 = vmatpush1.bf16.msra.mxu0 0
    %8058 = vmatprep.subr.bf16.mxu0 0
    %8059 = vmatpush1.bf16.msra.mxu0 0
    %8060 = vmatprep.subr.bf16.mxu0 0
    %8061 = vmatpush1.bf16.msra.mxu0 0
    %8062 = vmatprep.subr.bf16.mxu0 0
    %8063 = vmatpush1.bf16.msra.mxu0 0
    %8064 = vmatprep.subr.bf16.mxu0 0
    %8065 = vmatpush1.bf16.msra.mxu0 0
    %8066 = vmatprep.subr.bf16.mxu0 0
    %8067 = vmatpush1.bf16.msra.mxu0 0
    %8068 = vmatprep.subr.bf16.mxu0 0
    %8069 = vmatpush1.bf16.msra.mxu0 0
    %8070 = vmatprep.subr.bf16.mxu0 0
    %8071 = vmatpush1.bf16.msra.mxu0 0
    %8072 = vmatprep.subr.bf16.mxu0 0
    %8073 = vmatpush1.bf16.msra.mxu0 0
    %8074 = vmatprep.subr.bf16.mxu0 0
    %8075 = vmatpush1.bf16.msra.mxu0 0
    %8076 = vmatprep.subr.bf16.mxu0 0
    %8077 = vmatpush1.bf16.msra.mxu0 0
    %8078 = vmatprep.mubr.bf16.mxu0 0
    %8079 = vmatmul.mubr.bf16.gmra.mrb[0].mxu0 %v7999
    %v8080 = vpop.f32.mrb[0].mxu0
    %v8081 = vadd.f32 %v7829, %v8080
    %v8082 = vpop.f32.mrb[0].mxu0
    %v8083 = vadd.f32 %v7831, %v8082
    %v8084 = vpop.f32.mrb[0].mxu0
    %v8085 = vadd.f32 %v7833, %v8084
    %v8086 = vpop.f32.mrb[0].mxu0
    %v8087 = vadd.f32 %v7835, %v8086
    %8088 = vmatprep.mubr.bf16.mxu0 0
    %8089 = vmatmul.mubr.bf16.gmra.mrb[0].mxu0 %v8002
    %v8090 = vpop.f32.mrb[0].mxu0
    %v8091 = vadd.f32 %v7839, %v8090
    %v8092 = vpop.f32.mrb[0].mxu0
    %v8093 = vadd.f32 %v7841, %v8092
    %v8094 = vpop.f32.mrb[0].mxu0
    %v8095 = vadd.f32 %v7843, %v8094
    %v8096 = vpop.f32.mrb[0].mxu0
    %v8097 = vadd.f32 %v7845, %v8096
    %8098 = vmatprep.mubr.bf16.mxu0 0
    %8099 = vmatmul.mubr.bf16.gmra.mrb[0].mxu0 %v8005
    %v8100 = vpop.f32.mrb[0].mxu0
    %v8101 = vadd.f32 %v7849, %v8100
    %v8102 = vpop.f32.mrb[0].mxu0
    %v8103 = vadd.f32 %v7851, %v8102
    %v8104 = vpop.f32.mrb[0].mxu0
    %v8105 = vadd.f32 %v7853, %v8104
    %v8106 = vpop.f32.mrb[0].mxu0
    %v8107 = vadd.f32 %v7855, %v8106
    %8108 = vmatprep.mubr.bf16.mxu0 0
    %8109 = vmatmul.mubr.bf16.gmra.mrb[0].mxu0 %v8008
    %v8110 = vpop.f32.mrb[0].mxu0
    %v8111 = vadd.f32 %v7859, %v8110
    %v8112 = vpop.f32.mrb[0].mxu0
    %v8113 = vadd.f32 %v7861, %v8112
    %v8114 = vpop.f32.mrb[0].mxu0
    %v8115 = vadd.f32 %v7863, %v8114
    %v8116 = vpop.f32.mrb[0].mxu0
    %v8117 = vadd.f32 %v7865, %v8116
    %8118 = vmatprep.mubr.bf16.mxu0 0
    %8119 = vmatmul.mubr.bf16.gmra.mrb[0].mxu0 %v8011
    %v8120 = vpop.f32.mrb[0].mxu0
    %v8121 = vadd.f32 %v7869, %v8120
    %v8122 = vpop.f32.mrb[0].mxu0
    %v8123 = vadd.f32 %v7871, %v8122
    %v8124 = vpop.f32.mrb[0].mxu0
    %v8125 = vadd.f32 %v7873, %v8124
    %v8126 = vpop.f32.mrb[0].mxu0
    %v8127 = vadd.f32 %v7875, %v8126
    %8128 = vmatprep.mubr.bf16.mxu0 0
    %8129 = vmatmul.mubr.bf16.gmra.mrb[0].mxu0 %v8014
    %v8130 = vpop.f32.mrb[0].mxu0
    %v8131 = vadd.f32 %v7879, %v8130
    %v8132 = vpop.f32.mrb[0].mxu0
    %v8133 = vadd.f32 %v7881, %v8132
    %v8134 = vpop.f32.mrb[0].mxu0
    %v8135 = vadd.f32 %v7883, %v8134
    %v8136 = vpop.f32.mrb[0].mxu0
    %v8137 = vadd.f32 %v7885, %v8136
    %8138 = vmatprep.mubr.bf16.mxu0 0
    %8139 = vmatmul.mubr.bf16.gmra.mrb[0].mxu0 %v8017
    %v8140 = vpop.f32.mrb[0].mxu0
    %v8141 = vadd.f32 %v7889, %v8140
    %v8142 = vpop.f32.mrb[0].mxu0
    %v8143 = vadd.f32 %v7891, %v8142
    %v8144 = vpop.f32.mrb[0].mxu0
    %v8145 = vadd.f32 %v7893, %v8144
    %v8146 = vpop.f32.mrb[0].mxu0
    %v8147 = vadd.f32 %v7895, %v8146
    %8148 = vmatprep.mubr.bf16.mxu0 0
    %8149 = vmatmul.mubr.bf16.gmra.mrb[0].mxu0 %v8020
    %v8150 = vpop.f32.mrb[0].mxu0
    %v8151 = vadd.f32 %v7899, %v8150
    %v8152 = vpop.f32.mrb[0].mxu0
    %v8153 = vadd.f32 %v7901, %v8152
    %v8154 = vpop.f32.mrb[0].mxu0
    %v8155 = vadd.f32 %v7903, %v8154
    %v8156 = vpop.f32.mrb[0].mxu0
    %v8157 = vadd.f32 %v7905, %v8156
    %8158 = vmatprep.mubr.bf16.mxu0 0
    %8159 = vmatmul.mubr.bf16.gmra.mrb[0].mxu0 %v8023
    %v8160 = vpop.f32.mrb[0].mxu0
    %v8161 = vadd.f32 %v7909, %v8160
    %v8162 = vpop.f32.mrb[0].mxu0
    %v8163 = vadd.f32 %v7911, %v8162
    %v8164 = vpop.f32.mrb[0].mxu0
    %v8165 = vadd.f32 %v7913, %v8164
    %v8166 = vpop.f32.mrb[0].mxu0
    %v8167 = vadd.f32 %v7915, %v8166
    %8168 = vmatprep.mubr.bf16.mxu0 0
    %8169 = vmatmul.mubr.bf16.gmra.mrb[0].mxu0 %v8026
    %v8170 = vpop.f32.mrb[0].mxu0
    %v8171 = vadd.f32 %v7919, %v8170
    %v8172 = vpop.f32.mrb[0].mxu0
    %v8173 = vadd.f32 %v7921, %v8172
    %v8174 = vpop.f32.mrb[0].mxu0
    %v8175 = vadd.f32 %v7923, %v8174
    %v8176 = vpop.f32.mrb[0].mxu0
    %v8177 = vadd.f32 %v7925, %v8176
    %8178 = vmatprep.mubr.bf16.mxu0 0
    %8179 = vmatmul.mubr.bf16.gmra.mrb[0].mxu0 %v8029
    %v8180 = vpop.f32.mrb[0].mxu0
    %v8181 = vadd.f32 %v7929, %v8180
    %v8182 = vpop.f32.mrb[0].mxu0
    %v8183 = vadd.f32 %v7931, %v8182
    %v8184 = vpop.f32.mrb[0].mxu0
    %v8185 = vadd.f32 %v7933, %v8184
    %v8186 = vpop.f32.mrb[0].mxu0
    %v8187 = vadd.f32 %v7935, %v8186
    %8188 = vmatprep.mubr.bf16.mxu0 0
    %8189 = vmatmul.mubr.bf16.gmra.mrb[0].mxu0 %v8032
    %v8190 = vpop.f32.mrb[0].mxu0
    %v8191 = vadd.f32 %v7939, %v8190
    %v8192 = vpop.f32.mrb[0].mxu0
    %v8193 = vadd.f32 %v7941, %v8192
    %v8194 = vpop.f32.mrb[0].mxu0
    %v8195 = vadd.f32 %v7943, %v8194
    %v8196 = vpop.f32.mrb[0].mxu0
    %v8197 = vadd.f32 %v7945, %v8196
    %8198 = vmatprep.mubr.bf16.mxu0 0
    %8199 = vmatmul.mubr.bf16.gmra.mrb[0].mxu0 %v8035
    %v8200 = vpop.f32.mrb[0].mxu0
    %v8201 = vadd.f32 %v7949, %v8200
    %v8202 = vpop.f32.mrb[0].mxu0
    %v8203 = vadd.f32 %v7951, %v8202
    %v8204 = vpop.f32.mrb[0].mxu0
    %v8205 = vadd.f32 %v7953, %v8204
    %v8206 = vpop.f32.mrb[0].mxu0
    %v8207 = vadd.f32 %v7955, %v8206
    %8208 = vmatprep.mubr.bf16.mxu0 0
    %8209 = vmatmul.mubr.bf16.gmra.mrb[0].mxu0 %v8038
    %v8210 = vpop.f32.mrb[0].mxu0
    %v8211 = vadd.f32 %v7959, %v8210
    %v8212 = vpop.f32.mrb[0].mxu0
    %v8213 = vadd.f32 %v7961, %v8212
    %v8214 = vpop.f32.mrb[0].mxu0
    %v8215 = vadd.f32 %v7963, %v8214
    %v8216 = vpop.f32.mrb[0].mxu0
    %v8217 = vadd.f32 %v7965, %v8216
    %8218 = vmatprep.mubr.bf16.mxu0 0
    %8219 = vmatmul.mubr.bf16.gmra.mrb[0].mxu0 %v8041
    %v8220 = vpop.f32.mrb[0].mxu0
    %v8221 = vadd.f32 %v7969, %v8220
    %v8222 = vpop.f32.mrb[0].mxu0
    %v8223 = vadd.f32 %v7971, %v8222
    %v8224 = vpop.f32.mrb[0].mxu0
    %v8225 = vadd.f32 %v7973, %v8224
    %v8226 = vpop.f32.mrb[0].mxu0
    %v8227 = vadd.f32 %v7975, %v8226
    %8228 = vmatprep.mubr.bf16.mxu0 0
    %8229 = vmatmul.mubr.bf16.gmra.mrb[0].mxu0 %v8044
    %v8230 = vpop.f32.mrb[0].mxu0
    %v8231 = vadd.f32 %v7979, %v8230
    %v8232 = vpop.f32.mrb[0].mxu0
    %v8233 = vadd.f32 %v7981, %v8232
    %v8234 = vpop.f32.mrb[0].mxu0
    %v8235 = vadd.f32 %v7983, %v8234
    %v8236 = vpop.f32.mrb[0].mxu0
    %v8237 = vadd.f32 %v7985, %v8236
    %8238 = vdwg.mxu0
    %v8239 = vld [vmem:[%s8] sm:$0x3]
    %v8241 = vlaneseq
    %v8242 = vshrl.u32 %v8241, 7
    %v8243 = vsub.s32 0, %v8242
    %v8244 = vrot.slane %v8239, %v8243
    %v8245 = vlaneseq
    %v8246 = vshrl.u32 %v8245, 7
    %v8247 = vsub.s32 1, %v8246
    %v8248 = vrot.slane %v8239, %v8247
    %v8251 = vadd.f32 %v8081, %v8244
    %v8252 = vadd.f32 %v8083, %v8248
    %v8253 = vadd.f32 %v8085, %v8244
    %v8254 = vadd.f32 %v8087, %v8248
    %v8255 = vadd.f32 %v8091, %v8244
    %v8256 = vadd.f32 %v8093, %v8248
    %v8257 = vadd.f32 %v8095, %v8244
    %v8258 = vadd.f32 %v8097, %v8248
    %v8259 = vadd.f32 %v8101, %v8244
    %v8260 = vadd.f32 %v8103, %v8248
    %v8261 = vadd.f32 %v8105, %v8244
    %v8262 = vadd.f32 %v8107, %v8248
    %v8263 = vadd.f32 %v8111, %v8244
    %v8264 = vadd.f32 %v8113, %v8248
    %v8265 = vadd.f32 %v8115, %v8244
    %v8266 = vadd.f32 %v8117, %v8248
    %v8267 = vadd.f32 %v8121, %v8244
    %v8268 = vadd.f32 %v8123, %v8248
    %v8269 = vadd.f32 %v8125, %v8244
    %v8270 = vadd.f32 %v8127, %v8248
    %v8271 = vadd.f32 %v8131, %v8244
    %v8272 = vadd.f32 %v8133, %v8248
    %v8273 = vadd.f32 %v8135, %v8244
    %v8274 = vadd.f32 %v8137, %v8248
    %v8275 = vadd.f32 %v8141, %v8244
    %v8276 = vadd.f32 %v8143, %v8248
    %v8277 = vadd.f32 %v8145, %v8244
    %v8278 = vadd.f32 %v8147, %v8248
    %v8279 = vadd.f32 %v8151, %v8244
    %v8280 = vadd.f32 %v8153, %v8248
    %v8281 = vadd.f32 %v8155, %v8244
    %v8282 = vadd.f32 %v8157, %v8248
    %v8283 = vadd.f32 %v8161, %v8244
    %v8284 = vadd.f32 %v8163, %v8248
    %v8285 = vadd.f32 %v8165, %v8244
    %v8286 = vadd.f32 %v8167, %v8248
    %v8287 = vadd.f32 %v8171, %v8244
    %v8288 = vadd.f32 %v8173, %v8248
    %v8289 = vadd.f32 %v8175, %v8244
    %v8290 = vadd.f32 %v8177, %v8248
    %v8291 = vadd.f32 %v8181, %v8244
    %v8292 = vadd.f32 %v8183, %v8248
    %v8293 = vadd.f32 %v8185, %v8244
    %v8294 = vadd.f32 %v8187, %v8248
    %v8295 = vadd.f32 %v8191, %v8244
    %v8296 = vadd.f32 %v8193, %v8248
    %v8297 = vadd.f32 %v8195, %v8244
    %v8298 = vadd.f32 %v8197, %v8248
    %v8299 = vadd.f32 %v8201, %v8244
    %v8300 = vadd.f32 %v8203, %v8248
    %v8301 = vadd.f32 %v8205, %v8244
    %v8302 = vadd.f32 %v8207, %v8248
    %v8303 = vadd.f32 %v8211, %v8244
    %v8304 = vadd.f32 %v8213, %v8248
    %v8305 = vadd.f32 %v8215, %v8244
    %v8306 = vadd.f32 %v8217, %v8248
    %v8307 = vadd.f32 %v8221, %v8244
    %v8308 = vadd.f32 %v8223, %v8248
    %v8309 = vadd.f32 %v8225, %v8244
    %v8310 = vadd.f32 %v8227, %v8248
    %v8311 = vadd.f32 %v8231, %v8244
    %v8312 = vadd.f32 %v8233, %v8248
    %v8313 = vadd.f32 %v8235, %v8244
    %v8314 = vadd.f32 %v8237, %v8248
    %v8315 = vld [vmem:[#allocation7] sm:$0x3]
    %v8316 = vld [vmem:[#allocation8] sm:$0x3]
    %v8317 = vadd.f32 %v8251, %v8252
    %8318 = vadd.xlane.f32.xlu0 %v8317
    %v8319 = vpop.xlane.xlu0 %8318
    %v8320 = vadd.f32 %v8253, %v8254
    %8321 = vadd.xlane.f32.xlu0 %v8320
    %v8322 = vpop.xlane.xlu0 %8321
    %v8323 = vadd.f32 %v8255, %v8256
    %8324 = vadd.xlane.f32.xlu0 %v8323
    %v8325 = vpop.xlane.xlu0 %8324
    %v8326 = vadd.f32 %v8257, %v8258
    %8327 = vadd.xlane.f32.xlu0 %v8326
    %v8328 = vpop.xlane.xlu0 %8327
    %v8329 = vadd.f32 %v8259, %v8260
    %8330 = vadd.xlane.f32.xlu0 %v8329
    %v8331 = vpop.xlane.xlu0 %8330
    %v8332 = vadd.f32 %v8261, %v8262
    %8333 = vadd.xlane.f32.xlu0 %v8332
    %v8334 = vpop.xlane.xlu0 %8333
    %v8335 = vadd.f32 %v8263, %v8264
    %8336 = vadd.xlane.f32.xlu0 %v8335
    %v8337 = vpop.xlane.xlu0 %8336
    %v8338 = vadd.f32 %v8265, %v8266
    %8339 = vadd.xlane.f32.xlu0 %v8338
    %v8340 = vpop.xlane.xlu0 %8339
    %v8341 = vadd.f32 %v8267, %v8268
    %8342 = vadd.xlane.f32.xlu0 %v8341
    %v8343 = vpop.xlane.xlu0 %8342
    %v8344 = vadd.f32 %v8269, %v8270
    %8345 = vadd.xlane.f32.xlu0 %v8344
    %v8346 = vpop.xlane.xlu0 %8345
    %v8347 = vadd.f32 %v8271, %v8272
    %8348 = vadd.xlane.f32.xlu0 %v8347
    %v8349 = vpop.xlane.xlu0 %8348
    %v8350 = vadd.f32 %v8273, %v8274
    %8351 = vadd.xlane.f32.xlu0 %v8350
    %v8352 = vpop.xlane.xlu0 %8351
    %v8353 = vadd.f32 %v8275, %v8276
    %8354 = vadd.xlane.f32.xlu0 %v8353
    %v8355 = vpop.xlane.xlu0 %8354
    %v8356 = vadd.f32 %v8277, %v8278
    %8357 = vadd.xlane.f32.xlu0 %v8356
    %v8358 = vpop.xlane.xlu0 %8357
    %v8359 = vadd.f32 %v8279, %v8280
    %8360 = vadd.xlane.f32.xlu0 %v8359
    %v8361 = vpop.xlane.xlu0 %8360
    %v8362 = vadd.f32 %v8281, %v8282
    %8363 = vadd.xlane.f32.xlu0 %v8362
    %v8364 = vpop.xlane.xlu0 %8363
    %v8365 = vadd.f32 %v8283, %v8284
    %8366 = vadd.xlane.f32.xlu0 %v8365
    %v8367 = vpop.xlane.xlu0 %8366
    %v8368 = vadd.f32 %v8285, %v8286
    %8369 = vadd.xlane.f32.xlu0 %v8368
    %v8370 = vpop.xlane.xlu0 %8369
    %v8371 = vadd.f32 %v8287, %v8288
    %8372 = vadd.xlane.f32.xlu0 %v8371
    %v8373 = vpop.xlane.xlu0 %8372
    %v8374 = vadd.f32 %v8289, %v8290
    %8375 = vadd.xlane.f32.xlu0 %v8374
    %v8376 = vpop.xlane.xlu0 %8375
    %v8377 = vadd.f32 %v8291, %v8292
    %8378 = vadd.xlane.f32.xlu0 %v8377
    %v8379 = vpop.xlane.xlu0 %8378
    %v8380 = vadd.f32 %v8293, %v8294
    %8381 = vadd.xlane.f32.xlu0 %v8380
    %v8382 = vpop.xlane.xlu0 %8381
    %v8383 = vadd.f32 %v8295, %v8296
    %8384 = vadd.xlane.f32.xlu0 %v8383
    %v8385 = vpop.xlane.xlu0 %8384
    %v8386 = vadd.f32 %v8297, %v8298
    %8387 = vadd.xlane.f32.xlu0 %v8386
    %v8388 = vpop.xlane.xlu0 %8387
    %v8389 = vadd.f32 %v8299, %v8300
    %8390 = vadd.xlane.f32.xlu0 %v8389
    %v8391 = vpop.xlane.xlu0 %8390
    %v8392 = vadd.f32 %v8301, %v8302
    %8393 = vadd.xlane.f32.xlu0 %v8392
    %v8394 = vpop.xlane.xlu0 %8393
    %v8395 = vadd.f32 %v8303, %v8304
    %8396 = vadd.xlane.f32.xlu0 %v8395
    %v8397 = vpop.xlane.xlu0 %8396
    %v8398 = vadd.f32 %v8305, %v8306
    %8399 = vadd.xlane.f32.xlu0 %v8398
    %v8400 = vpop.xlane.xlu0 %8399
    %v8401 = vadd.f32 %v8307, %v8308
    %8402 = vadd.xlane.f32.xlu0 %v8401
    %v8403 = vpop.xlane.xlu0 %8402
    %v8404 = vadd.f32 %v8309, %v8310
    %8405 = vadd.xlane.f32.xlu0 %v8404
    %v8406 = vpop.xlane.xlu0 %8405
    %v8407 = vadd.f32 %v8311, %v8312
    %8408 = vadd.xlane.f32.xlu0 %v8407
    %v8409 = vpop.xlane.xlu0 %8408
    %v8410 = vadd.f32 %v8313, %v8314
    %8411 = vadd.xlane.f32.xlu0 %v8410
    %v8412 = vpop.xlane.xlu0 %8411
    %v8413 = vrcp.pop 256.0
    %v8414 = vmul.f32 %v8319, %v8413
    %v8415 = vmul.f32 %v8322, %v8413
    %v8416 = vmul.f32 %v8325, %v8413
    %v8417 = vmul.f32 %v8328, %v8413
    %v8418 = vmul.f32 %v8331, %v8413
    %v8419 = vmul.f32 %v8334, %v8413
    %v8420 = vmul.f32 %v8337, %v8413
    %v8421 = vmul.f32 %v8340, %v8413
    %v8422 = vmul.f32 %v8343, %v8413
    %v8423 = vmul.f32 %v8346, %v8413
    %v8424 = vmul.f32 %v8349, %v8413
    %v8425 = vmul.f32 %v8352, %v8413
    %v8426 = vmul.f32 %v8355, %v8413
    %v8427 = vmul.f32 %v8358, %v8413
    %v8428 = vmul.f32 %v8361, %v8413
    %v8429 = vmul.f32 %v8364, %v8413
    %v8430 = vmul.f32 %v8367, %v8413
    %v8431 = vmul.f32 %v8370, %v8413
    %v8432 = vmul.f32 %v8373, %v8413
    %v8433 = vmul.f32 %v8376, %v8413
    %v8434 = vmul.f32 %v8379, %v8413
    %v8435 = vmul.f32 %v8382, %v8413
    %v8436 = vmul.f32 %v8385, %v8413
    %v8437 = vmul.f32 %v8388, %v8413
    %v8438 = vmul.f32 %v8391, %v8413
    %v8439 = vmul.f32 %v8394, %v8413
    %v8440 = vmul.f32 %v8397, %v8413
    %v8441 = vmul.f32 %v8400, %v8413
    %v8442 = vmul.f32 %v8403, %v8413
    %v8443 = vmul.f32 %v8406, %v8413
    %v8444 = vmul.f32 %v8409, %v8413
    %v8445 = vmul.f32 %v8412, %v8413
    %v8446 = vsub.f32 %v8251, %v8414
    %v8447 = vsub.f32 %v8252, %v8414
    %v8448 = vsub.f32 %v8253, %v8415
    %v8449 = vsub.f32 %v8254, %v8415
    %v8450 = vsub.f32 %v8255, %v8416
    %v8451 = vsub.f32 %v8256, %v8416
    %v8452 = vsub.f32 %v8257, %v8417
    %v8453 = vsub.f32 %v8258, %v8417
    %v8454 = vsub.f32 %v8259, %v8418
    %v8455 = vsub.f32 %v8260, %v8418
    %v8456 = vsub.f32 %v8261, %v8419
    %v8457 = vsub.f32 %v8262, %v8419
    %v8458 = vsub.f32 %v8263, %v8420
    %v8459 = vsub.f32 %v8264, %v8420
    %v8460 = vsub.f32 %v8265, %v8421
    %v8461 = vsub.f32 %v8266, %v8421
    %v8462 = vsub.f32 %v8267, %v8422
    %v8463 = vsub.f32 %v8268, %v8422
    %v8464 = vsub.f32 %v8269, %v8423
    %v8465 = vsub.f32 %v8270, %v8423
    %v8466 = vsub.f32 %v8271, %v8424
    %v8467 = vsub.f32 %v8272, %v8424
    %v8468 = vsub.f32 %v8273, %v8425
    %v8469 = vsub.f32 %v8274, %v8425
    %v8470 = vsub.f32 %v8275, %v8426
    %v8471 = vsub.f32 %v8276, %v8426
    %v8472 = vsub.f32 %v8277, %v8427
    %v8473 = vsub.f32 %v8278, %v8427
    %v8474 = vsub.f32 %v8279, %v8428
    %v8475 = vsub.f32 %v8280, %v8428
    %v8476 = vsub.f32 %v8281, %v8429
    %v8477 = vsub.f32 %v8282, %v8429
    %v8478 = vsub.f32 %v8283, %v8430
    %v8479 = vsub.f32 %v8284, %v8430
    %v8480 = vsub.f32 %v8285, %v8431
    %v8481 = vsub.f32 %v8286, %v8431
    %v8482 = vsub.f32 %v8287, %v8432
    %v8483 = vsub.f32 %v8288, %v8432
    %v8484 = vsub.f32 %v8289, %v8433
    %v8485 = vsub.f32 %v8290, %v8433
    %v8486 = vsub.f32 %v8291, %v8434
    %v8487 = vsub.f32 %v8292, %v8434
    %v8488 = vsub.f32 %v8293, %v8435
    %v8489 = vsub.f32 %v8294, %v8435
    %v8490 = vsub.f32 %v8295, %v8436
    %v8491 = vsub.f32 %v8296, %v8436
    %v8492 = vsub.f32 %v8297, %v8437
    %v8493 = vsub.f32 %v8298, %v8437
    %v8494 = vsub.f32 %v8299, %v8438
    %v8495 = vsub.f32 %v8300, %v8438
    %v8496 = vsub.f32 %v8301, %v8439
    %v8497 = vsub.f32 %v8302, %v8439
    %v8498 = vsub.f32 %v8303, %v8440
    %v8499 = vsub.f32 %v8304, %v8440
    %v8500 = vsub.f32 %v8305, %v8441
    %v8501 = vsub.f32 %v8306, %v8441
    %v8502 = vsub.f32 %v8307, %v8442
    %v8503 = vsub.f32 %v8308, %v8442
    %v8504 = vsub.f32 %v8309, %v8443
    %v8505 = vsub.f32 %v8310, %v8443
    %v8506 = vsub.f32 %v8311, %v8444
    %v8507 = vsub.f32 %v8312, %v8444
    %v8508 = vsub.f32 %v8313, %v8445
    %v8509 = vsub.f32 %v8314, %v8445
    %v8510 = vmul.f32 %v8446, %v8446
    %v8511 = vmul.f32 %v8447, %v8447
    %v8512 = vmul.f32 %v8448, %v8448
    %v8513 = vmul.f32 %v8449, %v8449
    %v8514 = vmul.f32 %v8450, %v8450
    %v8515 = vmul.f32 %v8451, %v8451
    %v8516 = vmul.f32 %v8452, %v8452
    %v8517 = vmul.f32 %v8453, %v8453
    %v8518 = vmul.f32 %v8454, %v8454
    %v8519 = vmul.f32 %v8455, %v8455
    %v8520 = vmul.f32 %v8456, %v8456
    %v8521 = vmul.f32 %v8457, %v8457
    %v8522 = vmul.f32 %v8458, %v8458
    %v8523 = vmul.f32 %v8459, %v8459
    %v8524 = vmul.f32 %v8460, %v8460
    %v8525 = vmul.f32 %v8461, %v8461
    %v8526 = vmul.f32 %v8462, %v8462
    %v8527 = vmul.f32 %v8463, %v8463
    %v8528 = vmul.f32 %v8464, %v8464
    %v8529 = vmul.f32 %v8465, %v8465
    %v8530 = vmul.f32 %v8466, %v8466
    %v8531 = vmul.f32 %v8467, %v8467
    %v8532 = vmul.f32 %v8468, %v8468
    %v8533 = vmul.f32 %v8469, %v8469
    %v8534 = vmul.f32 %v8470, %v8470
    %v8535 = vmul.f32 %v8471, %v8471
    %v8536 = vmul.f32 %v8472, %v8472
    %v8537 = vmul.f32 %v8473, %v8473
    %v8538 = vmul.f32 %v8474, %v8474
    %v8539 = vmul.f32 %v8475, %v8475
    %v8540 = vmul.f32 %v8476, %v8476
    %v8541 = vmul.f32 %v8477, %v8477
    %v8542 = vmul.f32 %v8478, %v8478
    %v8543 = vmul.f32 %v8479, %v8479
    %v8544 = vmul.f32 %v8480, %v8480
    %v8545 = vmul.f32 %v8481, %v8481
    %v8546 = vmul.f32 %v8482, %v8482
    %v8547 = vmul.f32 %v8483, %v8483
    %v8548 = vmul.f32 %v8484, %v8484
    %v8549 = vmul.f32 %v8485, %v8485
    %v8550 = vmul.f32 %v8486, %v8486
    %v8551 = vmul.f32 %v8487, %v8487
    %v8552 = vmul.f32 %v8488, %v8488
    %v8553 = vmul.f32 %v8489, %v8489
    %v8554 = vmul.f32 %v8490, %v8490
    %v8555 = vmul.f32 %v8491, %v8491
    %v8556 = vmul.f32 %v8492, %v8492
    %v8557 = vmul.f32 %v8493, %v8493
    %v8558 = vmul.f32 %v8494, %v8494
    %v8559 = vmul.f32 %v8495, %v8495
    %v8560 = vmul.f32 %v8496, %v8496
    %v8561 = vmul.f32 %v8497, %v8497
    %v8562 = vmul.f32 %v8498, %v8498
    %v8563 = vmul.f32 %v8499, %v8499
    %v8564 = vmul.f32 %v8500, %v8500
    %v8565 = vmul.f32 %v8501, %v8501
    %v8566 = vmul.f32 %v8502, %v8502
    %v8567 = vmul.f32 %v8503, %v8503
    %v8568 = vmul.f32 %v8504, %v8504
    %v8569 = vmul.f32 %v8505, %v8505
    %v8570 = vmul.f32 %v8506, %v8506
    %v8571 = vmul.f32 %v8507, %v8507
    %v8572 = vmul.f32 %v8508, %v8508
    %v8573 = vmul.f32 %v8509, %v8509
    %v8574 = vadd.f32 %v8510, %v8511
    %8575 = vadd.xlane.f32.xlu0 %v8574
    %v8576 = vpop.xlane.xlu0 %8575
    %v8577 = vadd.f32 %v8512, %v8513
    %8578 = vadd.xlane.f32.xlu0 %v8577
    %v8579 = vpop.xlane.xlu0 %8578
    %v8580 = vadd.f32 %v8514, %v8515
    %8581 = vadd.xlane.f32.xlu0 %v8580
    %v8582 = vpop.xlane.xlu0 %8581
    %v8583 = vadd.f32 %v8516, %v8517
    %8584 = vadd.xlane.f32.xlu0 %v8583
    %v8585 = vpop.xlane.xlu0 %8584
    %v8586 = vadd.f32 %v8518, %v8519
    %8587 = vadd.xlane.f32.xlu0 %v8586
    %v8588 = vpop.xlane.xlu0 %8587
    %v8589 = vadd.f32 %v8520, %v8521
    %8590 = vadd.xlane.f32.xlu0 %v8589
    %v8591 = vpop.xlane.xlu0 %8590
    %v8592 = vadd.f32 %v8522, %v8523
    %8593 = vadd.xlane.f32.xlu0 %v8592
    %v8594 = vpop.xlane.xlu0 %8593
    %v8595 = vadd.f32 %v8524, %v8525
    %8596 = vadd.xlane.f32.xlu0 %v8595
    %v8597 = vpop.xlane.xlu0 %8596
    %v8598 = vadd.f32 %v8526, %v8527
    %8599 = vadd.xlane.f32.xlu0 %v8598
    %v8600 = vpop.xlane.xlu0 %8599
    %v8601 = vadd.f32 %v8528, %v8529
    %8602 = vadd.xlane.f32.xlu0 %v8601
    %v8603 = vpop.xlane.xlu0 %8602
    %v8604 = vadd.f32 %v8530, %v8531
    %8605 = vadd.xlane.f32.xlu0 %v8604
    %v8606 = vpop.xlane.xlu0 %8605
    %v8607 = vadd.f32 %v8532, %v8533
    %8608 = vadd.xlane.f32.xlu0 %v8607
    %v8609 = vpop.xlane.xlu0 %8608
    %v8610 = vadd.f32 %v8534, %v8535
    %8611 = vadd.xlane.f32.xlu0 %v8610
    %v8612 = vpop.xlane.xlu0 %8611
    %v8613 = vadd.f32 %v8536, %v8537
    %8614 = vadd.xlane.f32.xlu0 %v8613
    %v8615 = vpop.xlane.xlu0 %8614
    %v8616 = vadd.f32 %v8538, %v8539
    %8617 = vadd.xlane.f32.xlu0 %v8616
    %v8618 = vpop.xlane.xlu0 %8617
    %v8619 = vadd.f32 %v8540, %v8541
    %8620 = vadd.xlane.f32.xlu0 %v8619
    %v8621 = vpop.xlane.xlu0 %8620
    %v8622 = vadd.f32 %v8542, %v8543
    %8623 = vadd.xlane.f32.xlu0 %v8622
    %v8624 = vpop.xlane.xlu0 %8623
    %v8625 = vadd.f32 %v8544, %v8545
    %8626 = vadd.xlane.f32.xlu0 %v8625
    %v8627 = vpop.xlane.xlu0 %8626
    %v8628 = vadd.f32 %v8546, %v8547
    %8629 = vadd.xlane.f32.xlu0 %v8628
    %v8630 = vpop.xlane.xlu0 %8629
    %v8631 = vadd.f32 %v8548, %v8549
    %8632 = vadd.xlane.f32.xlu0 %v8631
    %v8633 = vpop.xlane.xlu0 %8632
    %v8634 = vadd.f32 %v8550, %v8551
    %8635 = vadd.xlane.f32.xlu0 %v8634
    %v8636 = vpop.xlane.xlu0 %8635
    %v8637 = vadd.f32 %v8552, %v8553
    %8638 = vadd.xlane.f32.xlu0 %v8637
    %v8639 = vpop.xlane.xlu0 %8638
    %v8640 = vadd.f32 %v8554, %v8555
    %8641 = vadd.xlane.f32.xlu0 %v8640
    %v8642 = vpop.xlane.xlu0 %8641
    %v8643 = vadd.f32 %v8556, %v8557
    %8644 = vadd.xlane.f32.xlu0 %v8643
    %v8645 = vpop.xlane.xlu0 %8644
    %v8646 = vadd.f32 %v8558, %v8559
    %8647 = vadd.xlane.f32.xlu0 %v8646
    %v8648 = vpop.xlane.xlu0 %8647
    %v8649 = vadd.f32 %v8560, %v8561
    %8650 = vadd.xlane.f32.xlu0 %v8649
    %v8651 = vpop.xlane.xlu0 %8650
    %v8652 = vadd.f32 %v8562, %v8563
    %8653 = vadd.xlane.f32.xlu0 %v8652
    %v8654 = vpop.xlane.xlu0 %8653
    %v8655 = vadd.f32 %v8564, %v8565
    %8656 = vadd.xlane.f32.xlu0 %v8655
    %v8657 = vpop.xlane.xlu0 %8656
    %v8658 = vadd.f32 %v8566, %v8567
    %8659 = vadd.xlane.f32.xlu0 %v8658
    %v8660 = vpop.xlane.xlu0 %8659
    %v8661 = vadd.f32 %v8568, %v8569
    %8662 = vadd.xlane.f32.xlu0 %v8661
    %v8663 = vpop.xlane.xlu0 %8662
    %v8664 = vadd.f32 %v8570, %v8571
    %8665 = vadd.xlane.f32.xlu0 %v8664
    %v8666 = vpop.xlane.xlu0 %8665
    %v8667 = vadd.f32 %v8572, %v8573
    %8668 = vadd.xlane.f32.xlu0 %v8667
    %v8669 = vpop.xlane.xlu0 %8668
    %v8670 = vmul.f32 %v8576, %v8413
    %v8671 = vmul.f32 %v8579, %v8413
    %v8672 = vmul.f32 %v8582, %v8413
    %v8673 = vmul.f32 %v8585, %v8413
    %v8674 = vmul.f32 %v8588, %v8413
    %v8675 = vmul.f32 %v8591, %v8413
    %v8676 = vmul.f32 %v8594, %v8413
    %v8677 = vmul.f32 %v8597, %v8413
    %v8678 = vmul.f32 %v8600, %v8413
    %v8679 = vmul.f32 %v8603, %v8413
    %v8680 = vmul.f32 %v8606, %v8413
    %v8681 = vmul.f32 %v8609, %v8413
    %v8682 = vmul.f32 %v8612, %v8413
    %v8683 = vmul.f32 %v8615, %v8413
    %v8684 = vmul.f32 %v8618, %v8413
    %v8685 = vmul.f32 %v8621, %v8413
    %v8686 = vmul.f32 %v8624, %v8413
    %v8687 = vmul.f32 %v8627, %v8413
    %v8688 = vmul.f32 %v8630, %v8413
    %v8689 = vmul.f32 %v8633, %v8413
    %v8690 = vmul.f32 %v8636, %v8413
    %v8691 = vmul.f32 %v8639, %v8413
    %v8692 = vmul.f32 %v8642, %v8413
    %v8693 = vmul.f32 %v8645, %v8413
    %v8694 = vmul.f32 %v8648, %v8413
    %v8695 = vmul.f32 %v8651, %v8413
    %v8696 = vmul.f32 %v8654, %v8413
    %v8697 = vmul.f32 %v8657, %v8413
    %v8698 = vmul.f32 %v8660, %v8413
    %v8699 = vmul.f32 %v8663, %v8413
    %v8700 = vmul.f32 %v8666, %v8413
    %v8701 = vmul.f32 %v8669, %v8413
    %v8702 = vadd.f32 %v8670, 1e-05
    %v8703 = vadd.f32 %v8671, 1e-05
    %v8704 = vadd.f32 %v8672, 1e-05
    %v8705 = vadd.f32 %v8673, 1e-05
    %v8706 = vadd.f32 %v8674, 1e-05
    %v8707 = vadd.f32 %v8675, 1e-05
    %v8708 = vadd.f32 %v8676, 1e-05
    %v8709 = vadd.f32 %v8677, 1e-05
    %v8710 = vadd.f32 %v8678, 1e-05
    %v8711 = vadd.f32 %v8679, 1e-05
    %v8712 = vadd.f32 %v8680, 1e-05
    %v8713 = vadd.f32 %v8681, 1e-05
    %v8714 = vadd.f32 %v8682, 1e-05
    %v8715 = vadd.f32 %v8683, 1e-05
    %v8716 = vadd.f32 %v8684, 1e-05
    %v8717 = vadd.f32 %v8685, 1e-05
    %v8718 = vadd.f32 %v8686, 1e-05
    %v8719 = vadd.f32 %v8687, 1e-05
    %v8720 = vadd.f32 %v8688, 1e-05
    %v8721 = vadd.f32 %v8689, 1e-05
    %v8722 = vadd.f32 %v8690, 1e-05
    %v8723 = vadd.f32 %v8691, 1e-05
    %v8724 = vadd.f32 %v8692, 1e-05
    %v8725 = vadd.f32 %v8693, 1e-05
    %v8726 = vadd.f32 %v8694, 1e-05
    %v8727 = vadd.f32 %v8695, 1e-05
    %v8728 = vadd.f32 %v8696, 1e-05
    %v8729 = vadd.f32 %v8697, 1e-05
    %v8730 = vadd.f32 %v8698, 1e-05
    %v8731 = vadd.f32 %v8699, 1e-05
    %v8732 = vadd.f32 %v8700, 1e-05
    %v8733 = vadd.f32 %v8701, 1e-05
    %v8734 = vrsqrt.pop %v8702
    %v8735 = vrsqrt.pop %v8703
    %v8736 = vrsqrt.pop %v8704
    %v8737 = vrsqrt.pop %v8705
    %v8738 = vrsqrt.pop %v8706
    %v8739 = vrsqrt.pop %v8707
    %v8740 = vrsqrt.pop %v8708
    %v8741 = vrsqrt.pop %v8709
    %v8742 = vrsqrt.pop %v8710
    %v8743 = vrsqrt.pop %v8711
    %v8744 = vrsqrt.pop %v8712
    %v8745 = vrsqrt.pop %v8713
    %v8746 = vrsqrt.pop %v8714
    %v8747 = vrsqrt.pop %v8715
    %v8748 = vrsqrt.pop %v8716
    %v8749 = vrsqrt.pop %v8717
    %v8750 = vrsqrt.pop %v8718
    %v8751 = vrsqrt.pop %v8719
    %v8752 = vrsqrt.pop %v8720
    %v8753 = vrsqrt.pop %v8721
    %v8754 = vrsqrt.pop %v8722
    %v8755 = vrsqrt.pop %v8723
    %v8756 = vrsqrt.pop %v8724
    %v8757 = vrsqrt.pop %v8725
    %v8758 = vrsqrt.pop %v8726
    %v8759 = vrsqrt.pop %v8727
    %v8760 = vrsqrt.pop %v8728
    %v8761 = vrsqrt.pop %v8729
    %v8762 = vrsqrt.pop %v8730
    %v8763 = vrsqrt.pop %v8731
    %v8764 = vrsqrt.pop %v8732
    %v8765 = vrsqrt.pop %v8733
    %v8766 = vmul.f32 %v8446, %v8734
    %v8767 = vmul.f32 %v8447, %v8734
    %v8768 = vmul.f32 %v8448, %v8735
    %v8769 = vmul.f32 %v8449, %v8735
    %v8770 = vmul.f32 %v8450, %v8736
    %v8771 = vmul.f32 %v8451, %v8736
    %v8772 = vmul.f32 %v8452, %v8737
    %v8773 = vmul.f32 %v8453, %v8737
    %v8774 = vmul.f32 %v8454, %v8738
    %v8775 = vmul.f32 %v8455, %v8738
    %v8776 = vmul.f32 %v8456, %v8739
    %v8777 = vmul.f32 %v8457, %v8739
    %v8778 = vmul.f32 %v8458, %v8740
    %v8779 = vmul.f32 %v8459, %v8740
    %v8780 = vmul.f32 %v8460, %v8741
    %v8781 = vmul.f32 %v8461, %v8741
    %v8782 = vmul.f32 %v8462, %v8742
    %v8783 = vmul.f32 %v8463, %v8742
    %v8784 = vmul.f32 %v8464, %v8743
    %v8785 = vmul.f32 %v8465, %v8743
    %v8786 = vmul.f32 %v8466, %v8744
    %v8787 = vmul.f32 %v8467, %v8744
    %v8788 = vmul.f32 %v8468, %v8745
    %v8789 = vmul.f32 %v8469, %v8745
    %v8790 = vmul.f32 %v8470, %v8746
    %v8791 = vmul.f32 %v8471, %v8746
    %v8792 = vmul.f32 %v8472, %v8747
    %v8793 = vmul.f32 %v8473, %v8747
    %v8794 = vmul.f32 %v8474, %v8748
    %v8795 = vmul.f32 %v8475, %v8748
    %v8796 = vmul.f32 %v8476, %v8749
    %v8797 = vmul.f32 %v8477, %v8749
    %v8798 = vmul.f32 %v8478, %v8750
    %v8799 = vmul.f32 %v8479, %v8750
    %v8800 = vmul.f32 %v8480, %v8751
    %v8801 = vmul.f32 %v8481, %v8751
    %v8802 = vmul.f32 %v8482, %v8752
    %v8803 = vmul.f32 %v8483, %v8752
    %v8804 = vmul.f32 %v8484, %v8753
    %v8805 = vmul.f32 %v8485, %v8753
    %v8806 = vmul.f32 %v8486, %v8754
    %v8807 = vmul.f32 %v8487, %v8754
    %v8808 = vmul.f32 %v8488, %v8755
    %v8809 = vmul.f32 %v8489, %v8755
    %v8810 = vmul.f32 %v8490, %v8756
    %v8811 = vmul.f32 %v8491, %v8756
    %v8812 = vmul.f32 %v8492, %v8757
    %v8813 = vmul.f32 %v8493, %v8757
    %v8814 = vmul.f32 %v8494, %v8758
    %v8815 = vmul.f32 %v8495, %v8758
    %v8816 = vmul.f32 %v8496, %v8759
    %v8817 = vmul.f32 %v8497, %v8759
    %v8818 = vmul.f32 %v8498, %v8760
    %v8819 = vmul.f32 %v8499, %v8760
    %v8820 = vmul.f32 %v8500, %v8761
    %v8821 = vmul.f32 %v8501, %v8761
    %v8822 = vmul.f32 %v8502, %v8762
    %v8823 = vmul.f32 %v8503, %v8762
    %v8824 = vmul.f32 %v8504, %v8763
    %v8825 = vmul.f32 %v8505, %v8763
    %v8826 = vmul.f32 %v8506, %v8764
    %v8827 = vmul.f32 %v8507, %v8764
    %v8828 = vmul.f32 %v8508, %v8765
    %v8829 = vmul.f32 %v8509, %v8765
    %v8831 = vlaneseq
    %v8832 = vshrl.u32 %v8831, 7
    %v8833 = vsub.s32 0, %v8832
    %v8834 = vrot.slane %v8315, %v8833
    %v8835 = vlaneseq
    %v8836 = vshrl.u32 %v8835, 7
    %v8837 = vsub.s32 1, %v8836
    %v8838 = vrot.slane %v8315, %v8837
    %v8841 = vmul.f32 %v8766, %v8834
    %v8842 = vmul.f32 %v8767, %v8838
    %v8843 = vmul.f32 %v8768, %v8834
    %v8844 = vmul.f32 %v8769, %v8838
    %v8845 = vmul.f32 %v8770, %v8834
    %v8846 = vmul.f32 %v8771, %v8838
    %v8847 = vmul.f32 %v8772, %v8834
    %v8848 = vmul.f32 %v8773, %v8838
    %v8849 = vmul.f32 %v8774, %v8834
    %v8850 = vmul.f32 %v8775, %v8838
    %v8851 = vmul.f32 %v8776, %v8834
    %v8852 = vmul.f32 %v8777, %v8838
    %v8853 = vmul.f32 %v8778, %v8834
    %v8854 = vmul.f32 %v8779, %v8838
    %v8855 = vmul.f32 %v8780, %v8834
    %v8856 = vmul.f32 %v8781, %v8838
    %v8857 = vmul.f32 %v8782, %v8834
    %v8858 = vmul.f32 %v8783, %v8838
    %v8859 = vmul.f32 %v8784, %v8834
    %v8860 = vmul.f32 %v8785, %v8838
    %v8861 = vmul.f32 %v8786, %v8834
    %v8862 = vmul.f32 %v8787, %v8838
    %v8863 = vmul.f32 %v8788, %v8834
    %v8864 = vmul.f32 %v8789, %v8838
    %v8865 = vmul.f32 %v8790, %v8834
    %v8866 = vmul.f32 %v8791, %v8838
    %v8867 = vmul.f32 %v8792, %v8834
    %v8868 = vmul.f32 %v8793, %v8838
    %v8869 = vmul.f32 %v8794, %v8834
    %v8870 = vmul.f32 %v8795, %v8838
    %v8871 = vmul.f32 %v8796, %v8834
    %v8872 = vmul.f32 %v8797, %v8838
    %v8873 = vmul.f32 %v8798, %v8834
    %v8874 = vmul.f32 %v8799, %v8838
    %v8875 = vmul.f32 %v8800, %v8834
    %v8876 = vmul.f32 %v8801, %v8838
    %v8877 = vmul.f32 %v8802, %v8834
    %v8878 = vmul.f32 %v8803, %v8838
    %v8879 = vmul.f32 %v8804, %v8834
    %v8880 = vmul.f32 %v8805, %v8838
    %v8881 = vmul.f32 %v8806, %v8834
    %v8882 = vmul.f32 %v8807, %v8838
    %v8883 = vmul.f32 %v8808, %v8834
    %v8884 = vmul.f32 %v8809, %v8838
    %v8885 = vmul.f32 %v8810, %v8834
    %v8886 = vmul.f32 %v8811, %v8838
    %v8887 = vmul.f32 %v8812, %v8834
    %v8888 = vmul.f32 %v8813, %v8838
    %v8889 = vmul.f32 %v8814, %v8834
    %v8890 = vmul.f32 %v8815, %v8838
    %v8891 = vmul.f32 %v8816, %v8834
    %v8892 = vmul.f32 %v8817, %v8838
    %v8893 = vmul.f32 %v8818, %v8834
    %v8894 = vmul.f32 %v8819, %v8838
    %v8895 = vmul.f32 %v8820, %v8834
    %v8896 = vmul.f32 %v8821, %v8838
    %v8897 = vmul.f32 %v8822, %v8834
    %v8898 = vmul.f32 %v8823, %v8838
    %v8899 = vmul.f32 %v8824, %v8834
    %v8900 = vmul.f32 %v8825, %v8838
    %v8901 = vmul.f32 %v8826, %v8834
    %v8902 = vmul.f32 %v8827, %v8838
    %v8903 = vmul.f32 %v8828, %v8834
    %v8904 = vmul.f32 %v8829, %v8838
    %v8906 = vlaneseq
    %v8907 = vshrl.u32 %v8906, 7
    %v8908 = vsub.s32 0, %v8907
    %v8909 = vrot.slane %v8316, %v8908
    %v8910 = vlaneseq
    %v8911 = vshrl.u32 %v8910, 7
    %v8912 = vsub.s32 1, %v8911
    %v8913 = vrot.slane %v8316, %v8912
    %v8916 = vadd.f32 %v8841, %v8909
    %v8917 = vadd.f32 %v8842, %v8913
    %v8918 = vadd.f32 %v8843, %v8909
    %v8919 = vadd.f32 %v8844, %v8913
    %v8920 = vadd.f32 %v8845, %v8909
    %v8921 = vadd.f32 %v8846, %v8913
    %v8922 = vadd.f32 %v8847, %v8909
    %v8923 = vadd.f32 %v8848, %v8913
    %v8924 = vadd.f32 %v8849, %v8909
    %v8925 = vadd.f32 %v8850, %v8913
    %v8926 = vadd.f32 %v8851, %v8909
    %v8927 = vadd.f32 %v8852, %v8913
    %v8928 = vadd.f32 %v8853, %v8909
    %v8929 = vadd.f32 %v8854, %v8913
    %v8930 = vadd.f32 %v8855, %v8909
    %v8931 = vadd.f32 %v8856, %v8913
    %v8932 = vadd.f32 %v8857, %v8909
    %v8933 = vadd.f32 %v8858, %v8913
    %v8934 = vadd.f32 %v8859, %v8909
    %v8935 = vadd.f32 %v8860, %v8913
    %v8936 = vadd.f32 %v8861, %v8909
    %v8937 = vadd.f32 %v8862, %v8913
    %v8938 = vadd.f32 %v8863, %v8909
    %v8939 = vadd.f32 %v8864, %v8913
    %v8940 = vadd.f32 %v8865, %v8909
    %v8941 = vadd.f32 %v8866, %v8913
    %v8942 = vadd.f32 %v8867, %v8909
    %v8943 = vadd.f32 %v8868, %v8913
    %v8944 = vadd.f32 %v8869, %v8909
    %v8945 = vadd.f32 %v8870, %v8913
    %v8946 = vadd.f32 %v8871, %v8909
    %v8947 = vadd.f32 %v8872, %v8913
    %v8948 = vadd.f32 %v8873, %v8909
    %v8949 = vadd.f32 %v8874, %v8913
    %v8950 = vadd.f32 %v8875, %v8909
    %v8951 = vadd.f32 %v8876, %v8913
    %v8952 = vadd.f32 %v8877, %v8909
    %v8953 = vadd.f32 %v8878, %v8913
    %v8954 = vadd.f32 %v8879, %v8909
    %v8955 = vadd.f32 %v8880, %v8913
    %v8956 = vadd.f32 %v8881, %v8909
    %v8957 = vadd.f32 %v8882, %v8913
    %v8958 = vadd.f32 %v8883, %v8909
    %v8959 = vadd.f32 %v8884, %v8913
    %v8960 = vadd.f32 %v8885, %v8909
    %v8961 = vadd.f32 %v8886, %v8913
    %v8962 = vadd.f32 %v8887, %v8909
    %v8963 = vadd.f32 %v8888, %v8913
    %v8964 = vadd.f32 %v8889, %v8909
    %v8965 = vadd.f32 %v8890, %v8913
    %v8966 = vadd.f32 %v8891, %v8909
    %v8967 = vadd.f32 %v8892, %v8913
    %v8968 = vadd.f32 %v8893, %v8909
    %v8969 = vadd.f32 %v8894, %v8913
    %v8970 = vadd.f32 %v8895, %v8909
    %v8971 = vadd.f32 %v8896, %v8913
    %v8972 = vadd.f32 %v8897, %v8909
    %v8973 = vadd.f32 %v8898, %v8913
    %v8974 = vadd.f32 %v8899, %v8909
    %v8975 = vadd.f32 %v8900, %v8913
    %v8976 = vadd.f32 %v8901, %v8909
    %v8977 = vadd.f32 %v8902, %v8913
    %v8978 = vadd.f32 %v8903, %v8909
    %v8979 = vadd.f32 %v8904, %v8913
    %v8980 = vmax.f32 %v8916, 0.0
    %v8981 = vmax.f32 %v8917, 0.0
    %v8982 = vmax.f32 %v8918, 0.0
    %v8983 = vmax.f32 %v8919, 0.0
    %v8984 = vmax.f32 %v8920, 0.0
    %v8985 = vmax.f32 %v8921, 0.0
    %v8986 = vmax.f32 %v8922, 0.0
    %v8987 = vmax.f32 %v8923, 0.0
    %v8988 = vmax.f32 %v8924, 0.0
    %v8989 = vmax.f32 %v8925, 0.0
    %v8990 = vmax.f32 %v8926, 0.0
    %v8991 = vmax.f32 %v8927, 0.0
    %v8992 = vmax.f32 %v8928, 0.0
    %v8993 = vmax.f32 %v8929, 0.0
    %v8994 = vmax.f32 %v8930, 0.0
    %v8995 = vmax.f32 %v8931, 0.0
    %v8996 = vmax.f32 %v8932, 0.0
    %v8997 = vmax.f32 %v8933, 0.0
    %v8998 = vmax.f32 %v8934, 0.0
    %v8999 = vmax.f32 %v8935, 0.0
    %v9000 = vmax.f32 %v8936, 0.0
    %v9001 = vmax.f32 %v8937, 0.0
    %v9002 = vmax.f32 %v8938, 0.0
    %v9003 = vmax.f32 %v8939, 0.0
    %v9004 = vmax.f32 %v8940, 0.0
    %v9005 = vmax.f32 %v8941, 0.0
    %v9006 = vmax.f32 %v8942, 0.0
    %v9007 = vmax.f32 %v8943, 0.0
    %v9008 = vmax.f32 %v8944, 0.0
    %v9009 = vmax.f32 %v8945, 0.0
    %v9010 = vmax.f32 %v8946, 0.0
    %v9011 = vmax.f32 %v8947, 0.0
    %v9012 = vmax.f32 %v8948, 0.0
    %v9013 = vmax.f32 %v8949, 0.0
    %v9014 = vmax.f32 %v8950, 0.0
    %v9015 = vmax.f32 %v8951, 0.0
    %v9016 = vmax.f32 %v8952, 0.0
    %v9017 = vmax.f32 %v8953, 0.0
    %v9018 = vmax.f32 %v8954, 0.0
    %v9019 = vmax.f32 %v8955, 0.0
    %v9020 = vmax.f32 %v8956, 0.0
    %v9021 = vmax.f32 %v8957, 0.0
    %v9022 = vmax.f32 %v8958, 0.0
    %v9023 = vmax.f32 %v8959, 0.0
    %v9024 = vmax.f32 %v8960, 0.0
    %v9025 = vmax.f32 %v8961, 0.0
    %v9026 = vmax.f32 %v8962, 0.0
    %v9027 = vmax.f32 %v8963, 0.0
    %v9028 = vmax.f32 %v8964, 0.0
    %v9029 = vmax.f32 %v8965, 0.0
    %v9030 = vmax.f32 %v8966, 0.0
    %v9031 = vmax.f32 %v8967, 0.0
    %v9032 = vmax.f32 %v8968, 0.0
    %v9033 = vmax.f32 %v8969, 0.0
    %v9034 = vmax.f32 %v8970, 0.0
    %v9035 = vmax.f32 %v8971, 0.0
    %v9036 = vmax.f32 %v8972, 0.0
    %v9037 = vmax.f32 %v8973, 0.0
    %v9038 = vmax.f32 %v8974, 0.0
    %v9039 = vmax.f32 %v8975, 0.0
    %v9040 = vmax.f32 %v8976, 0.0
    %v9041 = vmax.f32 %v8977, 0.0
    %v9042 = vmax.f32 %v8978, 0.0
    %v9043 = vmax.f32 %v8979, 0.0
    %v9044 = vpack.c.bf16 %v8982, %v8980
    %v9045 = vpack.c.bf16 %v8983, %v8981
    %v9046 = vpack.c.bf16 %v8986, %v8984
    %v9047 = vpack.c.bf16 %v8987, %v8985
    %v9048 = vpack.c.bf16 %v8990, %v8988
    %v9049 = vpack.c.bf16 %v8991, %v8989
    %v9050 = vpack.c.bf16 %v8994, %v8992
    %v9051 = vpack.c.bf16 %v8995, %v8993
    %v9052 = vpack.c.bf16 %v8998, %v8996
    %v9053 = vpack.c.bf16 %v8999, %v8997
    %v9054 = vpack.c.bf16 %v9002, %v9000
    %v9055 = vpack.c.bf16 %v9003, %v9001
    %v9056 = vpack.c.bf16 %v9006, %v9004
    %v9057 = vpack.c.bf16 %v9007, %v9005
    %v9058 = vpack.c.bf16 %v9010, %v9008
    %v9059 = vpack.c.bf16 %v9011, %v9009
    %v9060 = vpack.c.bf16 %v9014, %v9012
    %v9061 = vpack.c.bf16 %v9015, %v9013
    %v9062 = vpack.c.bf16 %v9018, %v9016
    %v9063 = vpack.c.bf16 %v9019, %v9017
    %v9064 = vpack.c.bf16 %v9022, %v9020
    %v9065 = vpack.c.bf16 %v9023, %v9021
    %v9066 = vpack.c.bf16 %v9026, %v9024
    %v9067 = vpack.c.bf16 %v9027, %v9025
    %v9068 = vpack.c.bf16 %v9030, %v9028
    %v9069 = vpack.c.bf16 %v9031, %v9029
    %v9070 = vpack.c.bf16 %v9034, %v9032
    %v9071 = vpack.c.bf16 %v9035, %v9033
    %v9072 = vpack.c.bf16 %v9038, %v9036
    %v9073 = vpack.c.bf16 %v9039, %v9037
    %v9074 = vpack.c.bf16 %v9042, %v9040
    %v9075 = vpack.c.bf16 %v9043, %v9041
    %v9076 = vld [vmem:[%s11] sm:$0xff]
    %v9077 = vld [vmem:[%s11 + $0x8] sm:$0xff]
    %v9078 = vld [vmem:[%s11 + $0x10] sm:$0xff]
    %v9079 = vld [vmem:[%s11 + $0x18] sm:$0xff]
    %v9080 = vld [vmem:[%s11 + $0x20] sm:$0xff]
    %v9081 = vld [vmem:[%s11 + $0x28] sm:$0xff]
    %v9082 = vld [vmem:[%s11 + $0x30] sm:$0xff]
    %v9083 = vld [vmem:[%s11 + $0x38] sm:$0xff]
    %v9084 = vld [vmem:[%s11 + $0x40] sm:$0xff]
    %v9085 = vld [vmem:[%s11 + $0x48] sm:$0xff]
    %v9086 = vld [vmem:[%s11 + $0x50] sm:$0xff]
    %v9087 = vld [vmem:[%s11 + $0x58] sm:$0xff]
    %v9088 = vld [vmem:[%s11 + $0x60] sm:$0xff]
    %v9089 = vld [vmem:[%s11 + $0x68] sm:$0xff]
    %v9090 = vld [vmem:[%s11 + $0x70] sm:$0xff]
    %v9091 = vld [vmem:[%s11 + $0x78] sm:$0xff]
    %v9092 = vld [vmem:[%s11 + $0x80] sm:$0xff]
    %v9093 = vld [vmem:[%s11 + $0x88] sm:$0xff]
    %v9094 = vld [vmem:[%s11 + $0x90] sm:$0xff]
    %v9095 = vld [vmem:[%s11 + $0x98] sm:$0xff]
    %v9096 = vld [vmem:[%s11 + $0xa0] sm:$0xff]
    %v9097 = vld [vmem:[%s11 + $0xa8] sm:$0xff]
    %v9098 = vld [vmem:[%s11 + $0xb0] sm:$0xff]
    %v9099 = vld [vmem:[%s11 + $0xb8] sm:$0xff]
    %v9100 = vld [vmem:[%s11 + $0xc0] sm:$0xff]
    %v9101 = vld [vmem:[%s11 + $0xc8] sm:$0xff]
    %v9102 = vld [vmem:[%s11 + $0xd0] sm:$0xff]
    %v9103 = vld [vmem:[%s11 + $0xd8] sm:$0xff]
    %v9104 = vld [vmem:[%s11 + $0xe0] sm:$0xff]
    %v9105 = vld [vmem:[%s11 + $0xe8] sm:$0xff]
    %v9106 = vld [vmem:[%s11 + $0xf0] sm:$0xff]
    %v9107 = vld [vmem:[%s11 + $0xf8] sm:$0xff]
    %v9108 = vld [vmem:[#allocation10] sm:$0x3]
    %v9110 = vlaneseq
    %v9111 = vshrl.u32 %v9110, 7
    %v9112 = vsub.s32 0, %v9111
    %v9113 = vrot.slane %v9108, %v9112
    %v9114 = vlaneseq
    %v9115 = vshrl.u32 %v9114, 7
    %v9116 = vsub.s32 1, %v9115
    %v9117 = vrot.slane %v9108, %v9116
    %v9152 = vunpack.c.l.b16 %v9076
    %v9153 = vunpack.c.h.b16 %v9076
    %v9154 = vunpack.c.l.b16 %v9077
    %v9155 = vunpack.c.h.b16 %v9077
    %v9156 = vunpack.c.l.b16 %v9078
    %v9157 = vunpack.c.h.b16 %v9078
    %v9158 = vunpack.c.l.b16 %v9079
    %v9159 = vunpack.c.h.b16 %v9079
    %v9160 = vunpack.c.l.b16 %v9080
    %v9161 = vunpack.c.h.b16 %v9080
    %v9162 = vunpack.c.l.b16 %v9081
    %v9163 = vunpack.c.h.b16 %v9081
    %v9164 = vunpack.c.l.b16 %v9082
    %v9165 = vunpack.c.h.b16 %v9082
    %v9166 = vunpack.c.l.b16 %v9083
    %v9167 = vunpack.c.h.b16 %v9083
    %v9168 = vunpack.c.l.b16 %v9084
    %v9169 = vunpack.c.h.b16 %v9084
    %v9170 = vunpack.c.l.b16 %v9085
    %v9171 = vunpack.c.h.b16 %v9085
    %v9172 = vunpack.c.l.b16 %v9086
    %v9173 = vunpack.c.h.b16 %v9086
    %v9174 = vunpack.c.l.b16 %v9087
    %v9175 = vunpack.c.h.b16 %v9087
    %v9176 = vunpack.c.l.b16 %v9088
    %v9177 = vunpack.c.h.b16 %v9088
    %v9178 = vunpack.c.l.b16 %v9089
    %v9179 = vunpack.c.h.b16 %v9089
    %v9180 = vunpack.c.l.b16 %v9090
    %v9181 = vunpack.c.h.b16 %v9090
    %v9182 = vunpack.c.l.b16 %v9091
    %v9183 = vunpack.c.h.b16 %v9091
    %v9184 = vunpack.c.l.b16 %v9092
    %v9185 = vunpack.c.h.b16 %v9092
    %v9186 = vunpack.c.l.b16 %v9093
    %v9187 = vunpack.c.h.b16 %v9093
    %v9188 = vunpack.c.l.b16 %v9094
    %v9189 = vunpack.c.h.b16 %v9094
    %v9190 = vunpack.c.l.b16 %v9095
    %v9191 = vunpack.c.h.b16 %v9095
    %v9192 = vunpack.c.l.b16 %v9096
    %v9193 = vunpack.c.h.b16 %v9096
    %v9194 = vunpack.c.l.b16 %v9097
    %v9195 = vunpack.c.h.b16 %v9097
    %v9196 = vunpack.c.l.b16 %v9098
    %v9197 = vunpack.c.h.b16 %v9098
    %v9198 = vunpack.c.l.b16 %v9099
    %v9199 = vunpack.c.h.b16 %v9099
    %v9200 = vunpack.c.l.b16 %v9100
    %v9201 = vunpack.c.h.b16 %v9100
    %v9202 = vunpack.c.l.b16 %v9101
    %v9203 = vunpack.c.h.b16 %v9101
    %v9204 = vunpack.c.l.b16 %v9102
    %v9205 = vunpack.c.h.b16 %v9102
    %v9206 = vunpack.c.l.b16 %v9103
    %v9207 = vunpack.c.h.b16 %v9103
    %v9208 = vunpack.c.l.b16 %v9104
    %v9209 = vunpack.c.h.b16 %v9104
    %v9210 = vunpack.c.l.b16 %v9105
    %v9211 = vunpack.c.h.b16 %v9105
    %v9212 = vunpack.c.l.b16 %v9106
    %v9213 = vunpack.c.h.b16 %v9106
    %v9214 = vunpack.c.l.b16 %v9107
    %v9215 = vunpack.c.h.b16 %v9107
    %v9216 = vpack.c.b16 %v9154, %v9152
    %v9217 = vpack.c.b16 %v9155, %v9153
    %v9218 = vpack.c.b16 %v9158, %v9156
    %v9219 = vpack.c.b16 %v9159, %v9157
    %v9220 = vpack.c.b16 %v9162, %v9160
    %v9221 = vpack.c.b16 %v9163, %v9161
    %v9222 = vpack.c.b16 %v9166, %v9164
    %v9223 = vpack.c.b16 %v9167, %v9165
    %v9224 = vpack.c.b16 %v9170, %v9168
    %v9225 = vpack.c.b16 %v9171, %v9169
    %v9226 = vpack.c.b16 %v9174, %v9172
    %v9227 = vpack.c.b16 %v9175, %v9173
    %v9228 = vpack.c.b16 %v9178, %v9176
    %v9229 = vpack.c.b16 %v9179, %v9177
    %v9230 = vpack.c.b16 %v9182, %v9180
    %v9231 = vpack.c.b16 %v9183, %v9181
    %v9232 = vpack.c.b16 %v9186, %v9184
    %v9233 = vpack.c.b16 %v9187, %v9185
    %v9234 = vpack.c.b16 %v9190, %v9188
    %v9235 = vpack.c.b16 %v9191, %v9189
    %v9236 = vpack.c.b16 %v9194, %v9192
    %v9237 = vpack.c.b16 %v9195, %v9193
    %v9238 = vpack.c.b16 %v9198, %v9196
    %v9239 = vpack.c.b16 %v9199, %v9197
    %v9240 = vpack.c.b16 %v9202, %v9200
    %v9241 = vpack.c.b16 %v9203, %v9201
    %v9242 = vpack.c.b16 %v9206, %v9204
    %v9243 = vpack.c.b16 %v9207, %v9205
    %v9244 = vpack.c.b16 %v9210, %v9208
    %v9245 = vpack.c.b16 %v9211, %v9209
    %v9246 = vpack.c.b16 %v9214, %v9212
    %v9247 = vpack.c.b16 %v9215, %v9213
    %9280 = vmatprep.subr.bf16.mxu0 %v9217
    %9281 = vmatpush1.bf16.msra.mxu0 %v9216
    %9282 = vmatprep.subr.bf16.mxu0 %v9219
    %9283 = vmatpush1.bf16.msra.mxu0 %v9218
    %9284 = vmatprep.subr.bf16.mxu0 %v9221
    %9285 = vmatpush1.bf16.msra.mxu0 %v9220
    %9286 = vmatprep.subr.bf16.mxu0 %v9223
    %9287 = vmatpush1.bf16.msra.mxu0 %v9222
    %9288 = vmatprep.subr.bf16.mxu0 %v9225
    %9289 = vmatpush1.bf16.msra.mxu0 %v9224
    %9290 = vmatprep.subr.bf16.mxu0 %v9227
    %9291 = vmatpush1.bf16.msra.mxu0 %v9226
    %9292 = vmatprep.subr.bf16.mxu0 %v9229
    %9293 = vmatpush1.bf16.msra.mxu0 %v9228
    %9294 = vmatprep.subr.bf16.mxu0 %v9231
    %9295 = vmatpush1.bf16.msra.mxu0 %v9230
    %9296 = vmatprep.subr.bf16.mxu0 %v9233
    %9297 = vmatpush1.bf16.msra.mxu0 %v9232
    %9298 = vmatprep.subr.bf16.mxu0 %v9235
    %9299 = vmatpush1.bf16.msra.mxu0 %v9234
    %9300 = vmatprep.subr.bf16.mxu0 %v9237
    %9301 = vmatpush1.bf16.msra.mxu0 %v9236
    %9302 = vmatprep.subr.bf16.mxu0 %v9239
    %9303 = vmatpush1.bf16.msra.mxu0 %v9238
    %9304 = vmatprep.subr.bf16.mxu0 %v9241
    %9305 = vmatpush1.bf16.msra.mxu0 %v9240
    %9306 = vmatprep.subr.bf16.mxu0 %v9243
    %9307 = vmatpush1.bf16.msra.mxu0 %v9242
    %9308 = vmatprep.subr.bf16.mxu0 %v9245
    %9309 = vmatpush1.bf16.msra.mxu0 %v9244
    %9310 = vmatprep.subr.bf16.mxu0 %v9247
    %9311 = vmatpush1.bf16.msra.mxu0 %v9246
    %9312 = vmatprep.mubr.bf16.mxu0 %v9045
    %9313 = vmatmul.mubr.bf16.gmra.mrb[0].mxu0 %v9044
    %v9314 = vpop.f32.mrb[0].mxu0
    %v9315 = vadd.f32 %v9113, %v9314
    %v9316 = vpop.f32.mrb[0].mxu0
    %v9317 = vadd.f32 %v9117, %v9316
    %v9318 = vpop.f32.mrb[0].mxu0
    %v9319 = vadd.f32 %v9113, %v9318
    %v9320 = vpop.f32.mrb[0].mxu0
    %v9321 = vadd.f32 %v9117, %v9320
    %9322 = vmatprep.mubr.bf16.mxu0 %v9047
    %9323 = vmatmul.mubr.bf16.gmra.mrb[0].mxu0 %v9046
    %v9324 = vpop.f32.mrb[0].mxu0
    %v9325 = vadd.f32 %v9113, %v9324
    %v9326 = vpop.f32.mrb[0].mxu0
    %v9327 = vadd.f32 %v9117, %v9326
    %v9328 = vpop.f32.mrb[0].mxu0
    %v9329 = vadd.f32 %v9113, %v9328
    %v9330 = vpop.f32.mrb[0].mxu0
    %v9331 = vadd.f32 %v9117, %v9330
    %9332 = vmatprep.mubr.bf16.mxu0 %v9049
    %9333 = vmatmul.mubr.bf16.gmra.mrb[0].mxu0 %v9048
    %v9334 = vpop.f32.mrb[0].mxu0
    %v9335 = vadd.f32 %v9113, %v9334
    %v9336 = vpop.f32.mrb[0].mxu0
    %v9337 = vadd.f32 %v9117, %v9336
    %v9338 = vpop.f32.mrb[0].mxu0
    %v9339 = vadd.f32 %v9113, %v9338
    %v9340 = vpop.f32.mrb[0].mxu0
    %v9341 = vadd.f32 %v9117, %v9340
    %9342 = vmatprep.mubr.bf16.mxu0 %v9051
    %9343 = vmatmul.mubr.bf16.gmra.mrb[0].mxu0 %v9050
    %v9344 = vpop.f32.mrb[0].mxu0
    %v9345 = vadd.f32 %v9113, %v9344
    %v9346 = vpop.f32.mrb[0].mxu0
    %v9347 = vadd.f32 %v9117, %v9346
    %v9348 = vpop.f32.mrb[0].mxu0
    %v9349 = vadd.f32 %v9113, %v9348
    %v9350 = vpop.f32.mrb[0].mxu0
    %v9351 = vadd.f32 %v9117, %v9350
    %9352 = vmatprep.mubr.bf16.mxu0 %v9053
    %9353 = vmatmul.mubr.bf16.gmra.mrb[0].mxu0 %v9052
    %v9354 = vpop.f32.mrb[0].mxu0
    %v9355 = vadd.f32 %v9113, %v9354
    %v9356 = vpop.f32.mrb[0].mxu0
    %v9357 = vadd.f32 %v9117, %v9356
    %v9358 = vpop.f32.mrb[0].mxu0
    %v9359 = vadd.f32 %v9113, %v9358
    %v9360 = vpop.f32.mrb[0].mxu0
    %v9361 = vadd.f32 %v9117, %v9360
    %9362 = vmatprep.mubr.bf16.mxu0 %v9055
    %9363 = vmatmul.mubr.bf16.gmra.mrb[0].mxu0 %v9054
    %v9364 = vpop.f32.mrb[0].mxu0
    %v9365 = vadd.f32 %v9113, %v9364
    %v9366 = vpop.f32.mrb[0].mxu0
    %v9367 = vadd.f32 %v9117, %v9366
    %v9368 = vpop.f32.mrb[0].mxu0
    %v9369 = vadd.f32 %v9113, %v9368
    %v9370 = vpop.f32.mrb[0].mxu0
    %v9371 = vadd.f32 %v9117, %v9370
    %9372 = vmatprep.mubr.bf16.mxu0 %v9057
    %9373 = vmatmul.mubr.bf16.gmra.mrb[0].mxu0 %v9056
    %v9374 = vpop.f32.mrb[0].mxu0
    %v9375 = vadd.f32 %v9113, %v9374
    %v9376 = vpop.f32.mrb[0].mxu0
    %v9377 = vadd.f32 %v9117, %v9376
    %v9378 = vpop.f32.mrb[0].mxu0
    %v9379 = vadd.f32 %v9113, %v9378
    %v9380 = vpop.f32.mrb[0].mxu0
    %v9381 = vadd.f32 %v9117, %v9380
    %9382 = vmatprep.mubr.bf16.mxu0 %v9059
    %9383 = vmatmul.mubr.bf16.gmra.mrb[0].mxu0 %v9058
    %v9384 = vpop.f32.mrb[0].mxu0
    %v9385 = vadd.f32 %v9113, %v9384
    %v9386 = vpop.f32.mrb[0].mxu0
    %v9387 = vadd.f32 %v9117, %v9386
    %v9388 = vpop.f32.mrb[0].mxu0
    %v9389 = vadd.f32 %v9113, %v9388
    %v9390 = vpop.f32.mrb[0].mxu0
    %v9391 = vadd.f32 %v9117, %v9390
    %9392 = vmatprep.mubr.bf16.mxu0 %v9061
    %9393 = vmatmul.mubr.bf16.gmra.mrb[0].mxu0 %v9060
    %v9394 = vpop.f32.mrb[0].mxu0
    %v9395 = vadd.f32 %v9113, %v9394
    %v9396 = vpop.f32.mrb[0].mxu0
    %v9397 = vadd.f32 %v9117, %v9396
    %v9398 = vpop.f32.mrb[0].mxu0
    %v9399 = vadd.f32 %v9113, %v9398
    %v9400 = vpop.f32.mrb[0].mxu0
    %v9401 = vadd.f32 %v9117, %v9400
    %9402 = vmatprep.mubr.bf16.mxu0 %v9063
    %9403 = vmatmul.mubr.bf16.gmra.mrb[0].mxu0 %v9062
    %v9404 = vpop.f32.mrb[0].mxu0
    %v9405 = vadd.f32 %v9113, %v9404
    %v9406 = vpop.f32.mrb[0].mxu0
    %v9407 = vadd.f32 %v9117, %v9406
    %v9408 = vpop.f32.mrb[0].mxu0
    %v9409 = vadd.f32 %v9113, %v9408
    %v9410 = vpop.f32.mrb[0].mxu0
    %v9411 = vadd.f32 %v9117, %v9410
    %9412 = vmatprep.mubr.bf16.mxu0 %v9065
    %9413 = vmatmul.mubr.bf16.gmra.mrb[0].mxu0 %v9064
    %v9414 = vpop.f32.mrb[0].mxu0
    %v9415 = vadd.f32 %v9113, %v9414
    %v9416 = vpop.f32.mrb[0].mxu0
    %v9417 = vadd.f32 %v9117, %v9416
    %v9418 = vpop.f32.mrb[0].mxu0
    %v9419 = vadd.f32 %v9113, %v9418
    %v9420 = vpop.f32.mrb[0].mxu0
    %v9421 = vadd.f32 %v9117, %v9420
    %9422 = vmatprep.mubr.bf16.mxu0 %v9067
    %9423 = vmatmul.mubr.bf16.gmra.mrb[0].mxu0 %v9066
    %v9424 = vpop.f32.mrb[0].mxu0
    %v9425 = vadd.f32 %v9113, %v9424
    %v9426 = vpop.f32.mrb[0].mxu0
    %v9427 = vadd.f32 %v9117, %v9426
    %v9428 = vpop.f32.mrb[0].mxu0
    %v9429 = vadd.f32 %v9113, %v9428
    %v9430 = vpop.f32.mrb[0].mxu0
    %v9431 = vadd.f32 %v9117, %v9430
    %9432 = vmatprep.mubr.bf16.mxu0 %v9069
    %9433 = vmatmul.mubr.bf16.gmra.mrb[0].mxu0 %v9068
    %v9434 = vpop.f32.mrb[0].mxu0
    %v9435 = vadd.f32 %v9113, %v9434
    %v9436 = vpop.f32.mrb[0].mxu0
    %v9437 = vadd.f32 %v9117, %v9436
    %v9438 = vpop.f32.mrb[0].mxu0
    %v9439 = vadd.f32 %v9113, %v9438
    %v9440 = vpop.f32.mrb[0].mxu0
    %v9441 = vadd.f32 %v9117, %v9440
    %9442 = vmatprep.mubr.bf16.mxu0 %v9071
    %9443 = vmatmul.mubr.bf16.gmra.mrb[0].mxu0 %v9070
    %v9444 = vpop.f32.mrb[0].mxu0
    %v9445 = vadd.f32 %v9113, %v9444
    %v9446 = vpop.f32.mrb[0].mxu0
    %v9447 = vadd.f32 %v9117, %v9446
    %v9448 = vpop.f32.mrb[0].mxu0
    %v9449 = vadd.f32 %v9113, %v9448
    %v9450 = vpop.f32.mrb[0].mxu0
    %v9451 = vadd.f32 %v9117, %v9450
    %9452 = vmatprep.mubr.bf16.mxu0 %v9073
    %9453 = vmatmul.mubr.bf16.gmra.mrb[0].mxu0 %v9072
    %v9454 = vpop.f32.mrb[0].mxu0
    %v9455 = vadd.f32 %v9113, %v9454
    %v9456 = vpop.f32.mrb[0].mxu0
    %v9457 = vadd.f32 %v9117, %v9456
    %v9458 = vpop.f32.mrb[0].mxu0
    %v9459 = vadd.f32 %v9113, %v9458
    %v9460 = vpop.f32.mrb[0].mxu0
    %v9461 = vadd.f32 %v9117, %v9460
    %9462 = vmatprep.mubr.bf16.mxu0 %v9075
    %9463 = vmatmul.mubr.bf16.gmra.mrb[0].mxu0 %v9074
    %v9464 = vpop.f32.mrb[0].mxu0
    %v9465 = vadd.f32 %v9113, %v9464
    %v9466 = vpop.f32.mrb[0].mxu0
    %v9467 = vadd.f32 %v9117, %v9466
    %v9468 = vpop.f32.mrb[0].mxu0
    %v9469 = vadd.f32 %v9113, %v9468
    %v9470 = vpop.f32.mrb[0].mxu0
    %v9471 = vadd.f32 %v9117, %v9470
    %9472 = vdwg.mxu0
    %v9473 = vld [vmem:[#allocation11] sm:$0x3]
    %v9474 = vld [vmem:[#allocation13] sm:$0x3]
    %v9475 = vadd.f32 %v9315, %v9317
    %9476 = vadd.xlane.f32.xlu0 %v9475
    %v9477 = vpop.xlane.xlu0 %9476
    %v9478 = vadd.f32 %v9319, %v9321
    %9479 = vadd.xlane.f32.xlu0 %v9478
    %v9480 = vpop.xlane.xlu0 %9479
    %v9481 = vadd.f32 %v9325, %v9327
    %9482 = vadd.xlane.f32.xlu0 %v9481
    %v9483 = vpop.xlane.xlu0 %9482
    %v9484 = vadd.f32 %v9329, %v9331
    %9485 = vadd.xlane.f32.xlu0 %v9484
    %v9486 = vpop.xlane.xlu0 %9485
    %v9487 = vadd.f32 %v9335, %v9337
    %9488 = vadd.xlane.f32.xlu0 %v9487
    %v9489 = vpop.xlane.xlu0 %9488
    %v9490 = vadd.f32 %v9339, %v9341
    %9491 = vadd.xlane.f32.xlu0 %v9490
    %v9492 = vpop.xlane.xlu0 %9491
    %v9493 = vadd.f32 %v9345, %v9347
    %9494 = vadd.xlane.f32.xlu0 %v9493
    %v9495 = vpop.xlane.xlu0 %9494
    %v9496 = vadd.f32 %v9349, %v9351
    %9497 = vadd.xlane.f32.xlu0 %v9496
    %v9498 = vpop.xlane.xlu0 %9497
    %v9499 = vadd.f32 %v9355, %v9357
    %9500 = vadd.xlane.f32.xlu0 %v9499
    %v9501 = vpop.xlane.xlu0 %9500
    %v9502 = vadd.f32 %v9359, %v9361
    %9503 = vadd.xlane.f32.xlu0 %v9502
    %v9504 = vpop.xlane.xlu0 %9503
    %v9505 = vadd.f32 %v9365, %v9367
    %9506 = vadd.xlane.f32.xlu0 %v9505
    %v9507 = vpop.xlane.xlu0 %9506
    %v9508 = vadd.f32 %v9369, %v9371
    %9509 = vadd.xlane.f32.xlu0 %v9508
    %v9510 = vpop.xlane.xlu0 %9509
    %v9511 = vadd.f32 %v9375, %v9377
    %9512 = vadd.xlane.f32.xlu0 %v9511
    %v9513 = vpop.xlane.xlu0 %9512
    %v9514 = vadd.f32 %v9379, %v9381
    %9515 = vadd.xlane.f32.xlu0 %v9514
    %v9516 = vpop.xlane.xlu0 %9515
    %v9517 = vadd.f32 %v9385, %v9387
    %9518 = vadd.xlane.f32.xlu0 %v9517
    %v9519 = vpop.xlane.xlu0 %9518
    %v9520 = vadd.f32 %v9389, %v9391
    %9521 = vadd.xlane.f32.xlu0 %v9520
    %v9522 = vpop.xlane.xlu0 %9521
    %v9523 = vadd.f32 %v9395, %v9397
    %9524 = vadd.xlane.f32.xlu0 %v9523
    %v9525 = vpop.xlane.xlu0 %9524
    %v9526 = vadd.f32 %v9399, %v9401
    %9527 = vadd.xlane.f32.xlu0 %v9526
    %v9528 = vpop.xlane.xlu0 %9527
    %v9529 = vadd.f32 %v9405, %v9407
    %9530 = vadd.xlane.f32.xlu0 %v9529
    %v9531 = vpop.xlane.xlu0 %9530
    %v9532 = vadd.f32 %v9409, %v9411
    %9533 = vadd.xlane.f32.xlu0 %v9532
    %v9534 = vpop.xlane.xlu0 %9533
    %v9535 = vadd.f32 %v9415, %v9417
    %9536 = vadd.xlane.f32.xlu0 %v9535
    %v9537 = vpop.xlane.xlu0 %9536
    %v9538 = vadd.f32 %v9419, %v9421
    %9539 = vadd.xlane.f32.xlu0 %v9538
    %v9540 = vpop.xlane.xlu0 %9539
    %v9541 = vadd.f32 %v9425, %v9427
    %9542 = vadd.xlane.f32.xlu0 %v9541
    %v9543 = vpop.xlane.xlu0 %9542
    %v9544 = vadd.f32 %v9429, %v9431
    %9545 = vadd.xlane.f32.xlu0 %v9544
    %v9546 = vpop.xlane.xlu0 %9545
    %v9547 = vadd.f32 %v9435, %v9437
    %9548 = vadd.xlane.f32.xlu0 %v9547
    %v9549 = vpop.xlane.xlu0 %9548
    %v9550 = vadd.f32 %v9439, %v9441
    %9551 = vadd.xlane.f32.xlu0 %v9550
    %v9552 = vpop.xlane.xlu0 %9551
    %v9553 = vadd.f32 %v9445, %v9447
    %9554 = vadd.xlane.f32.xlu0 %v9553
    %v9555 = vpop.xlane.xlu0 %9554
    %v9556 = vadd.f32 %v9449, %v9451
    %9557 = vadd.xlane.f32.xlu0 %v9556
    %v9558 = vpop.xlane.xlu0 %9557
    %v9559 = vadd.f32 %v9455, %v9457
    %9560 = vadd.xlane.f32.xlu0 %v9559
    %v9561 = vpop.xlane.xlu0 %9560
    %v9562 = vadd.f32 %v9459, %v9461
    %9563 = vadd.xlane.f32.xlu0 %v9562
    %v9564 = vpop.xlane.xlu0 %9563
    %v9565 = vadd.f32 %v9465, %v9467
    %9566 = vadd.xlane.f32.xlu0 %v9565
    %v9567 = vpop.xlane.xlu0 %9566
    %v9568 = vadd.f32 %v9469, %v9471
    %9569 = vadd.xlane.f32.xlu0 %v9568
    %v9570 = vpop.xlane.xlu0 %9569
    %v9571 = vmul.f32 %v9477, %v8413
    %v9572 = vmul.f32 %v9480, %v8413
    %v9573 = vmul.f32 %v9483, %v8413
    %v9574 = vmul.f32 %v9486, %v8413
    %v9575 = vmul.f32 %v9489, %v8413
    %v9576 = vmul.f32 %v9492, %v8413
    %v9577 = vmul.f32 %v9495, %v8413
    %v9578 = vmul.f32 %v9498, %v8413
    %v9579 = vmul.f32 %v9501, %v8413
    %v9580 = vmul.f32 %v9504, %v8413
    %v9581 = vmul.f32 %v9507, %v8413
    %v9582 = vmul.f32 %v9510, %v8413
    %v9583 = vmul.f32 %v9513, %v8413
    %v9584 = vmul.f32 %v9516, %v8413
    %v9585 = vmul.f32 %v9519, %v8413
    %v9586 = vmul.f32 %v9522, %v8413
    %v9587 = vmul.f32 %v9525, %v8413
    %v9588 = vmul.f32 %v9528, %v8413
    %v9589 = vmul.f32 %v9531, %v8413
    %v9590 = vmul.f32 %v9534, %v8413
    %v9591 = vmul.f32 %v9537, %v8413
    %v9592 = vmul.f32 %v9540, %v8413
    %v9593 = vmul.f32 %v9543, %v8413
    %v9594 = vmul.f32 %v9546, %v8413
    %v9595 = vmul.f32 %v9549, %v8413
    %v9596 = vmul.f32 %v9552, %v8413
    %v9597 = vmul.f32 %v9555, %v8413
    %v9598 = vmul.f32 %v9558, %v8413
    %v9599 = vmul.f32 %v9561, %v8413
    %v9600 = vmul.f32 %v9564, %v8413
    %v9601 = vmul.f32 %v9567, %v8413
    %v9602 = vmul.f32 %v9570, %v8413
    %v9603 = vsub.f32 %v9315, %v9571
    %v9604 = vsub.f32 %v9317, %v9571
    %v9605 = vsub.f32 %v9319, %v9572
    %v9606 = vsub.f32 %v9321, %v9572
    %v9607 = vsub.f32 %v9325, %v9573
    %v9608 = vsub.f32 %v9327, %v9573
    %v9609 = vsub.f32 %v9329, %v9574
    %v9610 = vsub.f32 %v9331, %v9574
    %v9611 = vsub.f32 %v9335, %v9575
    %v9612 = vsub.f32 %v9337, %v9575
    %v9613 = vsub.f32 %v9339, %v9576
    %v9614 = vsub.f32 %v9341, %v9576
    %v9615 = vsub.f32 %v9345, %v9577
    %v9616 = vsub.f32 %v9347, %v9577
    %v9617 = vsub.f32 %v9349, %v9578
    %v9618 = vsub.f32 %v9351, %v9578
    %v9619 = vsub.f32 %v9355, %v9579
    %v9620 = vsub.f32 %v9357, %v9579
    %v9621 = vsub.f32 %v9359, %v9580
    %v9622 = vsub.f32 %v9361, %v9580
    %v9623 = vsub.f32 %v9365, %v9581
    %v9624 = vsub.f32 %v9367, %v9581
    %v9625 = vsub.f32 %v9369, %v9582
    %v9626 = vsub.f32 %v9371, %v9582
    %v9627 = vsub.f32 %v9375, %v9583
    %v9628 = vsub.f32 %v9377, %v9583
    %v9629 = vsub.f32 %v9379, %v9584
    %v9630 = vsub.f32 %v9381, %v9584
    %v9631 = vsub.f32 %v9385, %v9585
    %v9632 = vsub.f32 %v9387, %v9585
    %v9633 = vsub.f32 %v9389, %v9586
    %v9634 = vsub.f32 %v9391, %v9586
    %v9635 = vsub.f32 %v9395, %v9587
    %v9636 = vsub.f32 %v9397, %v9587
    %v9637 = vsub.f32 %v9399, %v9588
    %v9638 = vsub.f32 %v9401, %v9588
    %v9639 = vsub.f32 %v9405, %v9589
    %v9640 = vsub.f32 %v9407, %v9589
    %v9641 = vsub.f32 %v9409, %v9590
    %v9642 = vsub.f32 %v9411, %v9590
    %v9643 = vsub.f32 %v9415, %v9591
    %v9644 = vsub.f32 %v9417, %v9591
    %v9645 = vsub.f32 %v9419, %v9592
    %v9646 = vsub.f32 %v9421, %v9592
    %v9647 = vsub.f32 %v9425, %v9593
    %v9648 = vsub.f32 %v9427, %v9593
    %v9649 = vsub.f32 %v9429, %v9594
    %v9650 = vsub.f32 %v9431, %v9594
    %v9651 = vsub.f32 %v9435, %v9595
    %v9652 = vsub.f32 %v9437, %v9595
    %v9653 = vsub.f32 %v9439, %v9596
    %v9654 = vsub.f32 %v9441, %v9596
    %v9655 = vsub.f32 %v9445, %v9597
    %v9656 = vsub.f32 %v9447, %v9597
    %v9657 = vsub.f32 %v9449, %v9598
    %v9658 = vsub.f32 %v9451, %v9598
    %v9659 = vsub.f32 %v9455, %v9599
    %v9660 = vsub.f32 %v9457, %v9599
    %v9661 = vsub.f32 %v9459, %v9600
    %v9662 = vsub.f32 %v9461, %v9600
    %v9663 = vsub.f32 %v9465, %v9601
    %v9664 = vsub.f32 %v9467, %v9601
    %v9665 = vsub.f32 %v9469, %v9602
    %v9666 = vsub.f32 %v9471, %v9602
    %v9667 = vmul.f32 %v9603, %v9603
    %v9668 = vmul.f32 %v9604, %v9604
    %v9669 = vmul.f32 %v9605, %v9605
    %v9670 = vmul.f32 %v9606, %v9606
    %v9671 = vmul.f32 %v9607, %v9607
    %v9672 = vmul.f32 %v9608, %v9608
    %v9673 = vmul.f32 %v9609, %v9609
    %v9674 = vmul.f32 %v9610, %v9610
    %v9675 = vmul.f32 %v9611, %v9611
    %v9676 = vmul.f32 %v9612, %v9612
    %v9677 = vmul.f32 %v9613, %v9613
    %v9678 = vmul.f32 %v9614, %v9614
    %v9679 = vmul.f32 %v9615, %v9615
    %v9680 = vmul.f32 %v9616, %v9616
    %v9681 = vmul.f32 %v9617, %v9617
    %v9682 = vmul.f32 %v9618, %v9618
    %v9683 = vmul.f32 %v9619, %v9619
    %v9684 = vmul.f32 %v9620, %v9620
    %v9685 = vmul.f32 %v9621, %v9621
    %v9686 = vmul.f32 %v9622, %v9622
    %v9687 = vmul.f32 %v9623, %v9623
    %v9688 = vmul.f32 %v9624, %v9624
    %v9689 = vmul.f32 %v9625, %v9625
    %v9690 = vmul.f32 %v9626, %v9626
    %v9691 = vmul.f32 %v9627, %v9627
    %v9692 = vmul.f32 %v9628, %v9628
    %v9693 = vmul.f32 %v9629, %v9629
    %v9694 = vmul.f32 %v9630, %v9630
    %v9695 = vmul.f32 %v9631, %v9631
    %v9696 = vmul.f32 %v9632, %v9632
    %v9697 = vmul.f32 %v9633, %v9633
    %v9698 = vmul.f32 %v9634, %v9634
    %v9699 = vmul.f32 %v9635, %v9635
    %v9700 = vmul.f32 %v9636, %v9636
    %v9701 = vmul.f32 %v9637, %v9637
    %v9702 = vmul.f32 %v9638, %v9638
    %v9703 = vmul.f32 %v9639, %v9639
    %v9704 = vmul.f32 %v9640, %v9640
    %v9705 = vmul.f32 %v9641, %v9641
    %v9706 = vmul.f32 %v9642, %v9642
    %v9707 = vmul.f32 %v9643, %v9643
    %v9708 = vmul.f32 %v9644, %v9644
    %v9709 = vmul.f32 %v9645, %v9645
    %v9710 = vmul.f32 %v9646, %v9646
    %v9711 = vmul.f32 %v9647, %v9647
    %v9712 = vmul.f32 %v9648, %v9648
    %v9713 = vmul.f32 %v9649, %v9649
    %v9714 = vmul.f32 %v9650, %v9650
    %v9715 = vmul.f32 %v9651, %v9651
    %v9716 = vmul.f32 %v9652, %v9652
    %v9717 = vmul.f32 %v9653, %v9653
    %v9718 = vmul.f32 %v9654, %v9654
    %v9719 = vmul.f32 %v9655, %v9655
    %v9720 = vmul.f32 %v9656, %v9656
    %v9721 = vmul.f32 %v9657, %v9657
    %v9722 = vmul.f32 %v9658, %v9658
    %v9723 = vmul.f32 %v9659, %v9659
    %v9724 = vmul.f32 %v9660, %v9660
    %v9725 = vmul.f32 %v9661, %v9661
    %v9726 = vmul.f32 %v9662, %v9662
    %v9727 = vmul.f32 %v9663, %v9663
    %v9728 = vmul.f32 %v9664, %v9664
    %v9729 = vmul.f32 %v9665, %v9665
    %v9730 = vmul.f32 %v9666, %v9666
    %v9731 = vadd.f32 %v9667, %v9668
    %9732 = vadd.xlane.f32.xlu0 %v9731
    %v9733 = vpop.xlane.xlu0 %9732
    %v9734 = vadd.f32 %v9669, %v9670
    %9735 = vadd.xlane.f32.xlu0 %v9734
    %v9736 = vpop.xlane.xlu0 %9735
    %v9737 = vadd.f32 %v9671, %v9672
    %9738 = vadd.xlane.f32.xlu0 %v9737
    %v9739 = vpop.xlane.xlu0 %9738
    %v9740 = vadd.f32 %v9673, %v9674
    %9741 = vadd.xlane.f32.xlu0 %v9740
    %v9742 = vpop.xlane.xlu0 %9741
    %v9743 = vadd.f32 %v9675, %v9676
    %9744 = vadd.xlane.f32.xlu0 %v9743
    %v9745 = vpop.xlane.xlu0 %9744
    %v9746 = vadd.f32 %v9677, %v9678
    %9747 = vadd.xlane.f32.xlu0 %v9746
    %v9748 = vpop.xlane.xlu0 %9747
    %v9749 = vadd.f32 %v9679, %v9680
    %9750 = vadd.xlane.f32.xlu0 %v9749
    %v9751 = vpop.xlane.xlu0 %9750
    %v9752 = vadd.f32 %v9681, %v9682
    %9753 = vadd.xlane.f32.xlu0 %v9752
    %v9754 = vpop.xlane.xlu0 %9753
    %v9755 = vadd.f32 %v9683, %v9684
    %9756 = vadd.xlane.f32.xlu0 %v9755
    %v9757 = vpop.xlane.xlu0 %9756
    %v9758 = vadd.f32 %v9685, %v9686
    %9759 = vadd.xlane.f32.xlu0 %v9758
    %v9760 = vpop.xlane.xlu0 %9759
    %v9761 = vadd.f32 %v9687, %v9688
    %9762 = vadd.xlane.f32.xlu0 %v9761
    %v9763 = vpop.xlane.xlu0 %9762
    %v9764 = vadd.f32 %v9689, %v9690
    %9765 = vadd.xlane.f32.xlu0 %v9764
    %v9766 = vpop.xlane.xlu0 %9765
    %v9767 = vadd.f32 %v9691, %v9692
    %9768 = vadd.xlane.f32.xlu0 %v9767
    %v9769 = vpop.xlane.xlu0 %9768
    %v9770 = vadd.f32 %v9693, %v9694
    %9771 = vadd.xlane.f32.xlu0 %v9770
    %v9772 = vpop.xlane.xlu0 %9771
    %v9773 = vadd.f32 %v9695, %v9696
    %9774 = vadd.xlane.f32.xlu0 %v9773
    %v9775 = vpop.xlane.xlu0 %9774
    %v9776 = vadd.f32 %v9697, %v9698
    %9777 = vadd.xlane.f32.xlu0 %v9776
    %v9778 = vpop.xlane.xlu0 %9777
    %v9779 = vadd.f32 %v9699, %v9700
    %9780 = vadd.xlane.f32.xlu0 %v9779
    %v9781 = vpop.xlane.xlu0 %9780
    %v9782 = vadd.f32 %v9701, %v9702
    %9783 = vadd.xlane.f32.xlu0 %v9782
    %v9784 = vpop.xlane.xlu0 %9783
    %v9785 = vadd.f32 %v9703, %v9704
    %9786 = vadd.xlane.f32.xlu0 %v9785
    %v9787 = vpop.xlane.xlu0 %9786
    %v9788 = vadd.f32 %v9705, %v9706
    %9789 = vadd.xlane.f32.xlu0 %v9788
    %v9790 = vpop.xlane.xlu0 %9789
    %v9791 = vadd.f32 %v9707, %v9708
    %9792 = vadd.xlane.f32.xlu0 %v9791
    %v9793 = vpop.xlane.xlu0 %9792
    %v9794 = vadd.f32 %v9709, %v9710
    %9795 = vadd.xlane.f32.xlu0 %v9794
    %v9796 = vpop.xlane.xlu0 %9795
    %v9797 = vadd.f32 %v9711, %v9712
    %9798 = vadd.xlane.f32.xlu0 %v9797
    %v9799 = vpop.xlane.xlu0 %9798
    %v9800 = vadd.f32 %v9713, %v9714
    %9801 = vadd.xlane.f32.xlu0 %v9800
    %v9802 = vpop.xlane.xlu0 %9801
    %v9803 = vadd.f32 %v9715, %v9716
    %9804 = vadd.xlane.f32.xlu0 %v9803
    %v9805 = vpop.xlane.xlu0 %9804
    %v9806 = vadd.f32 %v9717, %v9718
    %9807 = vadd.xlane.f32.xlu0 %v9806
    %v9808 = vpop.xlane.xlu0 %9807
    %v9809 = vadd.f32 %v9719, %v9720
    %9810 = vadd.xlane.f32.xlu0 %v9809
    %v9811 = vpop.xlane.xlu0 %9810
    %v9812 = vadd.f32 %v9721, %v9722
    %9813 = vadd.xlane.f32.xlu0 %v9812
    %v9814 = vpop.xlane.xlu0 %9813
    %v9815 = vadd.f32 %v9723, %v9724
    %9816 = vadd.xlane.f32.xlu0 %v9815
    %v9817 = vpop.xlane.xlu0 %9816
    %v9818 = vadd.f32 %v9725, %v9726
    %9819 = vadd.xlane.f32.xlu0 %v9818
    %v9820 = vpop.xlane.xlu0 %9819
    %v9821 = vadd.f32 %v9727, %v9728
    %9822 = vadd.xlane.f32.xlu0 %v9821
    %v9823 = vpop.xlane.xlu0 %9822
    %v9824 = vadd.f32 %v9729, %v9730
    %9825 = vadd.xlane.f32.xlu0 %v9824
    %v9826 = vpop.xlane.xlu0 %9825
    %v9827 = vmul.f32 %v9733, %v8413
    %v9828 = vmul.f32 %v9736, %v8413
    %v9829 = vmul.f32 %v9739, %v8413
    %v9830 = vmul.f32 %v9742, %v8413
    %v9831 = vmul.f32 %v9745, %v8413
    %v9832 = vmul.f32 %v9748, %v8413
    %v9833 = vmul.f32 %v9751, %v8413
    %v9834 = vmul.f32 %v9754, %v8413
    %v9835 = vmul.f32 %v9757, %v8413
    %v9836 = vmul.f32 %v9760, %v8413
    %v9837 = vmul.f32 %v9763, %v8413
    %v9838 = vmul.f32 %v9766, %v8413
    %v9839 = vmul.f32 %v9769, %v8413
    %v9840 = vmul.f32 %v9772, %v8413
    %v9841 = vmul.f32 %v9775, %v8413
    %v9842 = vmul.f32 %v9778, %v8413
    %v9843 = vmul.f32 %v9781, %v8413
    %v9844 = vmul.f32 %v9784, %v8413
    %v9845 = vmul.f32 %v9787, %v8413
    %v9846 = vmul.f32 %v9790, %v8413
    %v9847 = vmul.f32 %v9793, %v8413
    %v9848 = vmul.f32 %v9796, %v8413
    %v9849 = vmul.f32 %v9799, %v8413
    %v9850 = vmul.f32 %v9802, %v8413
    %v9851 = vmul.f32 %v9805, %v8413
    %v9852 = vmul.f32 %v9808, %v8413
    %v9853 = vmul.f32 %v9811, %v8413
    %v9854 = vmul.f32 %v9814, %v8413
    %v9855 = vmul.f32 %v9817, %v8413
    %v9856 = vmul.f32 %v9820, %v8413
    %v9857 = vmul.f32 %v9823, %v8413
    %v9858 = vmul.f32 %v9826, %v8413
    %v9859 = vadd.f32 %v9827, 1e-05
    %v9860 = vadd.f32 %v9828, 1e-05
    %v9861 = vadd.f32 %v9829, 1e-05
    %v9862 = vadd.f32 %v9830, 1e-05
    %v9863 = vadd.f32 %v9831, 1e-05
    %v9864 = vadd.f32 %v9832, 1e-05
    %v9865 = vadd.f32 %v9833, 1e-05
    %v9866 = vadd.f32 %v9834, 1e-05
    %v9867 = vadd.f32 %v9835, 1e-05
    %v9868 = vadd.f32 %v9836, 1e-05
    %v9869 = vadd.f32 %v9837, 1e-05
    %v9870 = vadd.f32 %v9838, 1e-05
    %v9871 = vadd.f32 %v9839, 1e-05
    %v9872 = vadd.f32 %v9840, 1e-05
    %v9873 = vadd.f32 %v9841, 1e-05
    %v9874 = vadd.f32 %v9842, 1e-05
    %v9875 = vadd.f32 %v9843, 1e-05
    %v9876 = vadd.f32 %v9844, 1e-05
    %v9877 = vadd.f32 %v9845, 1e-05
    %v9878 = vadd.f32 %v9846, 1e-05
    %v9879 = vadd.f32 %v9847, 1e-05
    %v9880 = vadd.f32 %v9848, 1e-05
    %v9881 = vadd.f32 %v9849, 1e-05
    %v9882 = vadd.f32 %v9850, 1e-05
    %v9883 = vadd.f32 %v9851, 1e-05
    %v9884 = vadd.f32 %v9852, 1e-05
    %v9885 = vadd.f32 %v9853, 1e-05
    %v9886 = vadd.f32 %v9854, 1e-05
    %v9887 = vadd.f32 %v9855, 1e-05
    %v9888 = vadd.f32 %v9856, 1e-05
    %v9889 = vadd.f32 %v9857, 1e-05
    %v9890 = vadd.f32 %v9858, 1e-05
    %v9891 = vrsqrt.pop %v9859
    %v9892 = vrsqrt.pop %v9860
    %v9893 = vrsqrt.pop %v9861
    %v9894 = vrsqrt.pop %v9862
    %v9895 = vrsqrt.pop %v9863
    %v9896 = vrsqrt.pop %v9864
    %v9897 = vrsqrt.pop %v9865
    %v9898 = vrsqrt.pop %v9866
    %v9899 = vrsqrt.pop %v9867
    %v9900 = vrsqrt.pop %v9868
    %v9901 = vrsqrt.pop %v9869
    %v9902 = vrsqrt.pop %v9870
    %v9903 = vrsqrt.pop %v9871
    %v9904 = vrsqrt.pop %v9872
    %v9905 = vrsqrt.pop %v9873
    %v9906 = vrsqrt.pop %v9874
    %v9907 = vrsqrt.pop %v9875
    %v9908 = vrsqrt.pop %v9876
    %v9909 = vrsqrt.pop %v9877
    %v9910 = vrsqrt.pop %v9878
    %v9911 = vrsqrt.pop %v9879
    %v9912 = vrsqrt.pop %v9880
    %v9913 = vrsqrt.pop %v9881
    %v9914 = vrsqrt.pop %v9882
    %v9915 = vrsqrt.pop %v9883
    %v9916 = vrsqrt.pop %v9884
    %v9917 = vrsqrt.pop %v9885
    %v9918 = vrsqrt.pop %v9886
    %v9919 = vrsqrt.pop %v9887
    %v9920 = vrsqrt.pop %v9888
    %v9921 = vrsqrt.pop %v9889
    %v9922 = vrsqrt.pop %v9890
    %v9923 = vmul.f32 %v9603, %v9891
    %v9924 = vmul.f32 %v9604, %v9891
    %v9925 = vmul.f32 %v9605, %v9892
    %v9926 = vmul.f32 %v9606, %v9892
    %v9927 = vmul.f32 %v9607, %v9893
    %v9928 = vmul.f32 %v9608, %v9893
    %v9929 = vmul.f32 %v9609, %v9894
    %v9930 = vmul.f32 %v9610, %v9894
    %v9931 = vmul.f32 %v9611, %v9895
    %v9932 = vmul.f32 %v9612, %v9895
    %v9933 = vmul.f32 %v9613, %v9896
    %v9934 = vmul.f32 %v9614, %v9896
    %v9935 = vmul.f32 %v9615, %v9897
    %v9936 = vmul.f32 %v9616, %v9897
    %v9937 = vmul.f32 %v9617, %v9898
    %v9938 = vmul.f32 %v9618, %v9898
    %v9939 = vmul.f32 %v9619, %v9899
    %v9940 = vmul.f32 %v9620, %v9899
    %v9941 = vmul.f32 %v9621, %v9900
    %v9942 = vmul.f32 %v9622, %v9900
    %v9943 = vmul.f32 %v9623, %v9901
    %v9944 = vmul.f32 %v9624, %v9901
    %v9945 = vmul.f32 %v9625, %v9902
    %v9946 = vmul.f32 %v9626, %v9902
    %v9947 = vmul.f32 %v9627, %v9903
    %v9948 = vmul.f32 %v9628, %v9903
    %v9949 = vmul.f32 %v9629, %v9904
    %v9950 = vmul.f32 %v9630, %v9904
    %v9951 = vmul.f32 %v9631, %v9905
    %v9952 = vmul.f32 %v9632, %v9905
    %v9953 = vmul.f32 %v9633, %v9906
    %v9954 = vmul.f32 %v9634, %v9906
    %v9955 = vmul.f32 %v9635, %v9907
    %v9956 = vmul.f32 %v9636, %v9907
    %v9957 = vmul.f32 %v9637, %v9908
    %v9958 = vmul.f32 %v9638, %v9908
    %v9959 = vmul.f32 %v9639, %v9909
    %v9960 = vmul.f32 %v9640, %v9909
    %v9961 = vmul.f32 %v9641, %v9910
    %v9962 = vmul.f32 %v9642, %v9910
    %v9963 = vmul.f32 %v9643, %v9911
    %v9964 = vmul.f32 %v9644, %v9911
    %v9965 = vmul.f32 %v9645, %v9912
    %v9966 = vmul.f32 %v9646, %v9912
    %v9967 = vmul.f32 %v9647, %v9913
    %v9968 = vmul.f32 %v9648, %v9913
    %v9969 = vmul.f32 %v9649, %v9914
    %v9970 = vmul.f32 %v9650, %v9914
    %v9971 = vmul.f32 %v9651, %v9915
    %v9972 = vmul.f32 %v9652, %v9915
    %v9973 = vmul.f32 %v9653, %v9916
    %v9974 = vmul.f32 %v9654, %v9916
    %v9975 = vmul.f32 %v9655, %v9917
    %v9976 = vmul.f32 %v9656, %v9917
    %v9977 = vmul.f32 %v9657, %v9918
    %v9978 = vmul.f32 %v9658, %v9918
    %v9979 = vmul.f32 %v9659, %v9919
    %v9980 = vmul.f32 %v9660, %v9919
    %v9981 = vmul.f32 %v9661, %v9920
    %v9982 = vmul.f32 %v9662, %v9920
    %v9983 = vmul.f32 %v9663, %v9921
    %v9984 = vmul.f32 %v9664, %v9921
    %v9985 = vmul.f32 %v9665, %v9922
    %v9986 = vmul.f32 %v9666, %v9922
    %v9988 = vlaneseq
    %v9989 = vshrl.u32 %v9988, 7
    %v9990 = vsub.s32 0, %v9989
    %v9991 = vrot.slane %v9473, %v9990
    %v9992 = vlaneseq
    %v9993 = vshrl.u32 %v9992, 7
    %v9994 = vsub.s32 1, %v9993
    %v9995 = vrot.slane %v9473, %v9994
    %v9998 = vmul.f32 %v9923, %v9991
    %v9999 = vmul.f32 %v9924, %v9995
    %v10000 = vmul.f32 %v9925, %v9991
    %v10001 = vmul.f32 %v9926, %v9995
    %v10002 = vmul.f32 %v9927, %v9991
    %v10003 = vmul.f32 %v9928, %v9995
    %v10004 = vmul.f32 %v9929, %v9991
    %v10005 = vmul.f32 %v9930, %v9995
    %v10006 = vmul.f32 %v9931, %v9991
    %v10007 = vmul.f32 %v9932, %v9995
    %v10008 = vmul.f32 %v9933, %v9991
    %v10009 = vmul.f32 %v9934, %v9995
    %v10010 = vmul.f32 %v9935, %v9991
    %v10011 = vmul.f32 %v9936, %v9995
    %v10012 = vmul.f32 %v9937, %v9991
    %v10013 = vmul.f32 %v9938, %v9995
    %v10014 = vmul.f32 %v9939, %v9991
    %v10015 = vmul.f32 %v9940, %v9995
    %v10016 = vmul.f32 %v9941, %v9991
    %v10017 = vmul.f32 %v9942, %v9995
    %v10018 = vmul.f32 %v9943, %v9991
    %v10019 = vmul.f32 %v9944, %v9995
    %v10020 = vmul.f32 %v9945, %v9991
    %v10021 = vmul.f32 %v9946, %v9995
    %v10022 = vmul.f32 %v9947, %v9991
    %v10023 = vmul.f32 %v9948, %v9995
    %v10024 = vmul.f32 %v9949, %v9991
    %v10025 = vmul.f32 %v9950, %v9995
    %v10026 = vmul.f32 %v9951, %v9991
    %v10027 = vmul.f32 %v9952, %v9995
    %v10028 = vmul.f32 %v9953, %v9991
    %v10029 = vmul.f32 %v9954, %v9995
    %v10030 = vmul.f32 %v9955, %v9991
    %v10031 = vmul.f32 %v9956, %v9995
    %v10032 = vmul.f32 %v9957, %v9991
    %v10033 = vmul.f32 %v9958, %v9995
    %v10034 = vmul.f32 %v9959, %v9991
    %v10035 = vmul.f32 %v9960, %v9995
    %v10036 = vmul.f32 %v9961, %v9991
    %v10037 = vmul.f32 %v9962, %v9995
    %v10038 = vmul.f32 %v9963, %v9991
    %v10039 = vmul.f32 %v9964, %v9995
    %v10040 = vmul.f32 %v9965, %v9991
    %v10041 = vmul.f32 %v9966, %v9995
    %v10042 = vmul.f32 %v9967, %v9991
    %v10043 = vmul.f32 %v9968, %v9995
    %v10044 = vmul.f32 %v9969, %v9991
    %v10045 = vmul.f32 %v9970, %v9995
    %v10046 = vmul.f32 %v9971, %v9991
    %v10047 = vmul.f32 %v9972, %v9995
    %v10048 = vmul.f32 %v9973, %v9991
    %v10049 = vmul.f32 %v9974, %v9995
    %v10050 = vmul.f32 %v9975, %v9991
    %v10051 = vmul.f32 %v9976, %v9995
    %v10052 = vmul.f32 %v9977, %v9991
    %v10053 = vmul.f32 %v9978, %v9995
    %v10054 = vmul.f32 %v9979, %v9991
    %v10055 = vmul.f32 %v9980, %v9995
    %v10056 = vmul.f32 %v9981, %v9991
    %v10057 = vmul.f32 %v9982, %v9995
    %v10058 = vmul.f32 %v9983, %v9991
    %v10059 = vmul.f32 %v9984, %v9995
    %v10060 = vmul.f32 %v9985, %v9991
    %v10061 = vmul.f32 %v9986, %v9995
    %v10063 = vlaneseq
    %v10064 = vshrl.u32 %v10063, 7
    %v10065 = vsub.s32 0, %v10064
    %v10066 = vrot.slane %v9474, %v10065
    %v10067 = vlaneseq
    %v10068 = vshrl.u32 %v10067, 7
    %v10069 = vsub.s32 1, %v10068
    %v10070 = vrot.slane %v9474, %v10069
    %v10073 = vadd.f32 %v9998, %v10066
    %v10074 = vadd.f32 %v9999, %v10070
    %v10075 = vadd.f32 %v10000, %v10066
    %v10076 = vadd.f32 %v10001, %v10070
    %v10077 = vadd.f32 %v10002, %v10066
    %v10078 = vadd.f32 %v10003, %v10070
    %v10079 = vadd.f32 %v10004, %v10066
    %v10080 = vadd.f32 %v10005, %v10070
    %v10081 = vadd.f32 %v10006, %v10066
    %v10082 = vadd.f32 %v10007, %v10070
    %v10083 = vadd.f32 %v10008, %v10066
    %v10084 = vadd.f32 %v10009, %v10070
    %v10085 = vadd.f32 %v10010, %v10066
    %v10086 = vadd.f32 %v10011, %v10070
    %v10087 = vadd.f32 %v10012, %v10066
    %v10088 = vadd.f32 %v10013, %v10070
    %v10089 = vadd.f32 %v10014, %v10066
    %v10090 = vadd.f32 %v10015, %v10070
    %v10091 = vadd.f32 %v10016, %v10066
    %v10092 = vadd.f32 %v10017, %v10070
    %v10093 = vadd.f32 %v10018, %v10066
    %v10094 = vadd.f32 %v10019, %v10070
    %v10095 = vadd.f32 %v10020, %v10066
    %v10096 = vadd.f32 %v10021, %v10070
    %v10097 = vadd.f32 %v10022, %v10066
    %v10098 = vadd.f32 %v10023, %v10070
    %v10099 = vadd.f32 %v10024, %v10066
    %v10100 = vadd.f32 %v10025, %v10070
    %v10101 = vadd.f32 %v10026, %v10066
    %v10102 = vadd.f32 %v10027, %v10070
    %v10103 = vadd.f32 %v10028, %v10066
    %v10104 = vadd.f32 %v10029, %v10070
    %v10105 = vadd.f32 %v10030, %v10066
    %v10106 = vadd.f32 %v10031, %v10070
    %v10107 = vadd.f32 %v10032, %v10066
    %v10108 = vadd.f32 %v10033, %v10070
    %v10109 = vadd.f32 %v10034, %v10066
    %v10110 = vadd.f32 %v10035, %v10070
    %v10111 = vadd.f32 %v10036, %v10066
    %v10112 = vadd.f32 %v10037, %v10070
    %v10113 = vadd.f32 %v10038, %v10066
    %v10114 = vadd.f32 %v10039, %v10070
    %v10115 = vadd.f32 %v10040, %v10066
    %v10116 = vadd.f32 %v10041, %v10070
    %v10117 = vadd.f32 %v10042, %v10066
    %v10118 = vadd.f32 %v10043, %v10070
    %v10119 = vadd.f32 %v10044, %v10066
    %v10120 = vadd.f32 %v10045, %v10070
    %v10121 = vadd.f32 %v10046, %v10066
    %v10122 = vadd.f32 %v10047, %v10070
    %v10123 = vadd.f32 %v10048, %v10066
    %v10124 = vadd.f32 %v10049, %v10070
    %v10125 = vadd.f32 %v10050, %v10066
    %v10126 = vadd.f32 %v10051, %v10070
    %v10127 = vadd.f32 %v10052, %v10066
    %v10128 = vadd.f32 %v10053, %v10070
    %v10129 = vadd.f32 %v10054, %v10066
    %v10130 = vadd.f32 %v10055, %v10070
    %v10131 = vadd.f32 %v10056, %v10066
    %v10132 = vadd.f32 %v10057, %v10070
    %v10133 = vadd.f32 %v10058, %v10066
    %v10134 = vadd.f32 %v10059, %v10070
    %v10135 = vadd.f32 %v10060, %v10066
    %v10136 = vadd.f32 %v10061, %v10070
    %v10137 = vmax.f32 %v10073, 0.0
    %v10138 = vmax.f32 %v10074, 0.0
    %v10139 = vmax.f32 %v10075, 0.0
    %v10140 = vmax.f32 %v10076, 0.0
    %v10141 = vmax.f32 %v10077, 0.0
    %v10142 = vmax.f32 %v10078, 0.0
    %v10143 = vmax.f32 %v10079, 0.0
    %v10144 = vmax.f32 %v10080, 0.0
    %v10145 = vmax.f32 %v10081, 0.0
    %v10146 = vmax.f32 %v10082, 0.0
    %v10147 = vmax.f32 %v10083, 0.0
    %v10148 = vmax.f32 %v10084, 0.0
    %v10149 = vmax.f32 %v10085, 0.0
    %v10150 = vmax.f32 %v10086, 0.0
    %v10151 = vmax.f32 %v10087, 0.0
    %v10152 = vmax.f32 %v10088, 0.0
    %v10153 = vmax.f32 %v10089, 0.0
    %v10154 = vmax.f32 %v10090, 0.0
    %v10155 = vmax.f32 %v10091, 0.0
    %v10156 = vmax.f32 %v10092, 0.0
    %v10157 = vmax.f32 %v10093, 0.0
    %v10158 = vmax.f32 %v10094, 0.0
    %v10159 = vmax.f32 %v10095, 0.0
    %v10160 = vmax.f32 %v10096, 0.0
    %v10161 = vmax.f32 %v10097, 0.0
    %v10162 = vmax.f32 %v10098, 0.0
    %v10163 = vmax.f32 %v10099, 0.0
    %v10164 = vmax.f32 %v10100, 0.0
    %v10165 = vmax.f32 %v10101, 0.0
    %v10166 = vmax.f32 %v10102, 0.0
    %v10167 = vmax.f32 %v10103, 0.0
    %v10168 = vmax.f32 %v10104, 0.0
    %v10169 = vmax.f32 %v10105, 0.0
    %v10170 = vmax.f32 %v10106, 0.0
    %v10171 = vmax.f32 %v10107, 0.0
    %v10172 = vmax.f32 %v10108, 0.0
    %v10173 = vmax.f32 %v10109, 0.0
    %v10174 = vmax.f32 %v10110, 0.0
    %v10175 = vmax.f32 %v10111, 0.0
    %v10176 = vmax.f32 %v10112, 0.0
    %v10177 = vmax.f32 %v10113, 0.0
    %v10178 = vmax.f32 %v10114, 0.0
    %v10179 = vmax.f32 %v10115, 0.0
    %v10180 = vmax.f32 %v10116, 0.0
    %v10181 = vmax.f32 %v10117, 0.0
    %v10182 = vmax.f32 %v10118, 0.0
    %v10183 = vmax.f32 %v10119, 0.0
    %v10184 = vmax.f32 %v10120, 0.0
    %v10185 = vmax.f32 %v10121, 0.0
    %v10186 = vmax.f32 %v10122, 0.0
    %v10187 = vmax.f32 %v10123, 0.0
    %v10188 = vmax.f32 %v10124, 0.0
    %v10189 = vmax.f32 %v10125, 0.0
    %v10190 = vmax.f32 %v10126, 0.0
    %v10191 = vmax.f32 %v10127, 0.0
    %v10192 = vmax.f32 %v10128, 0.0
    %v10193 = vmax.f32 %v10129, 0.0
    %v10194 = vmax.f32 %v10130, 0.0
    %v10195 = vmax.f32 %v10131, 0.0
    %v10196 = vmax.f32 %v10132, 0.0
    %v10197 = vmax.f32 %v10133, 0.0
    %v10198 = vmax.f32 %v10134, 0.0
    %v10199 = vmax.f32 %v10135, 0.0
    %v10200 = vmax.f32 %v10136, 0.0
    %v10201 = vpack.c.bf16 %v10139, %v10137
    %v10202 = vpack.c.bf16 %v10140, %v10138
    %v10203 = vpack.c.bf16 %v10143, %v10141
    %v10204 = vpack.c.bf16 %v10144, %v10142
    %v10205 = vpack.c.bf16 %v10147, %v10145
    %v10206 = vpack.c.bf16 %v10148, %v10146
    %v10207 = vpack.c.bf16 %v10151, %v10149
    %v10208 = vpack.c.bf16 %v10152, %v10150
    %v10209 = vpack.c.bf16 %v10155, %v10153
    %v10210 = vpack.c.bf16 %v10156, %v10154
    %v10211 = vpack.c.bf16 %v10159, %v10157
    %v10212 = vpack.c.bf16 %v10160, %v10158
    %v10213 = vpack.c.bf16 %v10163, %v10161
    %v10214 = vpack.c.bf16 %v10164, %v10162
    %v10215 = vpack.c.bf16 %v10167, %v10165
    %v10216 = vpack.c.bf16 %v10168, %v10166
    %v10217 = vpack.c.bf16 %v10171, %v10169
    %v10218 = vpack.c.bf16 %v10172, %v10170
    %v10219 = vpack.c.bf16 %v10175, %v10173
    %v10220 = vpack.c.bf16 %v10176, %v10174
    %v10221 = vpack.c.bf16 %v10179, %v10177
    %v10222 = vpack.c.bf16 %v10180, %v10178
    %v10223 = vpack.c.bf16 %v10183, %v10181
    %v10224 = vpack.c.bf16 %v10184, %v10182
    %v10225 = vpack.c.bf16 %v10187, %v10185
    %v10226 = vpack.c.bf16 %v10188, %v10186
    %v10227 = vpack.c.bf16 %v10191, %v10189
    %v10228 = vpack.c.bf16 %v10192, %v10190
    %v10229 = vpack.c.bf16 %v10195, %v10193
    %v10230 = vpack.c.bf16 %v10196, %v10194
    %v10231 = vpack.c.bf16 %v10199, %v10197
    %v10232 = vpack.c.bf16 %v10200, %v10198
    %v10233 = vld [vmem:[%s15] sm:$0xff]
    %v10234 = vld [vmem:[%s15 + $0x8] sm:$0xff]
    %v10235 = vld [vmem:[%s15 + $0x10] sm:$0xff]
    %v10236 = vld [vmem:[%s15 + $0x18] sm:$0xff]
    %v10237 = vld [vmem:[%s15 + $0x20] sm:$0xff]
    %v10238 = vld [vmem:[%s15 + $0x28] sm:$0xff]
    %v10239 = vld [vmem:[%s15 + $0x30] sm:$0xff]
    %v10240 = vld [vmem:[%s15 + $0x38] sm:$0xff]
    %v10241 = vld [vmem:[%s15 + $0x40] sm:$0xff]
    %v10242 = vld [vmem:[%s15 + $0x48] sm:$0xff]
    %v10243 = vld [vmem:[%s15 + $0x50] sm:$0xff]
    %v10244 = vld [vmem:[%s15 + $0x58] sm:$0xff]
    %v10245 = vld [vmem:[%s15 + $0x60] sm:$0xff]
    %v10246 = vld [vmem:[%s15 + $0x68] sm:$0xff]
    %v10247 = vld [vmem:[%s15 + $0x70] sm:$0xff]
    %v10248 = vld [vmem:[%s15 + $0x78] sm:$0xff]
    %v10249 = vld [vmem:[%s15 + $0x80] sm:$0xff]
    %v10250 = vld [vmem:[%s15 + $0x88] sm:$0xff]
    %v10251 = vld [vmem:[%s15 + $0x90] sm:$0xff]
    %v10252 = vld [vmem:[%s15 + $0x98] sm:$0xff]
    %v10253 = vld [vmem:[%s15 + $0xa0] sm:$0xff]
    %v10254 = vld [vmem:[%s15 + $0xa8] sm:$0xff]
    %v10255 = vld [vmem:[%s15 + $0xb0] sm:$0xff]
    %v10256 = vld [vmem:[%s15 + $0xb8] sm:$0xff]
    %v10257 = vld [vmem:[%s15 + $0xc0] sm:$0xff]
    %v10258 = vld [vmem:[%s15 + $0xc8] sm:$0xff]
    %v10259 = vld [vmem:[%s15 + $0xd0] sm:$0xff]
    %v10260 = vld [vmem:[%s15 + $0xd8] sm:$0xff]
    %v10261 = vld [vmem:[%s15 + $0xe0] sm:$0xff]
    %v10262 = vld [vmem:[%s15 + $0xe8] sm:$0xff]
    %v10263 = vld [vmem:[%s15 + $0xf0] sm:$0xff]
    %v10264 = vld [vmem:[%s15 + $0xf8] sm:$0xff]
    %v10265 = vld [vmem:[#allocation14] sm:$0x3]
    %v10267 = vlaneseq
    %v10268 = vshrl.u32 %v10267, 7
    %v10269 = vsub.s32 0, %v10268
    %v10270 = vrot.slane %v10265, %v10269
    %v10271 = vlaneseq
    %v10272 = vshrl.u32 %v10271, 7
    %v10273 = vsub.s32 1, %v10272
    %v10274 = vrot.slane %v10265, %v10273
    %v10309 = vunpack.c.l.b16 %v10233
    %v10310 = vunpack.c.h.b16 %v10233
    %v10311 = vunpack.c.l.b16 %v10234
    %v10312 = vunpack.c.h.b16 %v10234
    %v10313 = vunpack.c.l.b16 %v10235
    %v10314 = vunpack.c.h.b16 %v10235
    %v10315 = vunpack.c.l.b16 %v10236
    %v10316 = vunpack.c.h.b16 %v10236
    %v10317 = vunpack.c.l.b16 %v10237
    %v10318 = vunpack.c.h.b16 %v10237
    %v10319 = vunpack.c.l.b16 %v10238
    %v10320 = vunpack.c.h.b16 %v10238
    %v10321 = vunpack.c.l.b16 %v10239
    %v10322 = vunpack.c.h.b16 %v10239
    %v10323 = vunpack.c.l.b16 %v10240
    %v10324 = vunpack.c.h.b16 %v10240
    %v10325 = vunpack.c.l.b16 %v10241
    %v10326 = vunpack.c.h.b16 %v10241
    %v10327 = vunpack.c.l.b16 %v10242
    %v10328 = vunpack.c.h.b16 %v10242
    %v10329 = vunpack.c.l.b16 %v10243
    %v10330 = vunpack.c.h.b16 %v10243
    %v10331 = vunpack.c.l.b16 %v10244
    %v10332 = vunpack.c.h.b16 %v10244
    %v10333 = vunpack.c.l.b16 %v10245
    %v10334 = vunpack.c.h.b16 %v10245
    %v10335 = vunpack.c.l.b16 %v10246
    %v10336 = vunpack.c.h.b16 %v10246
    %v10337 = vunpack.c.l.b16 %v10247
    %v10338 = vunpack.c.h.b16 %v10247
    %v10339 = vunpack.c.l.b16 %v10248
    %v10340 = vunpack.c.h.b16 %v10248
    %v10341 = vunpack.c.l.b16 %v10249
    %v10342 = vunpack.c.h.b16 %v10249
    %v10343 = vunpack.c.l.b16 %v10250
    %v10344 = vunpack.c.h.b16 %v10250
    %v10345 = vunpack.c.l.b16 %v10251
    %v10346 = vunpack.c.h.b16 %v10251
    %v10347 = vunpack.c.l.b16 %v10252
    %v10348 = vunpack.c.h.b16 %v10252
    %v10349 = vunpack.c.l.b16 %v10253
    %v10350 = vunpack.c.h.b16 %v10253
    %v10351 = vunpack.c.l.b16 %v10254
    %v10352 = vunpack.c.h.b16 %v10254
    %v10353 = vunpack.c.l.b16 %v10255
    %v10354 = vunpack.c.h.b16 %v10255
    %v10355 = vunpack.c.l.b16 %v10256
    %v10356 = vunpack.c.h.b16 %v10256
    %v10357 = vunpack.c.l.b16 %v10257
    %v10358 = vunpack.c.h.b16 %v10257
    %v10359 = vunpack.c.l.b16 %v10258
    %v10360 = vunpack.c.h.b16 %v10258
    %v10361 = vunpack.c.l.b16 %v10259
    %v10362 = vunpack.c.h.b16 %v10259
    %v10363 = vunpack.c.l.b16 %v10260
    %v10364 = vunpack.c.h.b16 %v10260
    %v10365 = vunpack.c.l.b16 %v10261
    %v10366 = vunpack.c.h.b16 %v10261
    %v10367 = vunpack.c.l.b16 %v10262
    %v10368 = vunpack.c.h.b16 %v10262
    %v10369 = vunpack.c.l.b16 %v10263
    %v10370 = vunpack.c.h.b16 %v10263
    %v10371 = vunpack.c.l.b16 %v10264
    %v10372 = vunpack.c.h.b16 %v10264
    %v10373 = vpack.c.b16 %v10311, %v10309
    %v10374 = vpack.c.b16 %v10312, %v10310
    %v10375 = vpack.c.b16 %v10315, %v10313
    %v10376 = vpack.c.b16 %v10316, %v10314
    %v10377 = vpack.c.b16 %v10319, %v10317
    %v10378 = vpack.c.b16 %v10320, %v10318
    %v10379 = vpack.c.b16 %v10323, %v10321
    %v10380 = vpack.c.b16 %v10324, %v10322
    %v10381 = vpack.c.b16 %v10327, %v10325
    %v10382 = vpack.c.b16 %v10328, %v10326
    %v10383 = vpack.c.b16 %v10331, %v10329
    %v10384 = vpack.c.b16 %v10332, %v10330
    %v10385 = vpack.c.b16 %v10335, %v10333
    %v10386 = vpack.c.b16 %v10336, %v10334
    %v10387 = vpack.c.b16 %v10339, %v10337
    %v10388 = vpack.c.b16 %v10340, %v10338
    %v10389 = vpack.c.b16 %v10343, %v10341
    %v10390 = vpack.c.b16 %v10344, %v10342
    %v10391 = vpack.c.b16 %v10347, %v10345
    %v10392 = vpack.c.b16 %v10348, %v10346
    %v10393 = vpack.c.b16 %v10351, %v10349
    %v10394 = vpack.c.b16 %v10352, %v10350
    %v10395 = vpack.c.b16 %v10355, %v10353
    %v10396 = vpack.c.b16 %v10356, %v10354
    %v10397 = vpack.c.b16 %v10359, %v10357
    %v10398 = vpack.c.b16 %v10360, %v10358
    %v10399 = vpack.c.b16 %v10363, %v10361
    %v10400 = vpack.c.b16 %v10364, %v10362
    %v10401 = vpack.c.b16 %v10367, %v10365
    %v10402 = vpack.c.b16 %v10368, %v10366
    %v10403 = vpack.c.b16 %v10371, %v10369
    %v10404 = vpack.c.b16 %v10372, %v10370
    %10437 = vmatprep.subr.bf16.mxu0 %v10374
    %10438 = vmatpush1.bf16.msra.mxu0 %v10373
    %10439 = vmatprep.subr.bf16.mxu0 %v10376
    %10440 = vmatpush1.bf16.msra.mxu0 %v10375
    %10441 = vmatprep.subr.bf16.mxu0 %v10378
    %10442 = vmatpush1.bf16.msra.mxu0 %v10377
    %10443 = vmatprep.subr.bf16.mxu0 %v10380
    %10444 = vmatpush1.bf16.msra.mxu0 %v10379
    %10445 = vmatprep.subr.bf16.mxu0 %v10382
    %10446 = vmatpush1.bf16.msra.mxu0 %v10381
    %10447 = vmatprep.subr.bf16.mxu0 %v10384
    %10448 = vmatpush1.bf16.msra.mxu0 %v10383
    %10449 = vmatprep.subr.bf16.mxu0 %v10386
    %10450 = vmatpush1.bf16.msra.mxu0 %v10385
    %10451 = vmatprep.subr.bf16.mxu0 %v10388
    %10452 = vmatpush1.bf16.msra.mxu0 %v10387
    %10453 = vmatprep.subr.bf16.mxu0 %v10390
    %10454 = vmatpush1.bf16.msra.mxu0 %v10389
    %10455 = vmatprep.subr.bf16.mxu0 %v10392
    %10456 = vmatpush1.bf16.msra.mxu0 %v10391
    %10457 = vmatprep.subr.bf16.mxu0 %v10394
    %10458 = vmatpush1.bf16.msra.mxu0 %v10393
    %10459 = vmatprep.subr.bf16.mxu0 %v10396
    %10460 = vmatpush1.bf16.msra.mxu0 %v10395
    %10461 = vmatprep.subr.bf16.mxu0 %v10398
    %10462 = vmatpush1.bf16.msra.mxu0 %v10397
    %10463 = vmatprep.subr.bf16.mxu0 %v10400
    %10464 = vmatpush1.bf16.msra.mxu0 %v10399
    %10465 = vmatprep.subr.bf16.mxu0 %v10402
    %10466 = vmatpush1.bf16.msra.mxu0 %v10401
    %10467 = vmatprep.subr.bf16.mxu0 %v10404
    %10468 = vmatpush1.bf16.msra.mxu0 %v10403
    %10469 = vmatprep.mubr.bf16.mxu0 %v10202
    %10470 = vmatmul.mubr.bf16.gmra.mrb[0].mxu0 %v10201
    %v10471 = vpop.f32.mrb[0].mxu0
    %v10472 = vadd.f32 %v10270, %v10471
    %v10473 = vpop.f32.mrb[0].mxu0
    %v10474 = vadd.f32 %v10274, %v10473
    %v10475 = vpop.f32.mrb[0].mxu0
    %v10476 = vadd.f32 %v10270, %v10475
    %v10477 = vpop.f32.mrb[0].mxu0
    %v10478 = vadd.f32 %v10274, %v10477
    %10479 = vmatprep.mubr.bf16.mxu0 %v10204
    %10480 = vmatmul.mubr.bf16.gmra.mrb[0].mxu0 %v10203
    %v10481 = vpop.f32.mrb[0].mxu0
    %v10482 = vadd.f32 %v10270, %v10481
    %v10483 = vpop.f32.mrb[0].mxu0
    %v10484 = vadd.f32 %v10274, %v10483
    %v10485 = vpop.f32.mrb[0].mxu0
    %v10486 = vadd.f32 %v10270, %v10485
    %v10487 = vpop.f32.mrb[0].mxu0
    %v10488 = vadd.f32 %v10274, %v10487
    %10489 = vmatprep.mubr.bf16.mxu0 %v10206
    %10490 = vmatmul.mubr.bf16.gmra.mrb[0].mxu0 %v10205
    %v10491 = vpop.f32.mrb[0].mxu0
    %v10492 = vadd.f32 %v10270, %v10491
    %v10493 = vpop.f32.mrb[0].mxu0
    %v10494 = vadd.f32 %v10274, %v10493
    %v10495 = vpop.f32.mrb[0].mxu0
    %v10496 = vadd.f32 %v10270, %v10495
    %v10497 = vpop.f32.mrb[0].mxu0
    %v10498 = vadd.f32 %v10274, %v10497
    %10499 = vmatprep.mubr.bf16.mxu0 %v10208
    %10500 = vmatmul.mubr.bf16.gmra.mrb[0].mxu0 %v10207
    %v10501 = vpop.f32.mrb[0].mxu0
    %v10502 = vadd.f32 %v10270, %v10501
    %v10503 = vpop.f32.mrb[0].mxu0
    %v10504 = vadd.f32 %v10274, %v10503
    %v10505 = vpop.f32.mrb[0].mxu0
    %v10506 = vadd.f32 %v10270, %v10505
    %v10507 = vpop.f32.mrb[0].mxu0
    %v10508 = vadd.f32 %v10274, %v10507
    %10509 = vmatprep.mubr.bf16.mxu0 %v10210
    %10510 = vmatmul.mubr.bf16.gmra.mrb[0].mxu0 %v10209
    %v10511 = vpop.f32.mrb[0].mxu0
    %v10512 = vadd.f32 %v10270, %v10511
    %v10513 = vpop.f32.mrb[0].mxu0
    %v10514 = vadd.f32 %v10274, %v10513
    %v10515 = vpop.f32.mrb[0].mxu0
    %v10516 = vadd.f32 %v10270, %v10515
    %v10517 = vpop.f32.mrb[0].mxu0
    %v10518 = vadd.f32 %v10274, %v10517
    %10519 = vmatprep.mubr.bf16.mxu0 %v10212
    %10520 = vmatmul.mubr.bf16.gmra.mrb[0].mxu0 %v10211
    %v10521 = vpop.f32.mrb[0].mxu0
    %v10522 = vadd.f32 %v10270, %v10521
    %v10523 = vpop.f32.mrb[0].mxu0
    %v10524 = vadd.f32 %v10274, %v10523
    %v10525 = vpop.f32.mrb[0].mxu0
    %v10526 = vadd.f32 %v10270, %v10525
    %v10527 = vpop.f32.mrb[0].mxu0
    %v10528 = vadd.f32 %v10274, %v10527
    %10529 = vmatprep.mubr.bf16.mxu0 %v10214
    %10530 = vmatmul.mubr.bf16.gmra.mrb[0].mxu0 %v10213
    %v10531 = vpop.f32.mrb[0].mxu0
    %v10532 = vadd.f32 %v10270, %v10531
    %v10533 = vpop.f32.mrb[0].mxu0
    %v10534 = vadd.f32 %v10274, %v10533
    %v10535 = vpop.f32.mrb[0].mxu0
    %v10536 = vadd.f32 %v10270, %v10535
    %v10537 = vpop.f32.mrb[0].mxu0
    %v10538 = vadd.f32 %v10274, %v10537
    %10539 = vmatprep.mubr.bf16.mxu0 %v10216
    %10540 = vmatmul.mubr.bf16.gmra.mrb[0].mxu0 %v10215
    %v10541 = vpop.f32.mrb[0].mxu0
    %v10542 = vadd.f32 %v10270, %v10541
    %v10543 = vpop.f32.mrb[0].mxu0
    %v10544 = vadd.f32 %v10274, %v10543
    %v10545 = vpop.f32.mrb[0].mxu0
    %v10546 = vadd.f32 %v10270, %v10545
    %v10547 = vpop.f32.mrb[0].mxu0
    %v10548 = vadd.f32 %v10274, %v10547
    %10549 = vmatprep.mubr.bf16.mxu0 %v10218
    %10550 = vmatmul.mubr.bf16.gmra.mrb[0].mxu0 %v10217
    %v10551 = vpop.f32.mrb[0].mxu0
    %v10552 = vadd.f32 %v10270, %v10551
    %v10553 = vpop.f32.mrb[0].mxu0
    %v10554 = vadd.f32 %v10274, %v10553
    %v10555 = vpop.f32.mrb[0].mxu0
    %v10556 = vadd.f32 %v10270, %v10555
    %v10557 = vpop.f32.mrb[0].mxu0
    %v10558 = vadd.f32 %v10274, %v10557
    %10559 = vmatprep.mubr.bf16.mxu0 %v10220
    %10560 = vmatmul.mubr.bf16.gmra.mrb[0].mxu0 %v10219
    %v10561 = vpop.f32.mrb[0].mxu0
    %v10562 = vadd.f32 %v10270, %v10561
    %v10563 = vpop.f32.mrb[0].mxu0
    %v10564 = vadd.f32 %v10274, %v10563
    %v10565 = vpop.f32.mrb[0].mxu0
    %v10566 = vadd.f32 %v10270, %v10565
    %v10567 = vpop.f32.mrb[0].mxu0
    %v10568 = vadd.f32 %v10274, %v10567
    %10569 = vmatprep.mubr.bf16.mxu0 %v10222
    %10570 = vmatmul.mubr.bf16.gmra.mrb[0].mxu0 %v10221
    %v10571 = vpop.f32.mrb[0].mxu0
    %v10572 = vadd.f32 %v10270, %v10571
    %v10573 = vpop.f32.mrb[0].mxu0
    %v10574 = vadd.f32 %v10274, %v10573
    %v10575 = vpop.f32.mrb[0].mxu0
    %v10576 = vadd.f32 %v10270, %v10575
    %v10577 = vpop.f32.mrb[0].mxu0
    %v10578 = vadd.f32 %v10274, %v10577
    %10579 = vmatprep.mubr.bf16.mxu0 %v10224
    %10580 = vmatmul.mubr.bf16.gmra.mrb[0].mxu0 %v10223
    %v10581 = vpop.f32.mrb[0].mxu0
    %v10582 = vadd.f32 %v10270, %v10581
    %v10583 = vpop.f32.mrb[0].mxu0
    %v10584 = vadd.f32 %v10274, %v10583
    %v10585 = vpop.f32.mrb[0].mxu0
    %v10586 = vadd.f32 %v10270, %v10585
    %v10587 = vpop.f32.mrb[0].mxu0
    %v10588 = vadd.f32 %v10274, %v10587
    %10589 = vmatprep.mubr.bf16.mxu0 %v10226
    %10590 = vmatmul.mubr.bf16.gmra.mrb[0].mxu0 %v10225
    %v10591 = vpop.f32.mrb[0].mxu0
    %v10592 = vadd.f32 %v10270, %v10591
    %v10593 = vpop.f32.mrb[0].mxu0
    %v10594 = vadd.f32 %v10274, %v10593
    %v10595 = vpop.f32.mrb[0].mxu0
    %v10596 = vadd.f32 %v10270, %v10595
    %v10597 = vpop.f32.mrb[0].mxu0
    %v10598 = vadd.f32 %v10274, %v10597
    %10599 = vmatprep.mubr.bf16.mxu0 %v10228
    %10600 = vmatmul.mubr.bf16.gmra.mrb[0].mxu0 %v10227
    %v10601 = vpop.f32.mrb[0].mxu0
    %v10602 = vadd.f32 %v10270, %v10601
    %v10603 = vpop.f32.mrb[0].mxu0
    %v10604 = vadd.f32 %v10274, %v10603
    %v10605 = vpop.f32.mrb[0].mxu0
    %v10606 = vadd.f32 %v10270, %v10605
    %v10607 = vpop.f32.mrb[0].mxu0
    %v10608 = vadd.f32 %v10274, %v10607
    %10609 = vmatprep.mubr.bf16.mxu0 %v10230
    %10610 = vmatmul.mubr.bf16.gmra.mrb[0].mxu0 %v10229
    %v10611 = vpop.f32.mrb[0].mxu0
    %v10612 = vadd.f32 %v10270, %v10611
    %v10613 = vpop.f32.mrb[0].mxu0
    %v10614 = vadd.f32 %v10274, %v10613
    %v10615 = vpop.f32.mrb[0].mxu0
    %v10616 = vadd.f32 %v10270, %v10615
    %v10617 = vpop.f32.mrb[0].mxu0
    %v10618 = vadd.f32 %v10274, %v10617
    %10619 = vmatprep.mubr.bf16.mxu0 %v10232
    %10620 = vmatmul.mubr.bf16.gmra.mrb[0].mxu0 %v10231
    %v10621 = vpop.f32.mrb[0].mxu0
    %v10622 = vadd.f32 %v10270, %v10621
    %v10623 = vpop.f32.mrb[0].mxu0
    %v10624 = vadd.f32 %v10274, %v10623
    %v10625 = vpop.f32.mrb[0].mxu0
    %v10626 = vadd.f32 %v10270, %v10625
    %v10627 = vpop.f32.mrb[0].mxu0
    %v10628 = vadd.f32 %v10274, %v10627
    %10629 = vdwg.mxu0
    %v10630 = vld [vmem:[#allocation16] sm:$0x3]
    %v10631 = vld [vmem:[#allocation17] sm:$0x3]
    %v10632 = vadd.f32 %v10472, %v10474
    %10633 = vadd.xlane.f32.xlu0 %v10632
    %v10634 = vpop.xlane.xlu0 %10633
    %v10635 = vadd.f32 %v10476, %v10478
    %10636 = vadd.xlane.f32.xlu0 %v10635
    %v10637 = vpop.xlane.xlu0 %10636
    %v10638 = vadd.f32 %v10482, %v10484
    %10639 = vadd.xlane.f32.xlu0 %v10638
    %v10640 = vpop.xlane.xlu0 %10639
    %v10641 = vadd.f32 %v10486, %v10488
    %10642 = vadd.xlane.f32.xlu0 %v10641
    %v10643 = vpop.xlane.xlu0 %10642
    %v10644 = vadd.f32 %v10492, %v10494
    %10645 = vadd.xlane.f32.xlu0 %v10644
    %v10646 = vpop.xlane.xlu0 %10645
    %v10647 = vadd.f32 %v10496, %v10498
    %10648 = vadd.xlane.f32.xlu0 %v10647
    %v10649 = vpop.xlane.xlu0 %10648
    %v10650 = vadd.f32 %v10502, %v10504
    %10651 = vadd.xlane.f32.xlu0 %v10650
    %v10652 = vpop.xlane.xlu0 %10651
    %v10653 = vadd.f32 %v10506, %v10508
    %10654 = vadd.xlane.f32.xlu0 %v10653
    %v10655 = vpop.xlane.xlu0 %10654
    %v10656 = vadd.f32 %v10512, %v10514
    %10657 = vadd.xlane.f32.xlu0 %v10656
    %v10658 = vpop.xlane.xlu0 %10657
    %v10659 = vadd.f32 %v10516, %v10518
    %10660 = vadd.xlane.f32.xlu0 %v10659
    %v10661 = vpop.xlane.xlu0 %10660
    %v10662 = vadd.f32 %v10522, %v10524
    %10663 = vadd.xlane.f32.xlu0 %v10662
    %v10664 = vpop.xlane.xlu0 %10663
    %v10665 = vadd.f32 %v10526, %v10528
    %10666 = vadd.xlane.f32.xlu0 %v10665
    %v10667 = vpop.xlane.xlu0 %10666
    %v10668 = vadd.f32 %v10532, %v10534
    %10669 = vadd.xlane.f32.xlu0 %v10668
    %v10670 = vpop.xlane.xlu0 %10669
    %v10671 = vadd.f32 %v10536, %v10538
    %10672 = vadd.xlane.f32.xlu0 %v10671
    %v10673 = vpop.xlane.xlu0 %10672
    %v10674 = vadd.f32 %v10542, %v10544
    %10675 = vadd.xlane.f32.xlu0 %v10674
    %v10676 = vpop.xlane.xlu0 %10675
    %v10677 = vadd.f32 %v10546, %v10548
    %10678 = vadd.xlane.f32.xlu0 %v10677
    %v10679 = vpop.xlane.xlu0 %10678
    %v10680 = vadd.f32 %v10552, %v10554
    %10681 = vadd.xlane.f32.xlu0 %v10680
    %v10682 = vpop.xlane.xlu0 %10681
    %v10683 = vadd.f32 %v10556, %v10558
    %10684 = vadd.xlane.f32.xlu0 %v10683
    %v10685 = vpop.xlane.xlu0 %10684
    %v10686 = vadd.f32 %v10562, %v10564
    %10687 = vadd.xlane.f32.xlu0 %v10686
    %v10688 = vpop.xlane.xlu0 %10687
    %v10689 = vadd.f32 %v10566, %v10568
    %10690 = vadd.xlane.f32.xlu0 %v10689
    %v10691 = vpop.xlane.xlu0 %10690
    %v10692 = vadd.f32 %v10572, %v10574
    %10693 = vadd.xlane.f32.xlu0 %v10692
    %v10694 = vpop.xlane.xlu0 %10693
    %v10695 = vadd.f32 %v10576, %v10578
    %10696 = vadd.xlane.f32.xlu0 %v10695
    %v10697 = vpop.xlane.xlu0 %10696
    %v10698 = vadd.f32 %v10582, %v10584
    %10699 = vadd.xlane.f32.xlu0 %v10698
    %v10700 = vpop.xlane.xlu0 %10699
    %v10701 = vadd.f32 %v10586, %v10588
    %10702 = vadd.xlane.f32.xlu0 %v10701
    %v10703 = vpop.xlane.xlu0 %10702
    %v10704 = vadd.f32 %v10592, %v10594
    %10705 = vadd.xlane.f32.xlu0 %v10704
    %v10706 = vpop.xlane.xlu0 %10705
    %v10707 = vadd.f32 %v10596, %v10598
    %10708 = vadd.xlane.f32.xlu0 %v10707
    %v10709 = vpop.xlane.xlu0 %10708
    %v10710 = vadd.f32 %v10602, %v10604
    %10711 = vadd.xlane.f32.xlu0 %v10710
    %v10712 = vpop.xlane.xlu0 %10711
    %v10713 = vadd.f32 %v10606, %v10608
    %10714 = vadd.xlane.f32.xlu0 %v10713
    %v10715 = vpop.xlane.xlu0 %10714
    %v10716 = vadd.f32 %v10612, %v10614
    %10717 = vadd.xlane.f32.xlu0 %v10716
    %v10718 = vpop.xlane.xlu0 %10717
    %v10719 = vadd.f32 %v10616, %v10618
    %10720 = vadd.xlane.f32.xlu0 %v10719
    %v10721 = vpop.xlane.xlu0 %10720
    %v10722 = vadd.f32 %v10622, %v10624
    %10723 = vadd.xlane.f32.xlu0 %v10722
    %v10724 = vpop.xlane.xlu0 %10723
    %v10725 = vadd.f32 %v10626, %v10628
    %10726 = vadd.xlane.f32.xlu0 %v10725
    %v10727 = vpop.xlane.xlu0 %10726
    %v10728 = vmul.f32 %v10634, %v8413
    %v10729 = vmul.f32 %v10637, %v8413
    %v10730 = vmul.f32 %v10640, %v8413
    %v10731 = vmul.f32 %v10643, %v8413
    %v10732 = vmul.f32 %v10646, %v8413
    %v10733 = vmul.f32 %v10649, %v8413
    %v10734 = vmul.f32 %v10652, %v8413
    %v10735 = vmul.f32 %v10655, %v8413
    %v10736 = vmul.f32 %v10658, %v8413
    %v10737 = vmul.f32 %v10661, %v8413
    %v10738 = vmul.f32 %v10664, %v8413
    %v10739 = vmul.f32 %v10667, %v8413
    %v10740 = vmul.f32 %v10670, %v8413
    %v10741 = vmul.f32 %v10673, %v8413
    %v10742 = vmul.f32 %v10676, %v8413
    %v10743 = vmul.f32 %v10679, %v8413
    %v10744 = vmul.f32 %v10682, %v8413
    %v10745 = vmul.f32 %v10685, %v8413
    %v10746 = vmul.f32 %v10688, %v8413
    %v10747 = vmul.f32 %v10691, %v8413
    %v10748 = vmul.f32 %v10694, %v8413
    %v10749 = vmul.f32 %v10697, %v8413
    %v10750 = vmul.f32 %v10700, %v8413
    %v10751 = vmul.f32 %v10703, %v8413
    %v10752 = vmul.f32 %v10706, %v8413
    %v10753 = vmul.f32 %v10709, %v8413
    %v10754 = vmul.f32 %v10712, %v8413
    %v10755 = vmul.f32 %v10715, %v8413
    %v10756 = vmul.f32 %v10718, %v8413
    %v10757 = vmul.f32 %v10721, %v8413
    %v10758 = vmul.f32 %v10724, %v8413
    %v10759 = vmul.f32 %v10727, %v8413
    %v10760 = vsub.f32 %v10472, %v10728
    %v10761 = vsub.f32 %v10474, %v10728
    %v10762 = vsub.f32 %v10476, %v10729
    %v10763 = vsub.f32 %v10478, %v10729
    %v10764 = vsub.f32 %v10482, %v10730
    %v10765 = vsub.f32 %v10484, %v10730
    %v10766 = vsub.f32 %v10486, %v10731
    %v10767 = vsub.f32 %v10488, %v10731
    %v10768 = vsub.f32 %v10492, %v10732
    %v10769 = vsub.f32 %v10494, %v10732
    %v10770 = vsub.f32 %v10496, %v10733
    %v10771 = vsub.f32 %v10498, %v10733
    %v10772 = vsub.f32 %v10502, %v10734
    %v10773 = vsub.f32 %v10504, %v10734
    %v10774 = vsub.f32 %v10506, %v10735
    %v10775 = vsub.f32 %v10508, %v10735
    %v10776 = vsub.f32 %v10512, %v10736
    %v10777 = vsub.f32 %v10514, %v10736
    %v10778 = vsub.f32 %v10516, %v10737
    %v10779 = vsub.f32 %v10518, %v10737
    %v10780 = vsub.f32 %v10522, %v10738
    %v10781 = vsub.f32 %v10524, %v10738
    %v10782 = vsub.f32 %v10526, %v10739
    %v10783 = vsub.f32 %v10528, %v10739
    %v10784 = vsub.f32 %v10532, %v10740
    %v10785 = vsub.f32 %v10534, %v10740
    %v10786 = vsub.f32 %v10536, %v10741
    %v10787 = vsub.f32 %v10538, %v10741
    %v10788 = vsub.f32 %v10542, %v10742
    %v10789 = vsub.f32 %v10544, %v10742
    %v10790 = vsub.f32 %v10546, %v10743
    %v10791 = vsub.f32 %v10548, %v10743
    %v10792 = vsub.f32 %v10552, %v10744
    %v10793 = vsub.f32 %v10554, %v10744
    %v10794 = vsub.f32 %v10556, %v10745
    %v10795 = vsub.f32 %v10558, %v10745
    %v10796 = vsub.f32 %v10562, %v10746
    %v10797 = vsub.f32 %v10564, %v10746
    %v10798 = vsub.f32 %v10566, %v10747
    %v10799 = vsub.f32 %v10568, %v10747
    %v10800 = vsub.f32 %v10572, %v10748
    %v10801 = vsub.f32 %v10574, %v10748
    %v10802 = vsub.f32 %v10576, %v10749
    %v10803 = vsub.f32 %v10578, %v10749
    %v10804 = vsub.f32 %v10582, %v10750
    %v10805 = vsub.f32 %v10584, %v10750
    %v10806 = vsub.f32 %v10586, %v10751
    %v10807 = vsub.f32 %v10588, %v10751
    %v10808 = vsub.f32 %v10592, %v10752
    %v10809 = vsub.f32 %v10594, %v10752
    %v10810 = vsub.f32 %v10596, %v10753
    %v10811 = vsub.f32 %v10598, %v10753
    %v10812 = vsub.f32 %v10602, %v10754
    %v10813 = vsub.f32 %v10604, %v10754
    %v10814 = vsub.f32 %v10606, %v10755
    %v10815 = vsub.f32 %v10608, %v10755
    %v10816 = vsub.f32 %v10612, %v10756
    %v10817 = vsub.f32 %v10614, %v10756
    %v10818 = vsub.f32 %v10616, %v10757
    %v10819 = vsub.f32 %v10618, %v10757
    %v10820 = vsub.f32 %v10622, %v10758
    %v10821 = vsub.f32 %v10624, %v10758
    %v10822 = vsub.f32 %v10626, %v10759
    %v10823 = vsub.f32 %v10628, %v10759
    %v10824 = vmul.f32 %v10760, %v10760
    %v10825 = vmul.f32 %v10761, %v10761
    %v10826 = vmul.f32 %v10762, %v10762
    %v10827 = vmul.f32 %v10763, %v10763
    %v10828 = vmul.f32 %v10764, %v10764
    %v10829 = vmul.f32 %v10765, %v10765
    %v10830 = vmul.f32 %v10766, %v10766
    %v10831 = vmul.f32 %v10767, %v10767
    %v10832 = vmul.f32 %v10768, %v10768
    %v10833 = vmul.f32 %v10769, %v10769
    %v10834 = vmul.f32 %v10770, %v10770
    %v10835 = vmul.f32 %v10771, %v10771
    %v10836 = vmul.f32 %v10772, %v10772
    %v10837 = vmul.f32 %v10773, %v10773
    %v10838 = vmul.f32 %v10774, %v10774
    %v10839 = vmul.f32 %v10775, %v10775
    %v10840 = vmul.f32 %v10776, %v10776
    %v10841 = vmul.f32 %v10777, %v10777
    %v10842 = vmul.f32 %v10778, %v10778
    %v10843 = vmul.f32 %v10779, %v10779
    %v10844 = vmul.f32 %v10780, %v10780
    %v10845 = vmul.f32 %v10781, %v10781
    %v10846 = vmul.f32 %v10782, %v10782
    %v10847 = vmul.f32 %v10783, %v10783
    %v10848 = vmul.f32 %v10784, %v10784
    %v10849 = vmul.f32 %v10785, %v10785
    %v10850 = vmul.f32 %v10786, %v10786
    %v10851 = vmul.f32 %v10787, %v10787
    %v10852 = vmul.f32 %v10788, %v10788
    %v10853 = vmul.f32 %v10789, %v10789
    %v10854 = vmul.f32 %v10790, %v10790
    %v10855 = vmul.f32 %v10791, %v10791
    %v10856 = vmul.f32 %v10792, %v10792
    %v10857 = vmul.f32 %v10793, %v10793
    %v10858 = vmul.f32 %v10794, %v10794
    %v10859 = vmul.f32 %v10795, %v10795
    %v10860 = vmul.f32 %v10796, %v10796
    %v10861 = vmul.f32 %v10797, %v10797
    %v10862 = vmul.f32 %v10798, %v10798
    %v10863 = vmul.f32 %v10799, %v10799
    %v10864 = vmul.f32 %v10800, %v10800
    %v10865 = vmul.f32 %v10801, %v10801
    %v10866 = vmul.f32 %v10802, %v10802
    %v10867 = vmul.f32 %v10803, %v10803
    %v10868 = vmul.f32 %v10804, %v10804
    %v10869 = vmul.f32 %v10805, %v10805
    %v10870 = vmul.f32 %v10806, %v10806
    %v10871 = vmul.f32 %v10807, %v10807
    %v10872 = vmul.f32 %v10808, %v10808
    %v10873 = vmul.f32 %v10809, %v10809
    %v10874 = vmul.f32 %v10810, %v10810
    %v10875 = vmul.f32 %v10811, %v10811
    %v10876 = vmul.f32 %v10812, %v10812
    %v10877 = vmul.f32 %v10813, %v10813
    %v10878 = vmul.f32 %v10814, %v10814
    %v10879 = vmul.f32 %v10815, %v10815
    %v10880 = vmul.f32 %v10816, %v10816
    %v10881 = vmul.f32 %v10817, %v10817
    %v10882 = vmul.f32 %v10818, %v10818
    %v10883 = vmul.f32 %v10819, %v10819
    %v10884 = vmul.f32 %v10820, %v10820
    %v10885 = vmul.f32 %v10821, %v10821
    %v10886 = vmul.f32 %v10822, %v10822
    %v10887 = vmul.f32 %v10823, %v10823
    %v10888 = vadd.f32 %v10824, %v10825
    %10889 = vadd.xlane.f32.xlu0 %v10888
    %v10890 = vpop.xlane.xlu0 %10889
    %v10891 = vadd.f32 %v10826, %v10827
    %10892 = vadd.xlane.f32.xlu0 %v10891
    %v10893 = vpop.xlane.xlu0 %10892
    %v10894 = vadd.f32 %v10828, %v10829
    %10895 = vadd.xlane.f32.xlu0 %v10894
    %v10896 = vpop.xlane.xlu0 %10895
    %v10897 = vadd.f32 %v10830, %v10831
    %10898 = vadd.xlane.f32.xlu0 %v10897
    %v10899 = vpop.xlane.xlu0 %10898
    %v10900 = vadd.f32 %v10832, %v10833
    %10901 = vadd.xlane.f32.xlu0 %v10900
    %v10902 = vpop.xlane.xlu0 %10901
    %v10903 = vadd.f32 %v10834, %v10835
    %10904 = vadd.xlane.f32.xlu0 %v10903
    %v10905 = vpop.xlane.xlu0 %10904
    %v10906 = vadd.f32 %v10836, %v10837
    %10907 = vadd.xlane.f32.xlu0 %v10906
    %v10908 = vpop.xlane.xlu0 %10907
    %v10909 = vadd.f32 %v10838, %v10839
    %10910 = vadd.xlane.f32.xlu0 %v10909
    %v10911 = vpop.xlane.xlu0 %10910
    %v10912 = vadd.f32 %v10840, %v10841
    %10913 = vadd.xlane.f32.xlu0 %v10912
    %v10914 = vpop.xlane.xlu0 %10913
    %v10915 = vadd.f32 %v10842, %v10843
    %10916 = vadd.xlane.f32.xlu0 %v10915
    %v10917 = vpop.xlane.xlu0 %10916
    %v10918 = vadd.f32 %v10844, %v10845
    %10919 = vadd.xlane.f32.xlu0 %v10918
    %v10920 = vpop.xlane.xlu0 %10919
    %v10921 = vadd.f32 %v10846, %v10847
    %10922 = vadd.xlane.f32.xlu0 %v10921
    %v10923 = vpop.xlane.xlu0 %10922
    %v10924 = vadd.f32 %v10848, %v10849
    %10925 = vadd.xlane.f32.xlu0 %v10924
    %v10926 = vpop.xlane.xlu0 %10925
    %v10927 = vadd.f32 %v10850, %v10851
    %10928 = vadd.xlane.f32.xlu0 %v10927
    %v10929 = vpop.xlane.xlu0 %10928
    %v10930 = vadd.f32 %v10852, %v10853
    %10931 = vadd.xlane.f32.xlu0 %v10930
    %v10932 = vpop.xlane.xlu0 %10931
    %v10933 = vadd.f32 %v10854, %v10855
    %10934 = vadd.xlane.f32.xlu0 %v10933
    %v10935 = vpop.xlane.xlu0 %10934
    %v10936 = vadd.f32 %v10856, %v10857
    %10937 = vadd.xlane.f32.xlu0 %v10936
    %v10938 = vpop.xlane.xlu0 %10937
    %v10939 = vadd.f32 %v10858, %v10859
    %10940 = vadd.xlane.f32.xlu0 %v10939
    %v10941 = vpop.xlane.xlu0 %10940
    %v10942 = vadd.f32 %v10860, %v10861
    %10943 = vadd.xlane.f32.xlu0 %v10942
    %v10944 = vpop.xlane.xlu0 %10943
    %v10945 = vadd.f32 %v10862, %v10863
    %10946 = vadd.xlane.f32.xlu0 %v10945
    %v10947 = vpop.xlane.xlu0 %10946
    %v10948 = vadd.f32 %v10864, %v10865
    %10949 = vadd.xlane.f32.xlu0 %v10948
    %v10950 = vpop.xlane.xlu0 %10949
    %v10951 = vadd.f32 %v10866, %v10867
    %10952 = vadd.xlane.f32.xlu0 %v10951
    %v10953 = vpop.xlane.xlu0 %10952
    %v10954 = vadd.f32 %v10868, %v10869
    %10955 = vadd.xlane.f32.xlu0 %v10954
    %v10956 = vpop.xlane.xlu0 %10955
    %v10957 = vadd.f32 %v10870, %v10871
    %10958 = vadd.xlane.f32.xlu0 %v10957
    %v10959 = vpop.xlane.xlu0 %10958
    %v10960 = vadd.f32 %v10872, %v10873
    %10961 = vadd.xlane.f32.xlu0 %v10960
    %v10962 = vpop.xlane.xlu0 %10961
    %v10963 = vadd.f32 %v10874, %v10875
    %10964 = vadd.xlane.f32.xlu0 %v10963
    %v10965 = vpop.xlane.xlu0 %10964
    %v10966 = vadd.f32 %v10876, %v10877
    %10967 = vadd.xlane.f32.xlu0 %v10966
    %v10968 = vpop.xlane.xlu0 %10967
    %v10969 = vadd.f32 %v10878, %v10879
    %10970 = vadd.xlane.f32.xlu0 %v10969
    %v10971 = vpop.xlane.xlu0 %10970
    %v10972 = vadd.f32 %v10880, %v10881
    %10973 = vadd.xlane.f32.xlu0 %v10972
    %v10974 = vpop.xlane.xlu0 %10973
    %v10975 = vadd.f32 %v10882, %v10883
    %10976 = vadd.xlane.f32.xlu0 %v10975
    %v10977 = vpop.xlane.xlu0 %10976
    %v10978 = vadd.f32 %v10884, %v10885
    %10979 = vadd.xlane.f32.xlu0 %v10978
    %v10980 = vpop.xlane.xlu0 %10979
    %v10981 = vadd.f32 %v10886, %v10887
    %10982 = vadd.xlane.f32.xlu0 %v10981
    %v10983 = vpop.xlane.xlu0 %10982
    %v10984 = vmul.f32 %v10890, %v8413
    %v10985 = vmul.f32 %v10893, %v8413
    %v10986 = vmul.f32 %v10896, %v8413
    %v10987 = vmul.f32 %v10899, %v8413
    %v10988 = vmul.f32 %v10902, %v8413
    %v10989 = vmul.f32 %v10905, %v8413
    %v10990 = vmul.f32 %v10908, %v8413
    %v10991 = vmul.f32 %v10911, %v8413
    %v10992 = vmul.f32 %v10914, %v8413
    %v10993 = vmul.f32 %v10917, %v8413
    %v10994 = vmul.f32 %v10920, %v8413
    %v10995 = vmul.f32 %v10923, %v8413
    %v10996 = vmul.f32 %v10926, %v8413
    %v10997 = vmul.f32 %v10929, %v8413
    %v10998 = vmul.f32 %v10932, %v8413
    %v10999 = vmul.f32 %v10935, %v8413
    %v11000 = vmul.f32 %v10938, %v8413
    %v11001 = vmul.f32 %v10941, %v8413
    %v11002 = vmul.f32 %v10944, %v8413
    %v11003 = vmul.f32 %v10947, %v8413
    %v11004 = vmul.f32 %v10950, %v8413
    %v11005 = vmul.f32 %v10953, %v8413
    %v11006 = vmul.f32 %v10956, %v8413
    %v11007 = vmul.f32 %v10959, %v8413
    %v11008 = vmul.f32 %v10962, %v8413
    %v11009 = vmul.f32 %v10965, %v8413
    %v11010 = vmul.f32 %v10968, %v8413
    %v11011 = vmul.f32 %v10971, %v8413
    %v11012 = vmul.f32 %v10974, %v8413
    %v11013 = vmul.f32 %v10977, %v8413
    %v11014 = vmul.f32 %v10980, %v8413
    %v11015 = vmul.f32 %v10983, %v8413
    %v11016 = vadd.f32 %v10984, 1e-05
    %v11017 = vadd.f32 %v10985, 1e-05
    %v11018 = vadd.f32 %v10986, 1e-05
    %v11019 = vadd.f32 %v10987, 1e-05
    %v11020 = vadd.f32 %v10988, 1e-05
    %v11021 = vadd.f32 %v10989, 1e-05
    %v11022 = vadd.f32 %v10990, 1e-05
    %v11023 = vadd.f32 %v10991, 1e-05
    %v11024 = vadd.f32 %v10992, 1e-05
    %v11025 = vadd.f32 %v10993, 1e-05
    %v11026 = vadd.f32 %v10994, 1e-05
    %v11027 = vadd.f32 %v10995, 1e-05
    %v11028 = vadd.f32 %v10996, 1e-05
    %v11029 = vadd.f32 %v10997, 1e-05
    %v11030 = vadd.f32 %v10998, 1e-05
    %v11031 = vadd.f32 %v10999, 1e-05
    %v11032 = vadd.f32 %v11000, 1e-05
    %v11033 = vadd.f32 %v11001, 1e-05
    %v11034 = vadd.f32 %v11002, 1e-05
    %v11035 = vadd.f32 %v11003, 1e-05
    %v11036 = vadd.f32 %v11004, 1e-05
    %v11037 = vadd.f32 %v11005, 1e-05
    %v11038 = vadd.f32 %v11006, 1e-05
    %v11039 = vadd.f32 %v11007, 1e-05
    %v11040 = vadd.f32 %v11008, 1e-05
    %v11041 = vadd.f32 %v11009, 1e-05
    %v11042 = vadd.f32 %v11010, 1e-05
    %v11043 = vadd.f32 %v11011, 1e-05
    %v11044 = vadd.f32 %v11012, 1e-05
    %v11045 = vadd.f32 %v11013, 1e-05
    %v11046 = vadd.f32 %v11014, 1e-05
    %v11047 = vadd.f32 %v11015, 1e-05
    %v11048 = vrsqrt.pop %v11016
    %v11049 = vrsqrt.pop %v11017
    %v11050 = vrsqrt.pop %v11018
    %v11051 = vrsqrt.pop %v11019
    %v11052 = vrsqrt.pop %v11020
    %v11053 = vrsqrt.pop %v11021
    %v11054 = vrsqrt.pop %v11022
    %v11055 = vrsqrt.pop %v11023
    %v11056 = vrsqrt.pop %v11024
    %v11057 = vrsqrt.pop %v11025
    %v11058 = vrsqrt.pop %v11026
    %v11059 = vrsqrt.pop %v11027
    %v11060 = vrsqrt.pop %v11028
    %v11061 = vrsqrt.pop %v11029
    %v11062 = vrsqrt.pop %v11030
    %v11063 = vrsqrt.pop %v11031
    %v11064 = vrsqrt.pop %v11032
    %v11065 = vrsqrt.pop %v11033
    %v11066 = vrsqrt.pop %v11034
    %v11067 = vrsqrt.pop %v11035
    %v11068 = vrsqrt.pop %v11036
    %v11069 = vrsqrt.pop %v11037
    %v11070 = vrsqrt.pop %v11038
    %v11071 = vrsqrt.pop %v11039
    %v11072 = vrsqrt.pop %v11040
    %v11073 = vrsqrt.pop %v11041
    %v11074 = vrsqrt.pop %v11042
    %v11075 = vrsqrt.pop %v11043
    %v11076 = vrsqrt.pop %v11044
    %v11077 = vrsqrt.pop %v11045
    %v11078 = vrsqrt.pop %v11046
    %v11079 = vrsqrt.pop %v11047
    %v11080 = vmul.f32 %v10760, %v11048
    %v11081 = vmul.f32 %v10761, %v11048
    %v11082 = vmul.f32 %v10762, %v11049
    %v11083 = vmul.f32 %v10763, %v11049
    %v11084 = vmul.f32 %v10764, %v11050
    %v11085 = vmul.f32 %v10765, %v11050
    %v11086 = vmul.f32 %v10766, %v11051
    %v11087 = vmul.f32 %v10767, %v11051
    %v11088 = vmul.f32 %v10768, %v11052
    %v11089 = vmul.f32 %v10769, %v11052
    %v11090 = vmul.f32 %v10770, %v11053
    %v11091 = vmul.f32 %v10771, %v11053
    %v11092 = vmul.f32 %v10772, %v11054
    %v11093 = vmul.f32 %v10773, %v11054
    %v11094 = vmul.f32 %v10774, %v11055
    %v11095 = vmul.f32 %v10775, %v11055
    %v11096 = vmul.f32 %v10776, %v11056
    %v11097 = vmul.f32 %v10777, %v11056
    %v11098 = vmul.f32 %v10778, %v11057
    %v11099 = vmul.f32 %v10779, %v11057
    %v11100 = vmul.f32 %v10780, %v11058
    %v11101 = vmul.f32 %v10781, %v11058
    %v11102 = vmul.f32 %v10782, %v11059
    %v11103 = vmul.f32 %v10783, %v11059
    %v11104 = vmul.f32 %v10784, %v11060
    %v11105 = vmul.f32 %v10785, %v11060
    %v11106 = vmul.f32 %v10786, %v11061
    %v11107 = vmul.f32 %v10787, %v11061
    %v11108 = vmul.f32 %v10788, %v11062
    %v11109 = vmul.f32 %v10789, %v11062
    %v11110 = vmul.f32 %v10790, %v11063
    %v11111 = vmul.f32 %v10791, %v11063
    %v11112 = vmul.f32 %v10792, %v11064
    %v11113 = vmul.f32 %v10793, %v11064
    %v11114 = vmul.f32 %v10794, %v11065
    %v11115 = vmul.f32 %v10795, %v11065
    %v11116 = vmul.f32 %v10796, %v11066
    %v11117 = vmul.f32 %v10797, %v11066
    %v11118 = vmul.f32 %v10798, %v11067
    %v11119 = vmul.f32 %v10799, %v11067
    %v11120 = vmul.f32 %v10800, %v11068
    %v11121 = vmul.f32 %v10801, %v11068
    %v11122 = vmul.f32 %v10802, %v11069
    %v11123 = vmul.f32 %v10803, %v11069
    %v11124 = vmul.f32 %v10804, %v11070
    %v11125 = vmul.f32 %v10805, %v11070
    %v11126 = vmul.f32 %v10806, %v11071
    %v11127 = vmul.f32 %v10807, %v11071
    %v11128 = vmul.f32 %v10808, %v11072
    %v11129 = vmul.f32 %v10809, %v11072
    %v11130 = vmul.f32 %v10810, %v11073
    %v11131 = vmul.f32 %v10811, %v11073
    %v11132 = vmul.f32 %v10812, %v11074
    %v11133 = vmul.f32 %v10813, %v11074
    %v11134 = vmul.f32 %v10814, %v11075
    %v11135 = vmul.f32 %v10815, %v11075
    %v11136 = vmul.f32 %v10816, %v11076
    %v11137 = vmul.f32 %v10817, %v11076
    %v11138 = vmul.f32 %v10818, %v11077
    %v11139 = vmul.f32 %v10819, %v11077
    %v11140 = vmul.f32 %v10820, %v11078
    %v11141 = vmul.f32 %v10821, %v11078
    %v11142 = vmul.f32 %v10822, %v11079
    %v11143 = vmul.f32 %v10823, %v11079
    %v11145 = vlaneseq
    %v11146 = vshrl.u32 %v11145, 7
    %v11147 = vsub.s32 0, %v11146
    %v11148 = vrot.slane %v10630, %v11147
    %v11149 = vlaneseq
    %v11150 = vshrl.u32 %v11149, 7
    %v11151 = vsub.s32 1, %v11150
    %v11152 = vrot.slane %v10630, %v11151
    %v11155 = vmul.f32 %v11080, %v11148
    %v11156 = vmul.f32 %v11081, %v11152
    %v11157 = vmul.f32 %v11082, %v11148
    %v11158 = vmul.f32 %v11083, %v11152
    %v11159 = vmul.f32 %v11084, %v11148
    %v11160 = vmul.f32 %v11085, %v11152
    %v11161 = vmul.f32 %v11086, %v11148
    %v11162 = vmul.f32 %v11087, %v11152
    %v11163 = vmul.f32 %v11088, %v11148
    %v11164 = vmul.f32 %v11089, %v11152
    %v11165 = vmul.f32 %v11090, %v11148
    %v11166 = vmul.f32 %v11091, %v11152
    %v11167 = vmul.f32 %v11092, %v11148
    %v11168 = vmul.f32 %v11093, %v11152
    %v11169 = vmul.f32 %v11094, %v11148
    %v11170 = vmul.f32 %v11095, %v11152
    %v11171 = vmul.f32 %v11096, %v11148
    %v11172 = vmul.f32 %v11097, %v11152
    %v11173 = vmul.f32 %v11098, %v11148
    %v11174 = vmul.f32 %v11099, %v11152
    %v11175 = vmul.f32 %v11100, %v11148
    %v11176 = vmul.f32 %v11101, %v11152
    %v11177 = vmul.f32 %v11102, %v11148
    %v11178 = vmul.f32 %v11103, %v11152
    %v11179 = vmul.f32 %v11104, %v11148
    %v11180 = vmul.f32 %v11105, %v11152
    %v11181 = vmul.f32 %v11106, %v11148
    %v11182 = vmul.f32 %v11107, %v11152
    %v11183 = vmul.f32 %v11108, %v11148
    %v11184 = vmul.f32 %v11109, %v11152
    %v11185 = vmul.f32 %v11110, %v11148
    %v11186 = vmul.f32 %v11111, %v11152
    %v11187 = vmul.f32 %v11112, %v11148
    %v11188 = vmul.f32 %v11113, %v11152
    %v11189 = vmul.f32 %v11114, %v11148
    %v11190 = vmul.f32 %v11115, %v11152
    %v11191 = vmul.f32 %v11116, %v11148
    %v11192 = vmul.f32 %v11117, %v11152
    %v11193 = vmul.f32 %v11118, %v11148
    %v11194 = vmul.f32 %v11119, %v11152
    %v11195 = vmul.f32 %v11120, %v11148
    %v11196 = vmul.f32 %v11121, %v11152
    %v11197 = vmul.f32 %v11122, %v11148
    %v11198 = vmul.f32 %v11123, %v11152
    %v11199 = vmul.f32 %v11124, %v11148
    %v11200 = vmul.f32 %v11125, %v11152
    %v11201 = vmul.f32 %v11126, %v11148
    %v11202 = vmul.f32 %v11127, %v11152
    %v11203 = vmul.f32 %v11128, %v11148
    %v11204 = vmul.f32 %v11129, %v11152
    %v11205 = vmul.f32 %v11130, %v11148
    %v11206 = vmul.f32 %v11131, %v11152
    %v11207 = vmul.f32 %v11132, %v11148
    %v11208 = vmul.f32 %v11133, %v11152
    %v11209 = vmul.f32 %v11134, %v11148
    %v11210 = vmul.f32 %v11135, %v11152
    %v11211 = vmul.f32 %v11136, %v11148
    %v11212 = vmul.f32 %v11137, %v11152
    %v11213 = vmul.f32 %v11138, %v11148
    %v11214 = vmul.f32 %v11139, %v11152
    %v11215 = vmul.f32 %v11140, %v11148
    %v11216 = vmul.f32 %v11141, %v11152
    %v11217 = vmul.f32 %v11142, %v11148
    %v11218 = vmul.f32 %v11143, %v11152
    %v11220 = vlaneseq
    %v11221 = vshrl.u32 %v11220, 7
    %v11222 = vsub.s32 0, %v11221
    %v11223 = vrot.slane %v10631, %v11222
    %v11224 = vlaneseq
    %v11225 = vshrl.u32 %v11224, 7
    %v11226 = vsub.s32 1, %v11225
    %v11227 = vrot.slane %v10631, %v11226
    %v11230 = vadd.f32 %v11155, %v11223
    %v11231 = vadd.f32 %v11156, %v11227
    %v11232 = vadd.f32 %v11157, %v11223
    %v11233 = vadd.f32 %v11158, %v11227
    %v11234 = vadd.f32 %v11159, %v11223
    %v11235 = vadd.f32 %v11160, %v11227
    %v11236 = vadd.f32 %v11161, %v11223
    %v11237 = vadd.f32 %v11162, %v11227
    %v11238 = vadd.f32 %v11163, %v11223
    %v11239 = vadd.f32 %v11164, %v11227
    %v11240 = vadd.f32 %v11165, %v11223
    %v11241 = vadd.f32 %v11166, %v11227
    %v11242 = vadd.f32 %v11167, %v11223
    %v11243 = vadd.f32 %v11168, %v11227
    %v11244 = vadd.f32 %v11169, %v11223
    %v11245 = vadd.f32 %v11170, %v11227
    %v11246 = vadd.f32 %v11171, %v11223
    %v11247 = vadd.f32 %v11172, %v11227
    %v11248 = vadd.f32 %v11173, %v11223
    %v11249 = vadd.f32 %v11174, %v11227
    %v11250 = vadd.f32 %v11175, %v11223
    %v11251 = vadd.f32 %v11176, %v11227
    %v11252 = vadd.f32 %v11177, %v11223
    %v11253 = vadd.f32 %v11178, %v11227
    %v11254 = vadd.f32 %v11179, %v11223
    %v11255 = vadd.f32 %v11180, %v11227
    %v11256 = vadd.f32 %v11181, %v11223
    %v11257 = vadd.f32 %v11182, %v11227
    %v11258 = vadd.f32 %v11183, %v11223
    %v11259 = vadd.f32 %v11184, %v11227
    %v11260 = vadd.f32 %v11185, %v11223
    %v11261 = vadd.f32 %v11186, %v11227
    %v11262 = vadd.f32 %v11187, %v11223
    %v11263 = vadd.f32 %v11188, %v11227
    %v11264 = vadd.f32 %v11189, %v11223
    %v11265 = vadd.f32 %v11190, %v11227
    %v11266 = vadd.f32 %v11191, %v11223
    %v11267 = vadd.f32 %v11192, %v11227
    %v11268 = vadd.f32 %v11193, %v11223
    %v11269 = vadd.f32 %v11194, %v11227
    %v11270 = vadd.f32 %v11195, %v11223
    %v11271 = vadd.f32 %v11196, %v11227
    %v11272 = vadd.f32 %v11197, %v11223
    %v11273 = vadd.f32 %v11198, %v11227
    %v11274 = vadd.f32 %v11199, %v11223
    %v11275 = vadd.f32 %v11200, %v11227
    %v11276 = vadd.f32 %v11201, %v11223
    %v11277 = vadd.f32 %v11202, %v11227
    %v11278 = vadd.f32 %v11203, %v11223
    %v11279 = vadd.f32 %v11204, %v11227
    %v11280 = vadd.f32 %v11205, %v11223
    %v11281 = vadd.f32 %v11206, %v11227
    %v11282 = vadd.f32 %v11207, %v11223
    %v11283 = vadd.f32 %v11208, %v11227
    %v11284 = vadd.f32 %v11209, %v11223
    %v11285 = vadd.f32 %v11210, %v11227
    %v11286 = vadd.f32 %v11211, %v11223
    %v11287 = vadd.f32 %v11212, %v11227
    %v11288 = vadd.f32 %v11213, %v11223
    %v11289 = vadd.f32 %v11214, %v11227
    %v11290 = vadd.f32 %v11215, %v11223
    %v11291 = vadd.f32 %v11216, %v11227
    %v11292 = vadd.f32 %v11217, %v11223
    %v11293 = vadd.f32 %v11218, %v11227
    %v11294 = vmax.f32 %v11230, 0.0
    %v11295 = vmax.f32 %v11231, 0.0
    %v11296 = vmax.f32 %v11232, 0.0
    %v11297 = vmax.f32 %v11233, 0.0
    %v11298 = vmax.f32 %v11234, 0.0
    %v11299 = vmax.f32 %v11235, 0.0
    %v11300 = vmax.f32 %v11236, 0.0
    %v11301 = vmax.f32 %v11237, 0.0
    %v11302 = vmax.f32 %v11238, 0.0
    %v11303 = vmax.f32 %v11239, 0.0
    %v11304 = vmax.f32 %v11240, 0.0
    %v11305 = vmax.f32 %v11241, 0.0
    %v11306 = vmax.f32 %v11242, 0.0
    %v11307 = vmax.f32 %v11243, 0.0
    %v11308 = vmax.f32 %v11244, 0.0
    %v11309 = vmax.f32 %v11245, 0.0
    %v11310 = vmax.f32 %v11246, 0.0
    %v11311 = vmax.f32 %v11247, 0.0
    %v11312 = vmax.f32 %v11248, 0.0
    %v11313 = vmax.f32 %v11249, 0.0
    %v11314 = vmax.f32 %v11250, 0.0
    %v11315 = vmax.f32 %v11251, 0.0
    %v11316 = vmax.f32 %v11252, 0.0
    %v11317 = vmax.f32 %v11253, 0.0
    %v11318 = vmax.f32 %v11254, 0.0
    %v11319 = vmax.f32 %v11255, 0.0
    %v11320 = vmax.f32 %v11256, 0.0
    %v11321 = vmax.f32 %v11257, 0.0
    %v11322 = vmax.f32 %v11258, 0.0
    %v11323 = vmax.f32 %v11259, 0.0
    %v11324 = vmax.f32 %v11260, 0.0
    %v11325 = vmax.f32 %v11261, 0.0
    %v11326 = vmax.f32 %v11262, 0.0
    %v11327 = vmax.f32 %v11263, 0.0
    %v11328 = vmax.f32 %v11264, 0.0
    %v11329 = vmax.f32 %v11265, 0.0
    %v11330 = vmax.f32 %v11266, 0.0
    %v11331 = vmax.f32 %v11267, 0.0
    %v11332 = vmax.f32 %v11268, 0.0
    %v11333 = vmax.f32 %v11269, 0.0
    %v11334 = vmax.f32 %v11270, 0.0
    %v11335 = vmax.f32 %v11271, 0.0
    %v11336 = vmax.f32 %v11272, 0.0
    %v11337 = vmax.f32 %v11273, 0.0
    %v11338 = vmax.f32 %v11274, 0.0
    %v11339 = vmax.f32 %v11275, 0.0
    %v11340 = vmax.f32 %v11276, 0.0
    %v11341 = vmax.f32 %v11277, 0.0
    %v11342 = vmax.f32 %v11278, 0.0
    %v11343 = vmax.f32 %v11279, 0.0
    %v11344 = vmax.f32 %v11280, 0.0
    %v11345 = vmax.f32 %v11281, 0.0
    %v11346 = vmax.f32 %v11282, 0.0
    %v11347 = vmax.f32 %v11283, 0.0
    %v11348 = vmax.f32 %v11284, 0.0
    %v11349 = vmax.f32 %v11285, 0.0
    %v11350 = vmax.f32 %v11286, 0.0
    %v11351 = vmax.f32 %v11287, 0.0
    %v11352 = vmax.f32 %v11288, 0.0
    %v11353 = vmax.f32 %v11289, 0.0
    %v11354 = vmax.f32 %v11290, 0.0
    %v11355 = vmax.f32 %v11291, 0.0
    %v11356 = vmax.f32 %v11292, 0.0
    %v11357 = vmax.f32 %v11293, 0.0
    %v11358 = vld [vmem:[%s19] sm:$0x3]
    %v11359 = vpack.c.bf16 %v11296, %v11294
    %v11360 = vpack.c.bf16 %v11297, %v11295
    %v11361 = vpack.c.bf16 %v11300, %v11298
    %v11362 = vpack.c.bf16 %v11301, %v11299
    %v11363 = vpack.c.bf16 %v11304, %v11302
    %v11364 = vpack.c.bf16 %v11305, %v11303
    %v11365 = vpack.c.bf16 %v11308, %v11306
    %v11366 = vpack.c.bf16 %v11309, %v11307
    %v11367 = vpack.c.bf16 %v11312, %v11310
    %v11368 = vpack.c.bf16 %v11313, %v11311
    %v11369 = vpack.c.bf16 %v11316, %v11314
    %v11370 = vpack.c.bf16 %v11317, %v11315
    %v11371 = vpack.c.bf16 %v11320, %v11318
    %v11372 = vpack.c.bf16 %v11321, %v11319
    %v11373 = vpack.c.bf16 %v11324, %v11322
    %v11374 = vpack.c.bf16 %v11325, %v11323
    %v11375 = vpack.c.bf16 %v11328, %v11326
    %v11376 = vpack.c.bf16 %v11329, %v11327
    %v11377 = vpack.c.bf16 %v11332, %v11330
    %v11378 = vpack.c.bf16 %v11333, %v11331
    %v11379 = vpack.c.bf16 %v11336, %v11334
    %v11380 = vpack.c.bf16 %v11337, %v11335
    %v11381 = vpack.c.bf16 %v11340, %v11338
    %v11382 = vpack.c.bf16 %v11341, %v11339
    %v11383 = vpack.c.bf16 %v11344, %v11342
    %v11384 = vpack.c.bf16 %v11345, %v11343
    %v11385 = vpack.c.bf16 %v11348, %v11346
    %v11386 = vpack.c.bf16 %v11349, %v11347
    %v11387 = vpack.c.bf16 %v11352, %v11350
    %v11388 = vpack.c.bf16 %v11353, %v11351
    %v11389 = vpack.c.bf16 %v11356, %v11354
    %v11390 = vpack.c.bf16 %v11357, %v11355
    %v11391 = vld [vmem:[#allocation2] sm:$0x1]
    %11393 = vset.pattern.permute.xlu0 0
    %11394 = vperm.xlu0 %11393, %v11391
    %v11395 = vpop.permute.xlu0 %11394
    %v11397 = vlaneseq
    %v11398 = vshrl.u32 %v11397, 7
    %v11399 = vsub.s32 0, %v11398
    %v11400 = vrot.slane %v11395, %v11399
    %v11403 = vunpack.c.l.s4 1966171168
    %v11404 = vunpack.c.0.s8 %v11403
    %v11405 = vlaneseq
    %v11406 = vshrl.u32 %v11405, 7
    %v11407 = vsub.s32 %v11404, %v11406
    %v11408 = vrot.slane %v11358, %v11407
    %v11409 = vcombine.high %v11408, %v11408
    %v11411 = vunpack.c.l.s4 1966171168
    %v11412 = vunpack.c.0.s8 %v11411
    %v11413 = vlaneseq
    %v11414 = vshrl.u32 %v11413, 7
    %v11415 = vsub.s32 %v11412, %v11414
    %v11416 = vrot.slane %v11408, %v11415
    %v11418 = vunpack.c.l.s4 1966171168
    %v11419 = vunpack.c.0.s8 %v11418
    %v11420 = vlaneseq
    %v11421 = vshrl.u32 %v11420, 7
    %v11422 = vsub.s32 %v11419, %v11421
    %v11423 = vrot.slane %v11409, %v11422
    %11426 = vmatprep.subr.bf16.mxu0 %v11360
    %11427 = vmatpush1.bf16.xpose.msra.mxu0 %v11359
    %11428 = vmatprep.subr.bf16.mxu0 %v11362
    %11429 = vmatpush1.bf16.xpose.msra.mxu0 %v11361
    %11430 = vmatprep.subr.bf16.mxu0 %v11364
    %11431 = vmatpush1.bf16.xpose.msra.mxu0 %v11363
    %11432 = vmatprep.subr.bf16.mxu0 %v11366
    %11433 = vmatpush1.bf16.xpose.msra.mxu0 %v11365
    %11434 = vmatprep.subr.bf16.mxu0 %v11368
    %11435 = vmatpush1.bf16.xpose.msra.mxu0 %v11367
    %11436 = vmatprep.subr.bf16.mxu0 %v11370
    %11437 = vmatpush1.bf16.xpose.msra.mxu0 %v11369
    %11438 = vmatprep.subr.bf16.mxu0 %v11372
    %11439 = vmatpush1.bf16.xpose.msra.mxu0 %v11371
    %11440 = vmatprep.subr.bf16.mxu0 %v11374
    %11441 = vmatpush1.bf16.xpose.msra.mxu0 %v11373
    %11442 = vmatprep.subr.bf16.mxu0 %v11376
    %11443 = vmatpush1.bf16.xpose.msra.mxu0 %v11375
    %11444 = vmatprep.subr.bf16.mxu0 %v11378
    %11445 = vmatpush1.bf16.xpose.msra.mxu0 %v11377
    %11446 = vmatprep.subr.bf16.mxu0 %v11380
    %11447 = vmatpush1.bf16.xpose.msra.mxu0 %v11379
    %11448 = vmatprep.subr.bf16.mxu0 %v11382
    %11449 = vmatpush1.bf16.xpose.msra.mxu0 %v11381
    %11450 = vmatprep.subr.bf16.mxu0 %v11384
    %11451 = vmatpush1.bf16.xpose.msra.mxu0 %v11383
    %11452 = vmatprep.subr.bf16.mxu0 %v11386
    %11453 = vmatpush1.bf16.xpose.msra.mxu0 %v11385
    %11454 = vmatprep.subr.bf16.mxu0 %v11388
    %11455 = vmatpush1.bf16.xpose.msra.mxu0 %v11387
    %11456 = vmatprep.subr.bf16.mxu0 %v11390
    %11457 = vmatpush1.bf16.xpose.msra.mxu0 %v11389
    %11458 = vmatprep.mubr.bf16.mxu0 %v11423
    %11459 = vmatmul.mubr.bf16.gmra.mrb[0].mxu0 %v11416
    %v11460 = vpop.f32.mrb[0].mxu0
    %v11461 = vadd.f32 %v11400, %v11460
    %v11462 = vpop.f32.mrb[0].mxu0
    %v11463 = vadd.f32 %v11400, %v11462
    %v11464 = vpop.f32.mrb[0].mxu0
    %v11465 = vpop.f32.mrb[0].mxu0
    %11466 = vdwg.mxu0
    %v11469 = vcombine.low %v11461, %v11463
    %v11471 = vunpack.c.l.s4 1966171168
    %v11472 = vunpack.c.0.s8 %v11471
    %v11473 = vlaneseq
    %v11474 = vshrl.u32 %v11473, 7
    %v11475 = vsub.s32 %v11472, %v11474
    %v11476 = vrot.slane %v11469, %v11475
    %v11478 = vunpack.c.l.s4 1966171168
    %v11479 = vunpack.c.0.s8 %v11478
    %v11480 = vlaneseq
    %v11481 = vshrl.u32 %v11480, 7
    %v11482 = vsub.s32 %v11479, %v11481
    %v11483 = vrot.slane %v11476, %v11482
    %v11485 = vlaneseq
    %vm11486 = vcmp.ge.s32.totalorder %v11485, 0
    %vm11487 = vcmp.lt.s32.totalorder %v11485, 256
    %vm11488 = vmand %vm11486, %vm11487
    %11489 = vst.msk [vmem:[%s21] sm:$0x3] %vm11488, %v11483
    // Predicated region
    $region126: #{value_network_forward.1} parent=1 // pred_check
      _
    $region127: #{value_network_forward.1} parent=1 // pred_check_branch
      %11491 = sbr.rel (0) target = $region129
    $region128: #{value_network_forward.1} parent=1 // pred_region
      _
    $region129: #{value_network_forward.1} parent=1 // pred_fallthru
      _
    // Predicated region
    $region130: #{value_network_forward.1} parent=1 // pred_check
      _
    $region131: #{value_network_forward.1} parent=1 // pred_check_branch
      %11493 = sbr.rel (0) target = $region133
    $region132: #{value_network_forward.1} parent=1 // pred_region
      _
    $region133: #{value_network_forward.1} parent=1 // pred_fallthru
      _
    %11494 = vsyncpa [#allocation4], 1
    %11495 = vsyncpa [#allocation6], 1
    %11496 = vsyncpa [#allocation9], 1
    %11497 = vsyncpa [#allocation12], 1
    %11498 = vsyncpa [#allocation15], 1
    %11499 = vsyncpa [#allocation18], 1

</llo_original>
